<compile_context>
chip_gen: v6e
topology: v6e:2x2x1
jax: 0.10.0
libtpu: 0.0.40
codegen_flags: <defaults>
</compile_context>

<pallas_src>
import numpy as np
import jax
import jax.numpy as jnp
from jax.experimental import pallas as pl
from jax.experimental.pallas import tpu as pltpu

# ----------------------- configuration (FullDPM defaults) -----------------------
IN_NODE_NF = 26        # 20 (seq probs) + 3 (so3 vec) + 3 (t embed)
HIDDEN_NF = 26
OUT_NODE_NF = 23       # 20 (seq logits) + 3 (rotation quaternion part)
NUM_STEPS = 100
N_LAYERS = 4
NUM_CLASSES = 20
POSITION_MEAN = jnp.zeros((1, 1, 3), jnp.float32)
POSITION_SCALE = jnp.full((1, 1, 1), 10.0, jnp.float32)

# small example sizes (batch N must be 1: the torch forward squeezes dim 0)
L = 8
E = L * (L - 1)        # full graph without self-loops
MASK_DENOM = float(1 * L) + 1e-8
LOSS_LANES = 128       # lane-dense loss output slab (lane0=rot, lane1=pos, lane2=seq)


# ----------------------- helpers -----------------------
def _full_spec(shape):
    nd = len(shape)
    return pl.BlockSpec(shape, lambda i, _nd=nd: (0,) * _nd)


def _silu(x):
    return x * jax.nn.sigmoid(x)


def _lane_col(x, lane_ids, k):
    # Extract lane k of x as an (rows, 1) column via masked lane reduce (no lane slicing).
    return jnp.sum(jnp.where(lane_ids == k, x, 0.0), axis=-1, keepdims=True)


# ----------------------- Pallas kernel: fused EGNN + losses -----------------------
def fused_dpm_kernel(h0_ref, x0_ref, grow_ref, gcol_ref, ssum_ref, smean_ref,
                     p0_ref, rn_ref, r0c_ref, ptrue_ref, b2_ref, bc_ref,
                     win_ref, bin_ref,
                     ew1s_ref, ew1t_ref, ew1r_ref, eb1_ref, ew2_ref, eb2_ref,
                     aw_ref, ab_ref, cw1_ref, cb1_ref, cw2_ref,
                     nw1h_ref, nw1a_ref, nb1_ref, nw2_ref, nb2_ref,
                     wout_ref, bout_ref,
                     loss_ref):
    f32 = jnp.float32
    grow = grow_ref[...]          # (E, L) one-hot gather (row nodes)
    gcol = gcol_ref[...]          # (E, L) one-hot gather (col nodes)
    ssum = ssum_ref[...]          # (L, E) scatter-sum (== grow^T)
    smean = smean_ref[...]        # (L, E) scatter-mean (== grow^T / per-node edge count)

    # embedding_in
    h = jnp.dot(h0_ref[...], win_ref[...], preferred_element_type=f32) + bin_ref[...]
    x = x0_ref[...]

    for l in range(N_LAYERS):
        # per-node projections hoisted out of the gather: (grow@h)@W == grow@(h@W)
        p_s = jnp.dot(h, ew1s_ref[l], preferred_element_type=f32)      # (L, H)
        p_t = jnp.dot(h, ew1t_ref[l], preferred_element_type=f32)      # (L, H)
        hr = jnp.dot(grow, p_s, preferred_element_type=f32)            # (E, H)
        hc = jnp.dot(gcol, p_t, preferred_element_type=f32)            # (E, H)
        xr = jnp.dot(grow, x, preferred_element_type=f32)              # (E, 3)
        xc = jnp.dot(gcol, x, preferred_element_type=f32)              # (E, 3)

        diff = xr - xc
        radial = jnp.sum(diff * diff, axis=-1, keepdims=True)          # (E, 1)
        diff = diff * jax.lax.rsqrt(radial + 1e-8)                     # normalize=True

        # edge MLP: radial term is a VPU outer product (was a K=1 MXU matmul)
        m = hr + hc + radial * ew1r_ref[l] + eb1_ref[l]
        m = _silu(m)
        m = jnp.dot(m, ew2_ref[l], preferred_element_type=f32) + eb2_ref[l]
        m = _silu(m)

        # attention gate: (E,H)@(H,1) -> VPU multiply + lane reduce
        att = jax.nn.sigmoid(jnp.sum(m * aw_ref[l], axis=-1, keepdims=True) + ab_ref[l])
        m = m * att

        # coordinate update: per-edge scalar, segment-mean folded into smean operand
        cm = _silu(jnp.dot(m, cw1_ref[l], preferred_element_type=f32) + cb1_ref[l])
        w = jnp.sum(cm * cw2_ref[l], axis=-1, keepdims=True)           # (E, 1)
        x = x + jnp.dot(smean, diff * w, preferred_element_type=f32)   # (L, 3)

        # node update: segment-sum of messages, node MLP, residual
        aggh = jnp.dot(ssum, m, preferred_element_type=f32)            # (L, H)
        nh = (jnp.dot(h, nw1h_ref[l], preferred_element_type=f32)
              + jnp.dot(aggh, nw1a_ref[l], preferred_element_type=f32)
              + nb1_ref[l])
        nh = _silu(nh)
        nh = jnp.dot(nh, nw2_ref[l], preferred_element_type=f32) + nb2_ref[l]
        h = h + nh

    # embedding_out
    pred = jnp.dot(h, wout_ref[...], preferred_element_type=f32) + bout_ref[...]   # (L, 23)
    pred_lanes = jax.lax.broadcasted_iota(jnp.int32, (L, OUT_NODE_NF), 1)
    cls_mask = pred_lanes < NUM_CLASSES

    # ---- sequence loss: masked softmax over class lanes + D3PM posterior + KL ----
    zmax = jnp.max(jnp.where(cls_mask, pred, -1e30), axis=-1, keepdims=True)
    ez = jnp.where(cls_mask, jnp.exp(pred - zmax), 0.0)
    c_den = ez / jnp.sum(ez, axis=-1, keepdims=True)           # (L, 23), zero outside classes
    theta = b2_ref[...] * c_den + bc_ref[...]                  # pre-scaled posterior factors
    post_pred = theta / (jnp.sum(theta, axis=-1, keepdims=True) + 1e-8)
    pt = ptrue_ref[...]                                        # zero-padded to 23 lanes
    xlogx = jnp.where(pt > 0, pt * jnp.log(jnp.maximum(pt, 1e-30)), 0.0)
    kl = xlogx - pt * jnp.log(post_pred + 1e-8)
    kl_row = jnp.sum(kl, axis=-1, keepdims=True)               # (L, 1)
    loss_seq = jnp.sum(kl_row, axis=0, keepdims=True) / MASK_DENOM      # (1, 1)

    # ---- position loss (MSE summed over xyz, masked mean; mask all True) ----
    d = x - p0_ref[...]
    se = jnp.sum(d * d, axis=-1, keepdims=True)                # (L, 1)
    loss_pos = jnp.sum(se, axis=0, keepdims=True) / MASK_DENOM          # (1, 1)

    # ---- rotation loss: quaternion(1ijk) -> U, cosine loss on columns of R_noisy @ U ----
    qb = _lane_col(pred, pred_lanes, NUM_CLASSES + 0)
    qc = _lane_col(pred, pred_lanes, NUM_CLASSES + 1)
    qd = _lane_col(pred, pred_lanes, NUM_CLASSES + 2)
    inv = jax.lax.rsqrt(1.0 + qb * qb + qc * qc + qd * qd)
    a_, b_, c_, d_ = inv, qb * inv, qc * inv, qd * inv
    U = [[a_*a_ + b_*b_ - c_*c_ - d_*d_, 2*(b_*c_ - a_*d_),             2*(b_*d_ + a_*c_)],
         [2*(b_*c_ + a_*d_),             a_*a_ - b_*b_ + c_*c_ - d_*d_, 2*(c_*d_ - a_*b_)],
         [2*(b_*d_ - a_*c_),             2*(c_*d_ + a_*b_),             a_*a_ - b_*b_ - c_*c_ + d_*d_]]

    rn = rn_ref[...]                     # (L, 9): lane 3*i+j = R_noisy[l, i, j]
    r0 = r0c_ref[...]                    # (L, 9): lane 3*a+i = R_0[l, i, a] (columns)
    nine_lanes = jax.lax.broadcasted_iota(jnp.int32, (L, 9), 1)
    Rn = [[_lane_col(rn, nine_lanes, 3 * i + j) for j in range(3)] for i in range(3)]

    rot_acc = jnp.zeros((L, 1), f32)
    for col in range(3):
        cp = [Rn[i][0] * U[0][col] + Rn[i][1] * U[1][col] + Rn[i][2] * U[2][col]
              for i in range(3)]                               # column `col` of R_noisy @ U
        ct = [_lane_col(r0, nine_lanes, 3 * col + i) for i in range(3)]
        dot = cp[0] * ct[0] + cp[1] * ct[1] + cp[2] * ct[2]
        n_p = jnp.sqrt(cp[0] * cp[0] + cp[1] * cp[1] + cp[2] * cp[2])
        n_t = jnp.sqrt(ct[0] * ct[0] + ct[1] * ct[1] + ct[2] * ct[2])
        cos = dot / (jnp.maximum(n_p, 1e-8) * jnp.maximum(n_t, 1e-8))
        rot_acc = rot_acc + (1.0 - cos)
    loss_rot = jnp.sum(rot_acc, axis=0, keepdims=True) / MASK_DENOM     # (1, 1)

    # lane-dense output slab: lane0=rot, lane1=pos, lane2=seq
    out_lanes = jax.lax.broadcasted_iota(jnp.int32, (1, LOSS_LANES), 1)
    loss_ref[...] = jnp.where(out_lanes == 0, loss_rot,
                              jnp.where(out_lanes == 1, loss_pos,
                                        jnp.where(out_lanes == 2, loss_seq, 0.0)))


def fused_dpm_pallas(in_feat, p_noisy, grow, gcol, srow_sum, srow_mean,
                     p0n, rn9, r0c9, post_true, b2, bc, params):
    ins = [in_feat, p_noisy, grow, gcol, srow_sum, srow_mean, p0n, rn9, r0c9,
           post_true, b2, bc,
           params['win'], params['bin'],
           params['ew1s'], params['ew1t'], params['ew1r'], params['eb1'],
           params['ew2'], params['eb2'], params['aw'], params['ab'],
           params['cw1'], params['cb1'], params['cw2'],
           params['nw1h'], params['nw1a'], params['nb1'], params['nw2'], params['nb2'],
           params['wout'], params['bout']]
    return pl.pallas_call(
        fused_dpm_kernel,
        grid=(1,),
        in_specs=[_full_spec(a.shape) for a in ins],
        out_specs=_full_spec((1, LOSS_LANES)),
        out_shape=jax.ShapeDtypeStruct((1, LOSS_LANES), jnp.float32),
        compiler_params=pltpu.CompilerParams(dimension_semantics=("arbitrary",)),
    )(*ins)


# ----------------------- plain-JAX glue -----------------------
def make_variance_schedule(num_steps=NUM_STEPS, s=0.01):
    T = num_steps
    tt = jnp.arange(0, T + 1, dtype=jnp.float32)
    f_t = jnp.cos((jnp.pi / 2.0) * ((tt / T) + s) / (1.0 + s)) ** 2
    alpha_bars = f_t / f_t[0]
    betas = 1.0 - alpha_bars[1:] / alpha_bars[:-1]
    betas = jnp.concatenate([jnp.zeros((1,), jnp.float32), betas])
    betas = jnp.minimum(betas, 0.999)
    alphas = 1.0 - betas
    return betas, alphas, alpha_bars


def so3vec_to_rotation(v):
    theta = jnp.linalg.norm(v, axis=-1, keepdims=True)
    t2 = theta * theta
    a = jnp.where(theta < 1e-4, 1.0 - t2 / 6.0, jnp.sin(theta) / jnp.maximum(theta, 1e-8))
    b = jnp.where(theta < 1e-4, 0.5 - t2 / 24.0, (1.0 - jnp.cos(theta)) / jnp.maximum(t2, 1e-8))
    vx, vy, vz = v[..., 0], v[..., 1], v[..., 2]
    z = jnp.zeros_like(vx)
    V = jnp.stack([jnp.stack([z, -vz, vy], -1),
                   jnp.stack([vz, z, -vx], -1),
                   jnp.stack([-vy, vx, z], -1)], -2)
    I = jnp.eye(3, dtype=v.dtype)
    return I + a[..., None] * V + b[..., None] * (V @ V)


def rotation_to_so3vec(R):
    trace = R[..., 0, 0] + R[..., 1, 1] + R[..., 2, 2]
    cos_t = jnp.clip((trace - 1.0) / 2.0, -1.0, 1.0)
    theta = jnp.arccos(cos_t)
    w = jnp.stack([R[..., 2, 1] - R[..., 1, 2],
                   R[..., 0, 2] - R[..., 2, 0],
                   R[..., 1, 0] - R[..., 0, 1]], -1)
    sin_t = jnp.sin(theta)
    scale = jnp.where(theta < 1e-4, 0.5 + theta * theta / 12.0,
                      theta / (2.0 * jnp.maximum(sin_t, 1e-8)))
    return scale[..., None] * w


# ----------------------- deterministic parameter init -----------------------
class _KeyGen:
    def __init__(self, key):
        self.key = key

    def __call__(self):
        self.key, sub = jax.random.split(self.key)
        return sub


def init_params(key):
    kg = _KeyGen(key)

    def linear(fan_in, fan_out, bias=True, gain=1.0):
        bound = 1.0 / np.sqrt(fan_in)
        W = jax.random.uniform(kg(), (fan_in, fan_out), jnp.float32, -bound, bound) * gain
        b = (jax.random.uniform(kg(), (1, fan_out), jnp.float32, -bound, bound) * gain
             if bias else None)
        return W, b

    H = HIDDEN_NF
    win, bin_ = linear(IN_NODE_NF, H)
    ew1s, ew1t, ew1r, eb1 = [], [], [], []
    ew2, eb2, aw, ab = [], [], [], []
    cw1, cb1, cw2 = [], [], []
    nw1h, nw1a, nb1, nw2, nb2 = [], [], [], [], []
    for _ in range(N_LAYERS):
        W1, b1 = linear(2 * H + 1, H)
        ew1s.append(W1[:H]); ew1t.append(W1[H:2 * H]); ew1r.append(W1[2 * H:]); eb1.append(b1)
        W2, b2 = linear(H, H); ew2.append(W2); eb2.append(b2)
        Wa, ba = linear(H, 1); aw.append(Wa.T); ab.append(ba)               # stored as (1, H)
        Wc1, bc1 = linear(H, H); cw1.append(Wc1); cb1.append(bc1)
        Wc2, _ = linear(H, 1, bias=False, gain=0.001)                       # final coord layer
        cw2.append(Wc2.T)                                                   # stored as (1, H)
        Wn1, bn1 = linear(2 * H, H)
        nw1h.append(Wn1[:H]); nw1a.append(Wn1[H:]); nb1.append(bn1)
        Wn2, bn2 = linear(H, H); nw2.append(Wn2); nb2.append(bn2)
    wout, bout = linear(H, OUT_NODE_NF)

    st = lambda xs: jnp.stack(xs, axis=0)
    return dict(win=win, bin=bin_,
                ew1s=st(ew1s), ew1t=st(ew1t), ew1r=st(ew1r), eb1=st(eb1),
                ew2=st(ew2), eb2=st(eb2), aw=st(aw), ab=st(ab),
                cw1=st(cw1), cb1=st(cb1), cw2=st(cw2),
                nw1h=st(nw1h), nw1a=st(nw1a), nb1=st(nb1), nw2=st(nw2), nb2=st(nb2),
                wout=wout, bout=bout)


# ----------------------- FullDPM forward (jitted; single pallas_call inside) -----------------------
@jax.jit
def full_dpm_forward(p_0, c_0, v_0, e, t, params, noise_key):
    betas, alphas, alpha_bars = make_variance_schedule(NUM_STEPS)
    edges = [edge[0] for edge in e]                  # edge.squeeze(0)
    rows, cols = edges
    k_rot, k_pos, k_s0, k_st = jax.random.split(noise_key, 4)

    # normalize positions
    p_0n = (p_0 - POSITION_MEAN) / POSITION_SCALE
    R_0 = so3vec_to_rotation(v_0)                    # (1, L, 3, 3)

    ab_t = alpha_bars[t]                             # (1,)
    c0s = jnp.sqrt(ab_t)[:, None, None]
    c1s = jnp.sqrt(1.0 - ab_t)[:, None, None]

    # rotation noise
    # TODO(synk): exact IGSO(3) sampling (ApproxAngularDistribution) has no clean port;
    # approximated with isotropic Gaussian so3 noise scaled by sqrt(1 - alpha_bar).
    e_scaled = c1s * jax.random.normal(k_rot, v_0.shape, jnp.float32)
    R_tmp = so3vec_to_rotation(e_scaled) @ so3vec_to_rotation(c0s * v_0)
    v_noisy = rotation_to_so3vec(R_tmp)
    R_noisy = so3vec_to_rotation(v_noisy)

    # position noise
    eps_p = jax.random.normal(k_pos, p_0n.shape, jnp.float32)
    p_noisy = c0s * p_0n + c1s * eps_p

    # sequence noise (multinomial -> categorical)
    s_0 = jax.random.categorical(k_s0, jnp.log(c_0 + 1e-8), axis=-1)       # (1, L)
    c_0_oh = jax.nn.one_hot(s_0, NUM_CLASSES, dtype=jnp.float32)
    c_noisy = ab_t[:, None, None] * c_0_oh + (1.0 - ab_t[:, None, None]) / NUM_CLASSES
    s_noisy = jax.random.categorical(k_st, jnp.log(c_noisy + 1e-8), axis=-1)

    beta = betas[t]                                                        # (1,)
    t_embed = jnp.broadcast_to(
        jnp.stack([beta, jnp.sin(beta), jnp.cos(beta)], axis=-1), (L, 3))
    in_feat = jnp.concatenate([c_noisy[0], v_noisy[0], t_embed], axis=1)   # (L, 26)

    # dense gather / scatter operators (mean folded into srow_mean)
    grow = jax.nn.one_hot(rows, L, dtype=jnp.float32)                      # (E, L)
    gcol = jax.nn.one_hot(cols, L, dtype=jnp.float32)                      # (E, L)
    srow_sum = grow.T                                                      # (L, E)
    cnt = jnp.maximum(jnp.sum(srow_sum, axis=1, keepdims=True), 1.0)       # (L, 1)
    srow_mean = srow_sum / cnt

    # rotation-loss operands: R_noisy rows flattened, R_0 columns flattened
    rn9 = R_noisy[0].reshape(L, 9)
    r0c9 = jnp.transpose(R_0[0], (0, 2, 1)).reshape(L, 9)

    # D3PM posterior operands (true posterior + pre-scaled factors for predicted one)
    a_t = alphas[t][0]
    ab_tm1 = alpha_bars[t - 1][0]
    c_t_oh = jax.nn.one_hot(s_noisy, NUM_CLASSES, dtype=jnp.float32)[0]    # (L, 20)
    c0_oh0 = c_0_oh[0]                                                     # (L, 20)
    Bfac = a_t * c_t_oh + (1.0 - a_t) / NUM_CLASSES
    theta_true = Bfac * (ab_tm1 * c0_oh0 + (1.0 - ab_tm1) / NUM_CLASSES)
    post_true = theta_true / (jnp.sum(theta_true, axis=-1, keepdims=True) + 1e-8)
    b2 = ab_tm1 * Bfac
    bc = Bfac * (1.0 - ab_tm1) / NUM_CLASSES

    pad = ((0, 0), (0, OUT_NODE_NF - NUM_CLASSES))     # pad class-lane arrays to 23 lanes
    post_true = jnp.pad(post_true, pad)
    b2 = jnp.pad(b2, pad)
    bc = jnp.pad(bc, pad)

    loss_vec = fused_dpm_pallas(in_feat, p_noisy[0], grow, gcol, srow_sum, srow_mean,
                                p_0n[0], rn9, r0c9, post_true, b2, bc, params)
    return {'rot': loss_vec[0, 0], 'pos': loss_vec[0, 1], 'seq': loss_vec[0, 2]}


# ----------------------- main -----------------------
if __name__ == "__main__":
    key = jax.random.PRNGKey(0)
    k_params, k_data, k_noise = jax.random.split(key, 3)
    params = init_params(k_params)

    kd1, kd2, kd3 = jax.random.split(k_data, 3)
    p_0 = jax.random.normal(kd1, (1, L, 3), jnp.float32) * 10.0
    c_0 = jax.nn.softmax(jax.random.normal(kd2, (1, L, NUM_CLASSES), jnp.float32), axis=-1)
    v_0 = jax.random.normal(kd3, (1, L, 3), jnp.float32) * 0.5

    rows_np = np.array([i for i in range(L) for j in range(L) if j != i], dtype=np.int32)
    cols_np = np.array([j for i in range(L) for j in range(L) if j != i], dtype=np.int32)
    e = [jnp.asarray(rows_np)[None, :], jnp.asarray(cols_np)[None, :]]
    t = jnp.array([37], dtype=jnp.int32)

    losses = full_dpm_forward(p_0, c_0, v_0, e, t, params, k_noise)
    losses = {k: jax.block_until_ready(v) for k, v in losses.items()}

    for name in ('rot', 'pos', 'seq'):
        assert np.isfinite(float(losses[name])), name
    print("KERNEL_OK")
</pallas_src>

<mosaic_0001>
module attributes {stable_mosaic.version = 11 : i64} {
  func.func @fused_dpm_kernel(%arg0: i32, %arg1: memref<8x26xf32, #tpu.memory_space<vmem>>, %arg2: memref<8x3xf32, #tpu.memory_space<vmem>>, %arg3: memref<56x8xf32, #tpu.memory_space<vmem>>, %arg4: memref<56x8xf32, #tpu.memory_space<vmem>>, %arg5: memref<8x56xf32, #tpu.memory_space<vmem>>, %arg6: memref<8x56xf32, #tpu.memory_space<vmem>>, %arg7: memref<8x3xf32, #tpu.memory_space<vmem>>, %arg8: memref<8x9xf32, #tpu.memory_space<vmem>>, %arg9: memref<8x9xf32, #tpu.memory_space<vmem>>, %arg10: memref<8x23xf32, #tpu.memory_space<vmem>>, %arg11: memref<8x23xf32, #tpu.memory_space<vmem>>, %arg12: memref<8x23xf32, #tpu.memory_space<vmem>>, %arg13: memref<26x26xf32, #tpu.memory_space<vmem>>, %arg14: memref<1x26xf32, #tpu.memory_space<vmem>>, %arg15: memref<4x26x26xf32, #tpu.memory_space<vmem>>, %arg16: memref<4x26x26xf32, #tpu.memory_space<vmem>>, %arg17: memref<4x1x26xf32, #tpu.memory_space<vmem>>, %arg18: memref<4x1x26xf32, #tpu.memory_space<vmem>>, %arg19: memref<4x26x26xf32, #tpu.memory_space<vmem>>, %arg20: memref<4x1x26xf32, #tpu.memory_space<vmem>>, %arg21: memref<4x1x26xf32, #tpu.memory_space<vmem>>, %arg22: memref<4x1x1xf32, #tpu.memory_space<vmem>>, %arg23: memref<4x26x26xf32, #tpu.memory_space<vmem>>, %arg24: memref<4x1x26xf32, #tpu.memory_space<vmem>>, %arg25: memref<4x1x26xf32, #tpu.memory_space<vmem>>, %arg26: memref<4x26x26xf32, #tpu.memory_space<vmem>>, %arg27: memref<4x26x26xf32, #tpu.memory_space<vmem>>, %arg28: memref<4x1x26xf32, #tpu.memory_space<vmem>>, %arg29: memref<4x26x26xf32, #tpu.memory_space<vmem>>, %arg30: memref<4x1x26xf32, #tpu.memory_space<vmem>>, %arg31: memref<26x23xf32, #tpu.memory_space<vmem>>, %arg32: memref<1x23xf32, #tpu.memory_space<vmem>>, %arg33: memref<1x128xf32, #tpu.memory_space<vmem>>) attributes {dimension_semantics = [#tpu.dimension_semantics<arbitrary>], iteration_bounds = array<i64: 1>, scalar_prefetch = 0 : i64, scratch_operands = 0 : i64, tpu.core_type = #tpu.core_type<tc>, window_params = [{pipeline_mode = #tpu.pipeline_mode<synchronous>, transform_indices = @transform_0, window_bounds = array<i64: 8, 26>}, {pipeline_mode = #tpu.pipeline_mode<synchronous>, transform_indices = @transform_1, window_bounds = array<i64: 8, 3>}, {pipeline_mode = #tpu.pipeline_mode<synchronous>, transform_indices = @transform_2, window_bounds = array<i64: 56, 8>}, {pipeline_mode = #tpu.pipeline_mode<synchronous>, transform_indices = @transform_3, window_bounds = array<i64: 56, 8>}, {pipeline_mode = #tpu.pipeline_mode<synchronous>, transform_indices = @transform_4, window_bounds = array<i64: 8, 56>}, {pipeline_mode = #tpu.pipeline_mode<synchronous>, transform_indices = @transform_5, window_bounds = array<i64: 8, 56>}, {pipeline_mode = #tpu.pipeline_mode<synchronous>, transform_indices = @transform_6, window_bounds = array<i64: 8, 3>}, {pipeline_mode = #tpu.pipeline_mode<synchronous>, transform_indices = @transform_7, window_bounds = array<i64: 8, 9>}, {pipeline_mode = #tpu.pipeline_mode<synchronous>, transform_indices = @transform_8, window_bounds = array<i64: 8, 9>}, {pipeline_mode = #tpu.pipeline_mode<synchronous>, transform_indices = @transform_9, window_bounds = array<i64: 8, 23>}, {pipeline_mode = #tpu.pipeline_mode<synchronous>, transform_indices = @transform_10, window_bounds = array<i64: 8, 23>}, {pipeline_mode = #tpu.pipeline_mode<synchronous>, transform_indices = @transform_11, window_bounds = array<i64: 8, 23>}, {pipeline_mode = #tpu.pipeline_mode<synchronous>, transform_indices = @transform_12, window_bounds = array<i64: 26, 26>}, {pipeline_mode = #tpu.pipeline_mode<synchronous>, transform_indices = @transform_13, window_bounds = array<i64: 1, 26>}, {pipeline_mode = #tpu.pipeline_mode<synchronous>, transform_indices = @transform_14, window_bounds = array<i64: 4, 26, 26>}, {pipeline_mode = #tpu.pipeline_mode<synchronous>, transform_indices = @transform_15, window_bounds = array<i64: 4, 26, 26>}, {pipeline_mode = #tpu.pipeline_mode<synchronous>, transform_indices = @transform_16, window_bounds = array<i64: 4, 1, 26>}, {pipeline_mode = #tpu.pipeline_mode<synchronous>, transform_indices = @transform_17, window_bounds = array<i64: 4, 1, 26>}, {pipeline_mode = #tpu.pipeline_mode<synchronous>, transform_indices = @transform_18, window_bounds = array<i64: 4, 26, 26>}, {pipeline_mode = #tpu.pipeline_mode<synchronous>, transform_indices = @transform_19, window_bounds = array<i64: 4, 1, 26>}, {pipeline_mode = #tpu.pipeline_mode<synchronous>, transform_indices = @transform_20, window_bounds = array<i64: 4, 1, 26>}, {pipeline_mode = #tpu.pipeline_mode<synchronous>, transform_indices = @transform_21, window_bounds = array<i64: 4, 1, 1>}, {pipeline_mode = #tpu.pipeline_mode<synchronous>, transform_indices = @transform_22, window_bounds = array<i64: 4, 26, 26>}, {pipeline_mode = #tpu.pipeline_mode<synchronous>, transform_indices = @transform_23, window_bounds = array<i64: 4, 1, 26>}, {pipeline_mode = #tpu.pipeline_mode<synchronous>, transform_indices = @transform_24, window_bounds = array<i64: 4, 1, 26>}, {pipeline_mode = #tpu.pipeline_mode<synchronous>, transform_indices = @transform_25, window_bounds = array<i64: 4, 26, 26>}, {pipeline_mode = #tpu.pipeline_mode<synchronous>, transform_indices = @transform_26, window_bounds = array<i64: 4, 26, 26>}, {pipeline_mode = #tpu.pipeline_mode<synchronous>, transform_indices = @transform_27, window_bounds = array<i64: 4, 1, 26>}, {pipeline_mode = #tpu.pipeline_mode<synchronous>, transform_indices = @transform_28, window_bounds = array<i64: 4, 26, 26>}, {pipeline_mode = #tpu.pipeline_mode<synchronous>, transform_indices = @transform_29, window_bounds = array<i64: 4, 1, 26>}, {pipeline_mode = #tpu.pipeline_mode<synchronous>, transform_indices = @transform_30, window_bounds = array<i64: 26, 23>}, {pipeline_mode = #tpu.pipeline_mode<synchronous>, transform_indices = @transform_31, window_bounds = array<i64: 1, 23>}, {pipeline_mode = #tpu.pipeline_mode<synchronous>, transform_indices = @transform_32, window_bounds = array<i64: 1, 128>}]} {
    %c0 = arith.constant 0 : index
    %c0_0 = arith.constant 0 : index
    %0 = vector.load %arg3[%c0, %c0_0] : memref<56x8xf32, #tpu.memory_space<vmem>>, vector<56x8xf32>
    %c0_1 = arith.constant 0 : index
    %c0_2 = arith.constant 0 : index
    %1 = vector.load %arg4[%c0_1, %c0_2] : memref<56x8xf32, #tpu.memory_space<vmem>>, vector<56x8xf32>
    %c0_3 = arith.constant 0 : index
    %c0_4 = arith.constant 0 : index
    %2 = vector.load %arg5[%c0_3, %c0_4] : memref<8x56xf32, #tpu.memory_space<vmem>>, vector<8x56xf32>
    %c0_5 = arith.constant 0 : index
    %c0_6 = arith.constant 0 : index
    %3 = vector.load %arg6[%c0_5, %c0_6] : memref<8x56xf32, #tpu.memory_space<vmem>>, vector<8x56xf32>
    %c0_7 = arith.constant 0 : index
    %c0_8 = arith.constant 0 : index
    %4 = vector.load %arg1[%c0_7, %c0_8] : memref<8x26xf32, #tpu.memory_space<vmem>>, vector<8x26xf32>
    %c0_9 = arith.constant 0 : index
    %c0_10 = arith.constant 0 : index
    %5 = vector.load %arg13[%c0_9, %c0_10] : memref<26x26xf32, #tpu.memory_space<vmem>>, vector<26x26xf32>
    %cst = arith.constant dense<0.000000e+00> : vector<8x26xf32>
    %6 = tpu.matmul %4, %5, %cst {dimension_numbers = #tpu.dot_dimension_numbers<[1], [0], [0], [1], [0, 0, 1, 1], [], []>} : vector<8x26xf32>, vector<26x26xf32>, vector<8x26xf32> -> vector<8x26xf32>
    %c0_11 = arith.constant 0 : index
    %c0_12 = arith.constant 0 : index
    %7 = vector.load %arg14[%c0_11, %c0_12] : memref<1x26xf32, #tpu.memory_space<vmem>>, vector<1x26xf32>
    %8 = vector.broadcast %7 : vector<1x26xf32> to vector<8x26xf32>
    %9 = arith.addf %6, %8 : vector<8x26xf32>
    %c0_13 = arith.constant 0 : index
    %c0_14 = arith.constant 0 : index
    %10 = vector.load %arg2[%c0_13, %c0_14] : memref<8x3xf32, #tpu.memory_space<vmem>>, vector<8x3xf32>
    %c0_15 = arith.constant 0 : index
    %c0_16 = arith.constant 0 : index
    %c0_17 = arith.constant 0 : index
    %11 = vector.load %arg15[%c0_15, %c0_16, %c0_17] : memref<4x26x26xf32, #tpu.memory_space<vmem>>, vector<1x26x26xf32>
    %12 = vector.shape_cast %11 : vector<1x26x26xf32> to vector<26x26xf32>
    %cst_18 = arith.constant dense<0.000000e+00> : vector<8x26xf32>
    %13 = tpu.matmul %9, %12, %cst_18 {dimension_numbers = #tpu.dot_dimension_numbers<[1], [0], [0], [1], [0, 0, 1, 1], [], []>} : vector<8x26xf32>, vector<26x26xf32>, vector<8x26xf32> -> vector<8x26xf32>
    %c0_19 = arith.constant 0 : index
    %c0_20 = arith.constant 0 : index
    %c0_21 = arith.constant 0 : index
    %14 = vector.load %arg16[%c0_19, %c0_20, %c0_21] : memref<4x26x26xf32, #tpu.memory_space<vmem>>, vector<1x26x26xf32>
    %15 = vector.shape_cast %14 : vector<1x26x26xf32> to vector<26x26xf32>
    %cst_22 = arith.constant dense<0.000000e+00> : vector<8x26xf32>
    %16 = tpu.matmul %9, %15, %cst_22 {dimension_numbers = #tpu.dot_dimension_numbers<[1], [0], [0], [1], [0, 0, 1, 1], [], []>} : vector<8x26xf32>, vector<26x26xf32>, vector<8x26xf32> -> vector<8x26xf32>
    %cst_23 = arith.constant dense<0.000000e+00> : vector<56x26xf32>
    %17 = tpu.matmul %0, %13, %cst_23 {dimension_numbers = #tpu.dot_dimension_numbers<[1], [0], [0], [1], [0, 0, 1, 1], [], []>} : vector<56x8xf32>, vector<8x26xf32>, vector<56x26xf32> -> vector<56x26xf32>
    %cst_24 = arith.constant dense<0.000000e+00> : vector<56x26xf32>
    %18 = tpu.matmul %1, %16, %cst_24 {dimension_numbers = #tpu.dot_dimension_numbers<[1], [0], [0], [1], [0, 0, 1, 1], [], []>} : vector<56x8xf32>, vector<8x26xf32>, vector<56x26xf32> -> vector<56x26xf32>
    %cst_25 = arith.constant dense<0.000000e+00> : vector<56x3xf32>
    %19 = tpu.matmul %0, %10, %cst_25 {dimension_numbers = #tpu.dot_dimension_numbers<[1], [0], [0], [1], [0, 0, 1, 1], [], []>} : vector<56x8xf32>, vector<8x3xf32>, vector<56x3xf32> -> vector<56x3xf32>
    %cst_26 = arith.constant dense<0.000000e+00> : vector<56x3xf32>
    %20 = tpu.matmul %1, %10, %cst_26 {dimension_numbers = #tpu.dot_dimension_numbers<[1], [0], [0], [1], [0, 0, 1, 1], [], []>} : vector<56x8xf32>, vector<8x3xf32>, vector<56x3xf32> -> vector<56x3xf32>
    %21 = arith.subf %19, %20 : vector<56x3xf32>
    %22 = arith.mulf %21, %21 : vector<56x3xf32>
    %cst_27 = arith.constant dense<0.000000e+00> : vector<56xf32>
    %23 = vector.multi_reduction <add>, %22, %cst_27 [1] : vector<56x3xf32> to vector<56xf32>
    %24 = vector.shape_cast %23 : vector<56xf32> to vector<56x1xf32>
    %cst_28 = arith.constant 9.99999993E-9 : f32
    %25 = vector.broadcast %cst_28 : f32 to vector<56x1xf32>
    %26 = arith.addf %24, %25 : vector<56x1xf32>
    %27 = math.rsqrt %26 : vector<56x1xf32>
    %28 = vector.broadcast %27 : vector<56x1xf32> to vector<56x3xf32>
    %29 = arith.mulf %21, %28 : vector<56x3xf32>
    %30 = arith.addf %17, %18 : vector<56x26xf32>
    %c0_29 = arith.constant 0 : index
    %c0_30 = arith.constant 0 : index
    %c0_31 = arith.constant 0 : index
    %31 = vector.load %arg17[%c0_29, %c0_30, %c0_31] : memref<4x1x26xf32, #tpu.memory_space<vmem>>, vector<1x1x26xf32>
    %32 = vector.shape_cast %31 : vector<1x1x26xf32> to vector<1x26xf32>
    %33 = vector.broadcast %24 : vector<56x1xf32> to vector<56x26xf32>
    %34 = vector.broadcast %32 : vector<1x26xf32> to vector<56x26xf32>
    %35 = arith.mulf %33, %34 : vector<56x26xf32>
    %36 = arith.addf %30, %35 : vector<56x26xf32>
    %c0_32 = arith.constant 0 : index
    %c0_33 = arith.constant 0 : index
    %c0_34 = arith.constant 0 : index
    %37 = vector.load %arg18[%c0_32, %c0_33, %c0_34] : memref<4x1x26xf32, #tpu.memory_space<vmem>>, vector<1x1x26xf32>
    %38 = vector.shape_cast %37 : vector<1x1x26xf32> to vector<1x26xf32>
    %39 = vector.broadcast %38 : vector<1x26xf32> to vector<56x26xf32>
    %40 = arith.addf %36, %39 : vector<56x26xf32>
    %41 = arith.negf %40 : vector<56x26xf32>
    %42 = math.exp %41 : vector<56x26xf32>
    %cst_35 = arith.constant 1.000000e+00 : f32
    %43 = vector.broadcast %cst_35 : f32 to vector<56x26xf32>
    %44 = arith.addf %43, %42 : vector<56x26xf32>
    %45 = arith.divf %43, %44 : vector<56x26xf32>
    %46 = arith.mulf %40, %45 : vector<56x26xf32>
    %c0_36 = arith.constant 0 : index
    %c0_37 = arith.constant 0 : index
    %c0_38 = arith.constant 0 : index
    %47 = vector.load %arg19[%c0_36, %c0_37, %c0_38] : memref<4x26x26xf32, #tpu.memory_space<vmem>>, vector<1x26x26xf32>
    %48 = vector.shape_cast %47 : vector<1x26x26xf32> to vector<26x26xf32>
    %cst_39 = arith.constant dense<0.000000e+00> : vector<56x26xf32>
    %49 = tpu.matmul %46, %48, %cst_39 {dimension_numbers = #tpu.dot_dimension_numbers<[1], [0], [0], [1], [0, 0, 1, 1], [], []>} : vector<56x26xf32>, vector<26x26xf32>, vector<56x26xf32> -> vector<56x26xf32>
    %c0_40 = arith.constant 0 : index
    %c0_41 = arith.constant 0 : index
    %c0_42 = arith.constant 0 : index
    %50 = vector.load %arg20[%c0_40, %c0_41, %c0_42] : memref<4x1x26xf32, #tpu.memory_space<vmem>>, vector<1x1x26xf32>
    %51 = vector.shape_cast %50 : vector<1x1x26xf32> to vector<1x26xf32>
    %52 = vector.broadcast %51 : vector<1x26xf32> to vector<56x26xf32>
    %53 = arith.addf %49, %52 : vector<56x26xf32>
    %54 = arith.negf %53 : vector<56x26xf32>
    %55 = math.exp %54 : vector<56x26xf32>
    %cst_43 = arith.constant 1.000000e+00 : f32
    %56 = vector.broadcast %cst_43 : f32 to vector<56x26xf32>
    %57 = arith.addf %56, %55 : vector<56x26xf32>
    %58 = arith.divf %56, %57 : vector<56x26xf32>
    %59 = arith.mulf %53, %58 : vector<56x26xf32>
    %c0_44 = arith.constant 0 : index
    %c0_45 = arith.constant 0 : index
    %c0_46 = arith.constant 0 : index
    %60 = vector.load %arg21[%c0_44, %c0_45, %c0_46] : memref<4x1x26xf32, #tpu.memory_space<vmem>>, vector<1x1x26xf32>
    %61 = vector.shape_cast %60 : vector<1x1x26xf32> to vector<1x26xf32>
    %62 = vector.broadcast %61 : vector<1x26xf32> to vector<56x26xf32>
    %63 = arith.mulf %59, %62 : vector<56x26xf32>
    %cst_47 = arith.constant dense<0.000000e+00> : vector<56xf32>
    %64 = vector.multi_reduction <add>, %63, %cst_47 [1] : vector<56x26xf32> to vector<56xf32>
    %65 = vector.shape_cast %64 : vector<56xf32> to vector<56x1xf32>
    %c0_48 = arith.constant 0 : index
    %c0_49 = arith.constant 0 : index
    %c0_50 = arith.constant 0 : index
    %66 = vector.load %arg22[%c0_48, %c0_49, %c0_50] : memref<4x1x1xf32, #tpu.memory_space<vmem>>, vector<1x1x1xf32>
    %67 = vector.shape_cast %66 : vector<1x1x1xf32> to vector<1x1xf32>
    %68 = vector.broadcast %67 : vector<1x1xf32> to vector<56x1xf32>
    %69 = arith.addf %65, %68 : vector<56x1xf32>
    %70 = arith.negf %69 : vector<56x1xf32>
    %71 = math.exp %70 : vector<56x1xf32>
    %cst_51 = arith.constant 1.000000e+00 : f32
    %72 = vector.broadcast %cst_51 : f32 to vector<56x1xf32>
    %73 = arith.addf %72, %71 : vector<56x1xf32>
    %74 = arith.divf %72, %73 : vector<56x1xf32>
    %75 = vector.broadcast %74 : vector<56x1xf32> to vector<56x26xf32>
    %76 = arith.mulf %59, %75 : vector<56x26xf32>
    %c0_52 = arith.constant 0 : index
    %c0_53 = arith.constant 0 : index
    %c0_54 = arith.constant 0 : index
    %77 = vector.load %arg23[%c0_52, %c0_53, %c0_54] : memref<4x26x26xf32, #tpu.memory_space<vmem>>, vector<1x26x26xf32>
    %78 = vector.shape_cast %77 : vector<1x26x26xf32> to vector<26x26xf32>
    %cst_55 = arith.constant dense<0.000000e+00> : vector<56x26xf32>
    %79 = tpu.matmul %76, %78, %cst_55 {dimension_numbers = #tpu.dot_dimension_numbers<[1], [0], [0], [1], [0, 0, 1, 1], [], []>} : vector<56x26xf32>, vector<26x26xf32>, vector<56x26xf32> -> vector<56x26xf32>
    %c0_56 = arith.constant 0 : index
    %c0_57 = arith.constant 0 : index
    %c0_58 = arith.constant 0 : index
    %80 = vector.load %arg24[%c0_56, %c0_57, %c0_58] : memref<4x1x26xf32, #tpu.memory_space<vmem>>, vector<1x1x26xf32>
    %81 = vector.shape_cast %80 : vector<1x1x26xf32> to vector<1x26xf32>
    %82 = vector.broadcast %81 : vector<1x26xf32> to vector<56x26xf32>
    %83 = arith.addf %79, %82 : vector<56x26xf32>
    %84 = arith.negf %83 : vector<56x26xf32>
    %85 = math.exp %84 : vector<56x26xf32>
    %cst_59 = arith.constant 1.000000e+00 : f32
    %86 = vector.broadcast %cst_59 : f32 to vector<56x26xf32>
    %87 = arith.addf %86, %85 : vector<56x26xf32>
    %88 = arith.divf %86, %87 : vector<56x26xf32>
    %89 = arith.mulf %83, %88 : vector<56x26xf32>
    %c0_60 = arith.constant 0 : index
    %c0_61 = arith.constant 0 : index
    %c0_62 = arith.constant 0 : index
    %90 = vector.load %arg25[%c0_60, %c0_61, %c0_62] : memref<4x1x26xf32, #tpu.memory_space<vmem>>, vector<1x1x26xf32>
    %91 = vector.shape_cast %90 : vector<1x1x26xf32> to vector<1x26xf32>
    %92 = vector.broadcast %91 : vector<1x26xf32> to vector<56x26xf32>
    %93 = arith.mulf %89, %92 : vector<56x26xf32>
    %cst_63 = arith.constant dense<0.000000e+00> : vector<56xf32>
    %94 = vector.multi_reduction <add>, %93, %cst_63 [1] : vector<56x26xf32> to vector<56xf32>
    %95 = vector.shape_cast %94 : vector<56xf32> to vector<56x1xf32>
    %96 = vector.broadcast %95 : vector<56x1xf32> to vector<56x3xf32>
    %97 = arith.mulf %29, %96 : vector<56x3xf32>
    %cst_64 = arith.constant dense<0.000000e+00> : vector<8x3xf32>
    %98 = tpu.matmul %3, %97, %cst_64 {dimension_numbers = #tpu.dot_dimension_numbers<[1], [0], [0], [1], [0, 0, 1, 1], [], []>} : vector<8x56xf32>, vector<56x3xf32>, vector<8x3xf32> -> vector<8x3xf32>
    %99 = arith.addf %10, %98 : vector<8x3xf32>
    %cst_65 = arith.constant dense<0.000000e+00> : vector<8x26xf32>
    %100 = tpu.matmul %2, %76, %cst_65 {dimension_numbers = #tpu.dot_dimension_numbers<[1], [0], [0], [1], [0, 0, 1, 1], [], []>} : vector<8x56xf32>, vector<56x26xf32>, vector<8x26xf32> -> vector<8x26xf32>
    %c0_66 = arith.constant 0 : index
    %c0_67 = arith.constant 0 : index
    %c0_68 = arith.constant 0 : index
    %101 = vector.load %arg26[%c0_66, %c0_67, %c0_68] : memref<4x26x26xf32, #tpu.memory_space<vmem>>, vector<1x26x26xf32>
    %102 = vector.shape_cast %101 : vector<1x26x26xf32> to vector<26x26xf32>
    %cst_69 = arith.constant dense<0.000000e+00> : vector<8x26xf32>
    %103 = tpu.matmul %9, %102, %cst_69 {dimension_numbers = #tpu.dot_dimension_numbers<[1], [0], [0], [1], [0, 0, 1, 1], [], []>} : vector<8x26xf32>, vector<26x26xf32>, vector<8x26xf32> -> vector<8x26xf32>
    %c0_70 = arith.constant 0 : index
    %c0_71 = arith.constant 0 : index
    %c0_72 = arith.constant 0 : index
    %104 = vector.load %arg27[%c0_70, %c0_71, %c0_72] : memref<4x26x26xf32, #tpu.memory_space<vmem>>, vector<1x26x26xf32>
    %105 = vector.shape_cast %104 : vector<1x26x26xf32> to vector<26x26xf32>
    %cst_73 = arith.constant dense<0.000000e+00> : vector<8x26xf32>
    %106 = tpu.matmul %100, %105, %cst_73 {dimension_numbers = #tpu.dot_dimension_numbers<[1], [0], [0], [1], [0, 0, 1, 1], [], []>} : vector<8x26xf32>, vector<26x26xf32>, vector<8x26xf32> -> vector<8x26xf32>
    %107 = arith.addf %103, %106 : vector<8x26xf32>
    %c0_74 = arith.constant 0 : index
    %c0_75 = arith.constant 0 : index
    %c0_76 = arith.constant 0 : index
    %108 = vector.load %arg28[%c0_74, %c0_75, %c0_76] : memref<4x1x26xf32, #tpu.memory_space<vmem>>, vector<1x1x26xf32>
    %109 = vector.shape_cast %108 : vector<1x1x26xf32> to vector<1x26xf32>
    %110 = vector.broadcast %109 : vector<1x26xf32> to vector<8x26xf32>
    %111 = arith.addf %107, %110 : vector<8x26xf32>
    %112 = arith.negf %111 : vector<8x26xf32>
    %113 = math.exp %112 : vector<8x26xf32>
    %cst_77 = arith.constant 1.000000e+00 : f32
    %114 = vector.broadcast %cst_77 : f32 to vector<8x26xf32>
    %115 = arith.addf %114, %113 : vector<8x26xf32>
    %116 = arith.divf %114, %115 : vector<8x26xf32>
    %117 = arith.mulf %111, %116 : vector<8x26xf32>
    %c0_78 = arith.constant 0 : index
    %c0_79 = arith.constant 0 : index
    %c0_80 = arith.constant 0 : index
    %118 = vector.load %arg29[%c0_78, %c0_79, %c0_80] : memref<4x26x26xf32, #tpu.memory_space<vmem>>, vector<1x26x26xf32>
    %119 = vector.shape_cast %118 : vector<1x26x26xf32> to vector<26x26xf32>
    %cst_81 = arith.constant dense<0.000000e+00> : vector<8x26xf32>
    %120 = tpu.matmul %117, %119, %cst_81 {dimension_numbers = #tpu.dot_dimension_numbers<[1], [0], [0], [1], [0, 0, 1, 1], [], []>} : vector<8x26xf32>, vector<26x26xf32>, vector<8x26xf32> -> vector<8x26xf32>
    %c0_82 = arith.constant 0 : index
    %c0_83 = arith.constant 0 : index
    %c0_84 = arith.constant 0 : index
    %121 = vector.load %arg30[%c0_82, %c0_83, %c0_84] : memref<4x1x26xf32, #tpu.memory_space<vmem>>, vector<1x1x26xf32>
    %122 = vector.shape_cast %121 : vector<1x1x26xf32> to vector<1x26xf32>
    %123 = vector.broadcast %122 : vector<1x26xf32> to vector<8x26xf32>
    %124 = arith.addf %120, %123 : vector<8x26xf32>
    %125 = arith.addf %9, %124 : vector<8x26xf32>
    %c1 = arith.constant 1 : index
    %c0_85 = arith.constant 0 : index
    %c0_86 = arith.constant 0 : index
    %126 = vector.load %arg15[%c1, %c0_85, %c0_86] : memref<4x26x26xf32, #tpu.memory_space<vmem>>, vector<1x26x26xf32>
    %127 = vector.shape_cast %126 : vector<1x26x26xf32> to vector<26x26xf32>
    %cst_87 = arith.constant dense<0.000000e+00> : vector<8x26xf32>
    %128 = tpu.matmul %125, %127, %cst_87 {dimension_numbers = #tpu.dot_dimension_numbers<[1], [0], [0], [1], [0, 0, 1, 1], [], []>} : vector<8x26xf32>, vector<26x26xf32>, vector<8x26xf32> -> vector<8x26xf32>
    %c1_88 = arith.constant 1 : index
    %c0_89 = arith.constant 0 : index
    %c0_90 = arith.constant 0 : index
    %129 = vector.load %arg16[%c1_88, %c0_89, %c0_90] : memref<4x26x26xf32, #tpu.memory_space<vmem>>, vector<1x26x26xf32>
    %130 = vector.shape_cast %129 : vector<1x26x26xf32> to vector<26x26xf32>
    %cst_91 = arith.constant dense<0.000000e+00> : vector<8x26xf32>
    %131 = tpu.matmul %125, %130, %cst_91 {dimension_numbers = #tpu.dot_dimension_numbers<[1], [0], [0], [1], [0, 0, 1, 1], [], []>} : vector<8x26xf32>, vector<26x26xf32>, vector<8x26xf32> -> vector<8x26xf32>
    %cst_92 = arith.constant dense<0.000000e+00> : vector<56x26xf32>
    %132 = tpu.matmul %0, %128, %cst_92 {dimension_numbers = #tpu.dot_dimension_numbers<[1], [0], [0], [1], [0, 0, 1, 1], [], []>} : vector<56x8xf32>, vector<8x26xf32>, vector<56x26xf32> -> vector<56x26xf32>
    %cst_93 = arith.constant dense<0.000000e+00> : vector<56x26xf32>
    %133 = tpu.matmul %1, %131, %cst_93 {dimension_numbers = #tpu.dot_dimension_numbers<[1], [0], [0], [1], [0, 0, 1, 1], [], []>} : vector<56x8xf32>, vector<8x26xf32>, vector<56x26xf32> -> vector<56x26xf32>
    %cst_94 = arith.constant dense<0.000000e+00> : vector<56x3xf32>
    %134 = tpu.matmul %0, %99, %cst_94 {dimension_numbers = #tpu.dot_dimension_numbers<[1], [0], [0], [1], [0, 0, 1, 1], [], []>} : vector<56x8xf32>, vector<8x3xf32>, vector<56x3xf32> -> vector<56x3xf32>
    %cst_95 = arith.constant dense<0.000000e+00> : vector<56x3xf32>
    %135 = tpu.matmul %1, %99, %cst_95 {dimension_numbers = #tpu.dot_dimension_numbers<[1], [0], [0], [1], [0, 0, 1, 1], [], []>} : vector<56x8xf32>, vector<8x3xf32>, vector<56x3xf32> -> vector<56x3xf32>
    %136 = arith.subf %134, %135 : vector<56x3xf32>
    %137 = arith.mulf %136, %136 : vector<56x3xf32>
    %cst_96 = arith.constant dense<0.000000e+00> : vector<56xf32>
    %138 = vector.multi_reduction <add>, %137, %cst_96 [1] : vector<56x3xf32> to vector<56xf32>
    %139 = vector.shape_cast %138 : vector<56xf32> to vector<56x1xf32>
    %cst_97 = arith.constant 9.99999993E-9 : f32
    %140 = vector.broadcast %cst_97 : f32 to vector<56x1xf32>
    %141 = arith.addf %139, %140 : vector<56x1xf32>
    %142 = math.rsqrt %141 : vector<56x1xf32>
    %143 = vector.broadcast %142 : vector<56x1xf32> to vector<56x3xf32>
    %144 = arith.mulf %136, %143 : vector<56x3xf32>
    %145 = arith.addf %132, %133 : vector<56x26xf32>
    %c1_98 = arith.constant 1 : index
    %c0_99 = arith.constant 0 : index
    %c0_100 = arith.constant 0 : index
    %146 = vector.load %arg17[%c1_98, %c0_99, %c0_100] : memref<4x1x26xf32, #tpu.memory_space<vmem>>, vector<1x1x26xf32>
    %147 = vector.shape_cast %146 : vector<1x1x26xf32> to vector<1x26xf32>
    %148 = vector.broadcast %139 : vector<56x1xf32> to vector<56x26xf32>
    %149 = vector.broadcast %147 : vector<1x26xf32> to vector<56x26xf32>
    %150 = arith.mulf %148, %149 : vector<56x26xf32>
    %151 = arith.addf %145, %150 : vector<56x26xf32>
    %c1_101 = arith.constant 1 : index
    %c0_102 = arith.constant 0 : index
    %c0_103 = arith.constant 0 : index
    %152 = vector.load %arg18[%c1_101, %c0_102, %c0_103] : memref<4x1x26xf32, #tpu.memory_space<vmem>>, vector<1x1x26xf32>
    %153 = vector.shape_cast %152 : vector<1x1x26xf32> to vector<1x26xf32>
    %154 = vector.broadcast %153 : vector<1x26xf32> to vector<56x26xf32>
    %155 = arith.addf %151, %154 : vector<56x26xf32>
    %156 = arith.negf %155 : vector<56x26xf32>
    %157 = math.exp %156 : vector<56x26xf32>
    %cst_104 = arith.constant 1.000000e+00 : f32
    %158 = vector.broadcast %cst_104 : f32 to vector<56x26xf32>
    %159 = arith.addf %158, %157 : vector<56x26xf32>
    %160 = arith.divf %158, %159 : vector<56x26xf32>
    %161 = arith.mulf %155, %160 : vector<56x26xf32>
    %c1_105 = arith.constant 1 : index
    %c0_106 = arith.constant 0 : index
    %c0_107 = arith.constant 0 : index
    %162 = vector.load %arg19[%c1_105, %c0_106, %c0_107] : memref<4x26x26xf32, #tpu.memory_space<vmem>>, vector<1x26x26xf32>
    %163 = vector.shape_cast %162 : vector<1x26x26xf32> to vector<26x26xf32>
    %cst_108 = arith.constant dense<0.000000e+00> : vector<56x26xf32>
    %164 = tpu.matmul %161, %163, %cst_108 {dimension_numbers = #tpu.dot_dimension_numbers<[1], [0], [0], [1], [0, 0, 1, 1], [], []>} : vector<56x26xf32>, vector<26x26xf32>, vector<56x26xf32> -> vector<56x26xf32>
    %c1_109 = arith.constant 1 : index
    %c0_110 = arith.constant 0 : index
    %c0_111 = arith.constant 0 : index
    %165 = vector.load %arg20[%c1_109, %c0_110, %c0_111] : memref<4x1x26xf32, #tpu.memory_space<vmem>>, vector<1x1x26xf32>
    %166 = vector.shape_cast %165 : vector<1x1x26xf32> to vector<1x26xf32>
    %167 = vector.broadcast %166 : vector<1x26xf32> to vector<56x26xf32>
    %168 = arith.addf %164, %167 : vector<56x26xf32>
    %169 = arith.negf %168 : vector<56x26xf32>
    %170 = math.exp %169 : vector<56x26xf32>
    %cst_112 = arith.constant 1.000000e+00 : f32
    %171 = vector.broadcast %cst_112 : f32 to vector<56x26xf32>
    %172 = arith.addf %171, %170 : vector<56x26xf32>
    %173 = arith.divf %171, %172 : vector<56x26xf32>
    %174 = arith.mulf %168, %173 : vector<56x26xf32>
    %c1_113 = arith.constant 1 : index
    %c0_114 = arith.constant 0 : index
    %c0_115 = arith.constant 0 : index
    %175 = vector.load %arg21[%c1_113, %c0_114, %c0_115] : memref<4x1x26xf32, #tpu.memory_space<vmem>>, vector<1x1x26xf32>
    %176 = vector.shape_cast %175 : vector<1x1x26xf32> to vector<1x26xf32>
    %177 = vector.broadcast %176 : vector<1x26xf32> to vector<56x26xf32>
    %178 = arith.mulf %174, %177 : vector<56x26xf32>
    %cst_116 = arith.constant dense<0.000000e+00> : vector<56xf32>
    %179 = vector.multi_reduction <add>, %178, %cst_116 [1] : vector<56x26xf32> to vector<56xf32>
    %180 = vector.shape_cast %179 : vector<56xf32> to vector<56x1xf32>
    %c1_117 = arith.constant 1 : index
    %c0_118 = arith.constant 0 : index
    %c0_119 = arith.constant 0 : index
    %181 = vector.load %arg22[%c1_117, %c0_118, %c0_119] : memref<4x1x1xf32, #tpu.memory_space<vmem>>, vector<1x1x1xf32>
    %182 = vector.shape_cast %181 : vector<1x1x1xf32> to vector<1x1xf32>
    %183 = vector.broadcast %182 : vector<1x1xf32> to vector<56x1xf32>
    %184 = arith.addf %180, %183 : vector<56x1xf32>
    %185 = arith.negf %184 : vector<56x1xf32>
    %186 = math.exp %185 : vector<56x1xf32>
    %cst_120 = arith.constant 1.000000e+00 : f32
    %187 = vector.broadcast %cst_120 : f32 to vector<56x1xf32>
    %188 = arith.addf %187, %186 : vector<56x1xf32>
    %189 = arith.divf %187, %188 : vector<56x1xf32>
    %190 = vector.broadcast %189 : vector<56x1xf32> to vector<56x26xf32>
    %191 = arith.mulf %174, %190 : vector<56x26xf32>
    %c1_121 = arith.constant 1 : index
    %c0_122 = arith.constant 0 : index
    %c0_123 = arith.constant 0 : index
    %192 = vector.load %arg23[%c1_121, %c0_122, %c0_123] : memref<4x26x26xf32, #tpu.memory_space<vmem>>, vector<1x26x26xf32>
    %193 = vector.shape_cast %192 : vector<1x26x26xf32> to vector<26x26xf32>
    %cst_124 = arith.constant dense<0.000000e+00> : vector<56x26xf32>
    %194 = tpu.matmul %191, %193, %cst_124 {dimension_numbers = #tpu.dot_dimension_numbers<[1], [0], [0], [1], [0, 0, 1, 1], [], []>} : vector<56x26xf32>, vector<26x26xf32>, vector<56x26xf32> -> vector<56x26xf32>
    %c1_125 = arith.constant 1 : index
    %c0_126 = arith.constant 0 : index
    %c0_127 = arith.constant 0 : index
    %195 = vector.load %arg24[%c1_125, %c0_126, %c0_127] : memref<4x1x26xf32, #tpu.memory_space<vmem>>, vector<1x1x26xf32>
    %196 = vector.shape_cast %195 : vector<1x1x26xf32> to vector<1x26xf32>
    %197 = vector.broadcast %196 : vector<1x26xf32> to vector<56x26xf32>
    %198 = arith.addf %194, %197 : vector<56x26xf32>
    %199 = arith.negf %198 : vector<56x26xf32>
    %200 = math.exp %199 : vector<56x26xf32>
    %cst_128 = arith.constant 1.000000e+00 : f32
    %201 = vector.broadcast %cst_128 : f32 to vector<56x26xf32>
    %202 = arith.addf %201, %200 : vector<56x26xf32>
    %203 = arith.divf %201, %202 : vector<56x26xf32>
    %204 = arith.mulf %198, %203 : vector<56x26xf32>
    %c1_129 = arith.constant 1 : index
    %c0_130 = arith.constant 0 : index
    %c0_131 = arith.constant 0 : index
    %205 = vector.load %arg25[%c1_129, %c0_130, %c0_131] : memref<4x1x26xf32, #tpu.memory_space<vmem>>, vector<1x1x26xf32>
    %206 = vector.shape_cast %205 : vector<1x1x26xf32> to vector<1x26xf32>
    %207 = vector.broadcast %206 : vector<1x26xf32> to vector<56x26xf32>
    %208 = arith.mulf %204, %207 : vector<56x26xf32>
    %cst_132 = arith.constant dense<0.000000e+00> : vector<56xf32>
    %209 = vector.multi_reduction <add>, %208, %cst_132 [1] : vector<56x26xf32> to vector<56xf32>
    %210 = vector.shape_cast %209 : vector<56xf32> to vector<56x1xf32>
    %211 = vector.broadcast %210 : vector<56x1xf32> to vector<56x3xf32>
    %212 = arith.mulf %144, %211 : vector<56x3xf32>
    %cst_133 = arith.constant dense<0.000000e+00> : vector<8x3xf32>
    %213 = tpu.matmul %3, %212, %cst_133 {dimension_numbers = #tpu.dot_dimension_numbers<[1], [0], [0], [1], [0, 0, 1, 1], [], []>} : vector<8x56xf32>, vector<56x3xf32>, vector<8x3xf32> -> vector<8x3xf32>
    %214 = arith.addf %99, %213 : vector<8x3xf32>
    %cst_134 = arith.constant dense<0.000000e+00> : vector<8x26xf32>
    %215 = tpu.matmul %2, %191, %cst_134 {dimension_numbers = #tpu.dot_dimension_numbers<[1], [0], [0], [1], [0, 0, 1, 1], [], []>} : vector<8x56xf32>, vector<56x26xf32>, vector<8x26xf32> -> vector<8x26xf32>
    %c1_135 = arith.constant 1 : index
    %c0_136 = arith.constant 0 : index
    %c0_137 = arith.constant 0 : index
    %216 = vector.load %arg26[%c1_135, %c0_136, %c0_137] : memref<4x26x26xf32, #tpu.memory_space<vmem>>, vector<1x26x26xf32>
    %217 = vector.shape_cast %216 : vector<1x26x26xf32> to vector<26x26xf32>
    %cst_138 = arith.constant dense<0.000000e+00> : vector<8x26xf32>
    %218 = tpu.matmul %125, %217, %cst_138 {dimension_numbers = #tpu.dot_dimension_numbers<[1], [0], [0], [1], [0, 0, 1, 1], [], []>} : vector<8x26xf32>, vector<26x26xf32>, vector<8x26xf32> -> vector<8x26xf32>
    %c1_139 = arith.constant 1 : index
    %c0_140 = arith.constant 0 : index
    %c0_141 = arith.constant 0 : index
    %219 = vector.load %arg27[%c1_139, %c0_140, %c0_141] : memref<4x26x26xf32, #tpu.memory_space<vmem>>, vector<1x26x26xf32>
    %220 = vector.shape_cast %219 : vector<1x26x26xf32> to vector<26x26xf32>
    %cst_142 = arith.constant dense<0.000000e+00> : vector<8x26xf32>
    %221 = tpu.matmul %215, %220, %cst_142 {dimension_numbers = #tpu.dot_dimension_numbers<[1], [0], [0], [1], [0, 0, 1, 1], [], []>} : vector<8x26xf32>, vector<26x26xf32>, vector<8x26xf32> -> vector<8x26xf32>
    %222 = arith.addf %218, %221 : vector<8x26xf32>
    %c1_143 = arith.constant 1 : index
    %c0_144 = arith.constant 0 : index
    %c0_145 = arith.constant 0 : index
    %223 = vector.load %arg28[%c1_143, %c0_144, %c0_145] : memref<4x1x26xf32, #tpu.memory_space<vmem>>, vector<1x1x26xf32>
    %224 = vector.shape_cast %223 : vector<1x1x26xf32> to vector<1x26xf32>
    %225 = vector.broadcast %224 : vector<1x26xf32> to vector<8x26xf32>
    %226 = arith.addf %222, %225 : vector<8x26xf32>
    %227 = arith.negf %226 : vector<8x26xf32>
    %228 = math.exp %227 : vector<8x26xf32>
    %cst_146 = arith.constant 1.000000e+00 : f32
    %229 = vector.broadcast %cst_146 : f32 to vector<8x26xf32>
    %230 = arith.addf %229, %228 : vector<8x26xf32>
    %231 = arith.divf %229, %230 : vector<8x26xf32>
    %232 = arith.mulf %226, %231 : vector<8x26xf32>
    %c1_147 = arith.constant 1 : index
    %c0_148 = arith.constant 0 : index
    %c0_149 = arith.constant 0 : index
    %233 = vector.load %arg29[%c1_147, %c0_148, %c0_149] : memref<4x26x26xf32, #tpu.memory_space<vmem>>, vector<1x26x26xf32>
    %234 = vector.shape_cast %233 : vector<1x26x26xf32> to vector<26x26xf32>
    %cst_150 = arith.constant dense<0.000000e+00> : vector<8x26xf32>
    %235 = tpu.matmul %232, %234, %cst_150 {dimension_numbers = #tpu.dot_dimension_numbers<[1], [0], [0], [1], [0, 0, 1, 1], [], []>} : vector<8x26xf32>, vector<26x26xf32>, vector<8x26xf32> -> vector<8x26xf32>
    %c1_151 = arith.constant 1 : index
    %c0_152 = arith.constant 0 : index
    %c0_153 = arith.constant 0 : index
    %236 = vector.load %arg30[%c1_151, %c0_152, %c0_153] : memref<4x1x26xf32, #tpu.memory_space<vmem>>, vector<1x1x26xf32>
    %237 = vector.shape_cast %236 : vector<1x1x26xf32> to vector<1x26xf32>
    %238 = vector.broadcast %237 : vector<1x26xf32> to vector<8x26xf32>
    %239 = arith.addf %235, %238 : vector<8x26xf32>
    %240 = arith.addf %125, %239 : vector<8x26xf32>
    %c2 = arith.constant 2 : index
    %c0_154 = arith.constant 0 : index
    %c0_155 = arith.constant 0 : index
    %241 = vector.load %arg15[%c2, %c0_154, %c0_155] : memref<4x26x26xf32, #tpu.memory_space<vmem>>, vector<1x26x26xf32>
    %242 = vector.shape_cast %241 : vector<1x26x26xf32> to vector<26x26xf32>
    %cst_156 = arith.constant dense<0.000000e+00> : vector<8x26xf32>
    %243 = tpu.matmul %240, %242, %cst_156 {dimension_numbers = #tpu.dot_dimension_numbers<[1], [0], [0], [1], [0, 0, 1, 1], [], []>} : vector<8x26xf32>, vector<26x26xf32>, vector<8x26xf32> -> vector<8x26xf32>
    %c2_157 = arith.constant 2 : index
    %c0_158 = arith.constant 0 : index
    %c0_159 = arith.constant 0 : index
    %244 = vector.load %arg16[%c2_157, %c0_158, %c0_159] : memref<4x26x26xf32, #tpu.memory_space<vmem>>, vector<1x26x26xf32>
    %245 = vector.shape_cast %244 : vector<1x26x26xf32> to vector<26x26xf32>
    %cst_160 = arith.constant dense<0.000000e+00> : vector<8x26xf32>
    %246 = tpu.matmul %240, %245, %cst_160 {dimension_numbers = #tpu.dot_dimension_numbers<[1], [0], [0], [1], [0, 0, 1, 1], [], []>} : vector<8x26xf32>, vector<26x26xf32>, vector<8x26xf32> -> vector<8x26xf32>
    %cst_161 = arith.constant dense<0.000000e+00> : vector<56x26xf32>
    %247 = tpu.matmul %0, %243, %cst_161 {dimension_numbers = #tpu.dot_dimension_numbers<[1], [0], [0], [1], [0, 0, 1, 1], [], []>} : vector<56x8xf32>, vector<8x26xf32>, vector<56x26xf32> -> vector<56x26xf32>
    %cst_162 = arith.constant dense<0.000000e+00> : vector<56x26xf32>
    %248 = tpu.matmul %1, %246, %cst_162 {dimension_numbers = #tpu.dot_dimension_numbers<[1], [0], [0], [1], [0, 0, 1, 1], [], []>} : vector<56x8xf32>, vector<8x26xf32>, vector<56x26xf32> -> vector<56x26xf32>
    %cst_163 = arith.constant dense<0.000000e+00> : vector<56x3xf32>
    %249 = tpu.matmul %0, %214, %cst_163 {dimension_numbers = #tpu.dot_dimension_numbers<[1], [0], [0], [1], [0, 0, 1, 1], [], []>} : vector<56x8xf32>, vector<8x3xf32>, vector<56x3xf32> -> vector<56x3xf32>
    %cst_164 = arith.constant dense<0.000000e+00> : vector<56x3xf32>
    %250 = tpu.matmul %1, %214, %cst_164 {dimension_numbers = #tpu.dot_dimension_numbers<[1], [0], [0], [1], [0, 0, 1, 1], [], []>} : vector<56x8xf32>, vector<8x3xf32>, vector<56x3xf32> -> vector<56x3xf32>
    %251 = arith.subf %249, %250 : vector<56x3xf32>
    %252 = arith.mulf %251, %251 : vector<56x3xf32>
    %cst_165 = arith.constant dense<0.000000e+00> : vector<56xf32>
    %253 = vector.multi_reduction <add>, %252, %cst_165 [1] : vector<56x3xf32> to vector<56xf32>
    %254 = vector.shape_cast %253 : vector<56xf32> to vector<56x1xf32>
    %cst_166 = arith.constant 9.99999993E-9 : f32
    %255 = vector.broadcast %cst_166 : f32 to vector<56x1xf32>
    %256 = arith.addf %254, %255 : vector<56x1xf32>
    %257 = math.rsqrt %256 : vector<56x1xf32>
    %258 = vector.broadcast %257 : vector<56x1xf32> to vector<56x3xf32>
    %259 = arith.mulf %251, %258 : vector<56x3xf32>
    %260 = arith.addf %247, %248 : vector<56x26xf32>
    %c2_167 = arith.constant 2 : index
    %c0_168 = arith.constant 0 : index
    %c0_169 = arith.constant 0 : index
    %261 = vector.load %arg17[%c2_167, %c0_168, %c0_169] : memref<4x1x26xf32, #tpu.memory_space<vmem>>, vector<1x1x26xf32>
    %262 = vector.shape_cast %261 : vector<1x1x26xf32> to vector<1x26xf32>
    %263 = vector.broadcast %254 : vector<56x1xf32> to vector<56x26xf32>
    %264 = vector.broadcast %262 : vector<1x26xf32> to vector<56x26xf32>
    %265 = arith.mulf %263, %264 : vector<56x26xf32>
    %266 = arith.addf %260, %265 : vector<56x26xf32>
    %c2_170 = arith.constant 2 : index
    %c0_171 = arith.constant 0 : index
    %c0_172 = arith.constant 0 : index
    %267 = vector.load %arg18[%c2_170, %c0_171, %c0_172] : memref<4x1x26xf32, #tpu.memory_space<vmem>>, vector<1x1x26xf32>
    %268 = vector.shape_cast %267 : vector<1x1x26xf32> to vector<1x26xf32>
    %269 = vector.broadcast %268 : vector<1x26xf32> to vector<56x26xf32>
    %270 = arith.addf %266, %269 : vector<56x26xf32>
    %271 = arith.negf %270 : vector<56x26xf32>
    %272 = math.exp %271 : vector<56x26xf32>
    %cst_173 = arith.constant 1.000000e+00 : f32
    %273 = vector.broadcast %cst_173 : f32 to vector<56x26xf32>
    %274 = arith.addf %273, %272 : vector<56x26xf32>
    %275 = arith.divf %273, %274 : vector<56x26xf32>
    %276 = arith.mulf %270, %275 : vector<56x26xf32>
    %c2_174 = arith.constant 2 : index
    %c0_175 = arith.constant 0 : index
    %c0_176 = arith.constant 0 : index
    %277 = vector.load %arg19[%c2_174, %c0_175, %c0_176] : memref<4x26x26xf32, #tpu.memory_space<vmem>>, vector<1x26x26xf32>
    %278 = vector.shape_cast %277 : vector<1x26x26xf32> to vector<26x26xf32>
    %cst_177 = arith.constant dense<0.000000e+00> : vector<56x26xf32>
    %279 = tpu.matmul %276, %278, %cst_177 {dimension_numbers = #tpu.dot_dimension_numbers<[1], [0], [0], [1], [0, 0, 1, 1], [], []>} : vector<56x26xf32>, vector<26x26xf32>, vector<56x26xf32> -> vector<56x26xf32>
    %c2_178 = arith.constant 2 : index
    %c0_179 = arith.constant 0 : index
    %c0_180 = arith.constant 0 : index
    %280 = vector.load %arg20[%c2_178, %c0_179, %c0_180] : memref<4x1x26xf32, #tpu.memory_space<vmem>>, vector<1x1x26xf32>
    %281 = vector.shape_cast %280 : vector<1x1x26xf32> to vector<1x26xf32>
    %282 = vector.broadcast %281 : vector<1x26xf32> to vector<56x26xf32>
    %283 = arith.addf %279, %282 : vector<56x26xf32>
    %284 = arith.negf %283 : vector<56x26xf32>
    %285 = math.exp %284 : vector<56x26xf32>
    %cst_181 = arith.constant 1.000000e+00 : f32
    %286 = vector.broadcast %cst_181 : f32 to vector<56x26xf32>
    %287 = arith.addf %286, %285 : vector<56x26xf32>
    %288 = arith.divf %286, %287 : vector<56x26xf32>
    %289 = arith.mulf %283, %288 : vector<56x26xf32>
    %c2_182 = arith.constant 2 : index
    %c0_183 = arith.constant 0 : index
    %c0_184 = arith.constant 0 : index
    %290 = vector.load %arg21[%c2_182, %c0_183, %c0_184] : memref<4x1x26xf32, #tpu.memory_space<vmem>>, vector<1x1x26xf32>
    %291 = vector.shape_cast %290 : vector<1x1x26xf32> to vector<1x26xf32>
    %292 = vector.broadcast %291 : vector<1x26xf32> to vector<56x26xf32>
    %293 = arith.mulf %289, %292 : vector<56x26xf32>
    %cst_185 = arith.constant dense<0.000000e+00> : vector<56xf32>
    %294 = vector.multi_reduction <add>, %293, %cst_185 [1] : vector<56x26xf32> to vector<56xf32>
    %295 = vector.shape_cast %294 : vector<56xf32> to vector<56x1xf32>
    %c2_186 = arith.constant 2 : index
    %c0_187 = arith.constant 0 : index
    %c0_188 = arith.constant 0 : index
    %296 = vector.load %arg22[%c2_186, %c0_187, %c0_188] : memref<4x1x1xf32, #tpu.memory_space<vmem>>, vector<1x1x1xf32>
    %297 = vector.shape_cast %296 : vector<1x1x1xf32> to vector<1x1xf32>
    %298 = vector.broadcast %297 : vector<1x1xf32> to vector<56x1xf32>
    %299 = arith.addf %295, %298 : vector<56x1xf32>
    %300 = arith.negf %299 : vector<56x1xf32>
    %301 = math.exp %300 : vector<56x1xf32>
    %cst_189 = arith.constant 1.000000e+00 : f32
    %302 = vector.broadcast %cst_189 : f32 to vector<56x1xf32>
    %303 = arith.addf %302, %301 : vector<56x1xf32>
    %304 = arith.divf %302, %303 : vector<56x1xf32>
    %305 = vector.broadcast %304 : vector<56x1xf32> to vector<56x26xf32>
    %306 = arith.mulf %289, %305 : vector<56x26xf32>
    %c2_190 = arith.constant 2 : index
    %c0_191 = arith.constant 0 : index
    %c0_192 = arith.constant 0 : index
    %307 = vector.load %arg23[%c2_190, %c0_191, %c0_192] : memref<4x26x26xf32, #tpu.memory_space<vmem>>, vector<1x26x26xf32>
    %308 = vector.shape_cast %307 : vector<1x26x26xf32> to vector<26x26xf32>
    %cst_193 = arith.constant dense<0.000000e+00> : vector<56x26xf32>
    %309 = tpu.matmul %306, %308, %cst_193 {dimension_numbers = #tpu.dot_dimension_numbers<[1], [0], [0], [1], [0, 0, 1, 1], [], []>} : vector<56x26xf32>, vector<26x26xf32>, vector<56x26xf32> -> vector<56x26xf32>
    %c2_194 = arith.constant 2 : index
    %c0_195 = arith.constant 0 : index
    %c0_196 = arith.constant 0 : index
    %310 = vector.load %arg24[%c2_194, %c0_195, %c0_196] : memref<4x1x26xf32, #tpu.memory_space<vmem>>, vector<1x1x26xf32>
    %311 = vector.shape_cast %310 : vector<1x1x26xf32> to vector<1x26xf32>
    %312 = vector.broadcast %311 : vector<1x26xf32> to vector<56x26xf32>
    %313 = arith.addf %309, %312 : vector<56x26xf32>
    %314 = arith.negf %313 : vector<56x26xf32>
    %315 = math.exp %314 : vector<56x26xf32>
    %cst_197 = arith.constant 1.000000e+00 : f32
    %316 = vector.broadcast %cst_197 : f32 to vector<56x26xf32>
    %317 = arith.addf %316, %315 : vector<56x26xf32>
    %318 = arith.divf %316, %317 : vector<56x26xf32>
    %319 = arith.mulf %313, %318 : vector<56x26xf32>
    %c2_198 = arith.constant 2 : index
    %c0_199 = arith.constant 0 : index
    %c0_200 = arith.constant 0 : index
    %320 = vector.load %arg25[%c2_198, %c0_199, %c0_200] : memref<4x1x26xf32, #tpu.memory_space<vmem>>, vector<1x1x26xf32>
    %321 = vector.shape_cast %320 : vector<1x1x26xf32> to vector<1x26xf32>
    %322 = vector.broadcast %321 : vector<1x26xf32> to vector<56x26xf32>
    %323 = arith.mulf %319, %322 : vector<56x26xf32>
    %cst_201 = arith.constant dense<0.000000e+00> : vector<56xf32>
    %324 = vector.multi_reduction <add>, %323, %cst_201 [1] : vector<56x26xf32> to vector<56xf32>
    %325 = vector.shape_cast %324 : vector<56xf32> to vector<56x1xf32>
    %326 = vector.broadcast %325 : vector<56x1xf32> to vector<56x3xf32>
    %327 = arith.mulf %259, %326 : vector<56x3xf32>
    %cst_202 = arith.constant dense<0.000000e+00> : vector<8x3xf32>
    %328 = tpu.matmul %3, %327, %cst_202 {dimension_numbers = #tpu.dot_dimension_numbers<[1], [0], [0], [1], [0, 0, 1, 1], [], []>} : vector<8x56xf32>, vector<56x3xf32>, vector<8x3xf32> -> vector<8x3xf32>
    %329 = arith.addf %214, %328 : vector<8x3xf32>
    %cst_203 = arith.constant dense<0.000000e+00> : vector<8x26xf32>
    %330 = tpu.matmul %2, %306, %cst_203 {dimension_numbers = #tpu.dot_dimension_numbers<[1], [0], [0], [1], [0, 0, 1, 1], [], []>} : vector<8x56xf32>, vector<56x26xf32>, vector<8x26xf32> -> vector<8x26xf32>
    %c2_204 = arith.constant 2 : index
    %c0_205 = arith.constant 0 : index
    %c0_206 = arith.constant 0 : index
    %331 = vector.load %arg26[%c2_204, %c0_205, %c0_206] : memref<4x26x26xf32, #tpu.memory_space<vmem>>, vector<1x26x26xf32>
    %332 = vector.shape_cast %331 : vector<1x26x26xf32> to vector<26x26xf32>
    %cst_207 = arith.constant dense<0.000000e+00> : vector<8x26xf32>
    %333 = tpu.matmul %240, %332, %cst_207 {dimension_numbers = #tpu.dot_dimension_numbers<[1], [0], [0], [1], [0, 0, 1, 1], [], []>} : vector<8x26xf32>, vector<26x26xf32>, vector<8x26xf32> -> vector<8x26xf32>
    %c2_208 = arith.constant 2 : index
    %c0_209 = arith.constant 0 : index
    %c0_210 = arith.constant 0 : index
    %334 = vector.load %arg27[%c2_208, %c0_209, %c0_210] : memref<4x26x26xf32, #tpu.memory_space<vmem>>, vector<1x26x26xf32>
    %335 = vector.shape_cast %334 : vector<1x26x26xf32> to vector<26x26xf32>
    %cst_211 = arith.constant dense<0.000000e+00> : vector<8x26xf32>
    %336 = tpu.matmul %330, %335, %cst_211 {dimension_numbers = #tpu.dot_dimension_numbers<[1], [0], [0], [1], [0, 0, 1, 1], [], []>} : vector<8x26xf32>, vector<26x26xf32>, vector<8x26xf32> -> vector<8x26xf32>
    %337 = arith.addf %333, %336 : vector<8x26xf32>
    %c2_212 = arith.constant 2 : index
    %c0_213 = arith.constant 0 : index
    %c0_214 = arith.constant 0 : index
    %338 = vector.load %arg28[%c2_212, %c0_213, %c0_214] : memref<4x1x26xf32, #tpu.memory_space<vmem>>, vector<1x1x26xf32>
    %339 = vector.shape_cast %338 : vector<1x1x26xf32> to vector<1x26xf32>
    %340 = vector.broadcast %339 : vector<1x26xf32> to vector<8x26xf32>
    %341 = arith.addf %337, %340 : vector<8x26xf32>
    %342 = arith.negf %341 : vector<8x26xf32>
    %343 = math.exp %342 : vector<8x26xf32>
    %cst_215 = arith.constant 1.000000e+00 : f32
    %344 = vector.broadcast %cst_215 : f32 to vector<8x26xf32>
    %345 = arith.addf %344, %343 : vector<8x26xf32>
    %346 = arith.divf %344, %345 : vector<8x26xf32>
    %347 = arith.mulf %341, %346 : vector<8x26xf32>
    %c2_216 = arith.constant 2 : index
    %c0_217 = arith.constant 0 : index
    %c0_218 = arith.constant 0 : index
    %348 = vector.load %arg29[%c2_216, %c0_217, %c0_218] : memref<4x26x26xf32, #tpu.memory_space<vmem>>, vector<1x26x26xf32>
    %349 = vector.shape_cast %348 : vector<1x26x26xf32> to vector<26x26xf32>
    %cst_219 = arith.constant dense<0.000000e+00> : vector<8x26xf32>
    %350 = tpu.matmul %347, %349, %cst_219 {dimension_numbers = #tpu.dot_dimension_numbers<[1], [0], [0], [1], [0, 0, 1, 1], [], []>} : vector<8x26xf32>, vector<26x26xf32>, vector<8x26xf32> -> vector<8x26xf32>
    %c2_220 = arith.constant 2 : index
    %c0_221 = arith.constant 0 : index
    %c0_222 = arith.constant 0 : index
    %351 = vector.load %arg30[%c2_220, %c0_221, %c0_222] : memref<4x1x26xf32, #tpu.memory_space<vmem>>, vector<1x1x26xf32>
    %352 = vector.shape_cast %351 : vector<1x1x26xf32> to vector<1x26xf32>
    %353 = vector.broadcast %352 : vector<1x26xf32> to vector<8x26xf32>
    %354 = arith.addf %350, %353 : vector<8x26xf32>
    %355 = arith.addf %240, %354 : vector<8x26xf32>
    %c3 = arith.constant 3 : index
    %c0_223 = arith.constant 0 : index
    %c0_224 = arith.constant 0 : index
    %356 = vector.load %arg15[%c3, %c0_223, %c0_224] : memref<4x26x26xf32, #tpu.memory_space<vmem>>, vector<1x26x26xf32>
    %357 = vector.shape_cast %356 : vector<1x26x26xf32> to vector<26x26xf32>
    %cst_225 = arith.constant dense<0.000000e+00> : vector<8x26xf32>
    %358 = tpu.matmul %355, %357, %cst_225 {dimension_numbers = #tpu.dot_dimension_numbers<[1], [0], [0], [1], [0, 0, 1, 1], [], []>} : vector<8x26xf32>, vector<26x26xf32>, vector<8x26xf32> -> vector<8x26xf32>
    %c3_226 = arith.constant 3 : index
    %c0_227 = arith.constant 0 : index
    %c0_228 = arith.constant 0 : index
    %359 = vector.load %arg16[%c3_226, %c0_227, %c0_228] : memref<4x26x26xf32, #tpu.memory_space<vmem>>, vector<1x26x26xf32>
    %360 = vector.shape_cast %359 : vector<1x26x26xf32> to vector<26x26xf32>
    %cst_229 = arith.constant dense<0.000000e+00> : vector<8x26xf32>
    %361 = tpu.matmul %355, %360, %cst_229 {dimension_numbers = #tpu.dot_dimension_numbers<[1], [0], [0], [1], [0, 0, 1, 1], [], []>} : vector<8x26xf32>, vector<26x26xf32>, vector<8x26xf32> -> vector<8x26xf32>
    %cst_230 = arith.constant dense<0.000000e+00> : vector<56x26xf32>
    %362 = tpu.matmul %0, %358, %cst_230 {dimension_numbers = #tpu.dot_dimension_numbers<[1], [0], [0], [1], [0, 0, 1, 1], [], []>} : vector<56x8xf32>, vector<8x26xf32>, vector<56x26xf32> -> vector<56x26xf32>
    %cst_231 = arith.constant dense<0.000000e+00> : vector<56x26xf32>
    %363 = tpu.matmul %1, %361, %cst_231 {dimension_numbers = #tpu.dot_dimension_numbers<[1], [0], [0], [1], [0, 0, 1, 1], [], []>} : vector<56x8xf32>, vector<8x26xf32>, vector<56x26xf32> -> vector<56x26xf32>
    %cst_232 = arith.constant dense<0.000000e+00> : vector<56x3xf32>
    %364 = tpu.matmul %0, %329, %cst_232 {dimension_numbers = #tpu.dot_dimension_numbers<[1], [0], [0], [1], [0, 0, 1, 1], [], []>} : vector<56x8xf32>, vector<8x3xf32>, vector<56x3xf32> -> vector<56x3xf32>
    %cst_233 = arith.constant dense<0.000000e+00> : vector<56x3xf32>
    %365 = tpu.matmul %1, %329, %cst_233 {dimension_numbers = #tpu.dot_dimension_numbers<[1], [0], [0], [1], [0, 0, 1, 1], [], []>} : vector<56x8xf32>, vector<8x3xf32>, vector<56x3xf32> -> vector<56x3xf32>
    %366 = arith.subf %364, %365 : vector<56x3xf32>
    %367 = arith.mulf %366, %366 : vector<56x3xf32>
    %cst_234 = arith.constant dense<0.000000e+00> : vector<56xf32>
    %368 = vector.multi_reduction <add>, %367, %cst_234 [1] : vector<56x3xf32> to vector<56xf32>
    %369 = vector.shape_cast %368 : vector<56xf32> to vector<56x1xf32>
    %cst_235 = arith.constant 9.99999993E-9 : f32
    %370 = vector.broadcast %cst_235 : f32 to vector<56x1xf32>
    %371 = arith.addf %369, %370 : vector<56x1xf32>
    %372 = math.rsqrt %371 : vector<56x1xf32>
    %373 = vector.broadcast %372 : vector<56x1xf32> to vector<56x3xf32>
    %374 = arith.mulf %366, %373 : vector<56x3xf32>
    %375 = arith.addf %362, %363 : vector<56x26xf32>
    %c3_236 = arith.constant 3 : index
    %c0_237 = arith.constant 0 : index
    %c0_238 = arith.constant 0 : index
    %376 = vector.load %arg17[%c3_236, %c0_237, %c0_238] : memref<4x1x26xf32, #tpu.memory_space<vmem>>, vector<1x1x26xf32>
    %377 = vector.shape_cast %376 : vector<1x1x26xf32> to vector<1x26xf32>
    %378 = vector.broadcast %369 : vector<56x1xf32> to vector<56x26xf32>
    %379 = vector.broadcast %377 : vector<1x26xf32> to vector<56x26xf32>
    %380 = arith.mulf %378, %379 : vector<56x26xf32>
    %381 = arith.addf %375, %380 : vector<56x26xf32>
    %c3_239 = arith.constant 3 : index
    %c0_240 = arith.constant 0 : index
    %c0_241 = arith.constant 0 : index
    %382 = vector.load %arg18[%c3_239, %c0_240, %c0_241] : memref<4x1x26xf32, #tpu.memory_space<vmem>>, vector<1x1x26xf32>
    %383 = vector.shape_cast %382 : vector<1x1x26xf32> to vector<1x26xf32>
    %384 = vector.broadcast %383 : vector<1x26xf32> to vector<56x26xf32>
    %385 = arith.addf %381, %384 : vector<56x26xf32>
    %386 = arith.negf %385 : vector<56x26xf32>
    %387 = math.exp %386 : vector<56x26xf32>
    %cst_242 = arith.constant 1.000000e+00 : f32
    %388 = vector.broadcast %cst_242 : f32 to vector<56x26xf32>
    %389 = arith.addf %388, %387 : vector<56x26xf32>
    %390 = arith.divf %388, %389 : vector<56x26xf32>
    %391 = arith.mulf %385, %390 : vector<56x26xf32>
    %c3_243 = arith.constant 3 : index
    %c0_244 = arith.constant 0 : index
    %c0_245 = arith.constant 0 : index
    %392 = vector.load %arg19[%c3_243, %c0_244, %c0_245] : memref<4x26x26xf32, #tpu.memory_space<vmem>>, vector<1x26x26xf32>
    %393 = vector.shape_cast %392 : vector<1x26x26xf32> to vector<26x26xf32>
    %cst_246 = arith.constant dense<0.000000e+00> : vector<56x26xf32>
    %394 = tpu.matmul %391, %393, %cst_246 {dimension_numbers = #tpu.dot_dimension_numbers<[1], [0], [0], [1], [0, 0, 1, 1], [], []>} : vector<56x26xf32>, vector<26x26xf32>, vector<56x26xf32> -> vector<56x26xf32>
    %c3_247 = arith.constant 3 : index
    %c0_248 = arith.constant 0 : index
    %c0_249 = arith.constant 0 : index
    %395 = vector.load %arg20[%c3_247, %c0_248, %c0_249] : memref<4x1x26xf32, #tpu.memory_space<vmem>>, vector<1x1x26xf32>
    %396 = vector.shape_cast %395 : vector<1x1x26xf32> to vector<1x26xf32>
    %397 = vector.broadcast %396 : vector<1x26xf32> to vector<56x26xf32>
    %398 = arith.addf %394, %397 : vector<56x26xf32>
    %399 = arith.negf %398 : vector<56x26xf32>
    %400 = math.exp %399 : vector<56x26xf32>
    %cst_250 = arith.constant 1.000000e+00 : f32
    %401 = vector.broadcast %cst_250 : f32 to vector<56x26xf32>
    %402 = arith.addf %401, %400 : vector<56x26xf32>
    %403 = arith.divf %401, %402 : vector<56x26xf32>
    %404 = arith.mulf %398, %403 : vector<56x26xf32>
    %c3_251 = arith.constant 3 : index
    %c0_252 = arith.constant 0 : index
    %c0_253 = arith.constant 0 : index
    %405 = vector.load %arg21[%c3_251, %c0_252, %c0_253] : memref<4x1x26xf32, #tpu.memory_space<vmem>>, vector<1x1x26xf32>
    %406 = vector.shape_cast %405 : vector<1x1x26xf32> to vector<1x26xf32>
    %407 = vector.broadcast %406 : vector<1x26xf32> to vector<56x26xf32>
    %408 = arith.mulf %404, %407 : vector<56x26xf32>
    %cst_254 = arith.constant dense<0.000000e+00> : vector<56xf32>
    %409 = vector.multi_reduction <add>, %408, %cst_254 [1] : vector<56x26xf32> to vector<56xf32>
    %410 = vector.shape_cast %409 : vector<56xf32> to vector<56x1xf32>
    %c3_255 = arith.constant 3 : index
    %c0_256 = arith.constant 0 : index
    %c0_257 = arith.constant 0 : index
    %411 = vector.load %arg22[%c3_255, %c0_256, %c0_257] : memref<4x1x1xf32, #tpu.memory_space<vmem>>, vector<1x1x1xf32>
    %412 = vector.shape_cast %411 : vector<1x1x1xf32> to vector<1x1xf32>
    %413 = vector.broadcast %412 : vector<1x1xf32> to vector<56x1xf32>
    %414 = arith.addf %410, %413 : vector<56x1xf32>
    %415 = arith.negf %414 : vector<56x1xf32>
    %416 = math.exp %415 : vector<56x1xf32>
    %cst_258 = arith.constant 1.000000e+00 : f32
    %417 = vector.broadcast %cst_258 : f32 to vector<56x1xf32>
    %418 = arith.addf %417, %416 : vector<56x1xf32>
    %419 = arith.divf %417, %418 : vector<56x1xf32>
    %420 = vector.broadcast %419 : vector<56x1xf32> to vector<56x26xf32>
    %421 = arith.mulf %404, %420 : vector<56x26xf32>
    %c3_259 = arith.constant 3 : index
    %c0_260 = arith.constant 0 : index
    %c0_261 = arith.constant 0 : index
    %422 = vector.load %arg23[%c3_259, %c0_260, %c0_261] : memref<4x26x26xf32, #tpu.memory_space<vmem>>, vector<1x26x26xf32>
    %423 = vector.shape_cast %422 : vector<1x26x26xf32> to vector<26x26xf32>
    %cst_262 = arith.constant dense<0.000000e+00> : vector<56x26xf32>
    %424 = tpu.matmul %421, %423, %cst_262 {dimension_numbers = #tpu.dot_dimension_numbers<[1], [0], [0], [1], [0, 0, 1, 1], [], []>} : vector<56x26xf32>, vector<26x26xf32>, vector<56x26xf32> -> vector<56x26xf32>
    %c3_263 = arith.constant 3 : index
    %c0_264 = arith.constant 0 : index
    %c0_265 = arith.constant 0 : index
    %425 = vector.load %arg24[%c3_263, %c0_264, %c0_265] : memref<4x1x26xf32, #tpu.memory_space<vmem>>, vector<1x1x26xf32>
    %426 = vector.shape_cast %425 : vector<1x1x26xf32> to vector<1x26xf32>
    %427 = vector.broadcast %426 : vector<1x26xf32> to vector<56x26xf32>
    %428 = arith.addf %424, %427 : vector<56x26xf32>
    %429 = arith.negf %428 : vector<56x26xf32>
    %430 = math.exp %429 : vector<56x26xf32>
    %cst_266 = arith.constant 1.000000e+00 : f32
    %431 = vector.broadcast %cst_266 : f32 to vector<56x26xf32>
    %432 = arith.addf %431, %430 : vector<56x26xf32>
    %433 = arith.divf %431, %432 : vector<56x26xf32>
    %434 = arith.mulf %428, %433 : vector<56x26xf32>
    %c3_267 = arith.constant 3 : index
    %c0_268 = arith.constant 0 : index
    %c0_269 = arith.constant 0 : index
    %435 = vector.load %arg25[%c3_267, %c0_268, %c0_269] : memref<4x1x26xf32, #tpu.memory_space<vmem>>, vector<1x1x26xf32>
    %436 = vector.shape_cast %435 : vector<1x1x26xf32> to vector<1x26xf32>
    %437 = vector.broadcast %436 : vector<1x26xf32> to vector<56x26xf32>
    %438 = arith.mulf %434, %437 : vector<56x26xf32>
    %cst_270 = arith.constant dense<0.000000e+00> : vector<56xf32>
    %439 = vector.multi_reduction <add>, %438, %cst_270 [1] : vector<56x26xf32> to vector<56xf32>
    %440 = vector.shape_cast %439 : vector<56xf32> to vector<56x1xf32>
    %441 = vector.broadcast %440 : vector<56x1xf32> to vector<56x3xf32>
    %442 = arith.mulf %374, %441 : vector<56x3xf32>
    %cst_271 = arith.constant dense<0.000000e+00> : vector<8x3xf32>
    %443 = tpu.matmul %3, %442, %cst_271 {dimension_numbers = #tpu.dot_dimension_numbers<[1], [0], [0], [1], [0, 0, 1, 1], [], []>} : vector<8x56xf32>, vector<56x3xf32>, vector<8x3xf32> -> vector<8x3xf32>
    %444 = arith.addf %329, %443 : vector<8x3xf32>
    %cst_272 = arith.constant dense<0.000000e+00> : vector<8x26xf32>
    %445 = tpu.matmul %2, %421, %cst_272 {dimension_numbers = #tpu.dot_dimension_numbers<[1], [0], [0], [1], [0, 0, 1, 1], [], []>} : vector<8x56xf32>, vector<56x26xf32>, vector<8x26xf32> -> vector<8x26xf32>
    %c3_273 = arith.constant 3 : index
    %c0_274 = arith.constant 0 : index
    %c0_275 = arith.constant 0 : index
    %446 = vector.load %arg26[%c3_273, %c0_274, %c0_275] : memref<4x26x26xf32, #tpu.memory_space<vmem>>, vector<1x26x26xf32>
    %447 = vector.shape_cast %446 : vector<1x26x26xf32> to vector<26x26xf32>
    %cst_276 = arith.constant dense<0.000000e+00> : vector<8x26xf32>
    %448 = tpu.matmul %355, %447, %cst_276 {dimension_numbers = #tpu.dot_dimension_numbers<[1], [0], [0], [1], [0, 0, 1, 1], [], []>} : vector<8x26xf32>, vector<26x26xf32>, vector<8x26xf32> -> vector<8x26xf32>
    %c3_277 = arith.constant 3 : index
    %c0_278 = arith.constant 0 : index
    %c0_279 = arith.constant 0 : index
    %449 = vector.load %arg27[%c3_277, %c0_278, %c0_279] : memref<4x26x26xf32, #tpu.memory_space<vmem>>, vector<1x26x26xf32>
    %450 = vector.shape_cast %449 : vector<1x26x26xf32> to vector<26x26xf32>
    %cst_280 = arith.constant dense<0.000000e+00> : vector<8x26xf32>
    %451 = tpu.matmul %445, %450, %cst_280 {dimension_numbers = #tpu.dot_dimension_numbers<[1], [0], [0], [1], [0, 0, 1, 1], [], []>} : vector<8x26xf32>, vector<26x26xf32>, vector<8x26xf32> -> vector<8x26xf32>
    %452 = arith.addf %448, %451 : vector<8x26xf32>
    %c3_281 = arith.constant 3 : index
    %c0_282 = arith.constant 0 : index
    %c0_283 = arith.constant 0 : index
    %453 = vector.load %arg28[%c3_281, %c0_282, %c0_283] : memref<4x1x26xf32, #tpu.memory_space<vmem>>, vector<1x1x26xf32>
    %454 = vector.shape_cast %453 : vector<1x1x26xf32> to vector<1x26xf32>
    %455 = vector.broadcast %454 : vector<1x26xf32> to vector<8x26xf32>
    %456 = arith.addf %452, %455 : vector<8x26xf32>
    %457 = arith.negf %456 : vector<8x26xf32>
    %458 = math.exp %457 : vector<8x26xf32>
    %cst_284 = arith.constant 1.000000e+00 : f32
    %459 = vector.broadcast %cst_284 : f32 to vector<8x26xf32>
    %460 = arith.addf %459, %458 : vector<8x26xf32>
    %461 = arith.divf %459, %460 : vector<8x26xf32>
    %462 = arith.mulf %456, %461 : vector<8x26xf32>
    %c3_285 = arith.constant 3 : index
    %c0_286 = arith.constant 0 : index
    %c0_287 = arith.constant 0 : index
    %463 = vector.load %arg29[%c3_285, %c0_286, %c0_287] : memref<4x26x26xf32, #tpu.memory_space<vmem>>, vector<1x26x26xf32>
    %464 = vector.shape_cast %463 : vector<1x26x26xf32> to vector<26x26xf32>
    %cst_288 = arith.constant dense<0.000000e+00> : vector<8x26xf32>
    %465 = tpu.matmul %462, %464, %cst_288 {dimension_numbers = #tpu.dot_dimension_numbers<[1], [0], [0], [1], [0, 0, 1, 1], [], []>} : vector<8x26xf32>, vector<26x26xf32>, vector<8x26xf32> -> vector<8x26xf32>
    %c3_289 = arith.constant 3 : index
    %c0_290 = arith.constant 0 : index
    %c0_291 = arith.constant 0 : index
    %466 = vector.load %arg30[%c3_289, %c0_290, %c0_291] : memref<4x1x26xf32, #tpu.memory_space<vmem>>, vector<1x1x26xf32>
    %467 = vector.shape_cast %466 : vector<1x1x26xf32> to vector<1x26xf32>
    %468 = vector.broadcast %467 : vector<1x26xf32> to vector<8x26xf32>
    %469 = arith.addf %465, %468 : vector<8x26xf32>
    %470 = arith.addf %355, %469 : vector<8x26xf32>
    %c0_292 = arith.constant 0 : index
    %c0_293 = arith.constant 0 : index
    %471 = vector.load %arg31[%c0_292, %c0_293] : memref<26x23xf32, #tpu.memory_space<vmem>>, vector<26x23xf32>
    %cst_294 = arith.constant dense<0.000000e+00> : vector<8x23xf32>
    %472 = tpu.matmul %470, %471, %cst_294 {dimension_numbers = #tpu.dot_dimension_numbers<[1], [0], [0], [1], [0, 0, 1, 1], [], []>} : vector<8x26xf32>, vector<26x23xf32>, vector<8x23xf32> -> vector<8x23xf32>
    %c0_295 = arith.constant 0 : index
    %c0_296 = arith.constant 0 : index
    %473 = vector.load %arg32[%c0_295, %c0_296] : memref<1x23xf32, #tpu.memory_space<vmem>>, vector<1x23xf32>
    %474 = vector.broadcast %473 : vector<1x23xf32> to vector<8x23xf32>
    %475 = arith.addf %472, %474 : vector<8x23xf32>
    %476 = tpu.iota {dimensions = array<i32: 1>} : vector<8x23xi32>
    %c20_i32 = arith.constant 20 : i32
    %477 = vector.broadcast %c20_i32 : i32 to vector<8x23xi32>
    %478 = arith.cmpi slt, %476, %477 : vector<8x23xi32>
    %cst_297 = arith.constant -1.000000e+30 : f32
    %479 = vector.broadcast %cst_297 : f32 to vector<8x23xf32>
    %480 = arith.select %478, %475, %479 : vector<8x23xi1>, vector<8x23xf32>
    %cst_298 = arith.constant dense<0xFF800000> : vector<8xf32>
    %481 = vector.multi_reduction <maximumf>, %480, %cst_298 [1] : vector<8x23xf32> to vector<8xf32>
    %482 = vector.shape_cast %481 : vector<8xf32> to vector<8x1xf32>
    %483 = vector.broadcast %482 : vector<8x1xf32> to vector<8x23xf32>
    %484 = arith.subf %475, %483 : vector<8x23xf32>
    %485 = math.exp %484 : vector<8x23xf32>
    %cst_299 = arith.constant 0.000000e+00 : f32
    %486 = vector.broadcast %cst_299 : f32 to vector<8x23xf32>
    %487 = arith.select %478, %485, %486 : vector<8x23xi1>, vector<8x23xf32>
    %cst_300 = arith.constant dense<0.000000e+00> : vector<8xf32>
    %488 = vector.multi_reduction <add>, %487, %cst_300 [1] : vector<8x23xf32> to vector<8xf32>
    %489 = vector.shape_cast %488 : vector<8xf32> to vector<8x1xf32>
    %490 = vector.broadcast %489 : vector<8x1xf32> to vector<8x23xf32>
    %491 = arith.divf %487, %490 : vector<8x23xf32>
    %c0_301 = arith.constant 0 : index
    %c0_302 = arith.constant 0 : index
    %492 = vector.load %arg11[%c0_301, %c0_302] : memref<8x23xf32, #tpu.memory_space<vmem>>, vector<8x23xf32>
    %493 = arith.mulf %492, %491 : vector<8x23xf32>
    %c0_303 = arith.constant 0 : index
    %c0_304 = arith.constant 0 : index
    %494 = vector.load %arg12[%c0_303, %c0_304] : memref<8x23xf32, #tpu.memory_space<vmem>>, vector<8x23xf32>
    %495 = arith.addf %493, %494 : vector<8x23xf32>
    %cst_305 = arith.constant dense<0.000000e+00> : vector<8xf32>
    %496 = vector.multi_reduction <add>, %495, %cst_305 [1] : vector<8x23xf32> to vector<8xf32>
    %497 = vector.shape_cast %496 : vector<8xf32> to vector<8x1xf32>
    %cst_306 = arith.constant 9.99999993E-9 : f32
    %498 = vector.broadcast %cst_306 : f32 to vector<8x1xf32>
    %499 = arith.addf %497, %498 : vector<8x1xf32>
    %500 = vector.broadcast %499 : vector<8x1xf32> to vector<8x23xf32>
    %501 = arith.divf %495, %500 : vector<8x23xf32>
    %c0_307 = arith.constant 0 : index
    %c0_308 = arith.constant 0 : index
    %502 = vector.load %arg10[%c0_307, %c0_308] : memref<8x23xf32, #tpu.memory_space<vmem>>, vector<8x23xf32>
    %cst_309 = arith.constant 0.000000e+00 : f32
    %503 = vector.broadcast %cst_309 : f32 to vector<8x23xf32>
    %504 = arith.cmpf ogt, %502, %503 : vector<8x23xf32>
    %cst_310 = arith.constant 1.000000e-30 : f32
    %505 = vector.broadcast %cst_310 : f32 to vector<8x23xf32>
    %506 = arith.maximumf %502, %505 : vector<8x23xf32>
    %507 = math.log %506 : vector<8x23xf32>
    %508 = arith.mulf %502, %507 : vector<8x23xf32>
    %cst_311 = arith.constant 0.000000e+00 : f32
    %509 = vector.broadcast %cst_311 : f32 to vector<8x23xf32>
    %510 = arith.select %504, %508, %509 : vector<8x23xi1>, vector<8x23xf32>
    %cst_312 = arith.constant 9.99999993E-9 : f32
    %511 = vector.broadcast %cst_312 : f32 to vector<8x23xf32>
    %512 = arith.addf %501, %511 : vector<8x23xf32>
    %513 = math.log %512 : vector<8x23xf32>
    %514 = arith.mulf %502, %513 : vector<8x23xf32>
    %515 = arith.subf %510, %514 : vector<8x23xf32>
    %cst_313 = arith.constant dense<0.000000e+00> : vector<8xf32>
    %516 = vector.multi_reduction <add>, %515, %cst_313 [1] : vector<8x23xf32> to vector<8xf32>
    %517 = vector.shape_cast %516 : vector<8xf32> to vector<8x1xf32>
    %cst_314 = arith.constant dense<0.000000e+00> : vector<1xf32>
    %518 = vector.multi_reduction <add>, %517, %cst_314 [0] : vector<8x1xf32> to vector<1xf32>
    %519 = vector.shape_cast %518 : vector<1xf32> to vector<1x1xf32>
    %cst_315 = arith.constant 8.000000e+00 : f32
    %520 = vector.broadcast %cst_315 : f32 to vector<1x1xf32>
    %521 = arith.divf %519, %520 : vector<1x1xf32>
    %c0_316 = arith.constant 0 : index
    %c0_317 = arith.constant 0 : index
    %522 = vector.load %arg7[%c0_316, %c0_317] : memref<8x3xf32, #tpu.memory_space<vmem>>, vector<8x3xf32>
    %523 = arith.subf %444, %522 : vector<8x3xf32>
    %524 = arith.mulf %523, %523 : vector<8x3xf32>
    %cst_318 = arith.constant dense<0.000000e+00> : vector<8xf32>
    %525 = vector.multi_reduction <add>, %524, %cst_318 [1] : vector<8x3xf32> to vector<8xf32>
    %526 = vector.shape_cast %525 : vector<8xf32> to vector<8x1xf32>
    %cst_319 = arith.constant dense<0.000000e+00> : vector<1xf32>
    %527 = vector.multi_reduction <add>, %526, %cst_319 [0] : vector<8x1xf32> to vector<1xf32>
    %528 = vector.shape_cast %527 : vector<1xf32> to vector<1x1xf32>
    %cst_320 = arith.constant 8.000000e+00 : f32
    %529 = vector.broadcast %cst_320 : f32 to vector<1x1xf32>
    %530 = arith.divf %528, %529 : vector<1x1xf32>
    %c20_i32_321 = arith.constant 20 : i32
    %531 = vector.broadcast %c20_i32_321 : i32 to vector<8x23xi32>
    %532 = arith.cmpi eq, %476, %531 : vector<8x23xi32>
    %cst_322 = arith.constant 0.000000e+00 : f32
    %533 = vector.broadcast %cst_322 : f32 to vector<8x23xf32>
    %534 = arith.select %532, %475, %533 : vector<8x23xi1>, vector<8x23xf32>
    %cst_323 = arith.constant dense<0.000000e+00> : vector<8xf32>
    %535 = vector.multi_reduction <add>, %534, %cst_323 [1] : vector<8x23xf32> to vector<8xf32>
    %536 = vector.shape_cast %535 : vector<8xf32> to vector<8x1xf32>
    %c21_i32 = arith.constant 21 : i32
    %537 = vector.broadcast %c21_i32 : i32 to vector<8x23xi32>
    %538 = arith.cmpi eq, %476, %537 : vector<8x23xi32>
    %cst_324 = arith.constant 0.000000e+00 : f32
    %539 = vector.broadcast %cst_324 : f32 to vector<8x23xf32>
    %540 = arith.select %538, %475, %539 : vector<8x23xi1>, vector<8x23xf32>
    %cst_325 = arith.constant dense<0.000000e+00> : vector<8xf32>
    %541 = vector.multi_reduction <add>, %540, %cst_325 [1] : vector<8x23xf32> to vector<8xf32>
    %542 = vector.shape_cast %541 : vector<8xf32> to vector<8x1xf32>
    %c22_i32 = arith.constant 22 : i32
    %543 = vector.broadcast %c22_i32 : i32 to vector<8x23xi32>
    %544 = arith.cmpi eq, %476, %543 : vector<8x23xi32>
    %cst_326 = arith.constant 0.000000e+00 : f32
    %545 = vector.broadcast %cst_326 : f32 to vector<8x23xf32>
    %546 = arith.select %544, %475, %545 : vector<8x23xi1>, vector<8x23xf32>
    %cst_327 = arith.constant dense<0.000000e+00> : vector<8xf32>
    %547 = vector.multi_reduction <add>, %546, %cst_327 [1] : vector<8x23xf32> to vector<8xf32>
    %548 = vector.shape_cast %547 : vector<8xf32> to vector<8x1xf32>
    %549 = arith.mulf %536, %536 : vector<8x1xf32>
    %cst_328 = arith.constant 1.000000e+00 : f32
    %550 = vector.broadcast %cst_328 : f32 to vector<8x1xf32>
    %551 = arith.addf %550, %549 : vector<8x1xf32>
    %552 = arith.mulf %542, %542 : vector<8x1xf32>
    %553 = arith.addf %551, %552 : vector<8x1xf32>
    %554 = arith.mulf %548, %548 : vector<8x1xf32>
    %555 = arith.addf %553, %554 : vector<8x1xf32>
    %556 = math.rsqrt %555 : vector<8x1xf32>
    %557 = arith.mulf %536, %556 : vector<8x1xf32>
    %558 = arith.mulf %542, %556 : vector<8x1xf32>
    %559 = arith.mulf %548, %556 : vector<8x1xf32>
    %560 = arith.mulf %556, %556 : vector<8x1xf32>
    %561 = arith.mulf %557, %557 : vector<8x1xf32>
    %562 = arith.addf %560, %561 : vector<8x1xf32>
    %563 = arith.mulf %558, %558 : vector<8x1xf32>
    %564 = arith.subf %562, %563 : vector<8x1xf32>
    %565 = arith.mulf %559, %559 : vector<8x1xf32>
    %566 = arith.subf %564, %565 : vector<8x1xf32>
    %567 = arith.mulf %557, %558 : vector<8x1xf32>
    %568 = arith.mulf %556, %559 : vector<8x1xf32>
    %569 = arith.subf %567, %568 : vector<8x1xf32>
    %cst_329 = arith.constant 2.000000e+00 : f32
    %570 = vector.broadcast %cst_329 : f32 to vector<8x1xf32>
    %571 = arith.mulf %570, %569 : vector<8x1xf32>
    %572 = arith.mulf %557, %559 : vector<8x1xf32>
    %573 = arith.mulf %556, %558 : vector<8x1xf32>
    %574 = arith.addf %572, %573 : vector<8x1xf32>
    %cst_330 = arith.constant 2.000000e+00 : f32
    %575 = vector.broadcast %cst_330 : f32 to vector<8x1xf32>
    %576 = arith.mulf %575, %574 : vector<8x1xf32>
    %577 = arith.mulf %557, %558 : vector<8x1xf32>
    %578 = arith.mulf %556, %559 : vector<8x1xf32>
    %579 = arith.addf %577, %578 : vector<8x1xf32>
    %cst_331 = arith.constant 2.000000e+00 : f32
    %580 = vector.broadcast %cst_331 : f32 to vector<8x1xf32>
    %581 = arith.mulf %580, %579 : vector<8x1xf32>
    %582 = arith.mulf %556, %556 : vector<8x1xf32>
    %583 = arith.mulf %557, %557 : vector<8x1xf32>
    %584 = arith.subf %582, %583 : vector<8x1xf32>
    %585 = arith.mulf %558, %558 : vector<8x1xf32>
    %586 = arith.addf %584, %585 : vector<8x1xf32>
    %587 = arith.mulf %559, %559 : vector<8x1xf32>
    %588 = arith.subf %586, %587 : vector<8x1xf32>
    %589 = arith.mulf %558, %559 : vector<8x1xf32>
    %590 = arith.mulf %556, %557 : vector<8x1xf32>
    %591 = arith.subf %589, %590 : vector<8x1xf32>
    %cst_332 = arith.constant 2.000000e+00 : f32
    %592 = vector.broadcast %cst_332 : f32 to vector<8x1xf32>
    %593 = arith.mulf %592, %591 : vector<8x1xf32>
    %594 = arith.mulf %557, %559 : vector<8x1xf32>
    %595 = arith.mulf %556, %558 : vector<8x1xf32>
    %596 = arith.subf %594, %595 : vector<8x1xf32>
    %cst_333 = arith.constant 2.000000e+00 : f32
    %597 = vector.broadcast %cst_333 : f32 to vector<8x1xf32>
    %598 = arith.mulf %597, %596 : vector<8x1xf32>
    %599 = arith.mulf %558, %559 : vector<8x1xf32>
    %600 = arith.mulf %556, %557 : vector<8x1xf32>
    %601 = arith.addf %599, %600 : vector<8x1xf32>
    %cst_334 = arith.constant 2.000000e+00 : f32
    %602 = vector.broadcast %cst_334 : f32 to vector<8x1xf32>
    %603 = arith.mulf %602, %601 : vector<8x1xf32>
    %604 = arith.mulf %556, %556 : vector<8x1xf32>
    %605 = arith.mulf %557, %557 : vector<8x1xf32>
    %606 = arith.subf %604, %605 : vector<8x1xf32>
    %607 = arith.mulf %558, %558 : vector<8x1xf32>
    %608 = arith.subf %606, %607 : vector<8x1xf32>
    %609 = arith.mulf %559, %559 : vector<8x1xf32>
    %610 = arith.addf %608, %609 : vector<8x1xf32>
    %c0_335 = arith.constant 0 : index
    %c0_336 = arith.constant 0 : index
    %611 = vector.load %arg8[%c0_335, %c0_336] : memref<8x9xf32, #tpu.memory_space<vmem>>, vector<8x9xf32>
    %c0_337 = arith.constant 0 : index
    %c0_338 = arith.constant 0 : index
    %612 = vector.load %arg9[%c0_337, %c0_338] : memref<8x9xf32, #tpu.memory_space<vmem>>, vector<8x9xf32>
    %613 = tpu.iota {dimensions = array<i32: 1>} : vector<8x9xi32>
    %c0_i32 = arith.constant 0 : i32
    %614 = vector.broadcast %c0_i32 : i32 to vector<8x9xi32>
    %615 = arith.cmpi eq, %613, %614 : vector<8x9xi32>
    %cst_339 = arith.constant 0.000000e+00 : f32
    %616 = vector.broadcast %cst_339 : f32 to vector<8x9xf32>
    %617 = arith.select %615, %611, %616 : vector<8x9xi1>, vector<8x9xf32>
    %cst_340 = arith.constant dense<0.000000e+00> : vector<8xf32>
    %618 = vector.multi_reduction <add>, %617, %cst_340 [1] : vector<8x9xf32> to vector<8xf32>
    %619 = vector.shape_cast %618 : vector<8xf32> to vector<8x1xf32>
    %c1_i32 = arith.constant 1 : i32
    %620 = vector.broadcast %c1_i32 : i32 to vector<8x9xi32>
    %621 = arith.cmpi eq, %613, %620 : vector<8x9xi32>
    %cst_341 = arith.constant 0.000000e+00 : f32
    %622 = vector.broadcast %cst_341 : f32 to vector<8x9xf32>
    %623 = arith.select %621, %611, %622 : vector<8x9xi1>, vector<8x9xf32>
    %cst_342 = arith.constant dense<0.000000e+00> : vector<8xf32>
    %624 = vector.multi_reduction <add>, %623, %cst_342 [1] : vector<8x9xf32> to vector<8xf32>
    %625 = vector.shape_cast %624 : vector<8xf32> to vector<8x1xf32>
    %c2_i32 = arith.constant 2 : i32
    %626 = vector.broadcast %c2_i32 : i32 to vector<8x9xi32>
    %627 = arith.cmpi eq, %613, %626 : vector<8x9xi32>
    %cst_343 = arith.constant 0.000000e+00 : f32
    %628 = vector.broadcast %cst_343 : f32 to vector<8x9xf32>
    %629 = arith.select %627, %611, %628 : vector<8x9xi1>, vector<8x9xf32>
    %cst_344 = arith.constant dense<0.000000e+00> : vector<8xf32>
    %630 = vector.multi_reduction <add>, %629, %cst_344 [1] : vector<8x9xf32> to vector<8xf32>
    %631 = vector.shape_cast %630 : vector<8xf32> to vector<8x1xf32>
    %c3_i32 = arith.constant 3 : i32
    %632 = vector.broadcast %c3_i32 : i32 to vector<8x9xi32>
    %633 = arith.cmpi eq, %613, %632 : vector<8x9xi32>
    %cst_345 = arith.constant 0.000000e+00 : f32
    %634 = vector.broadcast %cst_345 : f32 to vector<8x9xf32>
    %635 = arith.select %633, %611, %634 : vector<8x9xi1>, vector<8x9xf32>
    %cst_346 = arith.constant dense<0.000000e+00> : vector<8xf32>
    %636 = vector.multi_reduction <add>, %635, %cst_346 [1] : vector<8x9xf32> to vector<8xf32>
    %637 = vector.shape_cast %636 : vector<8xf32> to vector<8x1xf32>
    %c4_i32 = arith.constant 4 : i32
    %638 = vector.broadcast %c4_i32 : i32 to vector<8x9xi32>
    %639 = arith.cmpi eq, %613, %638 : vector<8x9xi32>
    %cst_347 = arith.constant 0.000000e+00 : f32
    %640 = vector.broadcast %cst_347 : f32 to vector<8x9xf32>
    %641 = arith.select %639, %611, %640 : vector<8x9xi1>, vector<8x9xf32>
    %cst_348 = arith.constant dense<0.000000e+00> : vector<8xf32>
    %642 = vector.multi_reduction <add>, %641, %cst_348 [1] : vector<8x9xf32> to vector<8xf32>
    %643 = vector.shape_cast %642 : vector<8xf32> to vector<8x1xf32>
    %c5_i32 = arith.constant 5 : i32
    %644 = vector.broadcast %c5_i32 : i32 to vector<8x9xi32>
    %645 = arith.cmpi eq, %613, %644 : vector<8x9xi32>
    %cst_349 = arith.constant 0.000000e+00 : f32
    %646 = vector.broadcast %cst_349 : f32 to vector<8x9xf32>
    %647 = arith.select %645, %611, %646 : vector<8x9xi1>, vector<8x9xf32>
    %cst_350 = arith.constant dense<0.000000e+00> : vector<8xf32>
    %648 = vector.multi_reduction <add>, %647, %cst_350 [1] : vector<8x9xf32> to vector<8xf32>
    %649 = vector.shape_cast %648 : vector<8xf32> to vector<8x1xf32>
    %c6_i32 = arith.constant 6 : i32
    %650 = vector.broadcast %c6_i32 : i32 to vector<8x9xi32>
    %651 = arith.cmpi eq, %613, %650 : vector<8x9xi32>
    %cst_351 = arith.constant 0.000000e+00 : f32
    %652 = vector.broadcast %cst_351 : f32 to vector<8x9xf32>
    %653 = arith.select %651, %611, %652 : vector<8x9xi1>, vector<8x9xf32>
    %cst_352 = arith.constant dense<0.000000e+00> : vector<8xf32>
    %654 = vector.multi_reduction <add>, %653, %cst_352 [1] : vector<8x9xf32> to vector<8xf32>
    %655 = vector.shape_cast %654 : vector<8xf32> to vector<8x1xf32>
    %c7_i32 = arith.constant 7 : i32
    %656 = vector.broadcast %c7_i32 : i32 to vector<8x9xi32>
    %657 = arith.cmpi eq, %613, %656 : vector<8x9xi32>
    %cst_353 = arith.constant 0.000000e+00 : f32
    %658 = vector.broadcast %cst_353 : f32 to vector<8x9xf32>
    %659 = arith.select %657, %611, %658 : vector<8x9xi1>, vector<8x9xf32>
    %cst_354 = arith.constant dense<0.000000e+00> : vector<8xf32>
    %660 = vector.multi_reduction <add>, %659, %cst_354 [1] : vector<8x9xf32> to vector<8xf32>
    %661 = vector.shape_cast %660 : vector<8xf32> to vector<8x1xf32>
    %c8_i32 = arith.constant 8 : i32
    %662 = vector.broadcast %c8_i32 : i32 to vector<8x9xi32>
    %663 = arith.cmpi eq, %613, %662 : vector<8x9xi32>
    %cst_355 = arith.constant 0.000000e+00 : f32
    %664 = vector.broadcast %cst_355 : f32 to vector<8x9xf32>
    %665 = arith.select %663, %611, %664 : vector<8x9xi1>, vector<8x9xf32>
    %cst_356 = arith.constant dense<0.000000e+00> : vector<8xf32>
    %666 = vector.multi_reduction <add>, %665, %cst_356 [1] : vector<8x9xf32> to vector<8xf32>
    %667 = vector.shape_cast %666 : vector<8xf32> to vector<8x1xf32>
    %cst_357 = arith.constant 0.000000e+00 : f32
    %668 = vector.broadcast %cst_357 : f32 to vector<8x1xf32>
    %669 = arith.mulf %619, %566 : vector<8x1xf32>
    %670 = arith.mulf %625, %581 : vector<8x1xf32>
    %671 = arith.addf %669, %670 : vector<8x1xf32>
    %672 = arith.mulf %631, %598 : vector<8x1xf32>
    %673 = arith.addf %671, %672 : vector<8x1xf32>
    %674 = arith.mulf %637, %566 : vector<8x1xf32>
    %675 = arith.mulf %643, %581 : vector<8x1xf32>
    %676 = arith.addf %674, %675 : vector<8x1xf32>
    %677 = arith.mulf %649, %598 : vector<8x1xf32>
    %678 = arith.addf %676, %677 : vector<8x1xf32>
    %679 = arith.mulf %655, %566 : vector<8x1xf32>
    %680 = arith.mulf %661, %581 : vector<8x1xf32>
    %681 = arith.addf %679, %680 : vector<8x1xf32>
    %682 = arith.mulf %667, %598 : vector<8x1xf32>
    %683 = arith.addf %681, %682 : vector<8x1xf32>
    %c0_i32_358 = arith.constant 0 : i32
    %684 = vector.broadcast %c0_i32_358 : i32 to vector<8x9xi32>
    %685 = arith.cmpi eq, %613, %684 : vector<8x9xi32>
    %cst_359 = arith.constant 0.000000e+00 : f32
    %686 = vector.broadcast %cst_359 : f32 to vector<8x9xf32>
    %687 = arith.select %685, %612, %686 : vector<8x9xi1>, vector<8x9xf32>
    %cst_360 = arith.constant dense<0.000000e+00> : vector<8xf32>
    %688 = vector.multi_reduction <add>, %687, %cst_360 [1] : vector<8x9xf32> to vector<8xf32>
    %689 = vector.shape_cast %688 : vector<8xf32> to vector<8x1xf32>
    %c1_i32_361 = arith.constant 1 : i32
    %690 = vector.broadcast %c1_i32_361 : i32 to vector<8x9xi32>
    %691 = arith.cmpi eq, %613, %690 : vector<8x9xi32>
    %cst_362 = arith.constant 0.000000e+00 : f32
    %692 = vector.broadcast %cst_362 : f32 to vector<8x9xf32>
    %693 = arith.select %691, %612, %692 : vector<8x9xi1>, vector<8x9xf32>
    %cst_363 = arith.constant dense<0.000000e+00> : vector<8xf32>
    %694 = vector.multi_reduction <add>, %693, %cst_363 [1] : vector<8x9xf32> to vector<8xf32>
    %695 = vector.shape_cast %694 : vector<8xf32> to vector<8x1xf32>
    %c2_i32_364 = arith.constant 2 : i32
    %696 = vector.broadcast %c2_i32_364 : i32 to vector<8x9xi32>
    %697 = arith.cmpi eq, %613, %696 : vector<8x9xi32>
    %cst_365 = arith.constant 0.000000e+00 : f32
    %698 = vector.broadcast %cst_365 : f32 to vector<8x9xf32>
    %699 = arith.select %697, %612, %698 : vector<8x9xi1>, vector<8x9xf32>
    %cst_366 = arith.constant dense<0.000000e+00> : vector<8xf32>
    %700 = vector.multi_reduction <add>, %699, %cst_366 [1] : vector<8x9xf32> to vector<8xf32>
    %701 = vector.shape_cast %700 : vector<8xf32> to vector<8x1xf32>
    %702 = arith.mulf %673, %689 : vector<8x1xf32>
    %703 = arith.mulf %678, %695 : vector<8x1xf32>
    %704 = arith.addf %702, %703 : vector<8x1xf32>
    %705 = arith.mulf %683, %701 : vector<8x1xf32>
    %706 = arith.addf %704, %705 : vector<8x1xf32>
    %707 = arith.mulf %673, %673 : vector<8x1xf32>
    %708 = arith.mulf %678, %678 : vector<8x1xf32>
    %709 = arith.addf %707, %708 : vector<8x1xf32>
    %710 = arith.mulf %683, %683 : vector<8x1xf32>
    %711 = arith.addf %709, %710 : vector<8x1xf32>
    %712 = math.sqrt %711 : vector<8x1xf32>
    %713 = arith.mulf %689, %689 : vector<8x1xf32>
    %714 = arith.mulf %695, %695 : vector<8x1xf32>
    %715 = arith.addf %713, %714 : vector<8x1xf32>
    %716 = arith.mulf %701, %701 : vector<8x1xf32>
    %717 = arith.addf %715, %716 : vector<8x1xf32>
    %718 = math.sqrt %717 : vector<8x1xf32>
    %cst_367 = arith.constant 9.99999993E-9 : f32
    %719 = vector.broadcast %cst_367 : f32 to vector<8x1xf32>
    %720 = arith.maximumf %712, %719 : vector<8x1xf32>
    %cst_368 = arith.constant 9.99999993E-9 : f32
    %721 = vector.broadcast %cst_368 : f32 to vector<8x1xf32>
    %722 = arith.maximumf %718, %721 : vector<8x1xf32>
    %723 = arith.mulf %720, %722 : vector<8x1xf32>
    %724 = arith.divf %706, %723 : vector<8x1xf32>
    %cst_369 = arith.constant 1.000000e+00 : f32
    %725 = vector.broadcast %cst_369 : f32 to vector<8x1xf32>
    %726 = arith.subf %725, %724 : vector<8x1xf32>
    %727 = arith.addf %668, %726 : vector<8x1xf32>
    %728 = arith.mulf %619, %571 : vector<8x1xf32>
    %729 = arith.mulf %625, %588 : vector<8x1xf32>
    %730 = arith.addf %728, %729 : vector<8x1xf32>
    %731 = arith.mulf %631, %603 : vector<8x1xf32>
    %732 = arith.addf %730, %731 : vector<8x1xf32>
    %733 = arith.mulf %637, %571 : vector<8x1xf32>
    %734 = arith.mulf %643, %588 : vector<8x1xf32>
    %735 = arith.addf %733, %734 : vector<8x1xf32>
    %736 = arith.mulf %649, %603 : vector<8x1xf32>
    %737 = arith.addf %735, %736 : vector<8x1xf32>
    %738 = arith.mulf %655, %571 : vector<8x1xf32>
    %739 = arith.mulf %661, %588 : vector<8x1xf32>
    %740 = arith.addf %738, %739 : vector<8x1xf32>
    %741 = arith.mulf %667, %603 : vector<8x1xf32>
    %742 = arith.addf %740, %741 : vector<8x1xf32>
    %c3_i32_370 = arith.constant 3 : i32
    %743 = vector.broadcast %c3_i32_370 : i32 to vector<8x9xi32>
    %744 = arith.cmpi eq, %613, %743 : vector<8x9xi32>
    %cst_371 = arith.constant 0.000000e+00 : f32
    %745 = vector.broadcast %cst_371 : f32 to vector<8x9xf32>
    %746 = arith.select %744, %612, %745 : vector<8x9xi1>, vector<8x9xf32>
    %cst_372 = arith.constant dense<0.000000e+00> : vector<8xf32>
    %747 = vector.multi_reduction <add>, %746, %cst_372 [1] : vector<8x9xf32> to vector<8xf32>
    %748 = vector.shape_cast %747 : vector<8xf32> to vector<8x1xf32>
    %c4_i32_373 = arith.constant 4 : i32
    %749 = vector.broadcast %c4_i32_373 : i32 to vector<8x9xi32>
    %750 = arith.cmpi eq, %613, %749 : vector<8x9xi32>
    %cst_374 = arith.constant 0.000000e+00 : f32
    %751 = vector.broadcast %cst_374 : f32 to vector<8x9xf32>
    %752 = arith.select %750, %612, %751 : vector<8x9xi1>, vector<8x9xf32>
    %cst_375 = arith.constant dense<0.000000e+00> : vector<8xf32>
    %753 = vector.multi_reduction <add>, %752, %cst_375 [1] : vector<8x9xf32> to vector<8xf32>
    %754 = vector.shape_cast %753 : vector<8xf32> to vector<8x1xf32>
    %c5_i32_376 = arith.constant 5 : i32
    %755 = vector.broadcast %c5_i32_376 : i32 to vector<8x9xi32>
    %756 = arith.cmpi eq, %613, %755 : vector<8x9xi32>
    %cst_377 = arith.constant 0.000000e+00 : f32
    %757 = vector.broadcast %cst_377 : f32 to vector<8x9xf32>
    %758 = arith.select %756, %612, %757 : vector<8x9xi1>, vector<8x9xf32>
    %cst_378 = arith.constant dense<0.000000e+00> : vector<8xf32>
    %759 = vector.multi_reduction <add>, %758, %cst_378 [1] : vector<8x9xf32> to vector<8xf32>
    %760 = vector.shape_cast %759 : vector<8xf32> to vector<8x1xf32>
    %761 = arith.mulf %732, %748 : vector<8x1xf32>
    %762 = arith.mulf %737, %754 : vector<8x1xf32>
    %763 = arith.addf %761, %762 : vector<8x1xf32>
    %764 = arith.mulf %742, %760 : vector<8x1xf32>
    %765 = arith.addf %763, %764 : vector<8x1xf32>
    %766 = arith.mulf %732, %732 : vector<8x1xf32>
    %767 = arith.mulf %737, %737 : vector<8x1xf32>
    %768 = arith.addf %766, %767 : vector<8x1xf32>
    %769 = arith.mulf %742, %742 : vector<8x1xf32>
    %770 = arith.addf %768, %769 : vector<8x1xf32>
    %771 = math.sqrt %770 : vector<8x1xf32>
    %772 = arith.mulf %748, %748 : vector<8x1xf32>
    %773 = arith.mulf %754, %754 : vector<8x1xf32>
    %774 = arith.addf %772, %773 : vector<8x1xf32>
    %775 = arith.mulf %760, %760 : vector<8x1xf32>
    %776 = arith.addf %774, %775 : vector<8x1xf32>
    %777 = math.sqrt %776 : vector<8x1xf32>
    %cst_379 = arith.constant 9.99999993E-9 : f32
    %778 = vector.broadcast %cst_379 : f32 to vector<8x1xf32>
    %779 = arith.maximumf %771, %778 : vector<8x1xf32>
    %cst_380 = arith.constant 9.99999993E-9 : f32
    %780 = vector.broadcast %cst_380 : f32 to vector<8x1xf32>
    %781 = arith.maximumf %777, %780 : vector<8x1xf32>
    %782 = arith.mulf %779, %781 : vector<8x1xf32>
    %783 = arith.divf %765, %782 : vector<8x1xf32>
    %cst_381 = arith.constant 1.000000e+00 : f32
    %784 = vector.broadcast %cst_381 : f32 to vector<8x1xf32>
    %785 = arith.subf %784, %783 : vector<8x1xf32>
    %786 = arith.addf %727, %785 : vector<8x1xf32>
    %787 = arith.mulf %619, %576 : vector<8x1xf32>
    %788 = arith.mulf %625, %593 : vector<8x1xf32>
    %789 = arith.addf %787, %788 : vector<8x1xf32>
    %790 = arith.mulf %631, %610 : vector<8x1xf32>
    %791 = arith.addf %789, %790 : vector<8x1xf32>
    %792 = arith.mulf %637, %576 : vector<8x1xf32>
    %793 = arith.mulf %643, %593 : vector<8x1xf32>
    %794 = arith.addf %792, %793 : vector<8x1xf32>
    %795 = arith.mulf %649, %610 : vector<8x1xf32>
    %796 = arith.addf %794, %795 : vector<8x1xf32>
    %797 = arith.mulf %655, %576 : vector<8x1xf32>
    %798 = arith.mulf %661, %593 : vector<8x1xf32>
    %799 = arith.addf %797, %798 : vector<8x1xf32>
    %800 = arith.mulf %667, %610 : vector<8x1xf32>
    %801 = arith.addf %799, %800 : vector<8x1xf32>
    %c6_i32_382 = arith.constant 6 : i32
    %802 = vector.broadcast %c6_i32_382 : i32 to vector<8x9xi32>
    %803 = arith.cmpi eq, %613, %802 : vector<8x9xi32>
    %cst_383 = arith.constant 0.000000e+00 : f32
    %804 = vector.broadcast %cst_383 : f32 to vector<8x9xf32>
    %805 = arith.select %803, %612, %804 : vector<8x9xi1>, vector<8x9xf32>
    %cst_384 = arith.constant dense<0.000000e+00> : vector<8xf32>
    %806 = vector.multi_reduction <add>, %805, %cst_384 [1] : vector<8x9xf32> to vector<8xf32>
    %807 = vector.shape_cast %806 : vector<8xf32> to vector<8x1xf32>
    %c7_i32_385 = arith.constant 7 : i32
    %808 = vector.broadcast %c7_i32_385 : i32 to vector<8x9xi32>
    %809 = arith.cmpi eq, %613, %808 : vector<8x9xi32>
    %cst_386 = arith.constant 0.000000e+00 : f32
    %810 = vector.broadcast %cst_386 : f32 to vector<8x9xf32>
    %811 = arith.select %809, %612, %810 : vector<8x9xi1>, vector<8x9xf32>
    %cst_387 = arith.constant dense<0.000000e+00> : vector<8xf32>
    %812 = vector.multi_reduction <add>, %811, %cst_387 [1] : vector<8x9xf32> to vector<8xf32>
    %813 = vector.shape_cast %812 : vector<8xf32> to vector<8x1xf32>
    %c8_i32_388 = arith.constant 8 : i32
    %814 = vector.broadcast %c8_i32_388 : i32 to vector<8x9xi32>
    %815 = arith.cmpi eq, %613, %814 : vector<8x9xi32>
    %cst_389 = arith.constant 0.000000e+00 : f32
    %816 = vector.broadcast %cst_389 : f32 to vector<8x9xf32>
    %817 = arith.select %815, %612, %816 : vector<8x9xi1>, vector<8x9xf32>
    %cst_390 = arith.constant dense<0.000000e+00> : vector<8xf32>
    %818 = vector.multi_reduction <add>, %817, %cst_390 [1] : vector<8x9xf32> to vector<8xf32>
    %819 = vector.shape_cast %818 : vector<8xf32> to vector<8x1xf32>
    %820 = arith.mulf %791, %807 : vector<8x1xf32>
    %821 = arith.mulf %796, %813 : vector<8x1xf32>
    %822 = arith.addf %820, %821 : vector<8x1xf32>
    %823 = arith.mulf %801, %819 : vector<8x1xf32>
    %824 = arith.addf %822, %823 : vector<8x1xf32>
    %825 = arith.mulf %791, %791 : vector<8x1xf32>
    %826 = arith.mulf %796, %796 : vector<8x1xf32>
    %827 = arith.addf %825, %826 : vector<8x1xf32>
    %828 = arith.mulf %801, %801 : vector<8x1xf32>
    %829 = arith.addf %827, %828 : vector<8x1xf32>
    %830 = math.sqrt %829 : vector<8x1xf32>
    %831 = arith.mulf %807, %807 : vector<8x1xf32>
    %832 = arith.mulf %813, %813 : vector<8x1xf32>
    %833 = arith.addf %831, %832 : vector<8x1xf32>
    %834 = arith.mulf %819, %819 : vector<8x1xf32>
    %835 = arith.addf %833, %834 : vector<8x1xf32>
    %836 = math.sqrt %835 : vector<8x1xf32>
    %cst_391 = arith.constant 9.99999993E-9 : f32
    %837 = vector.broadcast %cst_391 : f32 to vector<8x1xf32>
    %838 = arith.maximumf %830, %837 : vector<8x1xf32>
    %cst_392 = arith.constant 9.99999993E-9 : f32
    %839 = vector.broadcast %cst_392 : f32 to vector<8x1xf32>
    %840 = arith.maximumf %836, %839 : vector<8x1xf32>
    %841 = arith.mulf %838, %840 : vector<8x1xf32>
    %842 = arith.divf %824, %841 : vector<8x1xf32>
    %cst_393 = arith.constant 1.000000e+00 : f32
    %843 = vector.broadcast %cst_393 : f32 to vector<8x1xf32>
    %844 = arith.subf %843, %842 : vector<8x1xf32>
    %845 = arith.addf %786, %844 : vector<8x1xf32>
    %cst_394 = arith.constant dense<0.000000e+00> : vector<1xf32>
    %846 = vector.multi_reduction <add>, %845, %cst_394 [0] : vector<8x1xf32> to vector<1xf32>
    %847 = vector.shape_cast %846 : vector<1xf32> to vector<1x1xf32>
    %cst_395 = arith.constant 8.000000e+00 : f32
    %848 = vector.broadcast %cst_395 : f32 to vector<1x1xf32>
    %849 = arith.divf %847, %848 : vector<1x1xf32>
    %850 = tpu.iota {dimensions = array<i32: 1>} : vector<1x128xi32>
    %c0_i32_396 = arith.constant 0 : i32
    %851 = vector.broadcast %c0_i32_396 : i32 to vector<1x128xi32>
    %852 = arith.cmpi eq, %850, %851 : vector<1x128xi32>
    %c1_i32_397 = arith.constant 1 : i32
    %853 = vector.broadcast %c1_i32_397 : i32 to vector<1x128xi32>
    %854 = arith.cmpi eq, %850, %853 : vector<1x128xi32>
    %c2_i32_398 = arith.constant 2 : i32
    %855 = vector.broadcast %c2_i32_398 : i32 to vector<1x128xi32>
    %856 = arith.cmpi eq, %850, %855 : vector<1x128xi32>
    %cst_399 = arith.constant 0.000000e+00 : f32
    %857 = vector.shape_cast %521 : vector<1x1xf32> to vector<1x1xf32>
    %858 = vector.broadcast %857 : vector<1x1xf32> to vector<1x128xf32>
    %859 = vector.broadcast %cst_399 : f32 to vector<1x128xf32>
    %860 = arith.select %856, %858, %859 : vector<1x128xi1>, vector<1x128xf32>
    %861 = vector.shape_cast %530 : vector<1x1xf32> to vector<1x1xf32>
    %862 = vector.broadcast %861 : vector<1x1xf32> to vector<1x128xf32>
    %863 = arith.select %854, %862, %860 : vector<1x128xi1>, vector<1x128xf32>
    %864 = vector.shape_cast %849 : vector<1x1xf32> to vector<1x1xf32>
    %865 = vector.broadcast %864 : vector<1x1xf32> to vector<1x128xf32>
    %866 = arith.select %852, %865, %863 : vector<1x128xi1>, vector<1x128xf32>
    %c0_400 = arith.constant 0 : index
    %c0_401 = arith.constant 0 : index
    %867 = vector.load %arg33[%c0_400, %c0_401] : memref<1x128xf32, #tpu.memory_space<vmem>>, vector<1x128xf32>
    tpu.vector_store %arg33[%c0_400, %c0_401], %866 {strides = array<i32>} : memref<1x128xf32, #tpu.memory_space<vmem>>, vector<1x128xf32>,
    return
  }
  func.func @transform_0(%arg0: i32) -> (i32, i32) {
    %c0_i32 = arith.constant 0 : i32
    %c0_i32_0 = arith.constant 0 : i32
    %c0_i32_1 = arith.constant 0 : i32
    return %c0_i32, %c0_i32_0 : i32, i32
  }
  func.func @transform_1(%arg0: i32) -> (i32, i32) {
    %c0_i32 = arith.constant 0 : i32
    %c0_i32_0 = arith.constant 0 : i32
    %c0_i32_1 = arith.constant 0 : i32
    return %c0_i32, %c0_i32_0 : i32, i32
  }
  func.func @transform_2(%arg0: i32) -> (i32, i32) {
    %c0_i32 = arith.constant 0 : i32
    %c0_i32_0 = arith.constant 0 : i32
    %c0_i32_1 = arith.constant 0 : i32
    return %c0_i32, %c0_i32_0 : i32, i32
  }
  func.func @transform_3(%arg0: i32) -> (i32, i32) {
    %c0_i32 = arith.constant 0 : i32
    %c0_i32_0 = arith.constant 0 : i32
    %c0_i32_1 = arith.constant 0 : i32
    return %c0_i32, %c0_i32_0 : i32, i32
  }
  func.func @transform_4(%arg0: i32) -> (i32, i32) {
    %c0_i32 = arith.constant 0 : i32
    %c0_i32_0 = arith.constant 0 : i32
    %c0_i32_1 = arith.constant 0 : i32
    return %c0_i32, %c0_i32_0 : i32, i32
  }
  func.func @transform_5(%arg0: i32) -> (i32, i32) {
    %c0_i32 = arith.constant 0 : i32
    %c0_i32_0 = arith.constant 0 : i32
    %c0_i32_1 = arith.constant 0 : i32
    return %c0_i32, %c0_i32_0 : i32, i32
  }
  func.func @transform_6(%arg0: i32) -> (i32, i32) {
    %c0_i32 = arith.constant 0 : i32
    %c0_i32_0 = arith.constant 0 : i32
    %c0_i32_1 = arith.constant 0 : i32
    return %c0_i32, %c0_i32_0 : i32, i32
  }
  func.func @transform_7(%arg0: i32) -> (i32, i32) {
    %c0_i32 = arith.constant 0 : i32
    %c0_i32_0 = arith.constant 0 : i32
    %c0_i32_1 = arith.constant 0 : i32
    return %c0_i32, %c0_i32_0 : i32, i32
  }
  func.func @transform_8(%arg0: i32) -> (i32, i32) {
    %c0_i32 = arith.constant 0 : i32
    %c0_i32_0 = arith.constant 0 : i32
    %c0_i32_1 = arith.constant 0 : i32
    return %c0_i32, %c0_i32_0 : i32, i32
  }
  func.func @transform_9(%arg0: i32) -> (i32, i32) {
    %c0_i32 = arith.constant 0 : i32
    %c0_i32_0 = arith.constant 0 : i32
    %c0_i32_1 = arith.constant 0 : i32
    return %c0_i32, %c0_i32_0 : i32, i32
  }
  func.func @transform_10(%arg0: i32) -> (i32, i32) {
    %c0_i32 = arith.constant 0 : i32
    %c0_i32_0 = arith.constant 0 : i32
    %c0_i32_1 = arith.constant 0 : i32
    return %c0_i32, %c0_i32_0 : i32, i32
  }
  func.func @transform_11(%arg0: i32) -> (i32, i32) {
    %c0_i32 = arith.constant 0 : i32
    %c0_i32_0 = arith.constant 0 : i32
    %c0_i32_1 = arith.constant 0 : i32
    return %c0_i32, %c0_i32_0 : i32, i32
  }
  func.func @transform_12(%arg0: i32) -> (i32, i32) {
    %c0_i32 = arith.constant 0 : i32
    %c0_i32_0 = arith.constant 0 : i32
    %c0_i32_1 = arith.constant 0 : i32
    return %c0_i32, %c0_i32_0 : i32, i32
  }
  func.func @transform_13(%arg0: i32) -> (i32, i32) {
    %c0_i32 = arith.constant 0 : i32
    %c0_i32_0 = arith.constant 0 : i32
    %c0_i32_1 = arith.constant 0 : i32
    return %c0_i32, %c0_i32_0 : i32, i32
  }
  func.func @transform_14(%arg0: i32) -> (i32, i32, i32) {
    %c0_i32 = arith.constant 0 : i32
    %c0_i32_0 = arith.constant 0 : i32
    %c0_i32_1 = arith.constant 0 : i32
    %c0_i32_2 = arith.constant 0 : i32
    return %c0_i32, %c0_i32_0, %c0_i32_1 : i32, i32, i32
  }
  func.func @transform_15(%arg0: i32) -> (i32, i32, i32) {
    %c0_i32 = arith.constant 0 : i32
    %c0_i32_0 = arith.constant 0 : i32
    %c0_i32_1 = arith.constant 0 : i32
    %c0_i32_2 = arith.constant 0 : i32
    return %c0_i32, %c0_i32_0, %c0_i32_1 : i32, i32, i32
  }
  func.func @transform_16(%arg0: i32) -> (i32, i32, i32) {
    %c0_i32 = arith.constant 0 : i32
    %c0_i32_0 = arith.constant 0 : i32
    %c0_i32_1 = arith.constant 0 : i32
    %c0_i32_2 = arith.constant 0 : i32
    return %c0_i32, %c0_i32_0, %c0_i32_1 : i32, i32, i32
  }
  func.func @transform_17(%arg0: i32) -> (i32, i32, i32) {
    %c0_i32 = arith.constant 0 : i32
    %c0_i32_0 = arith.constant 0 : i32
    %c0_i32_1 = arith.constant 0 : i32
    %c0_i32_2 = arith.constant 0 : i32
    return %c0_i32, %c0_i32_0, %c0_i32_1 : i32, i32, i32
  }
  func.func @transform_18(%arg0: i32) -> (i32, i32, i32) {
    %c0_i32 = arith.constant 0 : i32
    %c0_i32_0 = arith.constant 0 : i32
    %c0_i32_1 = arith.constant 0 : i32
    %c0_i32_2 = arith.constant 0 : i32
    return %c0_i32, %c0_i32_0, %c0_i32_1 : i32, i32, i32
  }
  func.func @transform_19(%arg0: i32) -> (i32, i32, i32) {
    %c0_i32 = arith.constant 0 : i32
    %c0_i32_0 = arith.constant 0 : i32
    %c0_i32_1 = arith.constant 0 : i32
    %c0_i32_2 = arith.constant 0 : i32
    return %c0_i32, %c0_i32_0, %c0_i32_1 : i32, i32, i32
  }
  func.func @transform_20(%arg0: i32) -> (i32, i32, i32) {
    %c0_i32 = arith.constant 0 : i32
    %c0_i32_0 = arith.constant 0 : i32
    %c0_i32_1 = arith.constant 0 : i32
    %c0_i32_2 = arith.constant 0 : i32
    return %c0_i32, %c0_i32_0, %c0_i32_1 : i32, i32, i32
  }
  func.func @transform_21(%arg0: i32) -> (i32, i32, i32) {
    %c0_i32 = arith.constant 0 : i32
    %c0_i32_0 = arith.constant 0 : i32
    %c0_i32_1 = arith.constant 0 : i32
    %c0_i32_2 = arith.constant 0 : i32
    return %c0_i32, %c0_i32_0, %c0_i32_1 : i32, i32, i32
  }
  func.func @transform_22(%arg0: i32) -> (i32, i32, i32) {
    %c0_i32 = arith.constant 0 : i32
    %c0_i32_0 = arith.constant 0 : i32
    %c0_i32_1 = arith.constant 0 : i32
    %c0_i32_2 = arith.constant 0 : i32
    return %c0_i32, %c0_i32_0, %c0_i32_1 : i32, i32, i32
  }
  func.func @transform_23(%arg0: i32) -> (i32, i32, i32) {
    %c0_i32 = arith.constant 0 : i32
    %c0_i32_0 = arith.constant 0 : i32
    %c0_i32_1 = arith.constant 0 : i32
    %c0_i32_2 = arith.constant 0 : i32
    return %c0_i32, %c0_i32_0, %c0_i32_1 : i32, i32, i32
  }
  func.func @transform_24(%arg0: i32) -> (i32, i32, i32) {
    %c0_i32 = arith.constant 0 : i32
    %c0_i32_0 = arith.constant 0 : i32
    %c0_i32_1 = arith.constant 0 : i32
    %c0_i32_2 = arith.constant 0 : i32
    return %c0_i32, %c0_i32_0, %c0_i32_1 : i32, i32, i32
  }
  func.func @transform_25(%arg0: i32) -> (i32, i32, i32) {
    %c0_i32 = arith.constant 0 : i32
    %c0_i32_0 = arith.constant 0 : i32
    %c0_i32_1 = arith.constant 0 : i32
    %c0_i32_2 = arith.constant 0 : i32
    return %c0_i32, %c0_i32_0, %c0_i32_1 : i32, i32, i32
  }
  func.func @transform_26(%arg0: i32) -> (i32, i32, i32) {
    %c0_i32 = arith.constant 0 : i32
    %c0_i32_0 = arith.constant 0 : i32
    %c0_i32_1 = arith.constant 0 : i32
    %c0_i32_2 = arith.constant 0 : i32
    return %c0_i32, %c0_i32_0, %c0_i32_1 : i32, i32, i32
  }
  func.func @transform_27(%arg0: i32) -> (i32, i32, i32) {
    %c0_i32 = arith.constant 0 : i32
    %c0_i32_0 = arith.constant 0 : i32
    %c0_i32_1 = arith.constant 0 : i32
    %c0_i32_2 = arith.constant 0 : i32
    return %c0_i32, %c0_i32_0, %c0_i32_1 : i32, i32, i32
  }
  func.func @transform_28(%arg0: i32) -> (i32, i32, i32) {
    %c0_i32 = arith.constant 0 : i32
    %c0_i32_0 = arith.constant 0 : i32
    %c0_i32_1 = arith.constant 0 : i32
    %c0_i32_2 = arith.constant 0 : i32
    return %c0_i32, %c0_i32_0, %c0_i32_1 : i32, i32, i32
  }
  func.func @transform_29(%arg0: i32) -> (i32, i32, i32) {
    %c0_i32 = arith.constant 0 : i32
    %c0_i32_0 = arith.constant 0 : i32
    %c0_i32_1 = arith.constant 0 : i32
    %c0_i32_2 = arith.constant 0 : i32
    return %c0_i32, %c0_i32_0, %c0_i32_1 : i32, i32, i32
  }
  func.func @transform_30(%arg0: i32) -> (i32, i32) {
    %c0_i32 = arith.constant 0 : i32
    %c0_i32_0 = arith.constant 0 : i32
    %c0_i32_1 = arith.constant 0 : i32
    return %c0_i32, %c0_i32_0 : i32, i32
  }
  func.func @transform_31(%arg0: i32) -> (i32, i32) {
    %c0_i32 = arith.constant 0 : i32
    %c0_i32_0 = arith.constant 0 : i32
    %c0_i32_1 = arith.constant 0 : i32
    return %c0_i32, %c0_i32_0 : i32, i32
  }
  func.func @transform_32(%arg0: i32) -> (i32, i32) {
    %c0_i32 = arith.constant 0 : i32
    %c0_i32_0 = arith.constant 0 : i32
    %c0_i32_1 = arith.constant 0 : i32
    return %c0_i32, %c0_i32_0 : i32, i32
  }
}

</mosaic_0001>

<llo_original>
// kernel: full_dpm_forward.3
$region0: #{full_dpm_forward.3}
  #allocation0 [shape = 'u32[]', space=smem, size = 0x4, offset = 0x4, fixed_abs, tag = 'smem constant byte address 0x4 - core index']
  #allocation1 [shape = 'u32[144,128]{1,0:T(1,128)}', space=vmem, size = 0x12000, scoped, tag = 'internal scratch']
  %s0 = inlined_call_operand.smem [shape: u32[33], index: -1, kind: input, shape index: {}]
  %s1 = sld [smem:[%s0]]
  %s2 = scalar_lea.smem %s0, 1
  %s3 = sld [smem:[%s2]]
  %s4 = scalar_lea.smem %s0, 2
  %s5 = sld [smem:[%s4]]
  %s6 = scalar_lea.smem %s0, 3
  %s7 = sld [smem:[%s6]]
  %s8 = scalar_lea.smem %s0, 4
  %s9 = sld [smem:[%s8]]
  %s10 = scalar_lea.smem %s0, 5
  %s11 = sld [smem:[%s10]]
  %s12 = scalar_lea.smem %s0, 6
  %s13 = sld [smem:[%s12]]
  %s14 = scalar_lea.smem %s0, 7
  %s15 = sld [smem:[%s14]]
  %s16 = scalar_lea.smem %s0, 8
  %s17 = sld [smem:[%s16]]
  %s18 = scalar_lea.smem %s0, 9
  %s19 = sld [smem:[%s18]]
  %s20 = scalar_lea.smem %s0, 10
  %s21 = sld [smem:[%s20]]
  %s22 = scalar_lea.smem %s0, 11
  %s23 = sld [smem:[%s22]]
  %s24 = scalar_lea.smem %s0, 12
  %s25 = sld [smem:[%s24]]
  %s26 = scalar_lea.smem %s0, 13
  %s27 = sld [smem:[%s26]]
  %s28 = scalar_lea.smem %s0, 14
  %s29 = sld [smem:[%s28]]
  %s30 = scalar_lea.smem %s0, 15
  %s31 = sld [smem:[%s30]]
  %s32 = scalar_lea.smem %s0, 16
  %s33 = sld [smem:[%s32]]
  %s34 = scalar_lea.smem %s0, 17
  %s35 = sld [smem:[%s34]]
  %s36 = scalar_lea.smem %s0, 18
  %s37 = sld [smem:[%s36]]
  %s38 = scalar_lea.smem %s0, 19
  %s39 = sld [smem:[%s38]]
  %s40 = scalar_lea.smem %s0, 20
  %s41 = sld [smem:[%s40]]
  %s42 = scalar_lea.smem %s0, 21
  %s43 = sld [smem:[%s42]]
  %s44 = scalar_lea.smem %s0, 22
  %s45 = sld [smem:[%s44]]
  %s46 = scalar_lea.smem %s0, 23
  %s47 = sld [smem:[%s46]]
  %s48 = scalar_lea.smem %s0, 24
  %s49 = sld [smem:[%s48]]
  %s50 = scalar_lea.smem %s0, 25
  %s51 = sld [smem:[%s50]]
  %s52 = scalar_lea.smem %s0, 26
  %s53 = sld [smem:[%s52]]
  %s54 = scalar_lea.smem %s0, 27
  %s55 = sld [smem:[%s54]]
  %s56 = scalar_lea.smem %s0, 28
  %s57 = sld [smem:[%s56]]
  %s58 = scalar_lea.smem %s0, 29
  %s59 = sld [smem:[%s58]]
  %s60 = scalar_lea.smem %s0, 30
  %s61 = sld [smem:[%s60]]
  %s62 = scalar_lea.smem %s0, 31
  %s63 = sld [smem:[%s62]]
  %s64 = scalar_lea.smem %s0, 32
  %s65 = sld [smem:[%s64]]
  %s66 = sld [smem:[#allocation0]]
  $region138: #{full_dpm_forward.3} parent=0
    _
  %s68 = ssub.s32 1, %s66
  %s69 = scalar_select 0, %s68, %s66
  // Predicated region
  $region2: #{full_dpm_forward.3} parent=0 // pred_check
    _
  $region3: #{full_dpm_forward.3} parent=0 // pred_check_branch
    %71 = sbr.rel (0) target = $region5
  $region4: #{full_dpm_forward.3} parent=0 // pred_region
    _
  $region5: #{full_dpm_forward.3} parent=0 // pred_fallthru
    _
  // Predicated region
  $region6: #{full_dpm_forward.3} parent=0 // pred_check
    _
  $region7: #{full_dpm_forward.3} parent=0 // pred_check_branch
    %73 = sbr.rel (0) target = $region9
  $region8: #{full_dpm_forward.3} parent=0 // pred_region
    _
  $region9: #{full_dpm_forward.3} parent=0 // pred_fallthru
    _
  // Predicated region
  $region10: #{full_dpm_forward.3} parent=0 // pred_check
    _
  $region11: #{full_dpm_forward.3} parent=0 // pred_check_branch
    %75 = sbr.rel (0) target = $region13
  $region12: #{full_dpm_forward.3} parent=0 // pred_region
    _
  $region13: #{full_dpm_forward.3} parent=0 // pred_fallthru
    _
  // Predicated region
  $region14: #{full_dpm_forward.3} parent=0 // pred_check
    _
  $region15: #{full_dpm_forward.3} parent=0 // pred_check_branch
    %77 = sbr.rel (0) target = $region17
  $region16: #{full_dpm_forward.3} parent=0 // pred_region
    _
  $region17: #{full_dpm_forward.3} parent=0 // pred_fallthru
    _
  // Predicated region
  $region18: #{full_dpm_forward.3} parent=0 // pred_check
    _
  $region19: #{full_dpm_forward.3} parent=0 // pred_check_branch
    %79 = sbr.rel (0) target = $region21
  $region20: #{full_dpm_forward.3} parent=0 // pred_region
    _
  $region21: #{full_dpm_forward.3} parent=0 // pred_fallthru
    _
  // Predicated region
  $region22: #{full_dpm_forward.3} parent=0 // pred_check
    _
  $region23: #{full_dpm_forward.3} parent=0 // pred_check_branch
    %81 = sbr.rel (0) target = $region25
  $region24: #{full_dpm_forward.3} parent=0 // pred_region
    _
  $region25: #{full_dpm_forward.3} parent=0 // pred_fallthru
    _
  // Predicated region
  $region26: #{full_dpm_forward.3} parent=0 // pred_check
    _
  $region27: #{full_dpm_forward.3} parent=0 // pred_check_branch
    %83 = sbr.rel (0) target = $region29
  $region28: #{full_dpm_forward.3} parent=0 // pred_region
    _
  $region29: #{full_dpm_forward.3} parent=0 // pred_fallthru
    _
  // Predicated region
  $region30: #{full_dpm_forward.3} parent=0 // pred_check
    _
  $region31: #{full_dpm_forward.3} parent=0 // pred_check_branch
    %85 = sbr.rel (0) target = $region33
  $region32: #{full_dpm_forward.3} parent=0 // pred_region
    _
  $region33: #{full_dpm_forward.3} parent=0 // pred_fallthru
    _
  // Predicated region
  $region34: #{full_dpm_forward.3} parent=0 // pred_check
    _
  $region35: #{full_dpm_forward.3} parent=0 // pred_check_branch
    %87 = sbr.rel (0) target = $region37
  $region36: #{full_dpm_forward.3} parent=0 // pred_region
    _
  $region37: #{full_dpm_forward.3} parent=0 // pred_fallthru
    _
  // Predicated region
  $region38: #{full_dpm_forward.3} parent=0 // pred_check
    _
  $region39: #{full_dpm_forward.3} parent=0 // pred_check_branch
    %89 = sbr.rel (0) target = $region41
  $region40: #{full_dpm_forward.3} parent=0 // pred_region
    _
  $region41: #{full_dpm_forward.3} parent=0 // pred_fallthru
    _
  // Predicated region
  $region42: #{full_dpm_forward.3} parent=0 // pred_check
    _
  $region43: #{full_dpm_forward.3} parent=0 // pred_check_branch
    %91 = sbr.rel (0) target = $region45
  $region44: #{full_dpm_forward.3} parent=0 // pred_region
    _
  $region45: #{full_dpm_forward.3} parent=0 // pred_fallthru
    _
  // Predicated region
  $region46: #{full_dpm_forward.3} parent=0 // pred_check
    _
  $region47: #{full_dpm_forward.3} parent=0 // pred_check_branch
    %93 = sbr.rel (0) target = $region49
  $region48: #{full_dpm_forward.3} parent=0 // pred_region
    _
  $region49: #{full_dpm_forward.3} parent=0 // pred_fallthru
    _
  // Predicated region
  $region50: #{full_dpm_forward.3} parent=0 // pred_check
    _
  $region51: #{full_dpm_forward.3} parent=0 // pred_check_branch
    %95 = sbr.rel (0) target = $region53
  $region52: #{full_dpm_forward.3} parent=0 // pred_region
    _
  $region53: #{full_dpm_forward.3} parent=0 // pred_fallthru
    _
  // Predicated region
  $region54: #{full_dpm_forward.3} parent=0 // pred_check
    _
  $region55: #{full_dpm_forward.3} parent=0 // pred_check_branch
    %97 = sbr.rel (0) target = $region57
  $region56: #{full_dpm_forward.3} parent=0 // pred_region
    _
  $region57: #{full_dpm_forward.3} parent=0 // pred_fallthru
    _
  // Predicated region
  $region58: #{full_dpm_forward.3} parent=0 // pred_check
    _
  $region59: #{full_dpm_forward.3} parent=0 // pred_check_branch
    %99 = sbr.rel (0) target = $region61
  $region60: #{full_dpm_forward.3} parent=0 // pred_region
    _
  $region61: #{full_dpm_forward.3} parent=0 // pred_fallthru
    _
  // Predicated region
  $region62: #{full_dpm_forward.3} parent=0 // pred_check
    _
  $region63: #{full_dpm_forward.3} parent=0 // pred_check_branch
    %101 = sbr.rel (0) target = $region65
  $region64: #{full_dpm_forward.3} parent=0 // pred_region
    _
  $region65: #{full_dpm_forward.3} parent=0 // pred_fallthru
    _
  // Predicated region
  $region66: #{full_dpm_forward.3} parent=0 // pred_check
    _
  $region67: #{full_dpm_forward.3} parent=0 // pred_check_branch
    %103 = sbr.rel (0) target = $region69
  $region68: #{full_dpm_forward.3} parent=0 // pred_region
    _
  $region69: #{full_dpm_forward.3} parent=0 // pred_fallthru
    _
  // Predicated region
  $region70: #{full_dpm_forward.3} parent=0 // pred_check
    _
  $region71: #{full_dpm_forward.3} parent=0 // pred_check_branch
    %105 = sbr.rel (0) target = $region73
  $region72: #{full_dpm_forward.3} parent=0 // pred_region
    _
  $region73: #{full_dpm_forward.3} parent=0 // pred_fallthru
    _
  // Predicated region
  $region74: #{full_dpm_forward.3} parent=0 // pred_check
    _
  $region75: #{full_dpm_forward.3} parent=0 // pred_check_branch
    %107 = sbr.rel (0) target = $region77
  $region76: #{full_dpm_forward.3} parent=0 // pred_region
    _
  $region77: #{full_dpm_forward.3} parent=0 // pred_fallthru
    _
  // Predicated region
  $region78: #{full_dpm_forward.3} parent=0 // pred_check
    _
  $region79: #{full_dpm_forward.3} parent=0 // pred_check_branch
    %109 = sbr.rel (0) target = $region81
  $region80: #{full_dpm_forward.3} parent=0 // pred_region
    _
  $region81: #{full_dpm_forward.3} parent=0 // pred_fallthru
    _
  // Predicated region
  $region82: #{full_dpm_forward.3} parent=0 // pred_check
    _
  $region83: #{full_dpm_forward.3} parent=0 // pred_check_branch
    %111 = sbr.rel (0) target = $region85
  $region84: #{full_dpm_forward.3} parent=0 // pred_region
    _
  $region85: #{full_dpm_forward.3} parent=0 // pred_fallthru
    _
  // Predicated region
  $region86: #{full_dpm_forward.3} parent=0 // pred_check
    _
  $region87: #{full_dpm_forward.3} parent=0 // pred_check_branch
    %113 = sbr.rel (0) target = $region89
  $region88: #{full_dpm_forward.3} parent=0 // pred_region
    _
  $region89: #{full_dpm_forward.3} parent=0 // pred_fallthru
    _
  // Predicated region
  $region90: #{full_dpm_forward.3} parent=0 // pred_check
    _
  $region91: #{full_dpm_forward.3} parent=0 // pred_check_branch
    %115 = sbr.rel (0) target = $region93
  $region92: #{full_dpm_forward.3} parent=0 // pred_region
    _
  $region93: #{full_dpm_forward.3} parent=0 // pred_fallthru
    _
  // Predicated region
  $region94: #{full_dpm_forward.3} parent=0 // pred_check
    _
  $region95: #{full_dpm_forward.3} parent=0 // pred_check_branch
    %117 = sbr.rel (0) target = $region97
  $region96: #{full_dpm_forward.3} parent=0 // pred_region
    _
  $region97: #{full_dpm_forward.3} parent=0 // pred_fallthru
    _
  // Predicated region
  $region98: #{full_dpm_forward.3} parent=0 // pred_check
    _
  $region99: #{full_dpm_forward.3} parent=0 // pred_check_branch
    %119 = sbr.rel (0) target = $region101
  $region100: #{full_dpm_forward.3} parent=0 // pred_region
    _
  $region101: #{full_dpm_forward.3} parent=0 // pred_fallthru
    _
  // Predicated region
  $region102: #{full_dpm_forward.3} parent=0 // pred_check
    _
  $region103: #{full_dpm_forward.3} parent=0 // pred_check_branch
    %121 = sbr.rel (0) target = $region105
  $region104: #{full_dpm_forward.3} parent=0 // pred_region
    _
  $region105: #{full_dpm_forward.3} parent=0 // pred_fallthru
    _
  // Predicated region
  $region106: #{full_dpm_forward.3} parent=0 // pred_check
    _
  $region107: #{full_dpm_forward.3} parent=0 // pred_check_branch
    %123 = sbr.rel (0) target = $region109
  $region108: #{full_dpm_forward.3} parent=0 // pred_region
    _
  $region109: #{full_dpm_forward.3} parent=0 // pred_fallthru
    _
  // Predicated region
  $region110: #{full_dpm_forward.3} parent=0 // pred_check
    _
  $region111: #{full_dpm_forward.3} parent=0 // pred_check_branch
    %125 = sbr.rel (0) target = $region113
  $region112: #{full_dpm_forward.3} parent=0 // pred_region
    _
  $region113: #{full_dpm_forward.3} parent=0 // pred_fallthru
    _
  // Predicated region
  $region114: #{full_dpm_forward.3} parent=0 // pred_check
    _
  $region115: #{full_dpm_forward.3} parent=0 // pred_check_branch
    %127 = sbr.rel (0) target = $region117
  $region116: #{full_dpm_forward.3} parent=0 // pred_region
    _
  $region117: #{full_dpm_forward.3} parent=0 // pred_fallthru
    _
  // Predicated region
  $region118: #{full_dpm_forward.3} parent=0 // pred_check
    _
  $region119: #{full_dpm_forward.3} parent=0 // pred_check_branch
    %129 = sbr.rel (0) target = $region121
  $region120: #{full_dpm_forward.3} parent=0 // pred_region
    _
  $region121: #{full_dpm_forward.3} parent=0 // pred_fallthru
    _
  // Predicated region
  $region122: #{full_dpm_forward.3} parent=0 // pred_check
    _
  $region123: #{full_dpm_forward.3} parent=0 // pred_check_branch
    %131 = sbr.rel (0) target = $region125
  $region124: #{full_dpm_forward.3} parent=0 // pred_region
    _
  $region125: #{full_dpm_forward.3} parent=0 // pred_fallthru
    _
  // Predicated region
  $region126: #{full_dpm_forward.3} parent=0 // pred_check
    _
  $region127: #{full_dpm_forward.3} parent=0 // pred_check_branch
    %133 = sbr.rel (0) target = $region129
  $region128: #{full_dpm_forward.3} parent=0 // pred_region
    _
  $region129: #{full_dpm_forward.3} parent=0 // pred_fallthru
    _
  %v134 = vld [vmem:[%s5] sm:$0xff]
  %v135 = vld [vmem:[%s5 + $0x8] sm:$0xff]
  %v136 = vld [vmem:[%s5 + $0x10] sm:$0xff]
  %v137 = vld [vmem:[%s5 + $0x18] sm:$0xff]
  %v138 = vld [vmem:[%s5 + $0x20] sm:$0xff]
  %v139 = vld [vmem:[%s5 + $0x28] sm:$0xff]
  %v140 = vld [vmem:[%s5 + $0x30] sm:$0xff]
  %v141 = vld [vmem:[%s7] sm:$0xff]
  %v142 = vld [vmem:[%s7 + $0x8] sm:$0xff]
  %v143 = vld [vmem:[%s7 + $0x10] sm:$0xff]
  %v144 = vld [vmem:[%s7 + $0x18] sm:$0xff]
  %v145 = vld [vmem:[%s7 + $0x20] sm:$0xff]
  %v146 = vld [vmem:[%s7 + $0x28] sm:$0xff]
  %v147 = vld [vmem:[%s7 + $0x30] sm:$0xff]
  %v148 = vld [vmem:[%s9] sm:$0xff]
  %v149 = vld [vmem:[%s11] sm:$0xff]
  %v150 = vld [vmem:[%s1] sm:$0xff]
  %v151 = vld [vmem:[%s25] sm:$0xff]
  %v152 = vld [vmem:[%s25 + $0x8] sm:$0xff]
  %v153 = vld [vmem:[%s25 + $0x10] sm:$0xff]
  %v154 = vld [vmem:[%s25 + $0x18] sm:$0x3]
  %v155 = vld [vmem:[%s27] sm:$0x1]
  %v157 = vlaneseq
  %v158 = vshrl.u32 %v157, 7
  %v159 = vsub.s32 0, %v158
  %v160 = vrot.slane %v155, %v159
  %vm162 = vcmask 211968
  %v164 = vsel %vm162, %v150, 0
  %vm166 = vcmask 1041408
  %v168 = vsel %vm166, %v154, 0
  %170 = vmatprep.subr.mxu0 0.0
  %171 = vmatpush1.msra.mxu0 0.0
  %172 = vmatprep.subr.mxu0 0.0
  %173 = vmatpush1.msra.mxu0 0.0
  %174 = vmatprep.subr.mxu0 0.0
  %175 = vmatpush1.msra.mxu0 0.0
  %176 = vmatprep.subr.mxu0 0.0
  %177 = vmatpush1.msra.mxu0 0.0
  %178 = vmatprep.subr.mxu0 0.0
  %179 = vmatpush1.msra.mxu0 0.0
  %180 = vmatprep.subr.mxu0 0.0
  %181 = vmatpush1.msra.mxu0 0.0
  %182 = vmatprep.subr.mxu0 0.0
  %183 = vmatpush1.msra.mxu0 0.0
  %184 = vmatprep.subr.mxu0 0.0
  %185 = vmatpush1.msra.mxu0 0.0
  %186 = vmatprep.subr.mxu0 0.0
  %187 = vmatpush1.msra.mxu0 0.0
  %188 = vmatprep.subr.mxu0 0.0
  %189 = vmatpush1.msra.mxu0 0.0
  %190 = vmatprep.subr.mxu0 0.0
  %191 = vmatpush1.msra.mxu0 0.0
  %192 = vmatprep.subr.mxu0 0.0
  %193 = vmatpush1.msra.mxu0 0.0
  %194 = vmatprep.subr.mxu0 0.0
  %195 = vmatpush1.msra.mxu0 %v168
  %196 = vmatprep.subr.mxu0 0.0
  %197 = vmatpush1.msra.mxu0 %v153
  %198 = vmatprep.subr.mxu0 0.0
  %199 = vmatpush1.msra.mxu0 %v152
  %200 = vmatprep.subr.mxu0 0.0
  %201 = vmatpush1.msra.mxu0 %v151
  %202 = vmatprep.subr.mxu0 0.0
  %203 = vmatpush2.msra.mxu0 0.0
  %204 = vmatprep.subr.mxu0 0.0
  %205 = vmatpush2.msra.mxu0 0.0
  %206 = vmatprep.subr.mxu0 0.0
  %207 = vmatpush2.msra.mxu0 0.0
  %208 = vmatprep.subr.mxu0 0.0
  %209 = vmatpush2.msra.mxu0 0.0
  %210 = vmatprep.subr.mxu0 0.0
  %211 = vmatpush2.msra.mxu0 0.0
  %212 = vmatprep.subr.mxu0 0.0
  %213 = vmatpush2.msra.mxu0 0.0
  %214 = vmatprep.subr.mxu0 0.0
  %215 = vmatpush2.msra.mxu0 0.0
  %216 = vmatprep.subr.mxu0 0.0
  %217 = vmatpush2.msra.mxu0 0.0
  %218 = vmatprep.subr.mxu0 0.0
  %219 = vmatpush2.msra.mxu0 0.0
  %220 = vmatprep.subr.mxu0 0.0
  %221 = vmatpush2.msra.mxu0 0.0
  %222 = vmatprep.subr.mxu0 0.0
  %223 = vmatpush2.msra.mxu0 0.0
  %224 = vmatprep.subr.mxu0 0.0
  %225 = vmatpush2.msra.mxu0 0.0
  %226 = vmatprep.subr.mxu0 0.0
  %227 = vmatpush2.msra.mxu0 0.0
  %228 = vmatprep.subr.mxu0 0.0
  %229 = vmatpush2.msra.mxu0 0.0
  %230 = vmatprep.subr.mxu0 0.0
  %231 = vmatpush2.msra.mxu0 0.0
  %232 = vmatprep.subr.mxu0 0.0
  %233 = vmatpush2.msra.mxu0 0.0
  %234 = vmatprep.mubr.f32.mxu0 0.0
  %235 = vmatmul.mubr.f32.gmra.mxu0 %v164
  %v236 = vpop.f32.mrf.mxu0
  %v237 = vadd.f32 %v160, %v236
  %v238 = vpop.f32.mrf.mxu0
  %239 = vdwg.mxu0
  %v240 = vld [vmem:[%s3] sm:$0xff]
  %v241 = vld [vmem:[%s29] sm:$0xff]
  %v242 = vld [vmem:[%s29 + $0x8] sm:$0xff]
  %v243 = vld [vmem:[%s29 + $0x10] sm:$0xff]
  %v244 = vld [vmem:[%s29 + $0x18] sm:$0x3]
  %v246 = vsel %vm162, %v237, 0
  %v249 = vsel %vm166, %v244, 0
  %251 = vmatprep.subr.mxu0 0.0
  %252 = vmatpush1.msra.mxu0 0.0
  %253 = vmatprep.subr.mxu0 0.0
  %254 = vmatpush1.msra.mxu0 0.0
  %255 = vmatprep.subr.mxu0 0.0
  %256 = vmatpush1.msra.mxu0 0.0
  %257 = vmatprep.subr.mxu0 0.0
  %258 = vmatpush1.msra.mxu0 0.0
  %259 = vmatprep.subr.mxu0 0.0
  %260 = vmatpush1.msra.mxu0 0.0
  %261 = vmatprep.subr.mxu0 0.0
  %262 = vmatpush1.msra.mxu0 0.0
  %263 = vmatprep.subr.mxu0 0.0
  %264 = vmatpush1.msra.mxu0 0.0
  %265 = vmatprep.subr.mxu0 0.0
  %266 = vmatpush1.msra.mxu0 0.0
  %267 = vmatprep.subr.mxu0 0.0
  %268 = vmatpush1.msra.mxu0 0.0
  %269 = vmatprep.subr.mxu0 0.0
  %270 = vmatpush1.msra.mxu0 0.0
  %271 = vmatprep.subr.mxu0 0.0
  %272 = vmatpush1.msra.mxu0 0.0
  %273 = vmatprep.subr.mxu0 0.0
  %274 = vmatpush1.msra.mxu0 0.0
  %275 = vmatprep.subr.mxu0 0.0
  %276 = vmatpush1.msra.mxu0 %v249
  %277 = vmatprep.subr.mxu0 0.0
  %278 = vmatpush1.msra.mxu0 %v243
  %279 = vmatprep.subr.mxu0 0.0
  %280 = vmatpush1.msra.mxu0 %v242
  %281 = vmatprep.subr.mxu0 0.0
  %282 = vmatpush1.msra.mxu0 %v241
  %283 = vmatprep.subr.mxu0 0.0
  %284 = vmatpush2.msra.mxu0 0.0
  %285 = vmatprep.subr.mxu0 0.0
  %286 = vmatpush2.msra.mxu0 0.0
  %287 = vmatprep.subr.mxu0 0.0
  %288 = vmatpush2.msra.mxu0 0.0
  %289 = vmatprep.subr.mxu0 0.0
  %290 = vmatpush2.msra.mxu0 0.0
  %291 = vmatprep.subr.mxu0 0.0
  %292 = vmatpush2.msra.mxu0 0.0
  %293 = vmatprep.subr.mxu0 0.0
  %294 = vmatpush2.msra.mxu0 0.0
  %295 = vmatprep.subr.mxu0 0.0
  %296 = vmatpush2.msra.mxu0 0.0
  %297 = vmatprep.subr.mxu0 0.0
  %298 = vmatpush2.msra.mxu0 0.0
  %299 = vmatprep.subr.mxu0 0.0
  %300 = vmatpush2.msra.mxu0 0.0
  %301 = vmatprep.subr.mxu0 0.0
  %302 = vmatpush2.msra.mxu0 0.0
  %303 = vmatprep.subr.mxu0 0.0
  %304 = vmatpush2.msra.mxu0 0.0
  %305 = vmatprep.subr.mxu0 0.0
  %306 = vmatpush2.msra.mxu0 0.0
  %307 = vmatprep.subr.mxu0 0.0
  %308 = vmatpush2.msra.mxu0 0.0
  %309 = vmatprep.subr.mxu0 0.0
  %310 = vmatpush2.msra.mxu0 0.0
  %311 = vmatprep.subr.mxu0 0.0
  %312 = vmatpush2.msra.mxu0 0.0
  %313 = vmatprep.subr.mxu0 0.0
  %314 = vmatpush2.msra.mxu0 0.0
  %315 = vmatprep.mubr.f32.mxu0 0.0
  %316 = vmatmul.mubr.f32.gmra.mxu0 %v246
  %v317 = vpop.f32.mrf.mxu0
  %v318 = vadd.f32 0.0, %v317
  %v319 = vpop.f32.mrf.mxu0
  %320 = vdwg.mxu0
  %v321 = vld [vmem:[%s31] sm:$0xff]
  %v322 = vld [vmem:[%s31 + $0x8] sm:$0xff]
  %v323 = vld [vmem:[%s31 + $0x10] sm:$0xff]
  %v324 = vld [vmem:[%s31 + $0x18] sm:$0x3]
  %v326 = vsel %vm166, %v324, 0
  %328 = vmatprep.subr.mxu0 0.0
  %329 = vmatpush1.msra.mxu0 0.0
  %330 = vmatprep.subr.mxu0 0.0
  %331 = vmatpush1.msra.mxu0 0.0
  %332 = vmatprep.subr.mxu0 0.0
  %333 = vmatpush1.msra.mxu0 0.0
  %334 = vmatprep.subr.mxu0 0.0
  %335 = vmatpush1.msra.mxu0 0.0
  %336 = vmatprep.subr.mxu0 0.0
  %337 = vmatpush1.msra.mxu0 0.0
  %338 = vmatprep.subr.mxu0 0.0
  %339 = vmatpush1.msra.mxu0 0.0
  %340 = vmatprep.subr.mxu0 0.0
  %341 = vmatpush1.msra.mxu0 0.0
  %342 = vmatprep.subr.mxu0 0.0
  %343 = vmatpush1.msra.mxu0 0.0
  %344 = vmatprep.subr.mxu0 0.0
  %345 = vmatpush1.msra.mxu0 0.0
  %346 = vmatprep.subr.mxu0 0.0
  %347 = vmatpush1.msra.mxu0 0.0
  %348 = vmatprep.subr.mxu0 0.0
  %349 = vmatpush1.msra.mxu0 0.0
  %350 = vmatprep.subr.mxu0 0.0
  %351 = vmatpush1.msra.mxu0 0.0
  %352 = vmatprep.subr.mxu0 0.0
  %353 = vmatpush1.msra.mxu0 %v326
  %354 = vmatprep.subr.mxu0 0.0
  %355 = vmatpush1.msra.mxu0 %v323
  %356 = vmatprep.subr.mxu0 0.0
  %357 = vmatpush1.msra.mxu0 %v322
  %358 = vmatprep.subr.mxu0 0.0
  %359 = vmatpush1.msra.mxu0 %v321
  %360 = vmatprep.subr.mxu0 0.0
  %361 = vmatpush2.msra.mxu0 0.0
  %362 = vmatprep.subr.mxu0 0.0
  %363 = vmatpush2.msra.mxu0 0.0
  %364 = vmatprep.subr.mxu0 0.0
  %365 = vmatpush2.msra.mxu0 0.0
  %366 = vmatprep.subr.mxu0 0.0
  %367 = vmatpush2.msra.mxu0 0.0
  %368 = vmatprep.subr.mxu0 0.0
  %369 = vmatpush2.msra.mxu0 0.0
  %370 = vmatprep.subr.mxu0 0.0
  %371 = vmatpush2.msra.mxu0 0.0
  %372 = vmatprep.subr.mxu0 0.0
  %373 = vmatpush2.msra.mxu0 0.0
  %374 = vmatprep.subr.mxu0 0.0
  %375 = vmatpush2.msra.mxu0 0.0
  %376 = vmatprep.subr.mxu0 0.0
  %377 = vmatpush2.msra.mxu0 0.0
  %378 = vmatprep.subr.mxu0 0.0
  %379 = vmatpush2.msra.mxu0 0.0
  %380 = vmatprep.subr.mxu0 0.0
  %381 = vmatpush2.msra.mxu0 0.0
  %382 = vmatprep.subr.mxu0 0.0
  %383 = vmatpush2.msra.mxu0 0.0
  %384 = vmatprep.subr.mxu0 0.0
  %385 = vmatpush2.msra.mxu0 0.0
  %386 = vmatprep.subr.mxu0 0.0
  %387 = vmatpush2.msra.mxu0 0.0
  %388 = vmatprep.subr.mxu0 0.0
  %389 = vmatpush2.msra.mxu0 0.0
  %390 = vmatprep.subr.mxu0 0.0
  %391 = vmatpush2.msra.mxu0 0.0
  %392 = vmatprep.mubr.f32.mxu0 0.0
  %393 = vmatmul.mubr.f32.gmra.mxu0 %v246
  %v394 = vpop.f32.mrf.mxu0
  %v395 = vadd.f32 0.0, %v394
  %v396 = vpop.f32.mrf.mxu0
  %397 = vdwg.mxu0
  %vm398 = vcmask 64512
  %v400 = vsel %vm398, %v141, 0
  %v403 = vsel %vm398, %v142, 0
  %v406 = vsel %vm398, %v143, 0
  %v409 = vsel %vm398, %v144, 0
  %v412 = vsel %vm398, %v145, 0
  %v415 = vsel %vm398, %v146, 0
  %v418 = vsel %vm398, %v147, 0
  %420 = vmatprep.subr.mxu0 0.0
  %421 = vmatpush1.msra.mxu0 0.0
  %422 = vmatprep.subr.mxu0 0.0
  %423 = vmatpush1.msra.mxu0 0.0
  %424 = vmatprep.subr.mxu0 0.0
  %425 = vmatpush1.msra.mxu0 0.0
  %426 = vmatprep.subr.mxu0 0.0
  %427 = vmatpush1.msra.mxu0 0.0
  %428 = vmatprep.subr.mxu0 0.0
  %429 = vmatpush1.msra.mxu0 0.0
  %430 = vmatprep.subr.mxu0 0.0
  %431 = vmatpush1.msra.mxu0 0.0
  %432 = vmatprep.subr.mxu0 0.0
  %433 = vmatpush1.msra.mxu0 0.0
  %434 = vmatprep.subr.mxu0 0.0
  %435 = vmatpush1.msra.mxu0 0.0
  %436 = vmatprep.subr.mxu0 0.0
  %437 = vmatpush1.msra.mxu0 0.0
  %438 = vmatprep.subr.mxu0 0.0
  %439 = vmatpush1.msra.mxu0 0.0
  %440 = vmatprep.subr.mxu0 0.0
  %441 = vmatpush1.msra.mxu0 0.0
  %442 = vmatprep.subr.mxu0 0.0
  %443 = vmatpush1.msra.mxu0 0.0
  %444 = vmatprep.subr.mxu0 0.0
  %445 = vmatpush1.msra.mxu0 0.0
  %446 = vmatprep.subr.mxu0 0.0
  %447 = vmatpush1.msra.mxu0 0.0
  %448 = vmatprep.subr.mxu0 0.0
  %449 = vmatpush1.msra.mxu0 0.0
  %450 = vmatprep.subr.mxu0 0.0
  %451 = vmatpush1.msra.mxu0 %v395
  %452 = vmatprep.subr.mxu0 0.0
  %453 = vmatpush2.msra.mxu0 0.0
  %454 = vmatprep.subr.mxu0 0.0
  %455 = vmatpush2.msra.mxu0 0.0
  %456 = vmatprep.subr.mxu0 0.0
  %457 = vmatpush2.msra.mxu0 0.0
  %458 = vmatprep.subr.mxu0 0.0
  %459 = vmatpush2.msra.mxu0 0.0
  %460 = vmatprep.subr.mxu0 0.0
  %461 = vmatpush2.msra.mxu0 0.0
  %462 = vmatprep.subr.mxu0 0.0
  %463 = vmatpush2.msra.mxu0 0.0
  %464 = vmatprep.subr.mxu0 0.0
  %465 = vmatpush2.msra.mxu0 0.0
  %466 = vmatprep.subr.mxu0 0.0
  %467 = vmatpush2.msra.mxu0 0.0
  %468 = vmatprep.subr.mxu0 0.0
  %469 = vmatpush2.msra.mxu0 0.0
  %470 = vmatprep.subr.mxu0 0.0
  %471 = vmatpush2.msra.mxu0 0.0
  %472 = vmatprep.subr.mxu0 0.0
  %473 = vmatpush2.msra.mxu0 0.0
  %474 = vmatprep.subr.mxu0 0.0
  %475 = vmatpush2.msra.mxu0 0.0
  %476 = vmatprep.subr.mxu0 0.0
  %477 = vmatpush2.msra.mxu0 0.0
  %478 = vmatprep.subr.mxu0 0.0
  %479 = vmatpush2.msra.mxu0 0.0
  %480 = vmatprep.subr.mxu0 0.0
  %481 = vmatpush2.msra.mxu0 0.0
  %482 = vmatprep.subr.mxu0 0.0
  %483 = vmatpush2.msra.mxu0 0.0
  %484 = vmatprep.mubr.f32.mxu0 0.0
  %485 = vmatmul.mubr.f32.gmra.mxu0 %v400
  %v486 = vpop.f32.mrf.mxu0
  %v487 = vadd.f32 0.0, %v486
  %v488 = vpop.f32.mrf.mxu0
  %489 = vmatprep.mubr.f32.mxu0 0.0
  %490 = vmatmul.mubr.f32.gmra.mxu0 %v403
  %v491 = vpop.f32.mrf.mxu0
  %v492 = vadd.f32 0.0, %v491
  %v493 = vpop.f32.mrf.mxu0
  %494 = vmatprep.mubr.f32.mxu0 0.0
  %495 = vmatmul.mubr.f32.gmra.mxu0 %v406
  %v496 = vpop.f32.mrf.mxu0
  %v497 = vadd.f32 0.0, %v496
  %v498 = vpop.f32.mrf.mxu0
  %499 = vmatprep.mubr.f32.mxu0 0.0
  %500 = vmatmul.mubr.f32.gmra.mxu0 %v409
  %v501 = vpop.f32.mrf.mxu0
  %v502 = vadd.f32 0.0, %v501
  %v503 = vpop.f32.mrf.mxu0
  %504 = vmatprep.mubr.f32.mxu0 0.0
  %505 = vmatmul.mubr.f32.gmra.mxu0 %v412
  %v506 = vpop.f32.mrf.mxu0
  %v507 = vadd.f32 0.0, %v506
  %v508 = vpop.f32.mrf.mxu0
  %509 = vmatprep.mubr.f32.mxu0 0.0
  %510 = vmatmul.mubr.f32.gmra.mxu0 %v415
  %v511 = vpop.f32.mrf.mxu0
  %v512 = vadd.f32 0.0, %v511
  %v513 = vpop.f32.mrf.mxu0
  %514 = vmatprep.mubr.f32.mxu0 0.0
  %515 = vmatmul.mubr.f32.gmra.mxu0 %v418
  %v516 = vpop.f32.mrf.mxu0
  %v517 = vadd.f32 0.0, %v516
  %v518 = vpop.f32.mrf.mxu0
  %519 = vdwg.mxu0
  %v521 = vsel %vm398, %v134, 0
  %v524 = vsel %vm398, %v135, 0
  %v527 = vsel %vm398, %v136, 0
  %v530 = vsel %vm398, %v137, 0
  %v533 = vsel %vm398, %v138, 0
  %v536 = vsel %vm398, %v139, 0
  %v539 = vsel %vm398, %v140, 0
  %541 = vmatprep.subr.mxu0 0.0
  %542 = vmatpush1.msra.mxu0 0.0
  %543 = vmatprep.subr.mxu0 0.0
  %544 = vmatpush1.msra.mxu0 0.0
  %545 = vmatprep.subr.mxu0 0.0
  %546 = vmatpush1.msra.mxu0 0.0
  %547 = vmatprep.subr.mxu0 0.0
  %548 = vmatpush1.msra.mxu0 0.0
  %549 = vmatprep.subr.mxu0 0.0
  %550 = vmatpush1.msra.mxu0 0.0
  %551 = vmatprep.subr.mxu0 0.0
  %552 = vmatpush1.msra.mxu0 0.0
  %553 = vmatprep.subr.mxu0 0.0
  %554 = vmatpush1.msra.mxu0 0.0
  %555 = vmatprep.subr.mxu0 0.0
  %556 = vmatpush1.msra.mxu0 0.0
  %557 = vmatprep.subr.mxu0 0.0
  %558 = vmatpush1.msra.mxu0 0.0
  %559 = vmatprep.subr.mxu0 0.0
  %560 = vmatpush1.msra.mxu0 0.0
  %561 = vmatprep.subr.mxu0 0.0
  %562 = vmatpush1.msra.mxu0 0.0
  %563 = vmatprep.subr.mxu0 0.0
  %564 = vmatpush1.msra.mxu0 0.0
  %565 = vmatprep.subr.mxu0 0.0
  %566 = vmatpush1.msra.mxu0 0.0
  %567 = vmatprep.subr.mxu0 0.0
  %568 = vmatpush1.msra.mxu0 0.0
  %569 = vmatprep.subr.mxu0 0.0
  %570 = vmatpush1.msra.mxu0 0.0
  %571 = vmatprep.subr.mxu0 0.0
  %572 = vmatpush1.msra.mxu0 %v240
  %573 = vmatprep.subr.mxu0 0.0
  %574 = vmatpush2.msra.mxu0 0.0
  %575 = vmatprep.subr.mxu0 0.0
  %576 = vmatpush2.msra.mxu0 0.0
  %577 = vmatprep.subr.mxu0 0.0
  %578 = vmatpush2.msra.mxu0 0.0
  %579 = vmatprep.subr.mxu0 0.0
  %580 = vmatpush2.msra.mxu0 0.0
  %581 = vmatprep.subr.mxu0 0.0
  %582 = vmatpush2.msra.mxu0 0.0
  %583 = vmatprep.subr.mxu0 0.0
  %584 = vmatpush2.msra.mxu0 0.0
  %585 = vmatprep.subr.mxu0 0.0
  %586 = vmatpush2.msra.mxu0 0.0
  %587 = vmatprep.subr.mxu0 0.0
  %588 = vmatpush2.msra.mxu0 0.0
  %589 = vmatprep.subr.mxu0 0.0
  %590 = vmatpush2.msra.mxu0 0.0
  %591 = vmatprep.subr.mxu0 0.0
  %592 = vmatpush2.msra.mxu0 0.0
  %593 = vmatprep.subr.mxu0 0.0
  %594 = vmatpush2.msra.mxu0 0.0
  %595 = vmatprep.subr.mxu0 0.0
  %596 = vmatpush2.msra.mxu0 0.0
  %597 = vmatprep.subr.mxu0 0.0
  %598 = vmatpush2.msra.mxu0 0.0
  %599 = vmatprep.subr.mxu0 0.0
  %600 = vmatpush2.msra.mxu0 0.0
  %601 = vmatprep.subr.mxu0 0.0
  %602 = vmatpush2.msra.mxu0 0.0
  %603 = vmatprep.subr.mxu0 0.0
  %604 = vmatpush2.msra.mxu0 0.0
  %605 = vmatprep.mubr.f32.mxu0 0.0
  %606 = vmatmul.mubr.f32.gmra.mxu0 %v521
  %v607 = vpop.f32.mrf.mxu0
  %v608 = vadd.f32 0.0, %v607
  %v609 = vpop.f32.mrf.mxu0
  %610 = vmatprep.mubr.f32.mxu0 0.0
  %611 = vmatmul.mubr.f32.gmra.mxu0 %v524
  %v612 = vpop.f32.mrf.mxu0
  %v613 = vadd.f32 0.0, %v612
  %v614 = vpop.f32.mrf.mxu0
  %615 = vmatprep.mubr.f32.mxu0 0.0
  %616 = vmatmul.mubr.f32.gmra.mxu0 %v527
  %v617 = vpop.f32.mrf.mxu0
  %v618 = vadd.f32 0.0, %v617
  %v619 = vpop.f32.mrf.mxu0
  %620 = vmatprep.mubr.f32.mxu0 0.0
  %621 = vmatmul.mubr.f32.gmra.mxu0 %v530
  %v622 = vpop.f32.mrf.mxu0
  %v623 = vadd.f32 0.0, %v622
  %v624 = vpop.f32.mrf.mxu0
  %625 = vmatprep.mubr.f32.mxu0 0.0
  %626 = vmatmul.mubr.f32.gmra.mxu0 %v533
  %v627 = vpop.f32.mrf.mxu0
  %v628 = vadd.f32 0.0, %v627
  %v629 = vpop.f32.mrf.mxu0
  %630 = vmatprep.mubr.f32.mxu0 0.0
  %631 = vmatmul.mubr.f32.gmra.mxu0 %v536
  %v632 = vpop.f32.mrf.mxu0
  %v633 = vadd.f32 0.0, %v632
  %v634 = vpop.f32.mrf.mxu0
  %635 = vmatprep.mubr.f32.mxu0 0.0
  %636 = vmatmul.mubr.f32.gmra.mxu0 %v539
  %v637 = vpop.f32.mrf.mxu0
  %v638 = vadd.f32 0.0, %v637
  %v639 = vpop.f32.mrf.mxu0
  %640 = vdwg.mxu0
  %641 = vmatprep.subr.mxu0 0.0
  %642 = vmatpush1.msra.mxu0 0.0
  %643 = vmatprep.subr.mxu0 0.0
  %644 = vmatpush1.msra.mxu0 0.0
  %645 = vmatprep.subr.mxu0 0.0
  %646 = vmatpush1.msra.mxu0 0.0
  %647 = vmatprep.subr.mxu0 0.0
  %648 = vmatpush1.msra.mxu0 0.0
  %649 = vmatprep.subr.mxu0 0.0
  %650 = vmatpush1.msra.mxu0 0.0
  %651 = vmatprep.subr.mxu0 0.0
  %652 = vmatpush1.msra.mxu0 0.0
  %653 = vmatprep.subr.mxu0 0.0
  %654 = vmatpush1.msra.mxu0 0.0
  %655 = vmatprep.subr.mxu0 0.0
  %656 = vmatpush1.msra.mxu0 0.0
  %657 = vmatprep.subr.mxu0 0.0
  %658 = vmatpush1.msra.mxu0 0.0
  %659 = vmatprep.subr.mxu0 0.0
  %660 = vmatpush1.msra.mxu0 0.0
  %661 = vmatprep.subr.mxu0 0.0
  %662 = vmatpush1.msra.mxu0 0.0
  %663 = vmatprep.subr.mxu0 0.0
  %664 = vmatpush1.msra.mxu0 0.0
  %665 = vmatprep.subr.mxu0 0.0
  %666 = vmatpush1.msra.mxu0 0.0
  %667 = vmatprep.subr.mxu0 0.0
  %668 = vmatpush1.msra.mxu0 0.0
  %669 = vmatprep.subr.mxu0 0.0
  %670 = vmatpush1.msra.mxu0 0.0
  %671 = vmatprep.subr.mxu0 0.0
  %672 = vmatpush1.msra.mxu0 %v240
  %673 = vmatprep.subr.mxu0 0.0
  %674 = vmatpush2.msra.mxu0 0.0
  %675 = vmatprep.subr.mxu0 0.0
  %676 = vmatpush2.msra.mxu0 0.0
  %677 = vmatprep.subr.mxu0 0.0
  %678 = vmatpush2.msra.mxu0 0.0
  %679 = vmatprep.subr.mxu0 0.0
  %680 = vmatpush2.msra.mxu0 0.0
  %681 = vmatprep.subr.mxu0 0.0
  %682 = vmatpush2.msra.mxu0 0.0
  %683 = vmatprep.subr.mxu0 0.0
  %684 = vmatpush2.msra.mxu0 0.0
  %685 = vmatprep.subr.mxu0 0.0
  %686 = vmatpush2.msra.mxu0 0.0
  %687 = vmatprep.subr.mxu0 0.0
  %688 = vmatpush2.msra.mxu0 0.0
  %689 = vmatprep.subr.mxu0 0.0
  %690 = vmatpush2.msra.mxu0 0.0
  %691 = vmatprep.subr.mxu0 0.0
  %692 = vmatpush2.msra.mxu0 0.0
  %693 = vmatprep.subr.mxu0 0.0
  %694 = vmatpush2.msra.mxu0 0.0
  %695 = vmatprep.subr.mxu0 0.0
  %696 = vmatpush2.msra.mxu0 0.0
  %697 = vmatprep.subr.mxu0 0.0
  %698 = vmatpush2.msra.mxu0 0.0
  %699 = vmatprep.subr.mxu0 0.0
  %700 = vmatpush2.msra.mxu0 0.0
  %701 = vmatprep.subr.mxu0 0.0
  %702 = vmatpush2.msra.mxu0 0.0
  %703 = vmatprep.subr.mxu0 0.0
  %704 = vmatpush2.msra.mxu0 0.0
  %705 = vmatprep.mubr.f32.mxu0 0.0
  %706 = vmatmul.mubr.f32.gmra.mxu0 %v400
  %v707 = vpop.f32.mrf.mxu0
  %v708 = vadd.f32 0.0, %v707
  %v709 = vpop.f32.mrf.mxu0
  %710 = vmatprep.mubr.f32.mxu0 0.0
  %711 = vmatmul.mubr.f32.gmra.mxu0 %v403
  %v712 = vpop.f32.mrf.mxu0
  %v713 = vadd.f32 0.0, %v712
  %v714 = vpop.f32.mrf.mxu0
  %715 = vmatprep.mubr.f32.mxu0 0.0
  %716 = vmatmul.mubr.f32.gmra.mxu0 %v406
  %v717 = vpop.f32.mrf.mxu0
  %v718 = vadd.f32 0.0, %v717
  %v719 = vpop.f32.mrf.mxu0
  %720 = vmatprep.mubr.f32.mxu0 0.0
  %721 = vmatmul.mubr.f32.gmra.mxu0 %v409
  %v722 = vpop.f32.mrf.mxu0
  %v723 = vadd.f32 0.0, %v722
  %v724 = vpop.f32.mrf.mxu0
  %725 = vmatprep.mubr.f32.mxu0 0.0
  %726 = vmatmul.mubr.f32.gmra.mxu0 %v412
  %v727 = vpop.f32.mrf.mxu0
  %v728 = vadd.f32 0.0, %v727
  %v729 = vpop.f32.mrf.mxu0
  %730 = vmatprep.mubr.f32.mxu0 0.0
  %731 = vmatmul.mubr.f32.gmra.mxu0 %v415
  %v732 = vpop.f32.mrf.mxu0
  %v733 = vadd.f32 0.0, %v732
  %v734 = vpop.f32.mrf.mxu0
  %735 = vmatprep.mubr.f32.mxu0 0.0
  %736 = vmatmul.mubr.f32.gmra.mxu0 %v418
  %v737 = vpop.f32.mrf.mxu0
  %v738 = vadd.f32 0.0, %v737
  %v739 = vpop.f32.mrf.mxu0
  %740 = vdwg.mxu0
  %v741 = vsub.f32 %v608, %v708
  %v742 = vsub.f32 %v613, %v713
  %v743 = vsub.f32 %v618, %v718
  %v744 = vsub.f32 %v623, %v723
  %v745 = vsub.f32 %v628, %v728
  %v746 = vsub.f32 %v633, %v733
  %v747 = vsub.f32 %v638, %v738
  %v748 = vmul.f32 %v741, %v741
  %v749 = vmul.f32 %v742, %v742
  %v750 = vmul.f32 %v743, %v743
  %v751 = vmul.f32 %v744, %v744
  %v752 = vmul.f32 %v745, %v745
  %v753 = vmul.f32 %v746, %v746
  %v754 = vmul.f32 %v747, %v747
  %vm755 = vcmask 23552
  %v756 = vsel %vm755, %v748, 0.0
  %757 = vadd.xlane.f32.xlu0 %v756
  %v758 = vpop.xlane.xlu0 %757
  %v759 = vsel %vm755, %v749, 0.0
  %760 = vadd.xlane.f32.xlu0 %v759
  %v761 = vpop.xlane.xlu0 %760
  %v762 = vsel %vm755, %v750, 0.0
  %763 = vadd.xlane.f32.xlu0 %v762
  %v764 = vpop.xlane.xlu0 %763
  %v765 = vsel %vm755, %v751, 0.0
  %766 = vadd.xlane.f32.xlu0 %v765
  %v767 = vpop.xlane.xlu0 %766
  %v768 = vsel %vm755, %v752, 0.0
  %769 = vadd.xlane.f32.xlu0 %v768
  %v770 = vpop.xlane.xlu0 %769
  %v771 = vsel %vm755, %v753, 0.0
  %772 = vadd.xlane.f32.xlu0 %v771
  %v773 = vpop.xlane.xlu0 %772
  %v774 = vsel %vm755, %v754, 0.0
  %775 = vadd.xlane.f32.xlu0 %v774
  %v776 = vpop.xlane.xlu0 %775
  %v777 = vadd.f32 %v758, 1e-08
  %v778 = vadd.f32 %v761, 1e-08
  %v779 = vadd.f32 %v764, 1e-08
  %v780 = vadd.f32 %v767, 1e-08
  %v781 = vadd.f32 %v770, 1e-08
  %v782 = vadd.f32 %v773, 1e-08
  %v783 = vadd.f32 %v776, 1e-08
  %v784 = vrsqrt.pop %v777
  %v785 = vrsqrt.pop %v778
  %v786 = vrsqrt.pop %v779
  %v787 = vrsqrt.pop %v780
  %v788 = vrsqrt.pop %v781
  %v789 = vrsqrt.pop %v782
  %v790 = vrsqrt.pop %v783
  %v791 = vmul.f32 %v741, %v784
  %v792 = vmul.f32 %v742, %v785
  %v793 = vmul.f32 %v743, %v786
  %v794 = vmul.f32 %v744, %v787
  %v795 = vmul.f32 %v745, %v788
  %v796 = vmul.f32 %v746, %v789
  %v797 = vmul.f32 %v747, %v790
  %798 = vmatprep.subr.mxu0 0.0
  %799 = vmatpush1.msra.mxu0 0.0
  %800 = vmatprep.subr.mxu0 0.0
  %801 = vmatpush1.msra.mxu0 0.0
  %802 = vmatprep.subr.mxu0 0.0
  %803 = vmatpush1.msra.mxu0 0.0
  %804 = vmatprep.subr.mxu0 0.0
  %805 = vmatpush1.msra.mxu0 0.0
  %806 = vmatprep.subr.mxu0 0.0
  %807 = vmatpush1.msra.mxu0 0.0
  %808 = vmatprep.subr.mxu0 0.0
  %809 = vmatpush1.msra.mxu0 0.0
  %810 = vmatprep.subr.mxu0 0.0
  %811 = vmatpush1.msra.mxu0 0.0
  %812 = vmatprep.subr.mxu0 0.0
  %813 = vmatpush1.msra.mxu0 0.0
  %814 = vmatprep.subr.mxu0 0.0
  %815 = vmatpush1.msra.mxu0 0.0
  %816 = vmatprep.subr.mxu0 0.0
  %817 = vmatpush1.msra.mxu0 0.0
  %818 = vmatprep.subr.mxu0 0.0
  %819 = vmatpush1.msra.mxu0 0.0
  %820 = vmatprep.subr.mxu0 0.0
  %821 = vmatpush1.msra.mxu0 0.0
  %822 = vmatprep.subr.mxu0 0.0
  %823 = vmatpush1.msra.mxu0 0.0
  %824 = vmatprep.subr.mxu0 0.0
  %825 = vmatpush1.msra.mxu0 0.0
  %826 = vmatprep.subr.mxu0 0.0
  %827 = vmatpush1.msra.mxu0 0.0
  %828 = vmatprep.subr.mxu0 0.0
  %829 = vmatpush1.msra.mxu0 %v318
  %830 = vmatprep.subr.mxu0 0.0
  %831 = vmatpush2.msra.mxu0 0.0
  %832 = vmatprep.subr.mxu0 0.0
  %833 = vmatpush2.msra.mxu0 0.0
  %834 = vmatprep.subr.mxu0 0.0
  %835 = vmatpush2.msra.mxu0 0.0
  %836 = vmatprep.subr.mxu0 0.0
  %837 = vmatpush2.msra.mxu0 0.0
  %838 = vmatprep.subr.mxu0 0.0
  %839 = vmatpush2.msra.mxu0 0.0
  %840 = vmatprep.subr.mxu0 0.0
  %841 = vmatpush2.msra.mxu0 0.0
  %842 = vmatprep.subr.mxu0 0.0
  %843 = vmatpush2.msra.mxu0 0.0
  %844 = vmatprep.subr.mxu0 0.0
  %845 = vmatpush2.msra.mxu0 0.0
  %846 = vmatprep.subr.mxu0 0.0
  %847 = vmatpush2.msra.mxu0 0.0
  %848 = vmatprep.subr.mxu0 0.0
  %849 = vmatpush2.msra.mxu0 0.0
  %850 = vmatprep.subr.mxu0 0.0
  %851 = vmatpush2.msra.mxu0 0.0
  %852 = vmatprep.subr.mxu0 0.0
  %853 = vmatpush2.msra.mxu0 0.0
  %854 = vmatprep.subr.mxu0 0.0
  %855 = vmatpush2.msra.mxu0 0.0
  %856 = vmatprep.subr.mxu0 0.0
  %857 = vmatpush2.msra.mxu0 0.0
  %858 = vmatprep.subr.mxu0 0.0
  %859 = vmatpush2.msra.mxu0 0.0
  %860 = vmatprep.subr.mxu0 0.0
  %861 = vmatpush2.msra.mxu0 0.0
  %862 = vmatprep.mubr.f32.mxu0 0.0
  %863 = vmatmul.mubr.f32.gmra.mxu0 %v521
  %v864 = vpop.f32.mrf.mxu0
  %v865 = vadd.f32 %v487, %v864
  %v866 = vpop.f32.mrf.mxu0
  %867 = vmatprep.mubr.f32.mxu0 0.0
  %868 = vmatmul.mubr.f32.gmra.mxu0 %v524
  %v869 = vpop.f32.mrf.mxu0
  %v870 = vadd.f32 %v492, %v869
  %v871 = vpop.f32.mrf.mxu0
  %872 = vmatprep.mubr.f32.mxu0 0.0
  %873 = vmatmul.mubr.f32.gmra.mxu0 %v527
  %v874 = vpop.f32.mrf.mxu0
  %v875 = vadd.f32 %v497, %v874
  %v876 = vpop.f32.mrf.mxu0
  %877 = vmatprep.mubr.f32.mxu0 0.0
  %878 = vmatmul.mubr.f32.gmra.mxu0 %v530
  %v879 = vpop.f32.mrf.mxu0
  %v880 = vadd.f32 %v502, %v879
  %v881 = vpop.f32.mrf.mxu0
  %882 = vmatprep.mubr.f32.mxu0 0.0
  %883 = vmatmul.mubr.f32.gmra.mxu0 %v533
  %v884 = vpop.f32.mrf.mxu0
  %v885 = vadd.f32 %v507, %v884
  %v886 = vpop.f32.mrf.mxu0
  %887 = vmatprep.mubr.f32.mxu0 0.0
  %888 = vmatmul.mubr.f32.gmra.mxu0 %v536
  %v889 = vpop.f32.mrf.mxu0
  %v890 = vadd.f32 %v512, %v889
  %v891 = vpop.f32.mrf.mxu0
  %892 = vmatprep.mubr.f32.mxu0 0.0
  %893 = vmatmul.mubr.f32.gmra.mxu0 %v539
  %v894 = vpop.f32.mrf.mxu0
  %v895 = vadd.f32 %v517, %v894
  %v896 = vpop.f32.mrf.mxu0
  %897 = vdwg.mxu0
  %v898 = vld [vmem:[%s33] sm:$0x1]
  %v900 = vlaneseq
  %v901 = vshrl.u32 %v900, 7
  %v902 = vsub.s32 0, %v901
  %v903 = vrot.slane %v898, %v902
  %v905 = vmul.f32 %v758, %v903
  %v906 = vmul.f32 %v761, %v903
  %v907 = vmul.f32 %v764, %v903
  %v908 = vmul.f32 %v767, %v903
  %v909 = vmul.f32 %v770, %v903
  %v910 = vmul.f32 %v773, %v903
  %v911 = vmul.f32 %v776, %v903
  %v912 = vadd.f32 %v865, %v905
  %v913 = vadd.f32 %v870, %v906
  %v914 = vadd.f32 %v875, %v907
  %v915 = vadd.f32 %v880, %v908
  %v916 = vadd.f32 %v885, %v909
  %v917 = vadd.f32 %v890, %v910
  %v918 = vadd.f32 %v895, %v911
  %v919 = vld [vmem:[%s35] sm:$0x1]
  %v921 = vlaneseq
  %v922 = vshrl.u32 %v921, 7
  %v923 = vsub.s32 0, %v922
  %v924 = vrot.slane %v919, %v923
  %v926 = vadd.f32 %v912, %v924
  %v927 = vadd.f32 %v913, %v924
  %v928 = vadd.f32 %v914, %v924
  %v929 = vadd.f32 %v915, %v924
  %v930 = vadd.f32 %v916, %v924
  %v931 = vadd.f32 %v917, %v924
  %v932 = vadd.f32 %v918, %v924
  %v933 = vxor.u32 %v926, 2147483648
  %v934 = vxor.u32 %v927, 2147483648
  %v935 = vxor.u32 %v928, 2147483648
  %v936 = vxor.u32 %v929, 2147483648
  %v937 = vxor.u32 %v930, 2147483648
  %v938 = vxor.u32 %v931, 2147483648
  %v939 = vxor.u32 %v932, 2147483648
  %v940 = vmul.f32 %v933, 1.442695
  %v941 = vpow.pop %v940
  %v942 = vmul.f32 %v934, 1.442695
  %v943 = vpow.pop %v942
  %v944 = vmul.f32 %v935, 1.442695
  %v945 = vpow.pop %v944
  %v946 = vmul.f32 %v936, 1.442695
  %v947 = vpow.pop %v946
  %v948 = vmul.f32 %v937, 1.442695
  %v949 = vpow.pop %v948
  %v950 = vmul.f32 %v938, 1.442695
  %v951 = vpow.pop %v950
  %v952 = vmul.f32 %v939, 1.442695
  %v953 = vpow.pop %v952
  %v954 = vadd.f32 %v941, 1.0
  %v955 = vadd.f32 %v943, 1.0
  %v956 = vadd.f32 %v945, 1.0
  %v957 = vadd.f32 %v947, 1.0
  %v958 = vadd.f32 %v949, 1.0
  %v959 = vadd.f32 %v951, 1.0
  %v960 = vadd.f32 %v953, 1.0
  %v961 = vrcp.pop %v954
  %v962 = vmul.f32 1.0, %v961
  %v963 = vrcp.pop %v955
  %v964 = vmul.f32 1.0, %v963
  %v965 = vrcp.pop %v956
  %v966 = vmul.f32 1.0, %v965
  %v967 = vrcp.pop %v957
  %v968 = vmul.f32 1.0, %v967
  %v969 = vrcp.pop %v958
  %v970 = vmul.f32 1.0, %v969
  %v971 = vrcp.pop %v959
  %v972 = vmul.f32 1.0, %v971
  %v973 = vrcp.pop %v960
  %v974 = vmul.f32 1.0, %v973
  %v975 = vmul.f32 %v926, %v962
  %v976 = vmul.f32 %v927, %v964
  %v977 = vmul.f32 %v928, %v966
  %v978 = vmul.f32 %v929, %v968
  %v979 = vmul.f32 %v930, %v970
  %v980 = vmul.f32 %v931, %v972
  %v981 = vmul.f32 %v932, %v974
  %v982 = vld [vmem:[%s37] sm:$0xff]
  %v983 = vld [vmem:[%s37 + $0x8] sm:$0xff]
  %v984 = vld [vmem:[%s37 + $0x10] sm:$0xff]
  %v985 = vld [vmem:[%s37 + $0x18] sm:$0x3]
  %v986 = vld [vmem:[%s39] sm:$0x1]
  %v988 = vlaneseq
  %v989 = vshrl.u32 %v988, 7
  %v990 = vsub.s32 0, %v989
  %v991 = vrot.slane %v986, %v990
  %v994 = vsel %vm162, %v975, 0
  %v997 = vsel %vm162, %v976, 0
  %v1000 = vsel %vm162, %v977, 0
  %v1003 = vsel %vm162, %v978, 0
  %v1006 = vsel %vm162, %v979, 0
  %v1009 = vsel %vm162, %v980, 0
  %v1012 = vsel %vm162, %v981, 0
  %v1015 = vsel %vm166, %v985, 0
  %1017 = vmatprep.subr.mxu0 0.0
  %1018 = vmatpush1.msra.mxu0 0.0
  %1019 = vmatprep.subr.mxu0 0.0
  %1020 = vmatpush1.msra.mxu0 0.0
  %1021 = vmatprep.subr.mxu0 0.0
  %1022 = vmatpush1.msra.mxu0 0.0
  %1023 = vmatprep.subr.mxu0 0.0
  %1024 = vmatpush1.msra.mxu0 0.0
  %1025 = vmatprep.subr.mxu0 0.0
  %1026 = vmatpush1.msra.mxu0 0.0
  %1027 = vmatprep.subr.mxu0 0.0
  %1028 = vmatpush1.msra.mxu0 0.0
  %1029 = vmatprep.subr.mxu0 0.0
  %1030 = vmatpush1.msra.mxu0 0.0
  %1031 = vmatprep.subr.mxu0 0.0
  %1032 = vmatpush1.msra.mxu0 0.0
  %1033 = vmatprep.subr.mxu0 0.0
  %1034 = vmatpush1.msra.mxu0 0.0
  %1035 = vmatprep.subr.mxu0 0.0
  %1036 = vmatpush1.msra.mxu0 0.0
  %1037 = vmatprep.subr.mxu0 0.0
  %1038 = vmatpush1.msra.mxu0 0.0
  %1039 = vmatprep.subr.mxu0 0.0
  %1040 = vmatpush1.msra.mxu0 0.0
  %1041 = vmatprep.subr.mxu0 0.0
  %1042 = vmatpush1.msra.mxu0 %v1015
  %1043 = vmatprep.subr.mxu0 0.0
  %1044 = vmatpush1.msra.mxu0 %v984
  %1045 = vmatprep.subr.mxu0 0.0
  %1046 = vmatpush1.msra.mxu0 %v983
  %1047 = vmatprep.subr.mxu0 0.0
  %1048 = vmatpush1.msra.mxu0 %v982
  %1049 = vmatprep.subr.mxu0 0.0
  %1050 = vmatpush2.msra.mxu0 0.0
  %1051 = vmatprep.subr.mxu0 0.0
  %1052 = vmatpush2.msra.mxu0 0.0
  %1053 = vmatprep.subr.mxu0 0.0
  %1054 = vmatpush2.msra.mxu0 0.0
  %1055 = vmatprep.subr.mxu0 0.0
  %1056 = vmatpush2.msra.mxu0 0.0
  %1057 = vmatprep.subr.mxu0 0.0
  %1058 = vmatpush2.msra.mxu0 0.0
  %1059 = vmatprep.subr.mxu0 0.0
  %1060 = vmatpush2.msra.mxu0 0.0
  %1061 = vmatprep.subr.mxu0 0.0
  %1062 = vmatpush2.msra.mxu0 0.0
  %1063 = vmatprep.subr.mxu0 0.0
  %1064 = vmatpush2.msra.mxu0 0.0
  %1065 = vmatprep.subr.mxu0 0.0
  %1066 = vmatpush2.msra.mxu0 0.0
  %1067 = vmatprep.subr.mxu0 0.0
  %1068 = vmatpush2.msra.mxu0 0.0
  %1069 = vmatprep.subr.mxu0 0.0
  %1070 = vmatpush2.msra.mxu0 0.0
  %1071 = vmatprep.subr.mxu0 0.0
  %1072 = vmatpush2.msra.mxu0 0.0
  %1073 = vmatprep.subr.mxu0 0.0
  %1074 = vmatpush2.msra.mxu0 0.0
  %1075 = vmatprep.subr.mxu0 0.0
  %1076 = vmatpush2.msra.mxu0 0.0
  %1077 = vmatprep.subr.mxu0 0.0
  %1078 = vmatpush2.msra.mxu0 0.0
  %1079 = vmatprep.subr.mxu0 0.0
  %1080 = vmatpush2.msra.mxu0 0.0
  %1081 = vmatprep.mubr.f32.mxu0 0.0
  %1082 = vmatmul.mubr.f32.gmra.mxu0 %v994
  %v1083 = vpop.f32.mrf.mxu0
  %v1084 = vadd.f32 %v991, %v1083
  %v1085 = vpop.f32.mrf.mxu0
  %1086 = vmatprep.mubr.f32.mxu0 0.0
  %1087 = vmatmul.mubr.f32.gmra.mxu0 %v997
  %v1088 = vpop.f32.mrf.mxu0
  %v1089 = vadd.f32 %v991, %v1088
  %v1090 = vpop.f32.mrf.mxu0
  %1091 = vmatprep.mubr.f32.mxu0 0.0
  %1092 = vmatmul.mubr.f32.gmra.mxu0 %v1000
  %v1093 = vpop.f32.mrf.mxu0
  %v1094 = vadd.f32 %v991, %v1093
  %v1095 = vpop.f32.mrf.mxu0
  %1096 = vmatprep.mubr.f32.mxu0 0.0
  %1097 = vmatmul.mubr.f32.gmra.mxu0 %v1003
  %v1098 = vpop.f32.mrf.mxu0
  %v1099 = vadd.f32 %v991, %v1098
  %v1100 = vpop.f32.mrf.mxu0
  %1101 = vmatprep.mubr.f32.mxu0 0.0
  %1102 = vmatmul.mubr.f32.gmra.mxu0 %v1006
  %v1103 = vpop.f32.mrf.mxu0
  %v1104 = vadd.f32 %v991, %v1103
  %v1105 = vpop.f32.mrf.mxu0
  %1106 = vmatprep.mubr.f32.mxu0 0.0
  %1107 = vmatmul.mubr.f32.gmra.mxu0 %v1009
  %v1108 = vpop.f32.mrf.mxu0
  %v1109 = vadd.f32 %v991, %v1108
  %v1110 = vpop.f32.mrf.mxu0
  %1111 = vmatprep.mubr.f32.mxu0 0.0
  %1112 = vmatmul.mubr.f32.gmra.mxu0 %v1012
  %v1113 = vpop.f32.mrf.mxu0
  %v1114 = vadd.f32 %v991, %v1113
  %v1115 = vpop.f32.mrf.mxu0
  %1116 = vdwg.mxu0
  %v1117 = vxor.u32 %v1084, 2147483648
  %v1118 = vxor.u32 %v1089, 2147483648
  %v1119 = vxor.u32 %v1094, 2147483648
  %v1120 = vxor.u32 %v1099, 2147483648
  %v1121 = vxor.u32 %v1104, 2147483648
  %v1122 = vxor.u32 %v1109, 2147483648
  %v1123 = vxor.u32 %v1114, 2147483648
  %v1124 = vmul.f32 %v1117, 1.442695
  %v1125 = vpow.pop %v1124
  %v1126 = vmul.f32 %v1118, 1.442695
  %v1127 = vpow.pop %v1126
  %v1128 = vmul.f32 %v1119, 1.442695
  %v1129 = vpow.pop %v1128
  %v1130 = vmul.f32 %v1120, 1.442695
  %v1131 = vpow.pop %v1130
  %v1132 = vmul.f32 %v1121, 1.442695
  %v1133 = vpow.pop %v1132
  %v1134 = vmul.f32 %v1122, 1.442695
  %v1135 = vpow.pop %v1134
  %v1136 = vmul.f32 %v1123, 1.442695
  %v1137 = vpow.pop %v1136
  %v1138 = vadd.f32 %v1125, 1.0
  %v1139 = vadd.f32 %v1127, 1.0
  %v1140 = vadd.f32 %v1129, 1.0
  %v1141 = vadd.f32 %v1131, 1.0
  %v1142 = vadd.f32 %v1133, 1.0
  %v1143 = vadd.f32 %v1135, 1.0
  %v1144 = vadd.f32 %v1137, 1.0
  %v1145 = vrcp.pop %v1138
  %v1146 = vmul.f32 1.0, %v1145
  %v1147 = vrcp.pop %v1139
  %v1148 = vmul.f32 1.0, %v1147
  %v1149 = vrcp.pop %v1140
  %v1150 = vmul.f32 1.0, %v1149
  %v1151 = vrcp.pop %v1141
  %v1152 = vmul.f32 1.0, %v1151
  %v1153 = vrcp.pop %v1142
  %v1154 = vmul.f32 1.0, %v1153
  %v1155 = vrcp.pop %v1143
  %v1156 = vmul.f32 1.0, %v1155
  %v1157 = vrcp.pop %v1144
  %v1158 = vmul.f32 1.0, %v1157
  %v1159 = vmul.f32 %v1084, %v1146
  %v1160 = vmul.f32 %v1089, %v1148
  %v1161 = vmul.f32 %v1094, %v1150
  %v1162 = vmul.f32 %v1099, %v1152
  %v1163 = vmul.f32 %v1104, %v1154
  %v1164 = vmul.f32 %v1109, %v1156
  %v1165 = vmul.f32 %v1114, %v1158
  %v1166 = vld [vmem:[%s41] sm:$0x1]
  %v1168 = vlaneseq
  %v1169 = vshrl.u32 %v1168, 7
  %v1170 = vsub.s32 0, %v1169
  %v1171 = vrot.slane %v1166, %v1170
  %v1173 = vmul.f32 %v1159, %v1171
  %v1174 = vmul.f32 %v1160, %v1171
  %v1175 = vmul.f32 %v1161, %v1171
  %v1176 = vmul.f32 %v1162, %v1171
  %v1177 = vmul.f32 %v1163, %v1171
  %v1178 = vmul.f32 %v1164, %v1171
  %v1179 = vmul.f32 %v1165, %v1171
  %v1180 = vsel %vm162, %v1173, 0.0
  %1181 = vadd.xlane.f32.xlu0 %v1180
  %v1182 = vpop.xlane.xlu0 %1181
  %v1183 = vsel %vm162, %v1174, 0.0
  %1184 = vadd.xlane.f32.xlu0 %v1183
  %v1185 = vpop.xlane.xlu0 %1184
  %v1186 = vsel %vm162, %v1175, 0.0
  %1187 = vadd.xlane.f32.xlu0 %v1186
  %v1188 = vpop.xlane.xlu0 %1187
  %v1189 = vsel %vm162, %v1176, 0.0
  %1190 = vadd.xlane.f32.xlu0 %v1189
  %v1191 = vpop.xlane.xlu0 %1190
  %v1192 = vsel %vm162, %v1177, 0.0
  %1193 = vadd.xlane.f32.xlu0 %v1192
  %v1194 = vpop.xlane.xlu0 %1193
  %v1195 = vsel %vm162, %v1178, 0.0
  %1196 = vadd.xlane.f32.xlu0 %v1195
  %v1197 = vpop.xlane.xlu0 %1196
  %v1198 = vsel %vm162, %v1179, 0.0
  %1199 = vadd.xlane.f32.xlu0 %v1198
  %v1200 = vpop.xlane.xlu0 %1199
  %v1201 = vld [vmem:[%s43] sm:$0x1]
  %v1203 = vlaneseq
  %v1204 = vshrl.u32 %v1203, 7
  %v1205 = vsub.s32 0, %v1204
  %v1206 = vrot.slane %v1201, %v1205
  %v1208 = vadd.f32 %v1182, %v1206
  %v1209 = vadd.f32 %v1185, %v1206
  %v1210 = vadd.f32 %v1188, %v1206
  %v1211 = vadd.f32 %v1191, %v1206
  %v1212 = vadd.f32 %v1194, %v1206
  %v1213 = vadd.f32 %v1197, %v1206
  %v1214 = vadd.f32 %v1200, %v1206
  %v1215 = vxor.u32 %v1208, 2147483648
  %v1216 = vxor.u32 %v1209, 2147483648
  %v1217 = vxor.u32 %v1210, 2147483648
  %v1218 = vxor.u32 %v1211, 2147483648
  %v1219 = vxor.u32 %v1212, 2147483648
  %v1220 = vxor.u32 %v1213, 2147483648
  %v1221 = vxor.u32 %v1214, 2147483648
  %v1222 = vmul.f32 %v1215, 1.442695
  %v1223 = vpow.pop %v1222
  %v1224 = vmul.f32 %v1216, 1.442695
  %v1225 = vpow.pop %v1224
  %v1226 = vmul.f32 %v1217, 1.442695
  %v1227 = vpow.pop %v1226
  %v1228 = vmul.f32 %v1218, 1.442695
  %v1229 = vpow.pop %v1228
  %v1230 = vmul.f32 %v1219, 1.442695
  %v1231 = vpow.pop %v1230
  %v1232 = vmul.f32 %v1220, 1.442695
  %v1233 = vpow.pop %v1232
  %v1234 = vmul.f32 %v1221, 1.442695
  %v1235 = vpow.pop %v1234
  %v1236 = vadd.f32 %v1223, 1.0
  %v1237 = vadd.f32 %v1225, 1.0
  %v1238 = vadd.f32 %v1227, 1.0
  %v1239 = vadd.f32 %v1229, 1.0
  %v1240 = vadd.f32 %v1231, 1.0
  %v1241 = vadd.f32 %v1233, 1.0
  %v1242 = vadd.f32 %v1235, 1.0
  %v1243 = vrcp.pop %v1236
  %v1244 = vmul.f32 1.0, %v1243
  %v1245 = vrcp.pop %v1237
  %v1246 = vmul.f32 1.0, %v1245
  %v1247 = vrcp.pop %v1238
  %v1248 = vmul.f32 1.0, %v1247
  %v1249 = vrcp.pop %v1239
  %v1250 = vmul.f32 1.0, %v1249
  %v1251 = vrcp.pop %v1240
  %v1252 = vmul.f32 1.0, %v1251
  %v1253 = vrcp.pop %v1241
  %v1254 = vmul.f32 1.0, %v1253
  %v1255 = vrcp.pop %v1242
  %v1256 = vmul.f32 1.0, %v1255
  %1258 = vset.pattern.permute.xlu0 0
  %1259 = vperm.xlu0 %1258, %v1244
  %v1260 = vpop.permute.xlu0 %1259
  %1263 = vset.pattern.permute.xlu0 0
  %1264 = vperm.xlu0 %1263, %v1246
  %v1265 = vpop.permute.xlu0 %1264
  %1268 = vset.pattern.permute.xlu0 0
  %1269 = vperm.xlu0 %1268, %v1248
  %v1270 = vpop.permute.xlu0 %1269
  %1273 = vset.pattern.permute.xlu0 0
  %1274 = vperm.xlu0 %1273, %v1250
  %v1275 = vpop.permute.xlu0 %1274
  %1278 = vset.pattern.permute.xlu0 0
  %1279 = vperm.xlu0 %1278, %v1252
  %v1280 = vpop.permute.xlu0 %1279
  %1283 = vset.pattern.permute.xlu0 0
  %1284 = vperm.xlu0 %1283, %v1254
  %v1285 = vpop.permute.xlu0 %1284
  %1288 = vset.pattern.permute.xlu0 0
  %1289 = vperm.xlu0 %1288, %v1256
  %v1290 = vpop.permute.xlu0 %1289
  %v1292 = vmul.f32 %v1159, %v1260
  %v1293 = vmul.f32 %v1160, %v1265
  %v1294 = vmul.f32 %v1161, %v1270
  %v1295 = vmul.f32 %v1162, %v1275
  %v1296 = vmul.f32 %v1163, %v1280
  %v1297 = vmul.f32 %v1164, %v1285
  %v1298 = vmul.f32 %v1165, %v1290
  %v1299 = vld [vmem:[%s45] sm:$0xff]
  %v1300 = vld [vmem:[%s45 + $0x8] sm:$0xff]
  %v1301 = vld [vmem:[%s45 + $0x10] sm:$0xff]
  %v1302 = vld [vmem:[%s45 + $0x18] sm:$0x3]
  %v1303 = vld [vmem:[%s47] sm:$0x1]
  %v1305 = vlaneseq
  %v1306 = vshrl.u32 %v1305, 7
  %v1307 = vsub.s32 0, %v1306
  %v1308 = vrot.slane %v1303, %v1307
  %v1311 = vsel %vm162, %v1292, 0
  %v1314 = vsel %vm162, %v1293, 0
  %v1317 = vsel %vm162, %v1294, 0
  %v1320 = vsel %vm162, %v1295, 0
  %v1323 = vsel %vm162, %v1296, 0
  %v1326 = vsel %vm162, %v1297, 0
  %v1329 = vsel %vm162, %v1298, 0
  %v1332 = vsel %vm166, %v1302, 0
  %1334 = vmatprep.subr.mxu0 0.0
  %1335 = vmatpush1.msra.mxu0 0.0
  %1336 = vmatprep.subr.mxu0 0.0
  %1337 = vmatpush1.msra.mxu0 0.0
  %1338 = vmatprep.subr.mxu0 0.0
  %1339 = vmatpush1.msra.mxu0 0.0
  %1340 = vmatprep.subr.mxu0 0.0
  %1341 = vmatpush1.msra.mxu0 0.0
  %1342 = vmatprep.subr.mxu0 0.0
  %1343 = vmatpush1.msra.mxu0 0.0
  %1344 = vmatprep.subr.mxu0 0.0
  %1345 = vmatpush1.msra.mxu0 0.0
  %1346 = vmatprep.subr.mxu0 0.0
  %1347 = vmatpush1.msra.mxu0 0.0
  %1348 = vmatprep.subr.mxu0 0.0
  %1349 = vmatpush1.msra.mxu0 0.0
  %1350 = vmatprep.subr.mxu0 0.0
  %1351 = vmatpush1.msra.mxu0 0.0
  %1352 = vmatprep.subr.mxu0 0.0
  %1353 = vmatpush1.msra.mxu0 0.0
  %1354 = vmatprep.subr.mxu0 0.0
  %1355 = vmatpush1.msra.mxu0 0.0
  %1356 = vmatprep.subr.mxu0 0.0
  %1357 = vmatpush1.msra.mxu0 0.0
  %1358 = vmatprep.subr.mxu0 0.0
  %1359 = vmatpush1.msra.mxu0 %v1332
  %1360 = vmatprep.subr.mxu0 0.0
  %1361 = vmatpush1.msra.mxu0 %v1301
  %1362 = vmatprep.subr.mxu0 0.0
  %1363 = vmatpush1.msra.mxu0 %v1300
  %1364 = vmatprep.subr.mxu0 0.0
  %1365 = vmatpush1.msra.mxu0 %v1299
  %1366 = vmatprep.subr.mxu0 0.0
  %1367 = vmatpush2.msra.mxu0 0.0
  %1368 = vmatprep.subr.mxu0 0.0
  %1369 = vmatpush2.msra.mxu0 0.0
  %1370 = vmatprep.subr.mxu0 0.0
  %1371 = vmatpush2.msra.mxu0 0.0
  %1372 = vmatprep.subr.mxu0 0.0
  %1373 = vmatpush2.msra.mxu0 0.0
  %1374 = vmatprep.subr.mxu0 0.0
  %1375 = vmatpush2.msra.mxu0 0.0
  %1376 = vmatprep.subr.mxu0 0.0
  %1377 = vmatpush2.msra.mxu0 0.0
  %1378 = vmatprep.subr.mxu0 0.0
  %1379 = vmatpush2.msra.mxu0 0.0
  %1380 = vmatprep.subr.mxu0 0.0
  %1381 = vmatpush2.msra.mxu0 0.0
  %1382 = vmatprep.subr.mxu0 0.0
  %1383 = vmatpush2.msra.mxu0 0.0
  %1384 = vmatprep.subr.mxu0 0.0
  %1385 = vmatpush2.msra.mxu0 0.0
  %1386 = vmatprep.subr.mxu0 0.0
  %1387 = vmatpush2.msra.mxu0 0.0
  %1388 = vmatprep.subr.mxu0 0.0
  %1389 = vmatpush2.msra.mxu0 0.0
  %1390 = vmatprep.subr.mxu0 0.0
  %1391 = vmatpush2.msra.mxu0 0.0
  %1392 = vmatprep.subr.mxu0 0.0
  %1393 = vmatpush2.msra.mxu0 0.0
  %1394 = vmatprep.subr.mxu0 0.0
  %1395 = vmatpush2.msra.mxu0 0.0
  %1396 = vmatprep.subr.mxu0 0.0
  %1397 = vmatpush2.msra.mxu0 0.0
  %1398 = vmatprep.mubr.f32.mxu0 0.0
  %1399 = vmatmul.mubr.f32.gmra.mxu0 %v1311
  %v1400 = vpop.f32.mrf.mxu0
  %v1401 = vadd.f32 %v1308, %v1400
  %v1402 = vpop.f32.mrf.mxu0
  %1403 = vmatprep.mubr.f32.mxu0 0.0
  %1404 = vmatmul.mubr.f32.gmra.mxu0 %v1314
  %v1405 = vpop.f32.mrf.mxu0
  %v1406 = vadd.f32 %v1308, %v1405
  %v1407 = vpop.f32.mrf.mxu0
  %1408 = vmatprep.mubr.f32.mxu0 0.0
  %1409 = vmatmul.mubr.f32.gmra.mxu0 %v1317
  %v1410 = vpop.f32.mrf.mxu0
  %v1411 = vadd.f32 %v1308, %v1410
  %v1412 = vpop.f32.mrf.mxu0
  %1413 = vmatprep.mubr.f32.mxu0 0.0
  %1414 = vmatmul.mubr.f32.gmra.mxu0 %v1320
  %v1415 = vpop.f32.mrf.mxu0
  %v1416 = vadd.f32 %v1308, %v1415
  %v1417 = vpop.f32.mrf.mxu0
  %1418 = vmatprep.mubr.f32.mxu0 0.0
  %1419 = vmatmul.mubr.f32.gmra.mxu0 %v1323
  %v1420 = vpop.f32.mrf.mxu0
  %v1421 = vadd.f32 %v1308, %v1420
  %v1422 = vpop.f32.mrf.mxu0
  %1423 = vmatprep.mubr.f32.mxu0 0.0
  %1424 = vmatmul.mubr.f32.gmra.mxu0 %v1326
  %v1425 = vpop.f32.mrf.mxu0
  %v1426 = vadd.f32 %v1308, %v1425
  %v1427 = vpop.f32.mrf.mxu0
  %1428 = vmatprep.mubr.f32.mxu0 0.0
  %1429 = vmatmul.mubr.f32.gmra.mxu0 %v1329
  %v1430 = vpop.f32.mrf.mxu0
  %v1431 = vadd.f32 %v1308, %v1430
  %v1432 = vpop.f32.mrf.mxu0
  %1433 = vdwg.mxu0
  %v1434 = vxor.u32 %v1401, 2147483648
  %v1435 = vxor.u32 %v1406, 2147483648
  %v1436 = vxor.u32 %v1411, 2147483648
  %v1437 = vxor.u32 %v1416, 2147483648
  %v1438 = vxor.u32 %v1421, 2147483648
  %v1439 = vxor.u32 %v1426, 2147483648
  %v1440 = vxor.u32 %v1431, 2147483648
  %v1441 = vmul.f32 %v1434, 1.442695
  %v1442 = vpow.pop %v1441
  %v1443 = vmul.f32 %v1435, 1.442695
  %v1444 = vpow.pop %v1443
  %v1445 = vmul.f32 %v1436, 1.442695
  %v1446 = vpow.pop %v1445
  %v1447 = vmul.f32 %v1437, 1.442695
  %v1448 = vpow.pop %v1447
  %v1449 = vmul.f32 %v1438, 1.442695
  %v1450 = vpow.pop %v1449
  %v1451 = vmul.f32 %v1439, 1.442695
  %v1452 = vpow.pop %v1451
  %v1453 = vmul.f32 %v1440, 1.442695
  %v1454 = vpow.pop %v1453
  %v1455 = vadd.f32 %v1442, 1.0
  %v1456 = vadd.f32 %v1444, 1.0
  %v1457 = vadd.f32 %v1446, 1.0
  %v1458 = vadd.f32 %v1448, 1.0
  %v1459 = vadd.f32 %v1450, 1.0
  %v1460 = vadd.f32 %v1452, 1.0
  %v1461 = vadd.f32 %v1454, 1.0
  %v1462 = vrcp.pop %v1455
  %v1463 = vmul.f32 1.0, %v1462
  %v1464 = vrcp.pop %v1456
  %v1465 = vmul.f32 1.0, %v1464
  %v1466 = vrcp.pop %v1457
  %v1467 = vmul.f32 1.0, %v1466
  %v1468 = vrcp.pop %v1458
  %v1469 = vmul.f32 1.0, %v1468
  %v1470 = vrcp.pop %v1459
  %v1471 = vmul.f32 1.0, %v1470
  %v1472 = vrcp.pop %v1460
  %v1473 = vmul.f32 1.0, %v1472
  %v1474 = vrcp.pop %v1461
  %v1475 = vmul.f32 1.0, %v1474
  %v1476 = vmul.f32 %v1401, %v1463
  %v1477 = vmul.f32 %v1406, %v1465
  %v1478 = vmul.f32 %v1411, %v1467
  %v1479 = vmul.f32 %v1416, %v1469
  %v1480 = vmul.f32 %v1421, %v1471
  %v1481 = vmul.f32 %v1426, %v1473
  %v1482 = vmul.f32 %v1431, %v1475
  %v1483 = vld [vmem:[%s49] sm:$0x1]
  %v1485 = vlaneseq
  %v1486 = vshrl.u32 %v1485, 7
  %v1487 = vsub.s32 0, %v1486
  %v1488 = vrot.slane %v1483, %v1487
  %v1490 = vmul.f32 %v1476, %v1488
  %v1491 = vmul.f32 %v1477, %v1488
  %v1492 = vmul.f32 %v1478, %v1488
  %v1493 = vmul.f32 %v1479, %v1488
  %v1494 = vmul.f32 %v1480, %v1488
  %v1495 = vmul.f32 %v1481, %v1488
  %v1496 = vmul.f32 %v1482, %v1488
  %v1497 = vsel %vm162, %v1490, 0.0
  %1498 = vadd.xlane.f32.xlu0 %v1497
  %v1499 = vpop.xlane.xlu0 %1498
  %v1500 = vsel %vm162, %v1491, 0.0
  %1501 = vadd.xlane.f32.xlu0 %v1500
  %v1502 = vpop.xlane.xlu0 %1501
  %v1503 = vsel %vm162, %v1492, 0.0
  %1504 = vadd.xlane.f32.xlu0 %v1503
  %v1505 = vpop.xlane.xlu0 %1504
  %v1506 = vsel %vm162, %v1493, 0.0
  %1507 = vadd.xlane.f32.xlu0 %v1506
  %v1508 = vpop.xlane.xlu0 %1507
  %v1509 = vsel %vm162, %v1494, 0.0
  %1510 = vadd.xlane.f32.xlu0 %v1509
  %v1511 = vpop.xlane.xlu0 %1510
  %v1512 = vsel %vm162, %v1495, 0.0
  %1513 = vadd.xlane.f32.xlu0 %v1512
  %v1514 = vpop.xlane.xlu0 %1513
  %v1515 = vsel %vm162, %v1496, 0.0
  %1516 = vadd.xlane.f32.xlu0 %v1515
  %v1517 = vpop.xlane.xlu0 %1516
  %v1518 = vmul.f32 %v791, %v1499
  %v1519 = vmul.f32 %v792, %v1502
  %v1520 = vmul.f32 %v793, %v1505
  %v1521 = vmul.f32 %v794, %v1508
  %v1522 = vmul.f32 %v795, %v1511
  %v1523 = vmul.f32 %v796, %v1514
  %v1524 = vmul.f32 %v797, %v1517
  %vm1525 = vcmask 457728
  %v1527 = vsel %vm1525, %v149, 0
  %1529 = vmatprep.subr.mxu0 0.0
  %1530 = vmatpush1.msra.mxu0 0.0
  %1531 = vmatprep.subr.mxu0 0.0
  %1532 = vmatpush1.msra.mxu0 0.0
  %1533 = vmatprep.subr.mxu0 0.0
  %1534 = vmatpush1.msra.mxu0 0.0
  %1535 = vmatprep.subr.mxu0 0.0
  %1536 = vmatpush1.msra.mxu0 0.0
  %1537 = vmatprep.subr.mxu0 0.0
  %1538 = vmatpush1.msra.mxu0 0.0
  %1539 = vmatprep.subr.mxu0 0.0
  %1540 = vmatpush1.msra.mxu0 0.0
  %1541 = vmatprep.subr.mxu0 0.0
  %1542 = vmatpush1.msra.mxu0 0.0
  %1543 = vmatprep.subr.mxu0 0.0
  %1544 = vmatpush1.msra.mxu0 0.0
  %1545 = vmatprep.subr.mxu0 0.0
  %1546 = vmatpush1.msra.mxu0 0.0
  %1547 = vmatprep.subr.mxu0 0.0
  %1548 = vmatpush1.msra.mxu0 %v1524
  %1549 = vmatprep.subr.mxu0 0.0
  %1550 = vmatpush1.msra.mxu0 %v1523
  %1551 = vmatprep.subr.mxu0 0.0
  %1552 = vmatpush1.msra.mxu0 %v1522
  %1553 = vmatprep.subr.mxu0 0.0
  %1554 = vmatpush1.msra.mxu0 %v1521
  %1555 = vmatprep.subr.mxu0 0.0
  %1556 = vmatpush1.msra.mxu0 %v1520
  %1557 = vmatprep.subr.mxu0 0.0
  %1558 = vmatpush1.msra.mxu0 %v1519
  %1559 = vmatprep.subr.mxu0 0.0
  %1560 = vmatpush1.msra.mxu0 %v1518
  %1561 = vmatprep.subr.mxu0 0.0
  %1562 = vmatpush2.msra.mxu0 0.0
  %1563 = vmatprep.subr.mxu0 0.0
  %1564 = vmatpush2.msra.mxu0 0.0
  %1565 = vmatprep.subr.mxu0 0.0
  %1566 = vmatpush2.msra.mxu0 0.0
  %1567 = vmatprep.subr.mxu0 0.0
  %1568 = vmatpush2.msra.mxu0 0.0
  %1569 = vmatprep.subr.mxu0 0.0
  %1570 = vmatpush2.msra.mxu0 0.0
  %1571 = vmatprep.subr.mxu0 0.0
  %1572 = vmatpush2.msra.mxu0 0.0
  %1573 = vmatprep.subr.mxu0 0.0
  %1574 = vmatpush2.msra.mxu0 0.0
  %1575 = vmatprep.subr.mxu0 0.0
  %1576 = vmatpush2.msra.mxu0 0.0
  %1577 = vmatprep.subr.mxu0 0.0
  %1578 = vmatpush2.msra.mxu0 0.0
  %1579 = vmatprep.subr.mxu0 0.0
  %1580 = vmatpush2.msra.mxu0 0.0
  %1581 = vmatprep.subr.mxu0 0.0
  %1582 = vmatpush2.msra.mxu0 0.0
  %1583 = vmatprep.subr.mxu0 0.0
  %1584 = vmatpush2.msra.mxu0 0.0
  %1585 = vmatprep.subr.mxu0 0.0
  %1586 = vmatpush2.msra.mxu0 0.0
  %1587 = vmatprep.subr.mxu0 0.0
  %1588 = vmatpush2.msra.mxu0 0.0
  %1589 = vmatprep.subr.mxu0 0.0
  %1590 = vmatpush2.msra.mxu0 0.0
  %1591 = vmatprep.subr.mxu0 0.0
  %1592 = vmatpush2.msra.mxu0 0.0
  %1593 = vmatprep.mubr.f32.mxu0 0.0
  %1594 = vmatmul.mubr.f32.gmra.mxu0 %v1527
  %v1595 = vpop.f32.mrf.mxu0
  %v1596 = vadd.f32 0.0, %v1595
  %v1597 = vpop.f32.mrf.mxu0
  %1598 = vdwg.mxu0
  %v1599 = vadd.f32 %v240, %v1596
  %v1601 = vsel %vm1525, %v148, 0
  %1603 = vmatprep.subr.mxu0 0.0
  %1604 = vmatpush1.msra.mxu0 0.0
  %1605 = vmatprep.subr.mxu0 0.0
  %1606 = vmatpush1.msra.mxu0 0.0
  %1607 = vmatprep.subr.mxu0 0.0
  %1608 = vmatpush1.msra.mxu0 0.0
  %1609 = vmatprep.subr.mxu0 0.0
  %1610 = vmatpush1.msra.mxu0 0.0
  %1611 = vmatprep.subr.mxu0 0.0
  %1612 = vmatpush1.msra.mxu0 0.0
  %1613 = vmatprep.subr.mxu0 0.0
  %1614 = vmatpush1.msra.mxu0 0.0
  %1615 = vmatprep.subr.mxu0 0.0
  %1616 = vmatpush1.msra.mxu0 0.0
  %1617 = vmatprep.subr.mxu0 0.0
  %1618 = vmatpush1.msra.mxu0 0.0
  %1619 = vmatprep.subr.mxu0 0.0
  %1620 = vmatpush1.msra.mxu0 0.0
  %1621 = vmatprep.subr.mxu0 0.0
  %1622 = vmatpush1.msra.mxu0 %v1298
  %1623 = vmatprep.subr.mxu0 0.0
  %1624 = vmatpush1.msra.mxu0 %v1297
  %1625 = vmatprep.subr.mxu0 0.0
  %1626 = vmatpush1.msra.mxu0 %v1296
  %1627 = vmatprep.subr.mxu0 0.0
  %1628 = vmatpush1.msra.mxu0 %v1295
  %1629 = vmatprep.subr.mxu0 0.0
  %1630 = vmatpush1.msra.mxu0 %v1294
  %1631 = vmatprep.subr.mxu0 0.0
  %1632 = vmatpush1.msra.mxu0 %v1293
  %1633 = vmatprep.subr.mxu0 0.0
  %1634 = vmatpush1.msra.mxu0 %v1292
  %1635 = vmatprep.subr.mxu0 0.0
  %1636 = vmatpush2.msra.mxu0 0.0
  %1637 = vmatprep.subr.mxu0 0.0
  %1638 = vmatpush2.msra.mxu0 0.0
  %1639 = vmatprep.subr.mxu0 0.0
  %1640 = vmatpush2.msra.mxu0 0.0
  %1641 = vmatprep.subr.mxu0 0.0
  %1642 = vmatpush2.msra.mxu0 0.0
  %1643 = vmatprep.subr.mxu0 0.0
  %1644 = vmatpush2.msra.mxu0 0.0
  %1645 = vmatprep.subr.mxu0 0.0
  %1646 = vmatpush2.msra.mxu0 0.0
  %1647 = vmatprep.subr.mxu0 0.0
  %1648 = vmatpush2.msra.mxu0 0.0
  %1649 = vmatprep.subr.mxu0 0.0
  %1650 = vmatpush2.msra.mxu0 0.0
  %1651 = vmatprep.subr.mxu0 0.0
  %1652 = vmatpush2.msra.mxu0 0.0
  %1653 = vmatprep.subr.mxu0 0.0
  %1654 = vmatpush2.msra.mxu0 0.0
  %1655 = vmatprep.subr.mxu0 0.0
  %1656 = vmatpush2.msra.mxu0 0.0
  %1657 = vmatprep.subr.mxu0 0.0
  %1658 = vmatpush2.msra.mxu0 0.0
  %1659 = vmatprep.subr.mxu0 0.0
  %1660 = vmatpush2.msra.mxu0 0.0
  %1661 = vmatprep.subr.mxu0 0.0
  %1662 = vmatpush2.msra.mxu0 0.0
  %1663 = vmatprep.subr.mxu0 0.0
  %1664 = vmatpush2.msra.mxu0 0.0
  %1665 = vmatprep.subr.mxu0 0.0
  %1666 = vmatpush2.msra.mxu0 0.0
  %1667 = vmatprep.mubr.f32.mxu0 0.0
  %1668 = vmatmul.mubr.f32.gmra.mxu0 %v1601
  %v1669 = vpop.f32.mrf.mxu0
  %v1670 = vadd.f32 0.0, %v1669
  %v1671 = vpop.f32.mrf.mxu0
  %1672 = vdwg.mxu0
  %v1673 = vld [vmem:[%s51] sm:$0xff]
  %v1674 = vld [vmem:[%s51 + $0x8] sm:$0xff]
  %v1675 = vld [vmem:[%s51 + $0x10] sm:$0xff]
  %v1676 = vld [vmem:[%s51 + $0x18] sm:$0x3]
  %v1677 = vld [vmem:[%s53] sm:$0xff]
  %v1678 = vld [vmem:[%s53 + $0x8] sm:$0xff]
  %v1679 = vld [vmem:[%s53 + $0x10] sm:$0xff]
  %v1680 = vld [vmem:[%s53 + $0x18] sm:$0x3]
  %v1682 = vsel %vm162, %v1670, 0
  %v1685 = vsel %vm166, %v1680, 0
  %1687 = vmatprep.subr.mxu0 0.0
  %1688 = vmatpush1.msra.mxu0 0.0
  %1689 = vmatprep.subr.mxu0 0.0
  %1690 = vmatpush1.msra.mxu0 0.0
  %1691 = vmatprep.subr.mxu0 0.0
  %1692 = vmatpush1.msra.mxu0 0.0
  %1693 = vmatprep.subr.mxu0 0.0
  %1694 = vmatpush1.msra.mxu0 0.0
  %1695 = vmatprep.subr.mxu0 0.0
  %1696 = vmatpush1.msra.mxu0 0.0
  %1697 = vmatprep.subr.mxu0 0.0
  %1698 = vmatpush1.msra.mxu0 0.0
  %1699 = vmatprep.subr.mxu0 0.0
  %1700 = vmatpush1.msra.mxu0 0.0
  %1701 = vmatprep.subr.mxu0 0.0
  %1702 = vmatpush1.msra.mxu0 0.0
  %1703 = vmatprep.subr.mxu0 0.0
  %1704 = vmatpush1.msra.mxu0 0.0
  %1705 = vmatprep.subr.mxu0 0.0
  %1706 = vmatpush1.msra.mxu0 0.0
  %1707 = vmatprep.subr.mxu0 0.0
  %1708 = vmatpush1.msra.mxu0 0.0
  %1709 = vmatprep.subr.mxu0 0.0
  %1710 = vmatpush1.msra.mxu0 0.0
  %1711 = vmatprep.subr.mxu0 0.0
  %1712 = vmatpush1.msra.mxu0 %v1685
  %1713 = vmatprep.subr.mxu0 0.0
  %1714 = vmatpush1.msra.mxu0 %v1679
  %1715 = vmatprep.subr.mxu0 0.0
  %1716 = vmatpush1.msra.mxu0 %v1678
  %1717 = vmatprep.subr.mxu0 0.0
  %1718 = vmatpush1.msra.mxu0 %v1677
  %1719 = vmatprep.subr.mxu0 0.0
  %1720 = vmatpush2.msra.mxu0 0.0
  %1721 = vmatprep.subr.mxu0 0.0
  %1722 = vmatpush2.msra.mxu0 0.0
  %1723 = vmatprep.subr.mxu0 0.0
  %1724 = vmatpush2.msra.mxu0 0.0
  %1725 = vmatprep.subr.mxu0 0.0
  %1726 = vmatpush2.msra.mxu0 0.0
  %1727 = vmatprep.subr.mxu0 0.0
  %1728 = vmatpush2.msra.mxu0 0.0
  %1729 = vmatprep.subr.mxu0 0.0
  %1730 = vmatpush2.msra.mxu0 0.0
  %1731 = vmatprep.subr.mxu0 0.0
  %1732 = vmatpush2.msra.mxu0 0.0
  %1733 = vmatprep.subr.mxu0 0.0
  %1734 = vmatpush2.msra.mxu0 0.0
  %1735 = vmatprep.subr.mxu0 0.0
  %1736 = vmatpush2.msra.mxu0 0.0
  %1737 = vmatprep.subr.mxu0 0.0
  %1738 = vmatpush2.msra.mxu0 0.0
  %1739 = vmatprep.subr.mxu0 0.0
  %1740 = vmatpush2.msra.mxu0 0.0
  %1741 = vmatprep.subr.mxu0 0.0
  %1742 = vmatpush2.msra.mxu0 0.0
  %1743 = vmatprep.subr.mxu0 0.0
  %1744 = vmatpush2.msra.mxu0 0.0
  %1745 = vmatprep.subr.mxu0 0.0
  %1746 = vmatpush2.msra.mxu0 0.0
  %1747 = vmatprep.subr.mxu0 0.0
  %1748 = vmatpush2.msra.mxu0 0.0
  %1749 = vmatprep.subr.mxu0 0.0
  %1750 = vmatpush2.msra.mxu0 0.0
  %1751 = vmatprep.mubr.f32.mxu0 0.0
  %1752 = vmatmul.mubr.f32.gmra.mxu0 %v1682
  %v1753 = vpop.f32.mrf.mxu0
  %v1754 = vadd.f32 0.0, %v1753
  %v1755 = vpop.f32.mrf.mxu0
  %1756 = vdwg.mxu0
  %v1758 = vsel %vm166, %v1676, 0
  %1760 = vmatprep.subr.mxu0 0.0
  %1761 = vmatpush1.msra.mxu0 0.0
  %1762 = vmatprep.subr.mxu0 0.0
  %1763 = vmatpush1.msra.mxu0 0.0
  %1764 = vmatprep.subr.mxu0 0.0
  %1765 = vmatpush1.msra.mxu0 0.0
  %1766 = vmatprep.subr.mxu0 0.0
  %1767 = vmatpush1.msra.mxu0 0.0
  %1768 = vmatprep.subr.mxu0 0.0
  %1769 = vmatpush1.msra.mxu0 0.0
  %1770 = vmatprep.subr.mxu0 0.0
  %1771 = vmatpush1.msra.mxu0 0.0
  %1772 = vmatprep.subr.mxu0 0.0
  %1773 = vmatpush1.msra.mxu0 0.0
  %1774 = vmatprep.subr.mxu0 0.0
  %1775 = vmatpush1.msra.mxu0 0.0
  %1776 = vmatprep.subr.mxu0 0.0
  %1777 = vmatpush1.msra.mxu0 0.0
  %1778 = vmatprep.subr.mxu0 0.0
  %1779 = vmatpush1.msra.mxu0 0.0
  %1780 = vmatprep.subr.mxu0 0.0
  %1781 = vmatpush1.msra.mxu0 0.0
  %1782 = vmatprep.subr.mxu0 0.0
  %1783 = vmatpush1.msra.mxu0 0.0
  %1784 = vmatprep.subr.mxu0 0.0
  %1785 = vmatpush1.msra.mxu0 %v1758
  %1786 = vmatprep.subr.mxu0 0.0
  %1787 = vmatpush1.msra.mxu0 %v1675
  %1788 = vmatprep.subr.mxu0 0.0
  %1789 = vmatpush1.msra.mxu0 %v1674
  %1790 = vmatprep.subr.mxu0 0.0
  %1791 = vmatpush1.msra.mxu0 %v1673
  %1792 = vmatprep.subr.mxu0 0.0
  %1793 = vmatpush2.msra.mxu0 0.0
  %1794 = vmatprep.subr.mxu0 0.0
  %1795 = vmatpush2.msra.mxu0 0.0
  %1796 = vmatprep.subr.mxu0 0.0
  %1797 = vmatpush2.msra.mxu0 0.0
  %1798 = vmatprep.subr.mxu0 0.0
  %1799 = vmatpush2.msra.mxu0 0.0
  %1800 = vmatprep.subr.mxu0 0.0
  %1801 = vmatpush2.msra.mxu0 0.0
  %1802 = vmatprep.subr.mxu0 0.0
  %1803 = vmatpush2.msra.mxu0 0.0
  %1804 = vmatprep.subr.mxu0 0.0
  %1805 = vmatpush2.msra.mxu0 0.0
  %1806 = vmatprep.subr.mxu0 0.0
  %1807 = vmatpush2.msra.mxu0 0.0
  %1808 = vmatprep.subr.mxu0 0.0
  %1809 = vmatpush2.msra.mxu0 0.0
  %1810 = vmatprep.subr.mxu0 0.0
  %1811 = vmatpush2.msra.mxu0 0.0
  %1812 = vmatprep.subr.mxu0 0.0
  %1813 = vmatpush2.msra.mxu0 0.0
  %1814 = vmatprep.subr.mxu0 0.0
  %1815 = vmatpush2.msra.mxu0 0.0
  %1816 = vmatprep.subr.mxu0 0.0
  %1817 = vmatpush2.msra.mxu0 0.0
  %1818 = vmatprep.subr.mxu0 0.0
  %1819 = vmatpush2.msra.mxu0 0.0
  %1820 = vmatprep.subr.mxu0 0.0
  %1821 = vmatpush2.msra.mxu0 0.0
  %1822 = vmatprep.subr.mxu0 0.0
  %1823 = vmatpush2.msra.mxu0 0.0
  %1824 = vmatprep.mubr.f32.mxu0 0.0
  %1825 = vmatmul.mubr.f32.gmra.mxu0 %v246
  %v1826 = vpop.f32.mrf.mxu0
  %v1827 = vadd.f32 %v1754, %v1826
  %v1828 = vpop.f32.mrf.mxu0
  %1829 = vdwg.mxu0
  %v1830 = vld [vmem:[%s55] sm:$0x1]
  %v1832 = vlaneseq
  %v1833 = vshrl.u32 %v1832, 7
  %v1834 = vsub.s32 0, %v1833
  %v1835 = vrot.slane %v1830, %v1834
  %v1837 = vadd.f32 %v1827, %v1835
  %v1838 = vxor.u32 %v1837, 2147483648
  %v1839 = vmul.f32 %v1838, 1.442695
  %v1840 = vpow.pop %v1839
  %v1841 = vadd.f32 %v1840, 1.0
  %v1842 = vrcp.pop %v1841
  %v1843 = vmul.f32 1.0, %v1842
  %v1844 = vmul.f32 %v1837, %v1843
  %v1845 = vld [vmem:[%s57] sm:$0xff]
  %v1846 = vld [vmem:[%s57 + $0x8] sm:$0xff]
  %v1847 = vld [vmem:[%s57 + $0x10] sm:$0xff]
  %v1848 = vld [vmem:[%s57 + $0x18] sm:$0x3]
  %v1849 = vld [vmem:[%s59] sm:$0x1]
  %v1851 = vlaneseq
  %v1852 = vshrl.u32 %v1851, 7
  %v1853 = vsub.s32 0, %v1852
  %v1854 = vrot.slane %v1849, %v1853
  %v1857 = vsel %vm162, %v1844, 0
  %v1860 = vsel %vm166, %v1848, 0
  %1862 = vmatprep.subr.mxu0 0.0
  %1863 = vmatpush1.msra.mxu0 0.0
  %1864 = vmatprep.subr.mxu0 0.0
  %1865 = vmatpush1.msra.mxu0 0.0
  %1866 = vmatprep.subr.mxu0 0.0
  %1867 = vmatpush1.msra.mxu0 0.0
  %1868 = vmatprep.subr.mxu0 0.0
  %1869 = vmatpush1.msra.mxu0 0.0
  %1870 = vmatprep.subr.mxu0 0.0
  %1871 = vmatpush1.msra.mxu0 0.0
  %1872 = vmatprep.subr.mxu0 0.0
  %1873 = vmatpush1.msra.mxu0 0.0
  %1874 = vmatprep.subr.mxu0 0.0
  %1875 = vmatpush1.msra.mxu0 0.0
  %1876 = vmatprep.subr.mxu0 0.0
  %1877 = vmatpush1.msra.mxu0 0.0
  %1878 = vmatprep.subr.mxu0 0.0
  %1879 = vmatpush1.msra.mxu0 0.0
  %1880 = vmatprep.subr.mxu0 0.0
  %1881 = vmatpush1.msra.mxu0 0.0
  %1882 = vmatprep.subr.mxu0 0.0
  %1883 = vmatpush1.msra.mxu0 0.0
  %1884 = vmatprep.subr.mxu0 0.0
  %1885 = vmatpush1.msra.mxu0 0.0
  %1886 = vmatprep.subr.mxu0 0.0
  %1887 = vmatpush1.msra.mxu0 %v1860
  %1888 = vmatprep.subr.mxu0 0.0
  %1889 = vmatpush1.msra.mxu0 %v1847
  %1890 = vmatprep.subr.mxu0 0.0
  %1891 = vmatpush1.msra.mxu0 %v1846
  %1892 = vmatprep.subr.mxu0 0.0
  %1893 = vmatpush1.msra.mxu0 %v1845
  %1894 = vmatprep.subr.mxu0 0.0
  %1895 = vmatpush2.msra.mxu0 0.0
  %1896 = vmatprep.subr.mxu0 0.0
  %1897 = vmatpush2.msra.mxu0 0.0
  %1898 = vmatprep.subr.mxu0 0.0
  %1899 = vmatpush2.msra.mxu0 0.0
  %1900 = vmatprep.subr.mxu0 0.0
  %1901 = vmatpush2.msra.mxu0 0.0
  %1902 = vmatprep.subr.mxu0 0.0
  %1903 = vmatpush2.msra.mxu0 0.0
  %1904 = vmatprep.subr.mxu0 0.0
  %1905 = vmatpush2.msra.mxu0 0.0
  %1906 = vmatprep.subr.mxu0 0.0
  %1907 = vmatpush2.msra.mxu0 0.0
  %1908 = vmatprep.subr.mxu0 0.0
  %1909 = vmatpush2.msra.mxu0 0.0
  %1910 = vmatprep.subr.mxu0 0.0
  %1911 = vmatpush2.msra.mxu0 0.0
  %1912 = vmatprep.subr.mxu0 0.0
  %1913 = vmatpush2.msra.mxu0 0.0
  %1914 = vmatprep.subr.mxu0 0.0
  %1915 = vmatpush2.msra.mxu0 0.0
  %1916 = vmatprep.subr.mxu0 0.0
  %1917 = vmatpush2.msra.mxu0 0.0
  %1918 = vmatprep.subr.mxu0 0.0
  %1919 = vmatpush2.msra.mxu0 0.0
  %1920 = vmatprep.subr.mxu0 0.0
  %1921 = vmatpush2.msra.mxu0 0.0
  %1922 = vmatprep.subr.mxu0 0.0
  %1923 = vmatpush2.msra.mxu0 0.0
  %1924 = vmatprep.subr.mxu0 0.0
  %1925 = vmatpush2.msra.mxu0 0.0
  %1926 = vmatprep.mubr.f32.mxu0 0.0
  %1927 = vmatmul.mubr.f32.gmra.mxu0 %v1857
  %v1928 = vpop.f32.mrf.mxu0
  %v1929 = vadd.f32 %v1854, %v1928
  %v1930 = vpop.f32.mrf.mxu0
  %1931 = vdwg.mxu0
  %v1932 = vadd.f32 %v237, %v1929
  %s1933 = scalar_lea.vmem %s29, 32
  %v1934 = vld [vmem:[%s1933] sm:$0xff]
  %v1935 = vld [vmem:[%s1933 + $0x8] sm:$0xff]
  %v1936 = vld [vmem:[%s1933 + $0x10] sm:$0xff]
  %v1937 = vld [vmem:[%s1933 + $0x18] sm:$0x3]
  %v1939 = vsel %vm162, %v1932, 0
  %v1942 = vsel %vm166, %v1937, 0
  %1944 = vmatprep.subr.mxu0 0.0
  %1945 = vmatpush1.msra.mxu0 0.0
  %1946 = vmatprep.subr.mxu0 0.0
  %1947 = vmatpush1.msra.mxu0 0.0
  %1948 = vmatprep.subr.mxu0 0.0
  %1949 = vmatpush1.msra.mxu0 0.0
  %1950 = vmatprep.subr.mxu0 0.0
  %1951 = vmatpush1.msra.mxu0 0.0
  %1952 = vmatprep.subr.mxu0 0.0
  %1953 = vmatpush1.msra.mxu0 0.0
  %1954 = vmatprep.subr.mxu0 0.0
  %1955 = vmatpush1.msra.mxu0 0.0
  %1956 = vmatprep.subr.mxu0 0.0
  %1957 = vmatpush1.msra.mxu0 0.0
  %1958 = vmatprep.subr.mxu0 0.0
  %1959 = vmatpush1.msra.mxu0 0.0
  %1960 = vmatprep.subr.mxu0 0.0
  %1961 = vmatpush1.msra.mxu0 0.0
  %1962 = vmatprep.subr.mxu0 0.0
  %1963 = vmatpush1.msra.mxu0 0.0
  %1964 = vmatprep.subr.mxu0 0.0
  %1965 = vmatpush1.msra.mxu0 0.0
  %1966 = vmatprep.subr.mxu0 0.0
  %1967 = vmatpush1.msra.mxu0 0.0
  %1968 = vmatprep.subr.mxu0 0.0
  %1969 = vmatpush1.msra.mxu0 %v1942
  %1970 = vmatprep.subr.mxu0 0.0
  %1971 = vmatpush1.msra.mxu0 %v1936
  %1972 = vmatprep.subr.mxu0 0.0
  %1973 = vmatpush1.msra.mxu0 %v1935
  %1974 = vmatprep.subr.mxu0 0.0
  %1975 = vmatpush1.msra.mxu0 %v1934
  %1976 = vmatprep.subr.mxu0 0.0
  %1977 = vmatpush2.msra.mxu0 0.0
  %1978 = vmatprep.subr.mxu0 0.0
  %1979 = vmatpush2.msra.mxu0 0.0
  %1980 = vmatprep.subr.mxu0 0.0
  %1981 = vmatpush2.msra.mxu0 0.0
  %1982 = vmatprep.subr.mxu0 0.0
  %1983 = vmatpush2.msra.mxu0 0.0
  %1984 = vmatprep.subr.mxu0 0.0
  %1985 = vmatpush2.msra.mxu0 0.0
  %1986 = vmatprep.subr.mxu0 0.0
  %1987 = vmatpush2.msra.mxu0 0.0
  %1988 = vmatprep.subr.mxu0 0.0
  %1989 = vmatpush2.msra.mxu0 0.0
  %1990 = vmatprep.subr.mxu0 0.0
  %1991 = vmatpush2.msra.mxu0 0.0
  %1992 = vmatprep.subr.mxu0 0.0
  %1993 = vmatpush2.msra.mxu0 0.0
  %1994 = vmatprep.subr.mxu0 0.0
  %1995 = vmatpush2.msra.mxu0 0.0
  %1996 = vmatprep.subr.mxu0 0.0
  %1997 = vmatpush2.msra.mxu0 0.0
  %1998 = vmatprep.subr.mxu0 0.0
  %1999 = vmatpush2.msra.mxu0 0.0
  %2000 = vmatprep.subr.mxu0 0.0
  %2001 = vmatpush2.msra.mxu0 0.0
  %2002 = vmatprep.subr.mxu0 0.0
  %2003 = vmatpush2.msra.mxu0 0.0
  %2004 = vmatprep.subr.mxu0 0.0
  %2005 = vmatpush2.msra.mxu0 0.0
  %2006 = vmatprep.subr.mxu0 0.0
  %2007 = vmatpush2.msra.mxu0 0.0
  %2008 = vmatprep.mubr.f32.mxu0 0.0
  %2009 = vmatmul.mubr.f32.gmra.mxu0 %v1939
  %v2010 = vpop.f32.mrf.mxu0
  %v2011 = vadd.f32 0.0, %v2010
  %v2012 = vpop.f32.mrf.mxu0
  %2013 = vdwg.mxu0
  %s2014 = scalar_lea.vmem %s31, 32
  %v2015 = vld [vmem:[%s2014] sm:$0xff]
  %v2016 = vld [vmem:[%s2014 + $0x8] sm:$0xff]
  %v2017 = vld [vmem:[%s2014 + $0x10] sm:$0xff]
  %v2018 = vld [vmem:[%s2014 + $0x18] sm:$0x3]
  %v2020 = vsel %vm166, %v2018, 0
  %2022 = vmatprep.subr.mxu0 0.0
  %2023 = vmatpush1.msra.mxu0 0.0
  %2024 = vmatprep.subr.mxu0 0.0
  %2025 = vmatpush1.msra.mxu0 0.0
  %2026 = vmatprep.subr.mxu0 0.0
  %2027 = vmatpush1.msra.mxu0 0.0
  %2028 = vmatprep.subr.mxu0 0.0
  %2029 = vmatpush1.msra.mxu0 0.0
  %2030 = vmatprep.subr.mxu0 0.0
  %2031 = vmatpush1.msra.mxu0 0.0
  %2032 = vmatprep.subr.mxu0 0.0
  %2033 = vmatpush1.msra.mxu0 0.0
  %2034 = vmatprep.subr.mxu0 0.0
  %2035 = vmatpush1.msra.mxu0 0.0
  %2036 = vmatprep.subr.mxu0 0.0
  %2037 = vmatpush1.msra.mxu0 0.0
  %2038 = vmatprep.subr.mxu0 0.0
  %2039 = vmatpush1.msra.mxu0 0.0
  %2040 = vmatprep.subr.mxu0 0.0
  %2041 = vmatpush1.msra.mxu0 0.0
  %2042 = vmatprep.subr.mxu0 0.0
  %2043 = vmatpush1.msra.mxu0 0.0
  %2044 = vmatprep.subr.mxu0 0.0
  %2045 = vmatpush1.msra.mxu0 0.0
  %2046 = vmatprep.subr.mxu0 0.0
  %2047 = vmatpush1.msra.mxu0 %v2020
  %2048 = vmatprep.subr.mxu0 0.0
  %2049 = vmatpush1.msra.mxu0 %v2017
  %2050 = vmatprep.subr.mxu0 0.0
  %2051 = vmatpush1.msra.mxu0 %v2016
  %2052 = vmatprep.subr.mxu0 0.0
  %2053 = vmatpush1.msra.mxu0 %v2015
  %2054 = vmatprep.subr.mxu0 0.0
  %2055 = vmatpush2.msra.mxu0 0.0
  %2056 = vmatprep.subr.mxu0 0.0
  %2057 = vmatpush2.msra.mxu0 0.0
  %2058 = vmatprep.subr.mxu0 0.0
  %2059 = vmatpush2.msra.mxu0 0.0
  %2060 = vmatprep.subr.mxu0 0.0
  %2061 = vmatpush2.msra.mxu0 0.0
  %2062 = vmatprep.subr.mxu0 0.0
  %2063 = vmatpush2.msra.mxu0 0.0
  %2064 = vmatprep.subr.mxu0 0.0
  %2065 = vmatpush2.msra.mxu0 0.0
  %2066 = vmatprep.subr.mxu0 0.0
  %2067 = vmatpush2.msra.mxu0 0.0
  %2068 = vmatprep.subr.mxu0 0.0
  %2069 = vmatpush2.msra.mxu0 0.0
  %2070 = vmatprep.subr.mxu0 0.0
  %2071 = vmatpush2.msra.mxu0 0.0
  %2072 = vmatprep.subr.mxu0 0.0
  %2073 = vmatpush2.msra.mxu0 0.0
  %2074 = vmatprep.subr.mxu0 0.0
  %2075 = vmatpush2.msra.mxu0 0.0
  %2076 = vmatprep.subr.mxu0 0.0
  %2077 = vmatpush2.msra.mxu0 0.0
  %2078 = vmatprep.subr.mxu0 0.0
  %2079 = vmatpush2.msra.mxu0 0.0
  %2080 = vmatprep.subr.mxu0 0.0
  %2081 = vmatpush2.msra.mxu0 0.0
  %2082 = vmatprep.subr.mxu0 0.0
  %2083 = vmatpush2.msra.mxu0 0.0
  %2084 = vmatprep.subr.mxu0 0.0
  %2085 = vmatpush2.msra.mxu0 0.0
  %2086 = vmatprep.mubr.f32.mxu0 0.0
  %2087 = vmatmul.mubr.f32.gmra.mxu0 %v1939
  %v2088 = vpop.f32.mrf.mxu0
  %v2089 = vadd.f32 0.0, %v2088
  %v2090 = vpop.f32.mrf.mxu0
  %2091 = vdwg.mxu0
  %2092 = vmatprep.subr.mxu0 0.0
  %2093 = vmatpush1.msra.mxu0 0.0
  %2094 = vmatprep.subr.mxu0 0.0
  %2095 = vmatpush1.msra.mxu0 0.0
  %2096 = vmatprep.subr.mxu0 0.0
  %2097 = vmatpush1.msra.mxu0 0.0
  %2098 = vmatprep.subr.mxu0 0.0
  %2099 = vmatpush1.msra.mxu0 0.0
  %2100 = vmatprep.subr.mxu0 0.0
  %2101 = vmatpush1.msra.mxu0 0.0
  %2102 = vmatprep.subr.mxu0 0.0
  %2103 = vmatpush1.msra.mxu0 0.0
  %2104 = vmatprep.subr.mxu0 0.0
  %2105 = vmatpush1.msra.mxu0 0.0
  %2106 = vmatprep.subr.mxu0 0.0
  %2107 = vmatpush1.msra.mxu0 0.0
  %2108 = vmatprep.subr.mxu0 0.0
  %2109 = vmatpush1.msra.mxu0 0.0
  %2110 = vmatprep.subr.mxu0 0.0
  %2111 = vmatpush1.msra.mxu0 0.0
  %2112 = vmatprep.subr.mxu0 0.0
  %2113 = vmatpush1.msra.mxu0 0.0
  %2114 = vmatprep.subr.mxu0 0.0
  %2115 = vmatpush1.msra.mxu0 0.0
  %2116 = vmatprep.subr.mxu0 0.0
  %2117 = vmatpush1.msra.mxu0 0.0
  %2118 = vmatprep.subr.mxu0 0.0
  %2119 = vmatpush1.msra.mxu0 0.0
  %2120 = vmatprep.subr.mxu0 0.0
  %2121 = vmatpush1.msra.mxu0 0.0
  %2122 = vmatprep.subr.mxu0 0.0
  %2123 = vmatpush1.msra.mxu0 %v2089
  %2124 = vmatprep.subr.mxu0 0.0
  %2125 = vmatpush2.msra.mxu0 0.0
  %2126 = vmatprep.subr.mxu0 0.0
  %2127 = vmatpush2.msra.mxu0 0.0
  %2128 = vmatprep.subr.mxu0 0.0
  %2129 = vmatpush2.msra.mxu0 0.0
  %2130 = vmatprep.subr.mxu0 0.0
  %2131 = vmatpush2.msra.mxu0 0.0
  %2132 = vmatprep.subr.mxu0 0.0
  %2133 = vmatpush2.msra.mxu0 0.0
  %2134 = vmatprep.subr.mxu0 0.0
  %2135 = vmatpush2.msra.mxu0 0.0
  %2136 = vmatprep.subr.mxu0 0.0
  %2137 = vmatpush2.msra.mxu0 0.0
  %2138 = vmatprep.subr.mxu0 0.0
  %2139 = vmatpush2.msra.mxu0 0.0
  %2140 = vmatprep.subr.mxu0 0.0
  %2141 = vmatpush2.msra.mxu0 0.0
  %2142 = vmatprep.subr.mxu0 0.0
  %2143 = vmatpush2.msra.mxu0 0.0
  %2144 = vmatprep.subr.mxu0 0.0
  %2145 = vmatpush2.msra.mxu0 0.0
  %2146 = vmatprep.subr.mxu0 0.0
  %2147 = vmatpush2.msra.mxu0 0.0
  %2148 = vmatprep.subr.mxu0 0.0
  %2149 = vmatpush2.msra.mxu0 0.0
  %2150 = vmatprep.subr.mxu0 0.0
  %2151 = vmatpush2.msra.mxu0 0.0
  %2152 = vmatprep.subr.mxu0 0.0
  %2153 = vmatpush2.msra.mxu0 0.0
  %2154 = vmatprep.subr.mxu0 0.0
  %2155 = vmatpush2.msra.mxu0 0.0
  %2156 = vmatprep.mubr.f32.mxu0 0.0
  %2157 = vmatmul.mubr.f32.gmra.mxu0 %v400
  %v2158 = vpop.f32.mrf.mxu0
  %v2159 = vadd.f32 0.0, %v2158
  %v2160 = vpop.f32.mrf.mxu0
  %2161 = vmatprep.mubr.f32.mxu0 0.0
  %2162 = vmatmul.mubr.f32.gmra.mxu0 %v403
  %v2163 = vpop.f32.mrf.mxu0
  %v2164 = vadd.f32 0.0, %v2163
  %v2165 = vpop.f32.mrf.mxu0
  %2166 = vmatprep.mubr.f32.mxu0 0.0
  %2167 = vmatmul.mubr.f32.gmra.mxu0 %v406
  %v2168 = vpop.f32.mrf.mxu0
  %v2169 = vadd.f32 0.0, %v2168
  %v2170 = vpop.f32.mrf.mxu0
  %2171 = vmatprep.mubr.f32.mxu0 0.0
  %2172 = vmatmul.mubr.f32.gmra.mxu0 %v409
  %v2173 = vpop.f32.mrf.mxu0
  %v2174 = vadd.f32 0.0, %v2173
  %v2175 = vpop.f32.mrf.mxu0
  %2176 = vmatprep.mubr.f32.mxu0 0.0
  %2177 = vmatmul.mubr.f32.gmra.mxu0 %v412
  %v2178 = vpop.f32.mrf.mxu0
  %v2179 = vadd.f32 0.0, %v2178
  %v2180 = vpop.f32.mrf.mxu0
  %2181 = vmatprep.mubr.f32.mxu0 0.0
  %2182 = vmatmul.mubr.f32.gmra.mxu0 %v415
  %v2183 = vpop.f32.mrf.mxu0
  %v2184 = vadd.f32 0.0, %v2183
  %v2185 = vpop.f32.mrf.mxu0
  %2186 = vmatprep.mubr.f32.mxu0 0.0
  %2187 = vmatmul.mubr.f32.gmra.mxu0 %v418
  %v2188 = vpop.f32.mrf.mxu0
  %v2189 = vadd.f32 0.0, %v2188
  %v2190 = vpop.f32.mrf.mxu0
  %2191 = vdwg.mxu0
  %2192 = vmatprep.subr.mxu0 0.0
  %2193 = vmatpush1.msra.mxu0 0.0
  %2194 = vmatprep.subr.mxu0 0.0
  %2195 = vmatpush1.msra.mxu0 0.0
  %2196 = vmatprep.subr.mxu0 0.0
  %2197 = vmatpush1.msra.mxu0 0.0
  %2198 = vmatprep.subr.mxu0 0.0
  %2199 = vmatpush1.msra.mxu0 0.0
  %2200 = vmatprep.subr.mxu0 0.0
  %2201 = vmatpush1.msra.mxu0 0.0
  %2202 = vmatprep.subr.mxu0 0.0
  %2203 = vmatpush1.msra.mxu0 0.0
  %2204 = vmatprep.subr.mxu0 0.0
  %2205 = vmatpush1.msra.mxu0 0.0
  %2206 = vmatprep.subr.mxu0 0.0
  %2207 = vmatpush1.msra.mxu0 0.0
  %2208 = vmatprep.subr.mxu0 0.0
  %2209 = vmatpush1.msra.mxu0 0.0
  %2210 = vmatprep.subr.mxu0 0.0
  %2211 = vmatpush1.msra.mxu0 0.0
  %2212 = vmatprep.subr.mxu0 0.0
  %2213 = vmatpush1.msra.mxu0 0.0
  %2214 = vmatprep.subr.mxu0 0.0
  %2215 = vmatpush1.msra.mxu0 0.0
  %2216 = vmatprep.subr.mxu0 0.0
  %2217 = vmatpush1.msra.mxu0 0.0
  %2218 = vmatprep.subr.mxu0 0.0
  %2219 = vmatpush1.msra.mxu0 0.0
  %2220 = vmatprep.subr.mxu0 0.0
  %2221 = vmatpush1.msra.mxu0 0.0
  %2222 = vmatprep.subr.mxu0 0.0
  %2223 = vmatpush1.msra.mxu0 %v1599
  %2224 = vmatprep.subr.mxu0 0.0
  %2225 = vmatpush2.msra.mxu0 0.0
  %2226 = vmatprep.subr.mxu0 0.0
  %2227 = vmatpush2.msra.mxu0 0.0
  %2228 = vmatprep.subr.mxu0 0.0
  %2229 = vmatpush2.msra.mxu0 0.0
  %2230 = vmatprep.subr.mxu0 0.0
  %2231 = vmatpush2.msra.mxu0 0.0
  %2232 = vmatprep.subr.mxu0 0.0
  %2233 = vmatpush2.msra.mxu0 0.0
  %2234 = vmatprep.subr.mxu0 0.0
  %2235 = vmatpush2.msra.mxu0 0.0
  %2236 = vmatprep.subr.mxu0 0.0
  %2237 = vmatpush2.msra.mxu0 0.0
  %2238 = vmatprep.subr.mxu0 0.0
  %2239 = vmatpush2.msra.mxu0 0.0
  %2240 = vmatprep.subr.mxu0 0.0
  %2241 = vmatpush2.msra.mxu0 0.0
  %2242 = vmatprep.subr.mxu0 0.0
  %2243 = vmatpush2.msra.mxu0 0.0
  %2244 = vmatprep.subr.mxu0 0.0
  %2245 = vmatpush2.msra.mxu0 0.0
  %2246 = vmatprep.subr.mxu0 0.0
  %2247 = vmatpush2.msra.mxu0 0.0
  %2248 = vmatprep.subr.mxu0 0.0
  %2249 = vmatpush2.msra.mxu0 0.0
  %2250 = vmatprep.subr.mxu0 0.0
  %2251 = vmatpush2.msra.mxu0 0.0
  %2252 = vmatprep.subr.mxu0 0.0
  %2253 = vmatpush2.msra.mxu0 0.0
  %2254 = vmatprep.subr.mxu0 0.0
  %2255 = vmatpush2.msra.mxu0 0.0
  %2256 = vmatprep.mubr.f32.mxu0 0.0
  %2257 = vmatmul.mubr.f32.gmra.mxu0 %v521
  %v2258 = vpop.f32.mrf.mxu0
  %v2259 = vadd.f32 0.0, %v2258
  %v2260 = vpop.f32.mrf.mxu0
  %2261 = vmatprep.mubr.f32.mxu0 0.0
  %2262 = vmatmul.mubr.f32.gmra.mxu0 %v524
  %v2263 = vpop.f32.mrf.mxu0
  %v2264 = vadd.f32 0.0, %v2263
  %v2265 = vpop.f32.mrf.mxu0
  %2266 = vmatprep.mubr.f32.mxu0 0.0
  %2267 = vmatmul.mubr.f32.gmra.mxu0 %v527
  %v2268 = vpop.f32.mrf.mxu0
  %v2269 = vadd.f32 0.0, %v2268
  %v2270 = vpop.f32.mrf.mxu0
  %2271 = vmatprep.mubr.f32.mxu0 0.0
  %2272 = vmatmul.mubr.f32.gmra.mxu0 %v530
  %v2273 = vpop.f32.mrf.mxu0
  %v2274 = vadd.f32 0.0, %v2273
  %v2275 = vpop.f32.mrf.mxu0
  %2276 = vmatprep.mubr.f32.mxu0 0.0
  %2277 = vmatmul.mubr.f32.gmra.mxu0 %v533
  %v2278 = vpop.f32.mrf.mxu0
  %v2279 = vadd.f32 0.0, %v2278
  %v2280 = vpop.f32.mrf.mxu0
  %2281 = vmatprep.mubr.f32.mxu0 0.0
  %2282 = vmatmul.mubr.f32.gmra.mxu0 %v536
  %v2283 = vpop.f32.mrf.mxu0
  %v2284 = vadd.f32 0.0, %v2283
  %v2285 = vpop.f32.mrf.mxu0
  %2286 = vmatprep.mubr.f32.mxu0 0.0
  %2287 = vmatmul.mubr.f32.gmra.mxu0 %v539
  %v2288 = vpop.f32.mrf.mxu0
  %v2289 = vadd.f32 0.0, %v2288
  %v2290 = vpop.f32.mrf.mxu0
  %2291 = vdwg.mxu0
  %2292 = vmatprep.subr.mxu0 0.0
  %2293 = vmatpush1.msra.mxu0 0.0
  %2294 = vmatprep.subr.mxu0 0.0
  %2295 = vmatpush1.msra.mxu0 0.0
  %2296 = vmatprep.subr.mxu0 0.0
  %2297 = vmatpush1.msra.mxu0 0.0
  %2298 = vmatprep.subr.mxu0 0.0
  %2299 = vmatpush1.msra.mxu0 0.0
  %2300 = vmatprep.subr.mxu0 0.0
  %2301 = vmatpush1.msra.mxu0 0.0
  %2302 = vmatprep.subr.mxu0 0.0
  %2303 = vmatpush1.msra.mxu0 0.0
  %2304 = vmatprep.subr.mxu0 0.0
  %2305 = vmatpush1.msra.mxu0 0.0
  %2306 = vmatprep.subr.mxu0 0.0
  %2307 = vmatpush1.msra.mxu0 0.0
  %2308 = vmatprep.subr.mxu0 0.0
  %2309 = vmatpush1.msra.mxu0 0.0
  %2310 = vmatprep.subr.mxu0 0.0
  %2311 = vmatpush1.msra.mxu0 0.0
  %2312 = vmatprep.subr.mxu0 0.0
  %2313 = vmatpush1.msra.mxu0 0.0
  %2314 = vmatprep.subr.mxu0 0.0
  %2315 = vmatpush1.msra.mxu0 0.0
  %2316 = vmatprep.subr.mxu0 0.0
  %2317 = vmatpush1.msra.mxu0 0.0
  %2318 = vmatprep.subr.mxu0 0.0
  %2319 = vmatpush1.msra.mxu0 0.0
  %2320 = vmatprep.subr.mxu0 0.0
  %2321 = vmatpush1.msra.mxu0 0.0
  %2322 = vmatprep.subr.mxu0 0.0
  %2323 = vmatpush1.msra.mxu0 %v1599
  %2324 = vmatprep.subr.mxu0 0.0
  %2325 = vmatpush2.msra.mxu0 0.0
  %2326 = vmatprep.subr.mxu0 0.0
  %2327 = vmatpush2.msra.mxu0 0.0
  %2328 = vmatprep.subr.mxu0 0.0
  %2329 = vmatpush2.msra.mxu0 0.0
  %2330 = vmatprep.subr.mxu0 0.0
  %2331 = vmatpush2.msra.mxu0 0.0
  %2332 = vmatprep.subr.mxu0 0.0
  %2333 = vmatpush2.msra.mxu0 0.0
  %2334 = vmatprep.subr.mxu0 0.0
  %2335 = vmatpush2.msra.mxu0 0.0
  %2336 = vmatprep.subr.mxu0 0.0
  %2337 = vmatpush2.msra.mxu0 0.0
  %2338 = vmatprep.subr.mxu0 0.0
  %2339 = vmatpush2.msra.mxu0 0.0
  %2340 = vmatprep.subr.mxu0 0.0
  %2341 = vmatpush2.msra.mxu0 0.0
  %2342 = vmatprep.subr.mxu0 0.0
  %2343 = vmatpush2.msra.mxu0 0.0
  %2344 = vmatprep.subr.mxu0 0.0
  %2345 = vmatpush2.msra.mxu0 0.0
  %2346 = vmatprep.subr.mxu0 0.0
  %2347 = vmatpush2.msra.mxu0 0.0
  %2348 = vmatprep.subr.mxu0 0.0
  %2349 = vmatpush2.msra.mxu0 0.0
  %2350 = vmatprep.subr.mxu0 0.0
  %2351 = vmatpush2.msra.mxu0 0.0
  %2352 = vmatprep.subr.mxu0 0.0
  %2353 = vmatpush2.msra.mxu0 0.0
  %2354 = vmatprep.subr.mxu0 0.0
  %2355 = vmatpush2.msra.mxu0 0.0
  %2356 = vmatprep.mubr.f32.mxu0 0.0
  %2357 = vmatmul.mubr.f32.gmra.mxu0 %v400
  %v2358 = vpop.f32.mrf.mxu0
  %v2359 = vadd.f32 0.0, %v2358
  %v2360 = vpop.f32.mrf.mxu0
  %2361 = vmatprep.mubr.f32.mxu0 0.0
  %2362 = vmatmul.mubr.f32.gmra.mxu0 %v403
  %v2363 = vpop.f32.mrf.mxu0
  %v2364 = vadd.f32 0.0, %v2363
  %v2365 = vpop.f32.mrf.mxu0
  %2366 = vmatprep.mubr.f32.mxu0 0.0
  %2367 = vmatmul.mubr.f32.gmra.mxu0 %v406
  %v2368 = vpop.f32.mrf.mxu0
  %v2369 = vadd.f32 0.0, %v2368
  %v2370 = vpop.f32.mrf.mxu0
  %2371 = vmatprep.mubr.f32.mxu0 0.0
  %2372 = vmatmul.mubr.f32.gmra.mxu0 %v409
  %v2373 = vpop.f32.mrf.mxu0
  %v2374 = vadd.f32 0.0, %v2373
  %v2375 = vpop.f32.mrf.mxu0
  %2376 = vmatprep.mubr.f32.mxu0 0.0
  %2377 = vmatmul.mubr.f32.gmra.mxu0 %v412
  %v2378 = vpop.f32.mrf.mxu0
  %v2379 = vadd.f32 0.0, %v2378
  %v2380 = vpop.f32.mrf.mxu0
  %2381 = vmatprep.mubr.f32.mxu0 0.0
  %2382 = vmatmul.mubr.f32.gmra.mxu0 %v415
  %v2383 = vpop.f32.mrf.mxu0
  %v2384 = vadd.f32 0.0, %v2383
  %v2385 = vpop.f32.mrf.mxu0
  %2386 = vmatprep.mubr.f32.mxu0 0.0
  %2387 = vmatmul.mubr.f32.gmra.mxu0 %v418
  %v2388 = vpop.f32.mrf.mxu0
  %v2389 = vadd.f32 0.0, %v2388
  %v2390 = vpop.f32.mrf.mxu0
  %2391 = vdwg.mxu0
  %v2392 = vsub.f32 %v2259, %v2359
  %v2393 = vsub.f32 %v2264, %v2364
  %v2394 = vsub.f32 %v2269, %v2369
  %v2395 = vsub.f32 %v2274, %v2374
  %v2396 = vsub.f32 %v2279, %v2379
  %v2397 = vsub.f32 %v2284, %v2384
  %v2398 = vsub.f32 %v2289, %v2389
  %v2399 = vmul.f32 %v2392, %v2392
  %v2400 = vmul.f32 %v2393, %v2393
  %v2401 = vmul.f32 %v2394, %v2394
  %v2402 = vmul.f32 %v2395, %v2395
  %v2403 = vmul.f32 %v2396, %v2396
  %v2404 = vmul.f32 %v2397, %v2397
  %v2405 = vmul.f32 %v2398, %v2398
  %v2406 = vsel %vm755, %v2399, 0.0
  %2407 = vadd.xlane.f32.xlu0 %v2406
  %v2408 = vpop.xlane.xlu0 %2407
  %v2409 = vsel %vm755, %v2400, 0.0
  %2410 = vadd.xlane.f32.xlu0 %v2409
  %v2411 = vpop.xlane.xlu0 %2410
  %v2412 = vsel %vm755, %v2401, 0.0
  %2413 = vadd.xlane.f32.xlu0 %v2412
  %v2414 = vpop.xlane.xlu0 %2413
  %v2415 = vsel %vm755, %v2402, 0.0
  %2416 = vadd.xlane.f32.xlu0 %v2415
  %v2417 = vpop.xlane.xlu0 %2416
  %v2418 = vsel %vm755, %v2403, 0.0
  %2419 = vadd.xlane.f32.xlu0 %v2418
  %v2420 = vpop.xlane.xlu0 %2419
  %v2421 = vsel %vm755, %v2404, 0.0
  %2422 = vadd.xlane.f32.xlu0 %v2421
  %v2423 = vpop.xlane.xlu0 %2422
  %v2424 = vsel %vm755, %v2405, 0.0
  %2425 = vadd.xlane.f32.xlu0 %v2424
  %v2426 = vpop.xlane.xlu0 %2425
  %v2427 = vadd.f32 %v2408, 1e-08
  %v2428 = vadd.f32 %v2411, 1e-08
  %v2429 = vadd.f32 %v2414, 1e-08
  %v2430 = vadd.f32 %v2417, 1e-08
  %v2431 = vadd.f32 %v2420, 1e-08
  %v2432 = vadd.f32 %v2423, 1e-08
  %v2433 = vadd.f32 %v2426, 1e-08
  %v2434 = vrsqrt.pop %v2427
  %v2435 = vrsqrt.pop %v2428
  %v2436 = vrsqrt.pop %v2429
  %v2437 = vrsqrt.pop %v2430
  %v2438 = vrsqrt.pop %v2431
  %v2439 = vrsqrt.pop %v2432
  %v2440 = vrsqrt.pop %v2433
  %v2441 = vmul.f32 %v2392, %v2434
  %v2442 = vmul.f32 %v2393, %v2435
  %v2443 = vmul.f32 %v2394, %v2436
  %v2444 = vmul.f32 %v2395, %v2437
  %v2445 = vmul.f32 %v2396, %v2438
  %v2446 = vmul.f32 %v2397, %v2439
  %v2447 = vmul.f32 %v2398, %v2440
  %2448 = vmatprep.subr.mxu0 0.0
  %2449 = vmatpush1.msra.mxu0 0.0
  %2450 = vmatprep.subr.mxu0 0.0
  %2451 = vmatpush1.msra.mxu0 0.0
  %2452 = vmatprep.subr.mxu0 0.0
  %2453 = vmatpush1.msra.mxu0 0.0
  %2454 = vmatprep.subr.mxu0 0.0
  %2455 = vmatpush1.msra.mxu0 0.0
  %2456 = vmatprep.subr.mxu0 0.0
  %2457 = vmatpush1.msra.mxu0 0.0
  %2458 = vmatprep.subr.mxu0 0.0
  %2459 = vmatpush1.msra.mxu0 0.0
  %2460 = vmatprep.subr.mxu0 0.0
  %2461 = vmatpush1.msra.mxu0 0.0
  %2462 = vmatprep.subr.mxu0 0.0
  %2463 = vmatpush1.msra.mxu0 0.0
  %2464 = vmatprep.subr.mxu0 0.0
  %2465 = vmatpush1.msra.mxu0 0.0
  %2466 = vmatprep.subr.mxu0 0.0
  %2467 = vmatpush1.msra.mxu0 0.0
  %2468 = vmatprep.subr.mxu0 0.0
  %2469 = vmatpush1.msra.mxu0 0.0
  %2470 = vmatprep.subr.mxu0 0.0
  %2471 = vmatpush1.msra.mxu0 0.0
  %2472 = vmatprep.subr.mxu0 0.0
  %2473 = vmatpush1.msra.mxu0 0.0
  %2474 = vmatprep.subr.mxu0 0.0
  %2475 = vmatpush1.msra.mxu0 0.0
  %2476 = vmatprep.subr.mxu0 0.0
  %2477 = vmatpush1.msra.mxu0 0.0
  %2478 = vmatprep.subr.mxu0 0.0
  %2479 = vmatpush1.msra.mxu0 %v2011
  %2480 = vmatprep.subr.mxu0 0.0
  %2481 = vmatpush2.msra.mxu0 0.0
  %2482 = vmatprep.subr.mxu0 0.0
  %2483 = vmatpush2.msra.mxu0 0.0
  %2484 = vmatprep.subr.mxu0 0.0
  %2485 = vmatpush2.msra.mxu0 0.0
  %2486 = vmatprep.subr.mxu0 0.0
  %2487 = vmatpush2.msra.mxu0 0.0
  %2488 = vmatprep.subr.mxu0 0.0
  %2489 = vmatpush2.msra.mxu0 0.0
  %2490 = vmatprep.subr.mxu0 0.0
  %2491 = vmatpush2.msra.mxu0 0.0
  %2492 = vmatprep.subr.mxu0 0.0
  %2493 = vmatpush2.msra.mxu0 0.0
  %2494 = vmatprep.subr.mxu0 0.0
  %2495 = vmatpush2.msra.mxu0 0.0
  %2496 = vmatprep.subr.mxu0 0.0
  %2497 = vmatpush2.msra.mxu0 0.0
  %2498 = vmatprep.subr.mxu0 0.0
  %2499 = vmatpush2.msra.mxu0 0.0
  %2500 = vmatprep.subr.mxu0 0.0
  %2501 = vmatpush2.msra.mxu0 0.0
  %2502 = vmatprep.subr.mxu0 0.0
  %2503 = vmatpush2.msra.mxu0 0.0
  %2504 = vmatprep.subr.mxu0 0.0
  %2505 = vmatpush2.msra.mxu0 0.0
  %2506 = vmatprep.subr.mxu0 0.0
  %2507 = vmatpush2.msra.mxu0 0.0
  %2508 = vmatprep.subr.mxu0 0.0
  %2509 = vmatpush2.msra.mxu0 0.0
  %2510 = vmatprep.subr.mxu0 0.0
  %2511 = vmatpush2.msra.mxu0 0.0
  %2512 = vmatprep.mubr.f32.mxu0 0.0
  %2513 = vmatmul.mubr.f32.gmra.mxu0 %v521
  %v2514 = vpop.f32.mrf.mxu0
  %v2515 = vadd.f32 %v2159, %v2514
  %v2516 = vpop.f32.mrf.mxu0
  %2517 = vmatprep.mubr.f32.mxu0 0.0
  %2518 = vmatmul.mubr.f32.gmra.mxu0 %v524
  %v2519 = vpop.f32.mrf.mxu0
  %v2520 = vadd.f32 %v2164, %v2519
  %v2521 = vpop.f32.mrf.mxu0
  %2522 = vmatprep.mubr.f32.mxu0 0.0
  %2523 = vmatmul.mubr.f32.gmra.mxu0 %v527
  %v2524 = vpop.f32.mrf.mxu0
  %v2525 = vadd.f32 %v2169, %v2524
  %v2526 = vpop.f32.mrf.mxu0
  %2527 = vmatprep.mubr.f32.mxu0 0.0
  %2528 = vmatmul.mubr.f32.gmra.mxu0 %v530
  %v2529 = vpop.f32.mrf.mxu0
  %v2530 = vadd.f32 %v2174, %v2529
  %v2531 = vpop.f32.mrf.mxu0
  %2532 = vmatprep.mubr.f32.mxu0 0.0
  %2533 = vmatmul.mubr.f32.gmra.mxu0 %v533
  %v2534 = vpop.f32.mrf.mxu0
  %v2535 = vadd.f32 %v2179, %v2534
  %v2536 = vpop.f32.mrf.mxu0
  %2537 = vmatprep.mubr.f32.mxu0 0.0
  %2538 = vmatmul.mubr.f32.gmra.mxu0 %v536
  %v2539 = vpop.f32.mrf.mxu0
  %v2540 = vadd.f32 %v2184, %v2539
  %v2541 = vpop.f32.mrf.mxu0
  %2542 = vmatprep.mubr.f32.mxu0 0.0
  %2543 = vmatmul.mubr.f32.gmra.mxu0 %v539
  %v2544 = vpop.f32.mrf.mxu0
  %v2545 = vadd.f32 %v2189, %v2544
  %v2546 = vpop.f32.mrf.mxu0
  %2547 = vdwg.mxu0
  %s2548 = scalar_lea.vmem %s33, 1
  %v2549 = vld [vmem:[%s2548] sm:$0x1]
  %v2551 = vlaneseq
  %v2552 = vshrl.u32 %v2551, 7
  %v2553 = vsub.s32 0, %v2552
  %v2554 = vrot.slane %v2549, %v2553
  %v2556 = vmul.f32 %v2408, %v2554
  %v2557 = vmul.f32 %v2411, %v2554
  %v2558 = vmul.f32 %v2414, %v2554
  %v2559 = vmul.f32 %v2417, %v2554
  %v2560 = vmul.f32 %v2420, %v2554
  %v2561 = vmul.f32 %v2423, %v2554
  %v2562 = vmul.f32 %v2426, %v2554
  %v2563 = vadd.f32 %v2515, %v2556
  %v2564 = vadd.f32 %v2520, %v2557
  %v2565 = vadd.f32 %v2525, %v2558
  %v2566 = vadd.f32 %v2530, %v2559
  %v2567 = vadd.f32 %v2535, %v2560
  %v2568 = vadd.f32 %v2540, %v2561
  %v2569 = vadd.f32 %v2545, %v2562
  %s2570 = scalar_lea.vmem %s35, 1
  %v2571 = vld [vmem:[%s2570] sm:$0x1]
  %v2573 = vlaneseq
  %v2574 = vshrl.u32 %v2573, 7
  %v2575 = vsub.s32 0, %v2574
  %v2576 = vrot.slane %v2571, %v2575
  %v2578 = vadd.f32 %v2563, %v2576
  %v2579 = vadd.f32 %v2564, %v2576
  %v2580 = vadd.f32 %v2565, %v2576
  %v2581 = vadd.f32 %v2566, %v2576
  %v2582 = vadd.f32 %v2567, %v2576
  %v2583 = vadd.f32 %v2568, %v2576
  %v2584 = vadd.f32 %v2569, %v2576
  %v2585 = vxor.u32 %v2578, 2147483648
  %v2586 = vxor.u32 %v2579, 2147483648
  %v2587 = vxor.u32 %v2580, 2147483648
  %v2588 = vxor.u32 %v2581, 2147483648
  %v2589 = vxor.u32 %v2582, 2147483648
  %v2590 = vxor.u32 %v2583, 2147483648
  %v2591 = vxor.u32 %v2584, 2147483648
  %v2592 = vmul.f32 %v2585, 1.442695
  %v2593 = vpow.pop %v2592
  %v2594 = vmul.f32 %v2586, 1.442695
  %v2595 = vpow.pop %v2594
  %v2596 = vmul.f32 %v2587, 1.442695
  %v2597 = vpow.pop %v2596
  %v2598 = vmul.f32 %v2588, 1.442695
  %v2599 = vpow.pop %v2598
  %v2600 = vmul.f32 %v2589, 1.442695
  %v2601 = vpow.pop %v2600
  %v2602 = vmul.f32 %v2590, 1.442695
  %v2603 = vpow.pop %v2602
  %v2604 = vmul.f32 %v2591, 1.442695
  %v2605 = vpow.pop %v2604
  %v2606 = vadd.f32 %v2593, 1.0
  %v2607 = vadd.f32 %v2595, 1.0
  %v2608 = vadd.f32 %v2597, 1.0
  %v2609 = vadd.f32 %v2599, 1.0
  %v2610 = vadd.f32 %v2601, 1.0
  %v2611 = vadd.f32 %v2603, 1.0
  %v2612 = vadd.f32 %v2605, 1.0
  %v2613 = vrcp.pop %v2606
  %v2614 = vmul.f32 1.0, %v2613
  %v2615 = vrcp.pop %v2607
  %v2616 = vmul.f32 1.0, %v2615
  %v2617 = vrcp.pop %v2608
  %v2618 = vmul.f32 1.0, %v2617
  %v2619 = vrcp.pop %v2609
  %v2620 = vmul.f32 1.0, %v2619
  %v2621 = vrcp.pop %v2610
  %v2622 = vmul.f32 1.0, %v2621
  %v2623 = vrcp.pop %v2611
  %v2624 = vmul.f32 1.0, %v2623
  %v2625 = vrcp.pop %v2612
  %v2626 = vmul.f32 1.0, %v2625
  %v2627 = vmul.f32 %v2578, %v2614
  %v2628 = vmul.f32 %v2579, %v2616
  %v2629 = vmul.f32 %v2580, %v2618
  %v2630 = vmul.f32 %v2581, %v2620
  %v2631 = vmul.f32 %v2582, %v2622
  %v2632 = vmul.f32 %v2583, %v2624
  %v2633 = vmul.f32 %v2584, %v2626
  %s2634 = scalar_lea.vmem %s37, 32
  %v2635 = vld [vmem:[%s2634] sm:$0xff]
  %v2636 = vld [vmem:[%s2634 + $0x8] sm:$0xff]
  %v2637 = vld [vmem:[%s2634 + $0x10] sm:$0xff]
  %v2638 = vld [vmem:[%s2634 + $0x18] sm:$0x3]
  %s2639 = scalar_lea.vmem %s39, 1
  %v2640 = vld [vmem:[%s2639] sm:$0x1]
  %v2642 = vlaneseq
  %v2643 = vshrl.u32 %v2642, 7
  %v2644 = vsub.s32 0, %v2643
  %v2645 = vrot.slane %v2640, %v2644
  %v2648 = vsel %vm162, %v2627, 0
  %v2651 = vsel %vm162, %v2628, 0
  %v2654 = vsel %vm162, %v2629, 0
  %v2657 = vsel %vm162, %v2630, 0
  %v2660 = vsel %vm162, %v2631, 0
  %v2663 = vsel %vm162, %v2632, 0
  %v2666 = vsel %vm162, %v2633, 0
  %v2669 = vsel %vm166, %v2638, 0
  %2671 = vmatprep.subr.mxu0 0.0
  %2672 = vmatpush1.msra.mxu0 0.0
  %2673 = vmatprep.subr.mxu0 0.0
  %2674 = vmatpush1.msra.mxu0 0.0
  %2675 = vmatprep.subr.mxu0 0.0
  %2676 = vmatpush1.msra.mxu0 0.0
  %2677 = vmatprep.subr.mxu0 0.0
  %2678 = vmatpush1.msra.mxu0 0.0
  %2679 = vmatprep.subr.mxu0 0.0
  %2680 = vmatpush1.msra.mxu0 0.0
  %2681 = vmatprep.subr.mxu0 0.0
  %2682 = vmatpush1.msra.mxu0 0.0
  %2683 = vmatprep.subr.mxu0 0.0
  %2684 = vmatpush1.msra.mxu0 0.0
  %2685 = vmatprep.subr.mxu0 0.0
  %2686 = vmatpush1.msra.mxu0 0.0
  %2687 = vmatprep.subr.mxu0 0.0
  %2688 = vmatpush1.msra.mxu0 0.0
  %2689 = vmatprep.subr.mxu0 0.0
  %2690 = vmatpush1.msra.mxu0 0.0
  %2691 = vmatprep.subr.mxu0 0.0
  %2692 = vmatpush1.msra.mxu0 0.0
  %2693 = vmatprep.subr.mxu0 0.0
  %2694 = vmatpush1.msra.mxu0 0.0
  %2695 = vmatprep.subr.mxu0 0.0
  %2696 = vmatpush1.msra.mxu0 %v2669
  %2697 = vmatprep.subr.mxu0 0.0
  %2698 = vmatpush1.msra.mxu0 %v2637
  %2699 = vmatprep.subr.mxu0 0.0
  %2700 = vmatpush1.msra.mxu0 %v2636
  %2701 = vmatprep.subr.mxu0 0.0
  %2702 = vmatpush1.msra.mxu0 %v2635
  %2703 = vmatprep.subr.mxu0 0.0
  %2704 = vmatpush2.msra.mxu0 0.0
  %2705 = vmatprep.subr.mxu0 0.0
  %2706 = vmatpush2.msra.mxu0 0.0
  %2707 = vmatprep.subr.mxu0 0.0
  %2708 = vmatpush2.msra.mxu0 0.0
  %2709 = vmatprep.subr.mxu0 0.0
  %2710 = vmatpush2.msra.mxu0 0.0
  %2711 = vmatprep.subr.mxu0 0.0
  %2712 = vmatpush2.msra.mxu0 0.0
  %2713 = vmatprep.subr.mxu0 0.0
  %2714 = vmatpush2.msra.mxu0 0.0
  %2715 = vmatprep.subr.mxu0 0.0
  %2716 = vmatpush2.msra.mxu0 0.0
  %2717 = vmatprep.subr.mxu0 0.0
  %2718 = vmatpush2.msra.mxu0 0.0
  %2719 = vmatprep.subr.mxu0 0.0
  %2720 = vmatpush2.msra.mxu0 0.0
  %2721 = vmatprep.subr.mxu0 0.0
  %2722 = vmatpush2.msra.mxu0 0.0
  %2723 = vmatprep.subr.mxu0 0.0
  %2724 = vmatpush2.msra.mxu0 0.0
  %2725 = vmatprep.subr.mxu0 0.0
  %2726 = vmatpush2.msra.mxu0 0.0
  %2727 = vmatprep.subr.mxu0 0.0
  %2728 = vmatpush2.msra.mxu0 0.0
  %2729 = vmatprep.subr.mxu0 0.0
  %2730 = vmatpush2.msra.mxu0 0.0
  %2731 = vmatprep.subr.mxu0 0.0
  %2732 = vmatpush2.msra.mxu0 0.0
  %2733 = vmatprep.subr.mxu0 0.0
  %2734 = vmatpush2.msra.mxu0 0.0
  %2735 = vmatprep.mubr.f32.mxu0 0.0
  %2736 = vmatmul.mubr.f32.gmra.mxu0 %v2648
  %v2737 = vpop.f32.mrf.mxu0
  %v2738 = vadd.f32 %v2645, %v2737
  %v2739 = vpop.f32.mrf.mxu0
  %2740 = vmatprep.mubr.f32.mxu0 0.0
  %2741 = vmatmul.mubr.f32.gmra.mxu0 %v2651
  %v2742 = vpop.f32.mrf.mxu0
  %v2743 = vadd.f32 %v2645, %v2742
  %v2744 = vpop.f32.mrf.mxu0
  %2745 = vmatprep.mubr.f32.mxu0 0.0
  %2746 = vmatmul.mubr.f32.gmra.mxu0 %v2654
  %v2747 = vpop.f32.mrf.mxu0
  %v2748 = vadd.f32 %v2645, %v2747
  %v2749 = vpop.f32.mrf.mxu0
  %2750 = vmatprep.mubr.f32.mxu0 0.0
  %2751 = vmatmul.mubr.f32.gmra.mxu0 %v2657
  %v2752 = vpop.f32.mrf.mxu0
  %v2753 = vadd.f32 %v2645, %v2752
  %v2754 = vpop.f32.mrf.mxu0
  %2755 = vmatprep.mubr.f32.mxu0 0.0
  %2756 = vmatmul.mubr.f32.gmra.mxu0 %v2660
  %v2757 = vpop.f32.mrf.mxu0
  %v2758 = vadd.f32 %v2645, %v2757
  %v2759 = vpop.f32.mrf.mxu0
  %2760 = vmatprep.mubr.f32.mxu0 0.0
  %2761 = vmatmul.mubr.f32.gmra.mxu0 %v2663
  %v2762 = vpop.f32.mrf.mxu0
  %v2763 = vadd.f32 %v2645, %v2762
  %v2764 = vpop.f32.mrf.mxu0
  %2765 = vmatprep.mubr.f32.mxu0 0.0
  %2766 = vmatmul.mubr.f32.gmra.mxu0 %v2666
  %v2767 = vpop.f32.mrf.mxu0
  %v2768 = vadd.f32 %v2645, %v2767
  %v2769 = vpop.f32.mrf.mxu0
  %2770 = vdwg.mxu0
  %v2771 = vxor.u32 %v2738, 2147483648
  %v2772 = vxor.u32 %v2743, 2147483648
  %v2773 = vxor.u32 %v2748, 2147483648
  %v2774 = vxor.u32 %v2753, 2147483648
  %v2775 = vxor.u32 %v2758, 2147483648
  %v2776 = vxor.u32 %v2763, 2147483648
  %v2777 = vxor.u32 %v2768, 2147483648
  %v2778 = vmul.f32 %v2771, 1.442695
  %v2779 = vpow.pop %v2778
  %v2780 = vmul.f32 %v2772, 1.442695
  %v2781 = vpow.pop %v2780
  %v2782 = vmul.f32 %v2773, 1.442695
  %v2783 = vpow.pop %v2782
  %v2784 = vmul.f32 %v2774, 1.442695
  %v2785 = vpow.pop %v2784
  %v2786 = vmul.f32 %v2775, 1.442695
  %v2787 = vpow.pop %v2786
  %v2788 = vmul.f32 %v2776, 1.442695
  %v2789 = vpow.pop %v2788
  %v2790 = vmul.f32 %v2777, 1.442695
  %v2791 = vpow.pop %v2790
  %v2792 = vadd.f32 %v2779, 1.0
  %v2793 = vadd.f32 %v2781, 1.0
  %v2794 = vadd.f32 %v2783, 1.0
  %v2795 = vadd.f32 %v2785, 1.0
  %v2796 = vadd.f32 %v2787, 1.0
  %v2797 = vadd.f32 %v2789, 1.0
  %v2798 = vadd.f32 %v2791, 1.0
  %v2799 = vrcp.pop %v2792
  %v2800 = vmul.f32 1.0, %v2799
  %v2801 = vrcp.pop %v2793
  %v2802 = vmul.f32 1.0, %v2801
  %v2803 = vrcp.pop %v2794
  %v2804 = vmul.f32 1.0, %v2803
  %v2805 = vrcp.pop %v2795
  %v2806 = vmul.f32 1.0, %v2805
  %v2807 = vrcp.pop %v2796
  %v2808 = vmul.f32 1.0, %v2807
  %v2809 = vrcp.pop %v2797
  %v2810 = vmul.f32 1.0, %v2809
  %v2811 = vrcp.pop %v2798
  %v2812 = vmul.f32 1.0, %v2811
  %v2813 = vmul.f32 %v2738, %v2800
  %v2814 = vmul.f32 %v2743, %v2802
  %v2815 = vmul.f32 %v2748, %v2804
  %v2816 = vmul.f32 %v2753, %v2806
  %v2817 = vmul.f32 %v2758, %v2808
  %v2818 = vmul.f32 %v2763, %v2810
  %v2819 = vmul.f32 %v2768, %v2812
  %s2820 = scalar_lea.vmem %s41, 1
  %v2821 = vld [vmem:[%s2820] sm:$0x1]
  %v2823 = vlaneseq
  %v2824 = vshrl.u32 %v2823, 7
  %v2825 = vsub.s32 0, %v2824
  %v2826 = vrot.slane %v2821, %v2825
  %v2828 = vmul.f32 %v2813, %v2826
  %v2829 = vmul.f32 %v2814, %v2826
  %v2830 = vmul.f32 %v2815, %v2826
  %v2831 = vmul.f32 %v2816, %v2826
  %v2832 = vmul.f32 %v2817, %v2826
  %v2833 = vmul.f32 %v2818, %v2826
  %v2834 = vmul.f32 %v2819, %v2826
  %v2835 = vsel %vm162, %v2828, 0.0
  %2836 = vadd.xlane.f32.xlu0 %v2835
  %v2837 = vpop.xlane.xlu0 %2836
  %v2838 = vsel %vm162, %v2829, 0.0
  %2839 = vadd.xlane.f32.xlu0 %v2838
  %v2840 = vpop.xlane.xlu0 %2839
  %v2841 = vsel %vm162, %v2830, 0.0
  %2842 = vadd.xlane.f32.xlu0 %v2841
  %v2843 = vpop.xlane.xlu0 %2842
  %v2844 = vsel %vm162, %v2831, 0.0
  %2845 = vadd.xlane.f32.xlu0 %v2844
  %v2846 = vpop.xlane.xlu0 %2845
  %v2847 = vsel %vm162, %v2832, 0.0
  %2848 = vadd.xlane.f32.xlu0 %v2847
  %v2849 = vpop.xlane.xlu0 %2848
  %v2850 = vsel %vm162, %v2833, 0.0
  %2851 = vadd.xlane.f32.xlu0 %v2850
  %v2852 = vpop.xlane.xlu0 %2851
  %v2853 = vsel %vm162, %v2834, 0.0
  %2854 = vadd.xlane.f32.xlu0 %v2853
  %v2855 = vpop.xlane.xlu0 %2854
  %s2856 = scalar_lea.vmem %s43, 1
  %v2857 = vld [vmem:[%s2856] sm:$0x1]
  %v2859 = vlaneseq
  %v2860 = vshrl.u32 %v2859, 7
  %v2861 = vsub.s32 0, %v2860
  %v2862 = vrot.slane %v2857, %v2861
  %v2864 = vadd.f32 %v2837, %v2862
  %v2865 = vadd.f32 %v2840, %v2862
  %v2866 = vadd.f32 %v2843, %v2862
  %v2867 = vadd.f32 %v2846, %v2862
  %v2868 = vadd.f32 %v2849, %v2862
  %v2869 = vadd.f32 %v2852, %v2862
  %v2870 = vadd.f32 %v2855, %v2862
  %v2871 = vxor.u32 %v2864, 2147483648
  %v2872 = vxor.u32 %v2865, 2147483648
  %v2873 = vxor.u32 %v2866, 2147483648
  %v2874 = vxor.u32 %v2867, 2147483648
  %v2875 = vxor.u32 %v2868, 2147483648
  %v2876 = vxor.u32 %v2869, 2147483648
  %v2877 = vxor.u32 %v2870, 2147483648
  %v2878 = vmul.f32 %v2871, 1.442695
  %v2879 = vpow.pop %v2878
  %v2880 = vmul.f32 %v2872, 1.442695
  %v2881 = vpow.pop %v2880
  %v2882 = vmul.f32 %v2873, 1.442695
  %v2883 = vpow.pop %v2882
  %v2884 = vmul.f32 %v2874, 1.442695
  %v2885 = vpow.pop %v2884
  %v2886 = vmul.f32 %v2875, 1.442695
  %v2887 = vpow.pop %v2886
  %v2888 = vmul.f32 %v2876, 1.442695
  %v2889 = vpow.pop %v2888
  %v2890 = vmul.f32 %v2877, 1.442695
  %v2891 = vpow.pop %v2890
  %v2892 = vadd.f32 %v2879, 1.0
  %v2893 = vadd.f32 %v2881, 1.0
  %v2894 = vadd.f32 %v2883, 1.0
  %v2895 = vadd.f32 %v2885, 1.0
  %v2896 = vadd.f32 %v2887, 1.0
  %v2897 = vadd.f32 %v2889, 1.0
  %v2898 = vadd.f32 %v2891, 1.0
  %v2899 = vrcp.pop %v2892
  %v2900 = vmul.f32 1.0, %v2899
  %v2901 = vrcp.pop %v2893
  %v2902 = vmul.f32 1.0, %v2901
  %v2903 = vrcp.pop %v2894
  %v2904 = vmul.f32 1.0, %v2903
  %v2905 = vrcp.pop %v2895
  %v2906 = vmul.f32 1.0, %v2905
  %v2907 = vrcp.pop %v2896
  %v2908 = vmul.f32 1.0, %v2907
  %v2909 = vrcp.pop %v2897
  %v2910 = vmul.f32 1.0, %v2909
  %v2911 = vrcp.pop %v2898
  %v2912 = vmul.f32 1.0, %v2911
  %2914 = vset.pattern.permute.xlu0 0
  %2915 = vperm.xlu0 %2914, %v2900
  %v2916 = vpop.permute.xlu0 %2915
  %2919 = vset.pattern.permute.xlu0 0
  %2920 = vperm.xlu0 %2919, %v2902
  %v2921 = vpop.permute.xlu0 %2920
  %2924 = vset.pattern.permute.xlu0 0
  %2925 = vperm.xlu0 %2924, %v2904
  %v2926 = vpop.permute.xlu0 %2925
  %2929 = vset.pattern.permute.xlu0 0
  %2930 = vperm.xlu0 %2929, %v2906
  %v2931 = vpop.permute.xlu0 %2930
  %2934 = vset.pattern.permute.xlu0 0
  %2935 = vperm.xlu0 %2934, %v2908
  %v2936 = vpop.permute.xlu0 %2935
  %2939 = vset.pattern.permute.xlu0 0
  %2940 = vperm.xlu0 %2939, %v2910
  %v2941 = vpop.permute.xlu0 %2940
  %2944 = vset.pattern.permute.xlu0 0
  %2945 = vperm.xlu0 %2944, %v2912
  %v2946 = vpop.permute.xlu0 %2945
  %v2948 = vmul.f32 %v2813, %v2916
  %v2949 = vmul.f32 %v2814, %v2921
  %v2950 = vmul.f32 %v2815, %v2926
  %v2951 = vmul.f32 %v2816, %v2931
  %v2952 = vmul.f32 %v2817, %v2936
  %v2953 = vmul.f32 %v2818, %v2941
  %v2954 = vmul.f32 %v2819, %v2946
  %s2955 = scalar_lea.vmem %s45, 32
  %v2956 = vld [vmem:[%s2955] sm:$0xff]
  %v2957 = vld [vmem:[%s2955 + $0x8] sm:$0xff]
  %v2958 = vld [vmem:[%s2955 + $0x10] sm:$0xff]
  %v2959 = vld [vmem:[%s2955 + $0x18] sm:$0x3]
  %s2960 = scalar_lea.vmem %s47, 1
  %v2961 = vld [vmem:[%s2960] sm:$0x1]
  %v2963 = vlaneseq
  %v2964 = vshrl.u32 %v2963, 7
  %v2965 = vsub.s32 0, %v2964
  %v2966 = vrot.slane %v2961, %v2965
  %v2969 = vsel %vm162, %v2948, 0
  %v2972 = vsel %vm162, %v2949, 0
  %v2975 = vsel %vm162, %v2950, 0
  %v2978 = vsel %vm162, %v2951, 0
  %v2981 = vsel %vm162, %v2952, 0
  %v2984 = vsel %vm162, %v2953, 0
  %v2987 = vsel %vm162, %v2954, 0
  %v2990 = vsel %vm166, %v2959, 0
  %2992 = vmatprep.subr.mxu0 0.0
  %2993 = vmatpush1.msra.mxu0 0.0
  %2994 = vmatprep.subr.mxu0 0.0
  %2995 = vmatpush1.msra.mxu0 0.0
  %2996 = vmatprep.subr.mxu0 0.0
  %2997 = vmatpush1.msra.mxu0 0.0
  %2998 = vmatprep.subr.mxu0 0.0
  %2999 = vmatpush1.msra.mxu0 0.0
  %3000 = vmatprep.subr.mxu0 0.0
  %3001 = vmatpush1.msra.mxu0 0.0
  %3002 = vmatprep.subr.mxu0 0.0
  %3003 = vmatpush1.msra.mxu0 0.0
  %3004 = vmatprep.subr.mxu0 0.0
  %3005 = vmatpush1.msra.mxu0 0.0
  %3006 = vmatprep.subr.mxu0 0.0
  %3007 = vmatpush1.msra.mxu0 0.0
  %3008 = vmatprep.subr.mxu0 0.0
  %3009 = vmatpush1.msra.mxu0 0.0
  %3010 = vmatprep.subr.mxu0 0.0
  %3011 = vmatpush1.msra.mxu0 0.0
  %3012 = vmatprep.subr.mxu0 0.0
  %3013 = vmatpush1.msra.mxu0 0.0
  %3014 = vmatprep.subr.mxu0 0.0
  %3015 = vmatpush1.msra.mxu0 0.0
  %3016 = vmatprep.subr.mxu0 0.0
  %3017 = vmatpush1.msra.mxu0 %v2990
  %3018 = vmatprep.subr.mxu0 0.0
  %3019 = vmatpush1.msra.mxu0 %v2958
  %3020 = vmatprep.subr.mxu0 0.0
  %3021 = vmatpush1.msra.mxu0 %v2957
  %3022 = vmatprep.subr.mxu0 0.0
  %3023 = vmatpush1.msra.mxu0 %v2956
  %3024 = vmatprep.subr.mxu0 0.0
  %3025 = vmatpush2.msra.mxu0 0.0
  %3026 = vmatprep.subr.mxu0 0.0
  %3027 = vmatpush2.msra.mxu0 0.0
  %3028 = vmatprep.subr.mxu0 0.0
  %3029 = vmatpush2.msra.mxu0 0.0
  %3030 = vmatprep.subr.mxu0 0.0
  %3031 = vmatpush2.msra.mxu0 0.0
  %3032 = vmatprep.subr.mxu0 0.0
  %3033 = vmatpush2.msra.mxu0 0.0
  %3034 = vmatprep.subr.mxu0 0.0
  %3035 = vmatpush2.msra.mxu0 0.0
  %3036 = vmatprep.subr.mxu0 0.0
  %3037 = vmatpush2.msra.mxu0 0.0
  %3038 = vmatprep.subr.mxu0 0.0
  %3039 = vmatpush2.msra.mxu0 0.0
  %3040 = vmatprep.subr.mxu0 0.0
  %3041 = vmatpush2.msra.mxu0 0.0
  %3042 = vmatprep.subr.mxu0 0.0
  %3043 = vmatpush2.msra.mxu0 0.0
  %3044 = vmatprep.subr.mxu0 0.0
  %3045 = vmatpush2.msra.mxu0 0.0
  %3046 = vmatprep.subr.mxu0 0.0
  %3047 = vmatpush2.msra.mxu0 0.0
  %3048 = vmatprep.subr.mxu0 0.0
  %3049 = vmatpush2.msra.mxu0 0.0
  %3050 = vmatprep.subr.mxu0 0.0
  %3051 = vmatpush2.msra.mxu0 0.0
  %3052 = vmatprep.subr.mxu0 0.0
  %3053 = vmatpush2.msra.mxu0 0.0
  %3054 = vmatprep.subr.mxu0 0.0
  %3055 = vmatpush2.msra.mxu0 0.0
  %3056 = vmatprep.mubr.f32.mxu0 0.0
  %3057 = vmatmul.mubr.f32.gmra.mxu0 %v2969
  %v3058 = vpop.f32.mrf.mxu0
  %v3059 = vadd.f32 %v2966, %v3058
  %v3060 = vpop.f32.mrf.mxu0
  %3061 = vmatprep.mubr.f32.mxu0 0.0
  %3062 = vmatmul.mubr.f32.gmra.mxu0 %v2972
  %v3063 = vpop.f32.mrf.mxu0
  %v3064 = vadd.f32 %v2966, %v3063
  %v3065 = vpop.f32.mrf.mxu0
  %3066 = vmatprep.mubr.f32.mxu0 0.0
  %3067 = vmatmul.mubr.f32.gmra.mxu0 %v2975
  %v3068 = vpop.f32.mrf.mxu0
  %v3069 = vadd.f32 %v2966, %v3068
  %v3070 = vpop.f32.mrf.mxu0
  %3071 = vmatprep.mubr.f32.mxu0 0.0
  %3072 = vmatmul.mubr.f32.gmra.mxu0 %v2978
  %v3073 = vpop.f32.mrf.mxu0
  %v3074 = vadd.f32 %v2966, %v3073
  %v3075 = vpop.f32.mrf.mxu0
  %3076 = vmatprep.mubr.f32.mxu0 0.0
  %3077 = vmatmul.mubr.f32.gmra.mxu0 %v2981
  %v3078 = vpop.f32.mrf.mxu0
  %v3079 = vadd.f32 %v2966, %v3078
  %v3080 = vpop.f32.mrf.mxu0
  %3081 = vmatprep.mubr.f32.mxu0 0.0
  %3082 = vmatmul.mubr.f32.gmra.mxu0 %v2984
  %v3083 = vpop.f32.mrf.mxu0
  %v3084 = vadd.f32 %v2966, %v3083
  %v3085 = vpop.f32.mrf.mxu0
  %3086 = vmatprep.mubr.f32.mxu0 0.0
  %3087 = vmatmul.mubr.f32.gmra.mxu0 %v2987
  %v3088 = vpop.f32.mrf.mxu0
  %v3089 = vadd.f32 %v2966, %v3088
  %v3090 = vpop.f32.mrf.mxu0
  %3091 = vdwg.mxu0
  %v3092 = vxor.u32 %v3059, 2147483648
  %v3093 = vxor.u32 %v3064, 2147483648
  %v3094 = vxor.u32 %v3069, 2147483648
  %v3095 = vxor.u32 %v3074, 2147483648
  %v3096 = vxor.u32 %v3079, 2147483648
  %v3097 = vxor.u32 %v3084, 2147483648
  %v3098 = vxor.u32 %v3089, 2147483648
  %v3099 = vmul.f32 %v3092, 1.442695
  %v3100 = vpow.pop %v3099
  %v3101 = vmul.f32 %v3093, 1.442695
  %v3102 = vpow.pop %v3101
  %v3103 = vmul.f32 %v3094, 1.442695
  %v3104 = vpow.pop %v3103
  %v3105 = vmul.f32 %v3095, 1.442695
  %v3106 = vpow.pop %v3105
  %v3107 = vmul.f32 %v3096, 1.442695
  %v3108 = vpow.pop %v3107
  %v3109 = vmul.f32 %v3097, 1.442695
  %v3110 = vpow.pop %v3109
  %v3111 = vmul.f32 %v3098, 1.442695
  %v3112 = vpow.pop %v3111
  %v3113 = vadd.f32 %v3100, 1.0
  %v3114 = vadd.f32 %v3102, 1.0
  %v3115 = vadd.f32 %v3104, 1.0
  %v3116 = vadd.f32 %v3106, 1.0
  %v3117 = vadd.f32 %v3108, 1.0
  %v3118 = vadd.f32 %v3110, 1.0
  %v3119 = vadd.f32 %v3112, 1.0
  %v3120 = vrcp.pop %v3113
  %v3121 = vmul.f32 1.0, %v3120
  %v3122 = vrcp.pop %v3114
  %v3123 = vmul.f32 1.0, %v3122
  %v3124 = vrcp.pop %v3115
  %v3125 = vmul.f32 1.0, %v3124
  %v3126 = vrcp.pop %v3116
  %v3127 = vmul.f32 1.0, %v3126
  %v3128 = vrcp.pop %v3117
  %v3129 = vmul.f32 1.0, %v3128
  %v3130 = vrcp.pop %v3118
  %v3131 = vmul.f32 1.0, %v3130
  %v3132 = vrcp.pop %v3119
  %v3133 = vmul.f32 1.0, %v3132
  %v3134 = vmul.f32 %v3059, %v3121
  %v3135 = vmul.f32 %v3064, %v3123
  %v3136 = vmul.f32 %v3069, %v3125
  %v3137 = vmul.f32 %v3074, %v3127
  %v3138 = vmul.f32 %v3079, %v3129
  %v3139 = vmul.f32 %v3084, %v3131
  %v3140 = vmul.f32 %v3089, %v3133
  %s3141 = scalar_lea.vmem %s49, 1
  %v3142 = vld [vmem:[%s3141] sm:$0x1]
  %v3144 = vlaneseq
  %v3145 = vshrl.u32 %v3144, 7
  %v3146 = vsub.s32 0, %v3145
  %v3147 = vrot.slane %v3142, %v3146
  %v3149 = vmul.f32 %v3134, %v3147
  %v3150 = vmul.f32 %v3135, %v3147
  %v3151 = vmul.f32 %v3136, %v3147
  %v3152 = vmul.f32 %v3137, %v3147
  %v3153 = vmul.f32 %v3138, %v3147
  %v3154 = vmul.f32 %v3139, %v3147
  %v3155 = vmul.f32 %v3140, %v3147
  %v3156 = vsel %vm162, %v3149, 0.0
  %3157 = vadd.xlane.f32.xlu0 %v3156
  %v3158 = vpop.xlane.xlu0 %3157
  %v3159 = vsel %vm162, %v3150, 0.0
  %3160 = vadd.xlane.f32.xlu0 %v3159
  %v3161 = vpop.xlane.xlu0 %3160
  %v3162 = vsel %vm162, %v3151, 0.0
  %3163 = vadd.xlane.f32.xlu0 %v3162
  %v3164 = vpop.xlane.xlu0 %3163
  %v3165 = vsel %vm162, %v3152, 0.0
  %3166 = vadd.xlane.f32.xlu0 %v3165
  %v3167 = vpop.xlane.xlu0 %3166
  %v3168 = vsel %vm162, %v3153, 0.0
  %3169 = vadd.xlane.f32.xlu0 %v3168
  %v3170 = vpop.xlane.xlu0 %3169
  %v3171 = vsel %vm162, %v3154, 0.0
  %3172 = vadd.xlane.f32.xlu0 %v3171
  %v3173 = vpop.xlane.xlu0 %3172
  %v3174 = vsel %vm162, %v3155, 0.0
  %3175 = vadd.xlane.f32.xlu0 %v3174
  %v3176 = vpop.xlane.xlu0 %3175
  %v3177 = vmul.f32 %v2441, %v3158
  %v3178 = vmul.f32 %v2442, %v3161
  %v3179 = vmul.f32 %v2443, %v3164
  %v3180 = vmul.f32 %v2444, %v3167
  %v3181 = vmul.f32 %v2445, %v3170
  %v3182 = vmul.f32 %v2446, %v3173
  %v3183 = vmul.f32 %v2447, %v3176
  %3184 = vmatprep.subr.mxu0 0.0
  %3185 = vmatpush1.msra.mxu0 0.0
  %3186 = vmatprep.subr.mxu0 0.0
  %3187 = vmatpush1.msra.mxu0 0.0
  %3188 = vmatprep.subr.mxu0 0.0
  %3189 = vmatpush1.msra.mxu0 0.0
  %3190 = vmatprep.subr.mxu0 0.0
  %3191 = vmatpush1.msra.mxu0 0.0
  %3192 = vmatprep.subr.mxu0 0.0
  %3193 = vmatpush1.msra.mxu0 0.0
  %3194 = vmatprep.subr.mxu0 0.0
  %3195 = vmatpush1.msra.mxu0 0.0
  %3196 = vmatprep.subr.mxu0 0.0
  %3197 = vmatpush1.msra.mxu0 0.0
  %3198 = vmatprep.subr.mxu0 0.0
  %3199 = vmatpush1.msra.mxu0 0.0
  %3200 = vmatprep.subr.mxu0 0.0
  %3201 = vmatpush1.msra.mxu0 0.0
  %3202 = vmatprep.subr.mxu0 0.0
  %3203 = vmatpush1.msra.mxu0 %v3183
  %3204 = vmatprep.subr.mxu0 0.0
  %3205 = vmatpush1.msra.mxu0 %v3182
  %3206 = vmatprep.subr.mxu0 0.0
  %3207 = vmatpush1.msra.mxu0 %v3181
  %3208 = vmatprep.subr.mxu0 0.0
  %3209 = vmatpush1.msra.mxu0 %v3180
  %3210 = vmatprep.subr.mxu0 0.0
  %3211 = vmatpush1.msra.mxu0 %v3179
  %3212 = vmatprep.subr.mxu0 0.0
  %3213 = vmatpush1.msra.mxu0 %v3178
  %3214 = vmatprep.subr.mxu0 0.0
  %3215 = vmatpush1.msra.mxu0 %v3177
  %3216 = vmatprep.subr.mxu0 0.0
  %3217 = vmatpush2.msra.mxu0 0.0
  %3218 = vmatprep.subr.mxu0 0.0
  %3219 = vmatpush2.msra.mxu0 0.0
  %3220 = vmatprep.subr.mxu0 0.0
  %3221 = vmatpush2.msra.mxu0 0.0
  %3222 = vmatprep.subr.mxu0 0.0
  %3223 = vmatpush2.msra.mxu0 0.0
  %3224 = vmatprep.subr.mxu0 0.0
  %3225 = vmatpush2.msra.mxu0 0.0
  %3226 = vmatprep.subr.mxu0 0.0
  %3227 = vmatpush2.msra.mxu0 0.0
  %3228 = vmatprep.subr.mxu0 0.0
  %3229 = vmatpush2.msra.mxu0 0.0
  %3230 = vmatprep.subr.mxu0 0.0
  %3231 = vmatpush2.msra.mxu0 0.0
  %3232 = vmatprep.subr.mxu0 0.0
  %3233 = vmatpush2.msra.mxu0 0.0
  %3234 = vmatprep.subr.mxu0 0.0
  %3235 = vmatpush2.msra.mxu0 0.0
  %3236 = vmatprep.subr.mxu0 0.0
  %3237 = vmatpush2.msra.mxu0 0.0
  %3238 = vmatprep.subr.mxu0 0.0
  %3239 = vmatpush2.msra.mxu0 0.0
  %3240 = vmatprep.subr.mxu0 0.0
  %3241 = vmatpush2.msra.mxu0 0.0
  %3242 = vmatprep.subr.mxu0 0.0
  %3243 = vmatpush2.msra.mxu0 0.0
  %3244 = vmatprep.subr.mxu0 0.0
  %3245 = vmatpush2.msra.mxu0 0.0
  %3246 = vmatprep.subr.mxu0 0.0
  %3247 = vmatpush2.msra.mxu0 0.0
  %3248 = vmatprep.mubr.f32.mxu0 0.0
  %3249 = vmatmul.mubr.f32.gmra.mxu0 %v1527
  %v3250 = vpop.f32.mrf.mxu0
  %v3251 = vadd.f32 0.0, %v3250
  %v3252 = vpop.f32.mrf.mxu0
  %3253 = vdwg.mxu0
  %v3254 = vadd.f32 %v1599, %v3251
  %3255 = vmatprep.subr.mxu0 0.0
  %3256 = vmatpush1.msra.mxu0 0.0
  %3257 = vmatprep.subr.mxu0 0.0
  %3258 = vmatpush1.msra.mxu0 0.0
  %3259 = vmatprep.subr.mxu0 0.0
  %3260 = vmatpush1.msra.mxu0 0.0
  %3261 = vmatprep.subr.mxu0 0.0
  %3262 = vmatpush1.msra.mxu0 0.0
  %3263 = vmatprep.subr.mxu0 0.0
  %3264 = vmatpush1.msra.mxu0 0.0
  %3265 = vmatprep.subr.mxu0 0.0
  %3266 = vmatpush1.msra.mxu0 0.0
  %3267 = vmatprep.subr.mxu0 0.0
  %3268 = vmatpush1.msra.mxu0 0.0
  %3269 = vmatprep.subr.mxu0 0.0
  %3270 = vmatpush1.msra.mxu0 0.0
  %3271 = vmatprep.subr.mxu0 0.0
  %3272 = vmatpush1.msra.mxu0 0.0
  %3273 = vmatprep.subr.mxu0 0.0
  %3274 = vmatpush1.msra.mxu0 %v2954
  %3275 = vmatprep.subr.mxu0 0.0
  %3276 = vmatpush1.msra.mxu0 %v2953
  %3277 = vmatprep.subr.mxu0 0.0
  %3278 = vmatpush1.msra.mxu0 %v2952
  %3279 = vmatprep.subr.mxu0 0.0
  %3280 = vmatpush1.msra.mxu0 %v2951
  %3281 = vmatprep.subr.mxu0 0.0
  %3282 = vmatpush1.msra.mxu0 %v2950
  %3283 = vmatprep.subr.mxu0 0.0
  %3284 = vmatpush1.msra.mxu0 %v2949
  %3285 = vmatprep.subr.mxu0 0.0
  %3286 = vmatpush1.msra.mxu0 %v2948
  %3287 = vmatprep.subr.mxu0 0.0
  %3288 = vmatpush2.msra.mxu0 0.0
  %3289 = vmatprep.subr.mxu0 0.0
  %3290 = vmatpush2.msra.mxu0 0.0
  %3291 = vmatprep.subr.mxu0 0.0
  %3292 = vmatpush2.msra.mxu0 0.0
  %3293 = vmatprep.subr.mxu0 0.0
  %3294 = vmatpush2.msra.mxu0 0.0
  %3295 = vmatprep.subr.mxu0 0.0
  %3296 = vmatpush2.msra.mxu0 0.0
  %3297 = vmatprep.subr.mxu0 0.0
  %3298 = vmatpush2.msra.mxu0 0.0
  %3299 = vmatprep.subr.mxu0 0.0
  %3300 = vmatpush2.msra.mxu0 0.0
  %3301 = vmatprep.subr.mxu0 0.0
  %3302 = vmatpush2.msra.mxu0 0.0
  %3303 = vmatprep.subr.mxu0 0.0
  %3304 = vmatpush2.msra.mxu0 0.0
  %3305 = vmatprep.subr.mxu0 0.0
  %3306 = vmatpush2.msra.mxu0 0.0
  %3307 = vmatprep.subr.mxu0 0.0
  %3308 = vmatpush2.msra.mxu0 0.0
  %3309 = vmatprep.subr.mxu0 0.0
  %3310 = vmatpush2.msra.mxu0 0.0
  %3311 = vmatprep.subr.mxu0 0.0
  %3312 = vmatpush2.msra.mxu0 0.0
  %3313 = vmatprep.subr.mxu0 0.0
  %3314 = vmatpush2.msra.mxu0 0.0
  %3315 = vmatprep.subr.mxu0 0.0
  %3316 = vmatpush2.msra.mxu0 0.0
  %3317 = vmatprep.subr.mxu0 0.0
  %3318 = vmatpush2.msra.mxu0 0.0
  %3319 = vmatprep.mubr.f32.mxu0 0.0
  %3320 = vmatmul.mubr.f32.gmra.mxu0 %v1601
  %v3321 = vpop.f32.mrf.mxu0
  %v3322 = vadd.f32 0.0, %v3321
  %v3323 = vpop.f32.mrf.mxu0
  %3324 = vdwg.mxu0
  %s3325 = scalar_lea.vmem %s51, 32
  %v3326 = vld [vmem:[%s3325] sm:$0xff]
  %v3327 = vld [vmem:[%s3325 + $0x8] sm:$0xff]
  %v3328 = vld [vmem:[%s3325 + $0x10] sm:$0xff]
  %v3329 = vld [vmem:[%s3325 + $0x18] sm:$0x3]
  %s3330 = scalar_lea.vmem %s53, 32
  %v3331 = vld [vmem:[%s3330] sm:$0xff]
  %v3332 = vld [vmem:[%s3330 + $0x8] sm:$0xff]
  %v3333 = vld [vmem:[%s3330 + $0x10] sm:$0xff]
  %v3334 = vld [vmem:[%s3330 + $0x18] sm:$0x3]
  %v3336 = vsel %vm162, %v3322, 0
  %v3339 = vsel %vm166, %v3334, 0
  %3341 = vmatprep.subr.mxu0 0.0
  %3342 = vmatpush1.msra.mxu0 0.0
  %3343 = vmatprep.subr.mxu0 0.0
  %3344 = vmatpush1.msra.mxu0 0.0
  %3345 = vmatprep.subr.mxu0 0.0
  %3346 = vmatpush1.msra.mxu0 0.0
  %3347 = vmatprep.subr.mxu0 0.0
  %3348 = vmatpush1.msra.mxu0 0.0
  %3349 = vmatprep.subr.mxu0 0.0
  %3350 = vmatpush1.msra.mxu0 0.0
  %3351 = vmatprep.subr.mxu0 0.0
  %3352 = vmatpush1.msra.mxu0 0.0
  %3353 = vmatprep.subr.mxu0 0.0
  %3354 = vmatpush1.msra.mxu0 0.0
  %3355 = vmatprep.subr.mxu0 0.0
  %3356 = vmatpush1.msra.mxu0 0.0
  %3357 = vmatprep.subr.mxu0 0.0
  %3358 = vmatpush1.msra.mxu0 0.0
  %3359 = vmatprep.subr.mxu0 0.0
  %3360 = vmatpush1.msra.mxu0 0.0
  %3361 = vmatprep.subr.mxu0 0.0
  %3362 = vmatpush1.msra.mxu0 0.0
  %3363 = vmatprep.subr.mxu0 0.0
  %3364 = vmatpush1.msra.mxu0 0.0
  %3365 = vmatprep.subr.mxu0 0.0
  %3366 = vmatpush1.msra.mxu0 %v3339
  %3367 = vmatprep.subr.mxu0 0.0
  %3368 = vmatpush1.msra.mxu0 %v3333
  %3369 = vmatprep.subr.mxu0 0.0
  %3370 = vmatpush1.msra.mxu0 %v3332
  %3371 = vmatprep.subr.mxu0 0.0
  %3372 = vmatpush1.msra.mxu0 %v3331
  %3373 = vmatprep.subr.mxu0 0.0
  %3374 = vmatpush2.msra.mxu0 0.0
  %3375 = vmatprep.subr.mxu0 0.0
  %3376 = vmatpush2.msra.mxu0 0.0
  %3377 = vmatprep.subr.mxu0 0.0
  %3378 = vmatpush2.msra.mxu0 0.0
  %3379 = vmatprep.subr.mxu0 0.0
  %3380 = vmatpush2.msra.mxu0 0.0
  %3381 = vmatprep.subr.mxu0 0.0
  %3382 = vmatpush2.msra.mxu0 0.0
  %3383 = vmatprep.subr.mxu0 0.0
  %3384 = vmatpush2.msra.mxu0 0.0
  %3385 = vmatprep.subr.mxu0 0.0
  %3386 = vmatpush2.msra.mxu0 0.0
  %3387 = vmatprep.subr.mxu0 0.0
  %3388 = vmatpush2.msra.mxu0 0.0
  %3389 = vmatprep.subr.mxu0 0.0
  %3390 = vmatpush2.msra.mxu0 0.0
  %3391 = vmatprep.subr.mxu0 0.0
  %3392 = vmatpush2.msra.mxu0 0.0
  %3393 = vmatprep.subr.mxu0 0.0
  %3394 = vmatpush2.msra.mxu0 0.0
  %3395 = vmatprep.subr.mxu0 0.0
  %3396 = vmatpush2.msra.mxu0 0.0
  %3397 = vmatprep.subr.mxu0 0.0
  %3398 = vmatpush2.msra.mxu0 0.0
  %3399 = vmatprep.subr.mxu0 0.0
  %3400 = vmatpush2.msra.mxu0 0.0
  %3401 = vmatprep.subr.mxu0 0.0
  %3402 = vmatpush2.msra.mxu0 0.0
  %3403 = vmatprep.subr.mxu0 0.0
  %3404 = vmatpush2.msra.mxu0 0.0
  %3405 = vmatprep.mubr.f32.mxu0 0.0
  %3406 = vmatmul.mubr.f32.gmra.mxu0 %v3336
  %v3407 = vpop.f32.mrf.mxu0
  %v3408 = vadd.f32 0.0, %v3407
  %v3409 = vpop.f32.mrf.mxu0
  %3410 = vdwg.mxu0
  %v3412 = vsel %vm166, %v3329, 0
  %3414 = vmatprep.subr.mxu0 0.0
  %3415 = vmatpush1.msra.mxu0 0.0
  %3416 = vmatprep.subr.mxu0 0.0
  %3417 = vmatpush1.msra.mxu0 0.0
  %3418 = vmatprep.subr.mxu0 0.0
  %3419 = vmatpush1.msra.mxu0 0.0
  %3420 = vmatprep.subr.mxu0 0.0
  %3421 = vmatpush1.msra.mxu0 0.0
  %3422 = vmatprep.subr.mxu0 0.0
  %3423 = vmatpush1.msra.mxu0 0.0
  %3424 = vmatprep.subr.mxu0 0.0
  %3425 = vmatpush1.msra.mxu0 0.0
  %3426 = vmatprep.subr.mxu0 0.0
  %3427 = vmatpush1.msra.mxu0 0.0
  %3428 = vmatprep.subr.mxu0 0.0
  %3429 = vmatpush1.msra.mxu0 0.0
  %3430 = vmatprep.subr.mxu0 0.0
  %3431 = vmatpush1.msra.mxu0 0.0
  %3432 = vmatprep.subr.mxu0 0.0
  %3433 = vmatpush1.msra.mxu0 0.0
  %3434 = vmatprep.subr.mxu0 0.0
  %3435 = vmatpush1.msra.mxu0 0.0
  %3436 = vmatprep.subr.mxu0 0.0
  %3437 = vmatpush1.msra.mxu0 0.0
  %3438 = vmatprep.subr.mxu0 0.0
  %3439 = vmatpush1.msra.mxu0 %v3412
  %3440 = vmatprep.subr.mxu0 0.0
  %3441 = vmatpush1.msra.mxu0 %v3328
  %3442 = vmatprep.subr.mxu0 0.0
  %3443 = vmatpush1.msra.mxu0 %v3327
  %3444 = vmatprep.subr.mxu0 0.0
  %3445 = vmatpush1.msra.mxu0 %v3326
  %3446 = vmatprep.subr.mxu0 0.0
  %3447 = vmatpush2.msra.mxu0 0.0
  %3448 = vmatprep.subr.mxu0 0.0
  %3449 = vmatpush2.msra.mxu0 0.0
  %3450 = vmatprep.subr.mxu0 0.0
  %3451 = vmatpush2.msra.mxu0 0.0
  %3452 = vmatprep.subr.mxu0 0.0
  %3453 = vmatpush2.msra.mxu0 0.0
  %3454 = vmatprep.subr.mxu0 0.0
  %3455 = vmatpush2.msra.mxu0 0.0
  %3456 = vmatprep.subr.mxu0 0.0
  %3457 = vmatpush2.msra.mxu0 0.0
  %3458 = vmatprep.subr.mxu0 0.0
  %3459 = vmatpush2.msra.mxu0 0.0
  %3460 = vmatprep.subr.mxu0 0.0
  %3461 = vmatpush2.msra.mxu0 0.0
  %3462 = vmatprep.subr.mxu0 0.0
  %3463 = vmatpush2.msra.mxu0 0.0
  %3464 = vmatprep.subr.mxu0 0.0
  %3465 = vmatpush2.msra.mxu0 0.0
  %3466 = vmatprep.subr.mxu0 0.0
  %3467 = vmatpush2.msra.mxu0 0.0
  %3468 = vmatprep.subr.mxu0 0.0
  %3469 = vmatpush2.msra.mxu0 0.0
  %3470 = vmatprep.subr.mxu0 0.0
  %3471 = vmatpush2.msra.mxu0 0.0
  %3472 = vmatprep.subr.mxu0 0.0
  %3473 = vmatpush2.msra.mxu0 0.0
  %3474 = vmatprep.subr.mxu0 0.0
  %3475 = vmatpush2.msra.mxu0 0.0
  %3476 = vmatprep.subr.mxu0 0.0
  %3477 = vmatpush2.msra.mxu0 0.0
  %3478 = vmatprep.mubr.f32.mxu0 0.0
  %3479 = vmatmul.mubr.f32.gmra.mxu0 %v1939
  %v3480 = vpop.f32.mrf.mxu0
  %v3481 = vadd.f32 %v3408, %v3480
  %v3482 = vpop.f32.mrf.mxu0
  %3483 = vdwg.mxu0
  %s3484 = scalar_lea.vmem %s55, 1
  %v3485 = vld [vmem:[%s3484] sm:$0x1]
  %v3487 = vlaneseq
  %v3488 = vshrl.u32 %v3487, 7
  %v3489 = vsub.s32 0, %v3488
  %v3490 = vrot.slane %v3485, %v3489
  %v3492 = vadd.f32 %v3481, %v3490
  %v3493 = vxor.u32 %v3492, 2147483648
  %v3494 = vmul.f32 %v3493, 1.442695
  %v3495 = vpow.pop %v3494
  %v3496 = vadd.f32 %v3495, 1.0
  %v3497 = vrcp.pop %v3496
  %v3498 = vmul.f32 1.0, %v3497
  %v3499 = vmul.f32 %v3492, %v3498
  %s3500 = scalar_lea.vmem %s57, 32
  %v3501 = vld [vmem:[%s3500] sm:$0xff]
  %v3502 = vld [vmem:[%s3500 + $0x8] sm:$0xff]
  %v3503 = vld [vmem:[%s3500 + $0x10] sm:$0xff]
  %v3504 = vld [vmem:[%s3500 + $0x18] sm:$0x3]
  %s3505 = scalar_lea.vmem %s59, 1
  %v3506 = vld [vmem:[%s3505] sm:$0x1]
  %v3508 = vlaneseq
  %v3509 = vshrl.u32 %v3508, 7
  %v3510 = vsub.s32 0, %v3509
  %v3511 = vrot.slane %v3506, %v3510
  %v3514 = vsel %vm162, %v3499, 0
  %v3517 = vsel %vm166, %v3504, 0
  %3519 = vmatprep.subr.mxu0 0.0
  %3520 = vmatpush1.msra.mxu0 0.0
  %3521 = vmatprep.subr.mxu0 0.0
  %3522 = vmatpush1.msra.mxu0 0.0
  %3523 = vmatprep.subr.mxu0 0.0
  %3524 = vmatpush1.msra.mxu0 0.0
  %3525 = vmatprep.subr.mxu0 0.0
  %3526 = vmatpush1.msra.mxu0 0.0
  %3527 = vmatprep.subr.mxu0 0.0
  %3528 = vmatpush1.msra.mxu0 0.0
  %3529 = vmatprep.subr.mxu0 0.0
  %3530 = vmatpush1.msra.mxu0 0.0
  %3531 = vmatprep.subr.mxu0 0.0
  %3532 = vmatpush1.msra.mxu0 0.0
  %3533 = vmatprep.subr.mxu0 0.0
  %3534 = vmatpush1.msra.mxu0 0.0
  %3535 = vmatprep.subr.mxu0 0.0
  %3536 = vmatpush1.msra.mxu0 0.0
  %3537 = vmatprep.subr.mxu0 0.0
  %3538 = vmatpush1.msra.mxu0 0.0
  %3539 = vmatprep.subr.mxu0 0.0
  %3540 = vmatpush1.msra.mxu0 0.0
  %3541 = vmatprep.subr.mxu0 0.0
  %3542 = vmatpush1.msra.mxu0 0.0
  %3543 = vmatprep.subr.mxu0 0.0
  %3544 = vmatpush1.msra.mxu0 %v3517
  %3545 = vmatprep.subr.mxu0 0.0
  %3546 = vmatpush1.msra.mxu0 %v3503
  %3547 = vmatprep.subr.mxu0 0.0
  %3548 = vmatpush1.msra.mxu0 %v3502
  %3549 = vmatprep.subr.mxu0 0.0
  %3550 = vmatpush1.msra.mxu0 %v3501
  %3551 = vmatprep.subr.mxu0 0.0
  %3552 = vmatpush2.msra.mxu0 0.0
  %3553 = vmatprep.subr.mxu0 0.0
  %3554 = vmatpush2.msra.mxu0 0.0
  %3555 = vmatprep.subr.mxu0 0.0
  %3556 = vmatpush2.msra.mxu0 0.0
  %3557 = vmatprep.subr.mxu0 0.0
  %3558 = vmatpush2.msra.mxu0 0.0
  %3559 = vmatprep.subr.mxu0 0.0
  %3560 = vmatpush2.msra.mxu0 0.0
  %3561 = vmatprep.subr.mxu0 0.0
  %3562 = vmatpush2.msra.mxu0 0.0
  %3563 = vmatprep.subr.mxu0 0.0
  %3564 = vmatpush2.msra.mxu0 0.0
  %3565 = vmatprep.subr.mxu0 0.0
  %3566 = vmatpush2.msra.mxu0 0.0
  %3567 = vmatprep.subr.mxu0 0.0
  %3568 = vmatpush2.msra.mxu0 0.0
  %3569 = vmatprep.subr.mxu0 0.0
  %3570 = vmatpush2.msra.mxu0 0.0
  %3571 = vmatprep.subr.mxu0 0.0
  %3572 = vmatpush2.msra.mxu0 0.0
  %3573 = vmatprep.subr.mxu0 0.0
  %3574 = vmatpush2.msra.mxu0 0.0
  %3575 = vmatprep.subr.mxu0 0.0
  %3576 = vmatpush2.msra.mxu0 0.0
  %3577 = vmatprep.subr.mxu0 0.0
  %3578 = vmatpush2.msra.mxu0 0.0
  %3579 = vmatprep.subr.mxu0 0.0
  %3580 = vmatpush2.msra.mxu0 0.0
  %3581 = vmatprep.subr.mxu0 0.0
  %3582 = vmatpush2.msra.mxu0 0.0
  %3583 = vmatprep.mubr.f32.mxu0 0.0
  %3584 = vmatmul.mubr.f32.gmra.mxu0 %v3514
  %v3585 = vpop.f32.mrf.mxu0
  %v3586 = vadd.f32 %v3511, %v3585
  %v3587 = vpop.f32.mrf.mxu0
  %3588 = vdwg.mxu0
  %v3589 = vadd.f32 %v1932, %v3586
  %s3590 = scalar_lea.vmem %s29, 64
  %v3591 = vld [vmem:[%s3590] sm:$0xff]
  %v3592 = vld [vmem:[%s3590 + $0x8] sm:$0xff]
  %v3593 = vld [vmem:[%s3590 + $0x10] sm:$0xff]
  %v3594 = vld [vmem:[%s3590 + $0x18] sm:$0x3]
  %v3596 = vsel %vm162, %v3589, 0
  %v3599 = vsel %vm166, %v3594, 0
  %3601 = vmatprep.subr.mxu0 0.0
  %3602 = vmatpush1.msra.mxu0 0.0
  %3603 = vmatprep.subr.mxu0 0.0
  %3604 = vmatpush1.msra.mxu0 0.0
  %3605 = vmatprep.subr.mxu0 0.0
  %3606 = vmatpush1.msra.mxu0 0.0
  %3607 = vmatprep.subr.mxu0 0.0
  %3608 = vmatpush1.msra.mxu0 0.0
  %3609 = vmatprep.subr.mxu0 0.0
  %3610 = vmatpush1.msra.mxu0 0.0
  %3611 = vmatprep.subr.mxu0 0.0
  %3612 = vmatpush1.msra.mxu0 0.0
  %3613 = vmatprep.subr.mxu0 0.0
  %3614 = vmatpush1.msra.mxu0 0.0
  %3615 = vmatprep.subr.mxu0 0.0
  %3616 = vmatpush1.msra.mxu0 0.0
  %3617 = vmatprep.subr.mxu0 0.0
  %3618 = vmatpush1.msra.mxu0 0.0
  %3619 = vmatprep.subr.mxu0 0.0
  %3620 = vmatpush1.msra.mxu0 0.0
  %3621 = vmatprep.subr.mxu0 0.0
  %3622 = vmatpush1.msra.mxu0 0.0
  %3623 = vmatprep.subr.mxu0 0.0
  %3624 = vmatpush1.msra.mxu0 0.0
  %3625 = vmatprep.subr.mxu0 0.0
  %3626 = vmatpush1.msra.mxu0 %v3599
  %3627 = vmatprep.subr.mxu0 0.0
  %3628 = vmatpush1.msra.mxu0 %v3593
  %3629 = vmatprep.subr.mxu0 0.0
  %3630 = vmatpush1.msra.mxu0 %v3592
  %3631 = vmatprep.subr.mxu0 0.0
  %3632 = vmatpush1.msra.mxu0 %v3591
  %3633 = vmatprep.subr.mxu0 0.0
  %3634 = vmatpush2.msra.mxu0 0.0
  %3635 = vmatprep.subr.mxu0 0.0
  %3636 = vmatpush2.msra.mxu0 0.0
  %3637 = vmatprep.subr.mxu0 0.0
  %3638 = vmatpush2.msra.mxu0 0.0
  %3639 = vmatprep.subr.mxu0 0.0
  %3640 = vmatpush2.msra.mxu0 0.0
  %3641 = vmatprep.subr.mxu0 0.0
  %3642 = vmatpush2.msra.mxu0 0.0
  %3643 = vmatprep.subr.mxu0 0.0
  %3644 = vmatpush2.msra.mxu0 0.0
  %3645 = vmatprep.subr.mxu0 0.0
  %3646 = vmatpush2.msra.mxu0 0.0
  %3647 = vmatprep.subr.mxu0 0.0
  %3648 = vmatpush2.msra.mxu0 0.0
  %3649 = vmatprep.subr.mxu0 0.0
  %3650 = vmatpush2.msra.mxu0 0.0
  %3651 = vmatprep.subr.mxu0 0.0
  %3652 = vmatpush2.msra.mxu0 0.0
  %3653 = vmatprep.subr.mxu0 0.0
  %3654 = vmatpush2.msra.mxu0 0.0
  %3655 = vmatprep.subr.mxu0 0.0
  %3656 = vmatpush2.msra.mxu0 0.0
  %3657 = vmatprep.subr.mxu0 0.0
  %3658 = vmatpush2.msra.mxu0 0.0
  %3659 = vmatprep.subr.mxu0 0.0
  %3660 = vmatpush2.msra.mxu0 0.0
  %3661 = vmatprep.subr.mxu0 0.0
  %3662 = vmatpush2.msra.mxu0 0.0
  %3663 = vmatprep.subr.mxu0 0.0
  %3664 = vmatpush2.msra.mxu0 0.0
  %3665 = vmatprep.mubr.f32.mxu0 0.0
  %3666 = vmatmul.mubr.f32.gmra.mxu0 %v3596
  %v3667 = vpop.f32.mrf.mxu0
  %v3668 = vadd.f32 0.0, %v3667
  %v3669 = vpop.f32.mrf.mxu0
  %3670 = vdwg.mxu0
  %s3671 = scalar_lea.vmem %s31, 64
  %v3672 = vld [vmem:[%s3671] sm:$0xff]
  %v3673 = vld [vmem:[%s3671 + $0x8] sm:$0xff]
  %v3674 = vld [vmem:[%s3671 + $0x10] sm:$0xff]
  %v3675 = vld [vmem:[%s3671 + $0x18] sm:$0x3]
  %v3677 = vsel %vm166, %v3675, 0
  %3679 = vmatprep.subr.mxu0 0.0
  %3680 = vmatpush1.msra.mxu0 0.0
  %3681 = vmatprep.subr.mxu0 0.0
  %3682 = vmatpush1.msra.mxu0 0.0
  %3683 = vmatprep.subr.mxu0 0.0
  %3684 = vmatpush1.msra.mxu0 0.0
  %3685 = vmatprep.subr.mxu0 0.0
  %3686 = vmatpush1.msra.mxu0 0.0
  %3687 = vmatprep.subr.mxu0 0.0
  %3688 = vmatpush1.msra.mxu0 0.0
  %3689 = vmatprep.subr.mxu0 0.0
  %3690 = vmatpush1.msra.mxu0 0.0
  %3691 = vmatprep.subr.mxu0 0.0
  %3692 = vmatpush1.msra.mxu0 0.0
  %3693 = vmatprep.subr.mxu0 0.0
  %3694 = vmatpush1.msra.mxu0 0.0
  %3695 = vmatprep.subr.mxu0 0.0
  %3696 = vmatpush1.msra.mxu0 0.0
  %3697 = vmatprep.subr.mxu0 0.0
  %3698 = vmatpush1.msra.mxu0 0.0
  %3699 = vmatprep.subr.mxu0 0.0
  %3700 = vmatpush1.msra.mxu0 0.0
  %3701 = vmatprep.subr.mxu0 0.0
  %3702 = vmatpush1.msra.mxu0 0.0
  %3703 = vmatprep.subr.mxu0 0.0
  %3704 = vmatpush1.msra.mxu0 %v3677
  %3705 = vmatprep.subr.mxu0 0.0
  %3706 = vmatpush1.msra.mxu0 %v3674
  %3707 = vmatprep.subr.mxu0 0.0
  %3708 = vmatpush1.msra.mxu0 %v3673
  %3709 = vmatprep.subr.mxu0 0.0
  %3710 = vmatpush1.msra.mxu0 %v3672
  %3711 = vmatprep.subr.mxu0 0.0
  %3712 = vmatpush2.msra.mxu0 0.0
  %3713 = vmatprep.subr.mxu0 0.0
  %3714 = vmatpush2.msra.mxu0 0.0
  %3715 = vmatprep.subr.mxu0 0.0
  %3716 = vmatpush2.msra.mxu0 0.0
  %3717 = vmatprep.subr.mxu0 0.0
  %3718 = vmatpush2.msra.mxu0 0.0
  %3719 = vmatprep.subr.mxu0 0.0
  %3720 = vmatpush2.msra.mxu0 0.0
  %3721 = vmatprep.subr.mxu0 0.0
  %3722 = vmatpush2.msra.mxu0 0.0
  %3723 = vmatprep.subr.mxu0 0.0
  %3724 = vmatpush2.msra.mxu0 0.0
  %3725 = vmatprep.subr.mxu0 0.0
  %3726 = vmatpush2.msra.mxu0 0.0
  %3727 = vmatprep.subr.mxu0 0.0
  %3728 = vmatpush2.msra.mxu0 0.0
  %3729 = vmatprep.subr.mxu0 0.0
  %3730 = vmatpush2.msra.mxu0 0.0
  %3731 = vmatprep.subr.mxu0 0.0
  %3732 = vmatpush2.msra.mxu0 0.0
  %3733 = vmatprep.subr.mxu0 0.0
  %3734 = vmatpush2.msra.mxu0 0.0
  %3735 = vmatprep.subr.mxu0 0.0
  %3736 = vmatpush2.msra.mxu0 0.0
  %3737 = vmatprep.subr.mxu0 0.0
  %3738 = vmatpush2.msra.mxu0 0.0
  %3739 = vmatprep.subr.mxu0 0.0
  %3740 = vmatpush2.msra.mxu0 0.0
  %3741 = vmatprep.subr.mxu0 0.0
  %3742 = vmatpush2.msra.mxu0 0.0
  %3743 = vmatprep.mubr.f32.mxu0 0.0
  %3744 = vmatmul.mubr.f32.gmra.mxu0 %v3596
  %v3745 = vpop.f32.mrf.mxu0
  %v3746 = vadd.f32 0.0, %v3745
  %v3747 = vpop.f32.mrf.mxu0
  %3748 = vdwg.mxu0
  %3749 = vmatprep.subr.mxu0 0.0
  %3750 = vmatpush1.msra.mxu0 0.0
  %3751 = vmatprep.subr.mxu0 0.0
  %3752 = vmatpush1.msra.mxu0 0.0
  %3753 = vmatprep.subr.mxu0 0.0
  %3754 = vmatpush1.msra.mxu0 0.0
  %3755 = vmatprep.subr.mxu0 0.0
  %3756 = vmatpush1.msra.mxu0 0.0
  %3757 = vmatprep.subr.mxu0 0.0
  %3758 = vmatpush1.msra.mxu0 0.0
  %3759 = vmatprep.subr.mxu0 0.0
  %3760 = vmatpush1.msra.mxu0 0.0
  %3761 = vmatprep.subr.mxu0 0.0
  %3762 = vmatpush1.msra.mxu0 0.0
  %3763 = vmatprep.subr.mxu0 0.0
  %3764 = vmatpush1.msra.mxu0 0.0
  %3765 = vmatprep.subr.mxu0 0.0
  %3766 = vmatpush1.msra.mxu0 0.0
  %3767 = vmatprep.subr.mxu0 0.0
  %3768 = vmatpush1.msra.mxu0 0.0
  %3769 = vmatprep.subr.mxu0 0.0
  %3770 = vmatpush1.msra.mxu0 0.0
  %3771 = vmatprep.subr.mxu0 0.0
  %3772 = vmatpush1.msra.mxu0 0.0
  %3773 = vmatprep.subr.mxu0 0.0
  %3774 = vmatpush1.msra.mxu0 0.0
  %3775 = vmatprep.subr.mxu0 0.0
  %3776 = vmatpush1.msra.mxu0 0.0
  %3777 = vmatprep.subr.mxu0 0.0
  %3778 = vmatpush1.msra.mxu0 0.0
  %3779 = vmatprep.subr.mxu0 0.0
  %3780 = vmatpush1.msra.mxu0 %v3746
  %3781 = vmatprep.subr.mxu0 0.0
  %3782 = vmatpush2.msra.mxu0 0.0
  %3783 = vmatprep.subr.mxu0 0.0
  %3784 = vmatpush2.msra.mxu0 0.0
  %3785 = vmatprep.subr.mxu0 0.0
  %3786 = vmatpush2.msra.mxu0 0.0
  %3787 = vmatprep.subr.mxu0 0.0
  %3788 = vmatpush2.msra.mxu0 0.0
  %3789 = vmatprep.subr.mxu0 0.0
  %3790 = vmatpush2.msra.mxu0 0.0
  %3791 = vmatprep.subr.mxu0 0.0
  %3792 = vmatpush2.msra.mxu0 0.0
  %3793 = vmatprep.subr.mxu0 0.0
  %3794 = vmatpush2.msra.mxu0 0.0
  %3795 = vmatprep.subr.mxu0 0.0
  %3796 = vmatpush2.msra.mxu0 0.0
  %3797 = vmatprep.subr.mxu0 0.0
  %3798 = vmatpush2.msra.mxu0 0.0
  %3799 = vmatprep.subr.mxu0 0.0
  %3800 = vmatpush2.msra.mxu0 0.0
  %3801 = vmatprep.subr.mxu0 0.0
  %3802 = vmatpush2.msra.mxu0 0.0
  %3803 = vmatprep.subr.mxu0 0.0
  %3804 = vmatpush2.msra.mxu0 0.0
  %3805 = vmatprep.subr.mxu0 0.0
  %3806 = vmatpush2.msra.mxu0 0.0
  %3807 = vmatprep.subr.mxu0 0.0
  %3808 = vmatpush2.msra.mxu0 0.0
  %3809 = vmatprep.subr.mxu0 0.0
  %3810 = vmatpush2.msra.mxu0 0.0
  %3811 = vmatprep.subr.mxu0 0.0
  %3812 = vmatpush2.msra.mxu0 0.0
  %3813 = vmatprep.mubr.f32.mxu0 0.0
  %3814 = vmatmul.mubr.f32.gmra.mxu0 %v400
  %v3815 = vpop.f32.mrf.mxu0
  %v3816 = vadd.f32 0.0, %v3815
  %v3817 = vpop.f32.mrf.mxu0
  %3818 = vmatprep.mubr.f32.mxu0 0.0
  %3819 = vmatmul.mubr.f32.gmra.mxu0 %v403
  %v3820 = vpop.f32.mrf.mxu0
  %v3821 = vadd.f32 0.0, %v3820
  %v3822 = vpop.f32.mrf.mxu0
  %3823 = vmatprep.mubr.f32.mxu0 0.0
  %3824 = vmatmul.mubr.f32.gmra.mxu0 %v406
  %v3825 = vpop.f32.mrf.mxu0
  %v3826 = vadd.f32 0.0, %v3825
  %v3827 = vpop.f32.mrf.mxu0
  %3828 = vmatprep.mubr.f32.mxu0 0.0
  %3829 = vmatmul.mubr.f32.gmra.mxu0 %v409
  %v3830 = vpop.f32.mrf.mxu0
  %v3831 = vadd.f32 0.0, %v3830
  %v3832 = vpop.f32.mrf.mxu0
  %3833 = vmatprep.mubr.f32.mxu0 0.0
  %3834 = vmatmul.mubr.f32.gmra.mxu0 %v412
  %v3835 = vpop.f32.mrf.mxu0
  %v3836 = vadd.f32 0.0, %v3835
  %v3837 = vpop.f32.mrf.mxu0
  %3838 = vmatprep.mubr.f32.mxu0 0.0
  %3839 = vmatmul.mubr.f32.gmra.mxu0 %v415
  %v3840 = vpop.f32.mrf.mxu0
  %v3841 = vadd.f32 0.0, %v3840
  %v3842 = vpop.f32.mrf.mxu0
  %3843 = vmatprep.mubr.f32.mxu0 0.0
  %3844 = vmatmul.mubr.f32.gmra.mxu0 %v418
  %v3845 = vpop.f32.mrf.mxu0
  %v3846 = vadd.f32 0.0, %v3845
  %v3847 = vpop.f32.mrf.mxu0
  %3848 = vdwg.mxu0
  %3849 = vmatprep.subr.mxu0 0.0
  %3850 = vmatpush1.msra.mxu0 0.0
  %3851 = vmatprep.subr.mxu0 0.0
  %3852 = vmatpush1.msra.mxu0 0.0
  %3853 = vmatprep.subr.mxu0 0.0
  %3854 = vmatpush1.msra.mxu0 0.0
  %3855 = vmatprep.subr.mxu0 0.0
  %3856 = vmatpush1.msra.mxu0 0.0
  %3857 = vmatprep.subr.mxu0 0.0
  %3858 = vmatpush1.msra.mxu0 0.0
  %3859 = vmatprep.subr.mxu0 0.0
  %3860 = vmatpush1.msra.mxu0 0.0
  %3861 = vmatprep.subr.mxu0 0.0
  %3862 = vmatpush1.msra.mxu0 0.0
  %3863 = vmatprep.subr.mxu0 0.0
  %3864 = vmatpush1.msra.mxu0 0.0
  %3865 = vmatprep.subr.mxu0 0.0
  %3866 = vmatpush1.msra.mxu0 0.0
  %3867 = vmatprep.subr.mxu0 0.0
  %3868 = vmatpush1.msra.mxu0 0.0
  %3869 = vmatprep.subr.mxu0 0.0
  %3870 = vmatpush1.msra.mxu0 0.0
  %3871 = vmatprep.subr.mxu0 0.0
  %3872 = vmatpush1.msra.mxu0 0.0
  %3873 = vmatprep.subr.mxu0 0.0
  %3874 = vmatpush1.msra.mxu0 0.0
  %3875 = vmatprep.subr.mxu0 0.0
  %3876 = vmatpush1.msra.mxu0 0.0
  %3877 = vmatprep.subr.mxu0 0.0
  %3878 = vmatpush1.msra.mxu0 0.0
  %3879 = vmatprep.subr.mxu0 0.0
  %3880 = vmatpush1.msra.mxu0 %v3254
  %3881 = vmatprep.subr.mxu0 0.0
  %3882 = vmatpush2.msra.mxu0 0.0
  %3883 = vmatprep.subr.mxu0 0.0
  %3884 = vmatpush2.msra.mxu0 0.0
  %3885 = vmatprep.subr.mxu0 0.0
  %3886 = vmatpush2.msra.mxu0 0.0
  %3887 = vmatprep.subr.mxu0 0.0
  %3888 = vmatpush2.msra.mxu0 0.0
  %3889 = vmatprep.subr.mxu0 0.0
  %3890 = vmatpush2.msra.mxu0 0.0
  %3891 = vmatprep.subr.mxu0 0.0
  %3892 = vmatpush2.msra.mxu0 0.0
  %3893 = vmatprep.subr.mxu0 0.0
  %3894 = vmatpush2.msra.mxu0 0.0
  %3895 = vmatprep.subr.mxu0 0.0
  %3896 = vmatpush2.msra.mxu0 0.0
  %3897 = vmatprep.subr.mxu0 0.0
  %3898 = vmatpush2.msra.mxu0 0.0
  %3899 = vmatprep.subr.mxu0 0.0
  %3900 = vmatpush2.msra.mxu0 0.0
  %3901 = vmatprep.subr.mxu0 0.0
  %3902 = vmatpush2.msra.mxu0 0.0
  %3903 = vmatprep.subr.mxu0 0.0
  %3904 = vmatpush2.msra.mxu0 0.0
  %3905 = vmatprep.subr.mxu0 0.0
  %3906 = vmatpush2.msra.mxu0 0.0
  %3907 = vmatprep.subr.mxu0 0.0
  %3908 = vmatpush2.msra.mxu0 0.0
  %3909 = vmatprep.subr.mxu0 0.0
  %3910 = vmatpush2.msra.mxu0 0.0
  %3911 = vmatprep.subr.mxu0 0.0
  %3912 = vmatpush2.msra.mxu0 0.0
  %3913 = vmatprep.mubr.f32.mxu0 0.0
  %3914 = vmatmul.mubr.f32.gmra.mxu0 %v521
  %v3915 = vpop.f32.mrf.mxu0
  %v3916 = vadd.f32 0.0, %v3915
  %v3917 = vpop.f32.mrf.mxu0
  %3918 = vmatprep.mubr.f32.mxu0 0.0
  %3919 = vmatmul.mubr.f32.gmra.mxu0 %v524
  %v3920 = vpop.f32.mrf.mxu0
  %v3921 = vadd.f32 0.0, %v3920
  %v3922 = vpop.f32.mrf.mxu0
  %3923 = vmatprep.mubr.f32.mxu0 0.0
  %3924 = vmatmul.mubr.f32.gmra.mxu0 %v527
  %v3925 = vpop.f32.mrf.mxu0
  %v3926 = vadd.f32 0.0, %v3925
  %v3927 = vpop.f32.mrf.mxu0
  %3928 = vmatprep.mubr.f32.mxu0 0.0
  %3929 = vmatmul.mubr.f32.gmra.mxu0 %v530
  %v3930 = vpop.f32.mrf.mxu0
  %v3931 = vadd.f32 0.0, %v3930
  %v3932 = vpop.f32.mrf.mxu0
  %3933 = vmatprep.mubr.f32.mxu0 0.0
  %3934 = vmatmul.mubr.f32.gmra.mxu0 %v533
  %v3935 = vpop.f32.mrf.mxu0
  %v3936 = vadd.f32 0.0, %v3935
  %v3937 = vpop.f32.mrf.mxu0
  %3938 = vmatprep.mubr.f32.mxu0 0.0
  %3939 = vmatmul.mubr.f32.gmra.mxu0 %v536
  %v3940 = vpop.f32.mrf.mxu0
  %v3941 = vadd.f32 0.0, %v3940
  %v3942 = vpop.f32.mrf.mxu0
  %3943 = vmatprep.mubr.f32.mxu0 0.0
  %3944 = vmatmul.mubr.f32.gmra.mxu0 %v539
  %v3945 = vpop.f32.mrf.mxu0
  %v3946 = vadd.f32 0.0, %v3945
  %v3947 = vpop.f32.mrf.mxu0
  %3948 = vdwg.mxu0
  %3949 = vmatprep.subr.mxu0 0.0
  %3950 = vmatpush1.msra.mxu0 0.0
  %3951 = vmatprep.subr.mxu0 0.0
  %3952 = vmatpush1.msra.mxu0 0.0
  %3953 = vmatprep.subr.mxu0 0.0
  %3954 = vmatpush1.msra.mxu0 0.0
  %3955 = vmatprep.subr.mxu0 0.0
  %3956 = vmatpush1.msra.mxu0 0.0
  %3957 = vmatprep.subr.mxu0 0.0
  %3958 = vmatpush1.msra.mxu0 0.0
  %3959 = vmatprep.subr.mxu0 0.0
  %3960 = vmatpush1.msra.mxu0 0.0
  %3961 = vmatprep.subr.mxu0 0.0
  %3962 = vmatpush1.msra.mxu0 0.0
  %3963 = vmatprep.subr.mxu0 0.0
  %3964 = vmatpush1.msra.mxu0 0.0
  %3965 = vmatprep.subr.mxu0 0.0
  %3966 = vmatpush1.msra.mxu0 0.0
  %3967 = vmatprep.subr.mxu0 0.0
  %3968 = vmatpush1.msra.mxu0 0.0
  %3969 = vmatprep.subr.mxu0 0.0
  %3970 = vmatpush1.msra.mxu0 0.0
  %3971 = vmatprep.subr.mxu0 0.0
  %3972 = vmatpush1.msra.mxu0 0.0
  %3973 = vmatprep.subr.mxu0 0.0
  %3974 = vmatpush1.msra.mxu0 0.0
  %3975 = vmatprep.subr.mxu0 0.0
  %3976 = vmatpush1.msra.mxu0 0.0
  %3977 = vmatprep.subr.mxu0 0.0
  %3978 = vmatpush1.msra.mxu0 0.0
  %3979 = vmatprep.subr.mxu0 0.0
  %3980 = vmatpush1.msra.mxu0 %v3254
  %3981 = vmatprep.subr.mxu0 0.0
  %3982 = vmatpush2.msra.mxu0 0.0
  %3983 = vmatprep.subr.mxu0 0.0
  %3984 = vmatpush2.msra.mxu0 0.0
  %3985 = vmatprep.subr.mxu0 0.0
  %3986 = vmatpush2.msra.mxu0 0.0
  %3987 = vmatprep.subr.mxu0 0.0
  %3988 = vmatpush2.msra.mxu0 0.0
  %3989 = vmatprep.subr.mxu0 0.0
  %3990 = vmatpush2.msra.mxu0 0.0
  %3991 = vmatprep.subr.mxu0 0.0
  %3992 = vmatpush2.msra.mxu0 0.0
  %3993 = vmatprep.subr.mxu0 0.0
  %3994 = vmatpush2.msra.mxu0 0.0
  %3995 = vmatprep.subr.mxu0 0.0
  %3996 = vmatpush2.msra.mxu0 0.0
  %3997 = vmatprep.subr.mxu0 0.0
  %3998 = vmatpush2.msra.mxu0 0.0
  %3999 = vmatprep.subr.mxu0 0.0
  %4000 = vmatpush2.msra.mxu0 0.0
  %4001 = vmatprep.subr.mxu0 0.0
  %4002 = vmatpush2.msra.mxu0 0.0
  %4003 = vmatprep.subr.mxu0 0.0
  %4004 = vmatpush2.msra.mxu0 0.0
  %4005 = vmatprep.subr.mxu0 0.0
  %4006 = vmatpush2.msra.mxu0 0.0
  %4007 = vmatprep.subr.mxu0 0.0
  %4008 = vmatpush2.msra.mxu0 0.0
  %4009 = vmatprep.subr.mxu0 0.0
  %4010 = vmatpush2.msra.mxu0 0.0
  %4011 = vmatprep.subr.mxu0 0.0
  %4012 = vmatpush2.msra.mxu0 0.0
  %4013 = vmatprep.mubr.f32.mxu0 0.0
  %4014 = vmatmul.mubr.f32.gmra.mxu0 %v400
  %v4015 = vpop.f32.mrf.mxu0
  %v4016 = vadd.f32 0.0, %v4015
  %v4017 = vpop.f32.mrf.mxu0
  %4018 = vmatprep.mubr.f32.mxu0 0.0
  %4019 = vmatmul.mubr.f32.gmra.mxu0 %v403
  %v4020 = vpop.f32.mrf.mxu0
  %v4021 = vadd.f32 0.0, %v4020
  %v4022 = vpop.f32.mrf.mxu0
  %4023 = vmatprep.mubr.f32.mxu0 0.0
  %4024 = vmatmul.mubr.f32.gmra.mxu0 %v406
  %v4025 = vpop.f32.mrf.mxu0
  %v4026 = vadd.f32 0.0, %v4025
  %v4027 = vpop.f32.mrf.mxu0
  %4028 = vmatprep.mubr.f32.mxu0 0.0
  %4029 = vmatmul.mubr.f32.gmra.mxu0 %v409
  %v4030 = vpop.f32.mrf.mxu0
  %v4031 = vadd.f32 0.0, %v4030
  %v4032 = vpop.f32.mrf.mxu0
  %4033 = vmatprep.mubr.f32.mxu0 0.0
  %4034 = vmatmul.mubr.f32.gmra.mxu0 %v412
  %v4035 = vpop.f32.mrf.mxu0
  %v4036 = vadd.f32 0.0, %v4035
  %v4037 = vpop.f32.mrf.mxu0
  %4038 = vmatprep.mubr.f32.mxu0 0.0
  %4039 = vmatmul.mubr.f32.gmra.mxu0 %v415
  %v4040 = vpop.f32.mrf.mxu0
  %v4041 = vadd.f32 0.0, %v4040
  %v4042 = vpop.f32.mrf.mxu0
  %4043 = vmatprep.mubr.f32.mxu0 0.0
  %4044 = vmatmul.mubr.f32.gmra.mxu0 %v418
  %v4045 = vpop.f32.mrf.mxu0
  %v4046 = vadd.f32 0.0, %v4045
  %v4047 = vpop.f32.mrf.mxu0
  %4048 = vdwg.mxu0
  %v4049 = vsub.f32 %v3916, %v4016
  %v4050 = vsub.f32 %v3921, %v4021
  %v4051 = vsub.f32 %v3926, %v4026
  %v4052 = vsub.f32 %v3931, %v4031
  %v4053 = vsub.f32 %v3936, %v4036
  %v4054 = vsub.f32 %v3941, %v4041
  %v4055 = vsub.f32 %v3946, %v4046
  %v4056 = vmul.f32 %v4049, %v4049
  %v4057 = vmul.f32 %v4050, %v4050
  %v4058 = vmul.f32 %v4051, %v4051
  %v4059 = vmul.f32 %v4052, %v4052
  %v4060 = vmul.f32 %v4053, %v4053
  %v4061 = vmul.f32 %v4054, %v4054
  %v4062 = vmul.f32 %v4055, %v4055
  %v4063 = vsel %vm755, %v4056, 0.0
  %4064 = vadd.xlane.f32.xlu0 %v4063
  %v4065 = vpop.xlane.xlu0 %4064
  %v4066 = vsel %vm755, %v4057, 0.0
  %4067 = vadd.xlane.f32.xlu0 %v4066
  %v4068 = vpop.xlane.xlu0 %4067
  %v4069 = vsel %vm755, %v4058, 0.0
  %4070 = vadd.xlane.f32.xlu0 %v4069
  %v4071 = vpop.xlane.xlu0 %4070
  %v4072 = vsel %vm755, %v4059, 0.0
  %4073 = vadd.xlane.f32.xlu0 %v4072
  %v4074 = vpop.xlane.xlu0 %4073
  %v4075 = vsel %vm755, %v4060, 0.0
  %4076 = vadd.xlane.f32.xlu0 %v4075
  %v4077 = vpop.xlane.xlu0 %4076
  %v4078 = vsel %vm755, %v4061, 0.0
  %4079 = vadd.xlane.f32.xlu0 %v4078
  %v4080 = vpop.xlane.xlu0 %4079
  %v4081 = vsel %vm755, %v4062, 0.0
  %4082 = vadd.xlane.f32.xlu0 %v4081
  %v4083 = vpop.xlane.xlu0 %4082
  %v4084 = vadd.f32 %v4065, 1e-08
  %v4085 = vadd.f32 %v4068, 1e-08
  %v4086 = vadd.f32 %v4071, 1e-08
  %v4087 = vadd.f32 %v4074, 1e-08
  %v4088 = vadd.f32 %v4077, 1e-08
  %v4089 = vadd.f32 %v4080, 1e-08
  %v4090 = vadd.f32 %v4083, 1e-08
  %v4091 = vrsqrt.pop %v4084
  %v4092 = vrsqrt.pop %v4085
  %v4093 = vrsqrt.pop %v4086
  %v4094 = vrsqrt.pop %v4087
  %v4095 = vrsqrt.pop %v4088
  %v4096 = vrsqrt.pop %v4089
  %v4097 = vrsqrt.pop %v4090
  %v4098 = vmul.f32 %v4049, %v4091
  %v4099 = vmul.f32 %v4050, %v4092
  %v4100 = vmul.f32 %v4051, %v4093
  %v4101 = vmul.f32 %v4052, %v4094
  %v4102 = vmul.f32 %v4053, %v4095
  %v4103 = vmul.f32 %v4054, %v4096
  %v4104 = vmul.f32 %v4055, %v4097
  %4105 = vmatprep.subr.mxu0 0.0
  %4106 = vmatpush1.msra.mxu0 0.0
  %4107 = vmatprep.subr.mxu0 0.0
  %4108 = vmatpush1.msra.mxu0 0.0
  %4109 = vmatprep.subr.mxu0 0.0
  %4110 = vmatpush1.msra.mxu0 0.0
  %4111 = vmatprep.subr.mxu0 0.0
  %4112 = vmatpush1.msra.mxu0 0.0
  %4113 = vmatprep.subr.mxu0 0.0
  %4114 = vmatpush1.msra.mxu0 0.0
  %4115 = vmatprep.subr.mxu0 0.0
  %4116 = vmatpush1.msra.mxu0 0.0
  %4117 = vmatprep.subr.mxu0 0.0
  %4118 = vmatpush1.msra.mxu0 0.0
  %4119 = vmatprep.subr.mxu0 0.0
  %4120 = vmatpush1.msra.mxu0 0.0
  %4121 = vmatprep.subr.mxu0 0.0
  %4122 = vmatpush1.msra.mxu0 0.0
  %4123 = vmatprep.subr.mxu0 0.0
  %4124 = vmatpush1.msra.mxu0 0.0
  %4125 = vmatprep.subr.mxu0 0.0
  %4126 = vmatpush1.msra.mxu0 0.0
  %4127 = vmatprep.subr.mxu0 0.0
  %4128 = vmatpush1.msra.mxu0 0.0
  %4129 = vmatprep.subr.mxu0 0.0
  %4130 = vmatpush1.msra.mxu0 0.0
  %4131 = vmatprep.subr.mxu0 0.0
  %4132 = vmatpush1.msra.mxu0 0.0
  %4133 = vmatprep.subr.mxu0 0.0
  %4134 = vmatpush1.msra.mxu0 0.0
  %4135 = vmatprep.subr.mxu0 0.0
  %4136 = vmatpush1.msra.mxu0 %v3668
  %4137 = vmatprep.subr.mxu0 0.0
  %4138 = vmatpush2.msra.mxu0 0.0
  %4139 = vmatprep.subr.mxu0 0.0
  %4140 = vmatpush2.msra.mxu0 0.0
  %4141 = vmatprep.subr.mxu0 0.0
  %4142 = vmatpush2.msra.mxu0 0.0
  %4143 = vmatprep.subr.mxu0 0.0
  %4144 = vmatpush2.msra.mxu0 0.0
  %4145 = vmatprep.subr.mxu0 0.0
  %4146 = vmatpush2.msra.mxu0 0.0
  %4147 = vmatprep.subr.mxu0 0.0
  %4148 = vmatpush2.msra.mxu0 0.0
  %4149 = vmatprep.subr.mxu0 0.0
  %4150 = vmatpush2.msra.mxu0 0.0
  %4151 = vmatprep.subr.mxu0 0.0
  %4152 = vmatpush2.msra.mxu0 0.0
  %4153 = vmatprep.subr.mxu0 0.0
  %4154 = vmatpush2.msra.mxu0 0.0
  %4155 = vmatprep.subr.mxu0 0.0
  %4156 = vmatpush2.msra.mxu0 0.0
  %4157 = vmatprep.subr.mxu0 0.0
  %4158 = vmatpush2.msra.mxu0 0.0
  %4159 = vmatprep.subr.mxu0 0.0
  %4160 = vmatpush2.msra.mxu0 0.0
  %4161 = vmatprep.subr.mxu0 0.0
  %4162 = vmatpush2.msra.mxu0 0.0
  %4163 = vmatprep.subr.mxu0 0.0
  %4164 = vmatpush2.msra.mxu0 0.0
  %4165 = vmatprep.subr.mxu0 0.0
  %4166 = vmatpush2.msra.mxu0 0.0
  %4167 = vmatprep.subr.mxu0 0.0
  %4168 = vmatpush2.msra.mxu0 0.0
  %4169 = vmatprep.mubr.f32.mxu0 0.0
  %4170 = vmatmul.mubr.f32.gmra.mxu0 %v521
  %v4171 = vpop.f32.mrf.mxu0
  %v4172 = vadd.f32 %v3816, %v4171
  %v4173 = vpop.f32.mrf.mxu0
  %4174 = vmatprep.mubr.f32.mxu0 0.0
  %4175 = vmatmul.mubr.f32.gmra.mxu0 %v524
  %v4176 = vpop.f32.mrf.mxu0
  %v4177 = vadd.f32 %v3821, %v4176
  %v4178 = vpop.f32.mrf.mxu0
  %4179 = vmatprep.mubr.f32.mxu0 0.0
  %4180 = vmatmul.mubr.f32.gmra.mxu0 %v527
  %v4181 = vpop.f32.mrf.mxu0
  %v4182 = vadd.f32 %v3826, %v4181
  %v4183 = vpop.f32.mrf.mxu0
  %4184 = vmatprep.mubr.f32.mxu0 0.0
  %4185 = vmatmul.mubr.f32.gmra.mxu0 %v530
  %v4186 = vpop.f32.mrf.mxu0
  %v4187 = vadd.f32 %v3831, %v4186
  %v4188 = vpop.f32.mrf.mxu0
  %4189 = vmatprep.mubr.f32.mxu0 0.0
  %4190 = vmatmul.mubr.f32.gmra.mxu0 %v533
  %v4191 = vpop.f32.mrf.mxu0
  %v4192 = vadd.f32 %v3836, %v4191
  %v4193 = vpop.f32.mrf.mxu0
  %4194 = vmatprep.mubr.f32.mxu0 0.0
  %4195 = vmatmul.mubr.f32.gmra.mxu0 %v536
  %v4196 = vpop.f32.mrf.mxu0
  %v4197 = vadd.f32 %v3841, %v4196
  %v4198 = vpop.f32.mrf.mxu0
  %4199 = vmatprep.mubr.f32.mxu0 0.0
  %4200 = vmatmul.mubr.f32.gmra.mxu0 %v539
  %v4201 = vpop.f32.mrf.mxu0
  %v4202 = vadd.f32 %v3846, %v4201
  %v4203 = vpop.f32.mrf.mxu0
  %4204 = vdwg.mxu0
  %s4205 = scalar_lea.vmem %s33, 2
  %v4206 = vld [vmem:[%s4205] sm:$0x1]
  %v4208 = vlaneseq
  %v4209 = vshrl.u32 %v4208, 7
  %v4210 = vsub.s32 0, %v4209
  %v4211 = vrot.slane %v4206, %v4210
  %v4213 = vmul.f32 %v4065, %v4211
  %v4214 = vmul.f32 %v4068, %v4211
  %v4215 = vmul.f32 %v4071, %v4211
  %v4216 = vmul.f32 %v4074, %v4211
  %v4217 = vmul.f32 %v4077, %v4211
  %v4218 = vmul.f32 %v4080, %v4211
  %v4219 = vmul.f32 %v4083, %v4211
  %v4220 = vadd.f32 %v4172, %v4213
  %v4221 = vadd.f32 %v4177, %v4214
  %v4222 = vadd.f32 %v4182, %v4215
  %v4223 = vadd.f32 %v4187, %v4216
  %v4224 = vadd.f32 %v4192, %v4217
  %v4225 = vadd.f32 %v4197, %v4218
  %v4226 = vadd.f32 %v4202, %v4219
  %s4227 = scalar_lea.vmem %s35, 2
  %v4228 = vld [vmem:[%s4227] sm:$0x1]
  %v4230 = vlaneseq
  %v4231 = vshrl.u32 %v4230, 7
  %v4232 = vsub.s32 0, %v4231
  %v4233 = vrot.slane %v4228, %v4232
  %v4235 = vadd.f32 %v4220, %v4233
  %v4236 = vadd.f32 %v4221, %v4233
  %v4237 = vadd.f32 %v4222, %v4233
  %v4238 = vadd.f32 %v4223, %v4233
  %v4239 = vadd.f32 %v4224, %v4233
  %v4240 = vadd.f32 %v4225, %v4233
  %v4241 = vadd.f32 %v4226, %v4233
  %v4242 = vxor.u32 %v4235, 2147483648
  %v4243 = vxor.u32 %v4236, 2147483648
  %v4244 = vxor.u32 %v4237, 2147483648
  %v4245 = vxor.u32 %v4238, 2147483648
  %v4246 = vxor.u32 %v4239, 2147483648
  %v4247 = vxor.u32 %v4240, 2147483648
  %v4248 = vxor.u32 %v4241, 2147483648
  %v4249 = vmul.f32 %v4242, 1.442695
  %v4250 = vpow.pop %v4249
  %v4251 = vmul.f32 %v4243, 1.442695
  %v4252 = vpow.pop %v4251
  %v4253 = vmul.f32 %v4244, 1.442695
  %v4254 = vpow.pop %v4253
  %v4255 = vmul.f32 %v4245, 1.442695
  %v4256 = vpow.pop %v4255
  %v4257 = vmul.f32 %v4246, 1.442695
  %v4258 = vpow.pop %v4257
  %v4259 = vmul.f32 %v4247, 1.442695
  %v4260 = vpow.pop %v4259
  %v4261 = vmul.f32 %v4248, 1.442695
  %v4262 = vpow.pop %v4261
  %v4263 = vadd.f32 %v4250, 1.0
  %v4264 = vadd.f32 %v4252, 1.0
  %v4265 = vadd.f32 %v4254, 1.0
  %v4266 = vadd.f32 %v4256, 1.0
  %v4267 = vadd.f32 %v4258, 1.0
  %v4268 = vadd.f32 %v4260, 1.0
  %v4269 = vadd.f32 %v4262, 1.0
  %v4270 = vrcp.pop %v4263
  %v4271 = vmul.f32 1.0, %v4270
  %v4272 = vrcp.pop %v4264
  %v4273 = vmul.f32 1.0, %v4272
  %v4274 = vrcp.pop %v4265
  %v4275 = vmul.f32 1.0, %v4274
  %v4276 = vrcp.pop %v4266
  %v4277 = vmul.f32 1.0, %v4276
  %v4278 = vrcp.pop %v4267
  %v4279 = vmul.f32 1.0, %v4278
  %v4280 = vrcp.pop %v4268
  %v4281 = vmul.f32 1.0, %v4280
  %v4282 = vrcp.pop %v4269
  %v4283 = vmul.f32 1.0, %v4282
  %v4284 = vmul.f32 %v4235, %v4271
  %v4285 = vmul.f32 %v4236, %v4273
  %v4286 = vmul.f32 %v4237, %v4275
  %v4287 = vmul.f32 %v4238, %v4277
  %v4288 = vmul.f32 %v4239, %v4279
  %v4289 = vmul.f32 %v4240, %v4281
  %v4290 = vmul.f32 %v4241, %v4283
  %s4291 = scalar_lea.vmem %s37, 64
  %v4292 = vld [vmem:[%s4291] sm:$0xff]
  %v4293 = vld [vmem:[%s4291 + $0x8] sm:$0xff]
  %v4294 = vld [vmem:[%s4291 + $0x10] sm:$0xff]
  %v4295 = vld [vmem:[%s4291 + $0x18] sm:$0x3]
  %s4296 = scalar_lea.vmem %s39, 2
  %v4297 = vld [vmem:[%s4296] sm:$0x1]
  %v4299 = vlaneseq
  %v4300 = vshrl.u32 %v4299, 7
  %v4301 = vsub.s32 0, %v4300
  %v4302 = vrot.slane %v4297, %v4301
  %v4305 = vsel %vm162, %v4284, 0
  %v4308 = vsel %vm162, %v4285, 0
  %v4311 = vsel %vm162, %v4286, 0
  %v4314 = vsel %vm162, %v4287, 0
  %v4317 = vsel %vm162, %v4288, 0
  %v4320 = vsel %vm162, %v4289, 0
  %v4323 = vsel %vm162, %v4290, 0
  %v4326 = vsel %vm166, %v4295, 0
  %4328 = vmatprep.subr.mxu0 0.0
  %4329 = vmatpush1.msra.mxu0 0.0
  %4330 = vmatprep.subr.mxu0 0.0
  %4331 = vmatpush1.msra.mxu0 0.0
  %4332 = vmatprep.subr.mxu0 0.0
  %4333 = vmatpush1.msra.mxu0 0.0
  %4334 = vmatprep.subr.mxu0 0.0
  %4335 = vmatpush1.msra.mxu0 0.0
  %4336 = vmatprep.subr.mxu0 0.0
  %4337 = vmatpush1.msra.mxu0 0.0
  %4338 = vmatprep.subr.mxu0 0.0
  %4339 = vmatpush1.msra.mxu0 0.0
  %4340 = vmatprep.subr.mxu0 0.0
  %4341 = vmatpush1.msra.mxu0 0.0
  %4342 = vmatprep.subr.mxu0 0.0
  %4343 = vmatpush1.msra.mxu0 0.0
  %4344 = vmatprep.subr.mxu0 0.0
  %4345 = vmatpush1.msra.mxu0 0.0
  %4346 = vmatprep.subr.mxu0 0.0
  %4347 = vmatpush1.msra.mxu0 0.0
  %4348 = vmatprep.subr.mxu0 0.0
  %4349 = vmatpush1.msra.mxu0 0.0
  %4350 = vmatprep.subr.mxu0 0.0
  %4351 = vmatpush1.msra.mxu0 0.0
  %4352 = vmatprep.subr.mxu0 0.0
  %4353 = vmatpush1.msra.mxu0 %v4326
  %4354 = vmatprep.subr.mxu0 0.0
  %4355 = vmatpush1.msra.mxu0 %v4294
  %4356 = vmatprep.subr.mxu0 0.0
  %4357 = vmatpush1.msra.mxu0 %v4293
  %4358 = vmatprep.subr.mxu0 0.0
  %4359 = vmatpush1.msra.mxu0 %v4292
  %4360 = vmatprep.subr.mxu0 0.0
  %4361 = vmatpush2.msra.mxu0 0.0
  %4362 = vmatprep.subr.mxu0 0.0
  %4363 = vmatpush2.msra.mxu0 0.0
  %4364 = vmatprep.subr.mxu0 0.0
  %4365 = vmatpush2.msra.mxu0 0.0
  %4366 = vmatprep.subr.mxu0 0.0
  %4367 = vmatpush2.msra.mxu0 0.0
  %4368 = vmatprep.subr.mxu0 0.0
  %4369 = vmatpush2.msra.mxu0 0.0
  %4370 = vmatprep.subr.mxu0 0.0
  %4371 = vmatpush2.msra.mxu0 0.0
  %4372 = vmatprep.subr.mxu0 0.0
  %4373 = vmatpush2.msra.mxu0 0.0
  %4374 = vmatprep.subr.mxu0 0.0
  %4375 = vmatpush2.msra.mxu0 0.0
  %4376 = vmatprep.subr.mxu0 0.0
  %4377 = vmatpush2.msra.mxu0 0.0
  %4378 = vmatprep.subr.mxu0 0.0
  %4379 = vmatpush2.msra.mxu0 0.0
  %4380 = vmatprep.subr.mxu0 0.0
  %4381 = vmatpush2.msra.mxu0 0.0
  %4382 = vmatprep.subr.mxu0 0.0
  %4383 = vmatpush2.msra.mxu0 0.0
  %4384 = vmatprep.subr.mxu0 0.0
  %4385 = vmatpush2.msra.mxu0 0.0
  %4386 = vmatprep.subr.mxu0 0.0
  %4387 = vmatpush2.msra.mxu0 0.0
  %4388 = vmatprep.subr.mxu0 0.0
  %4389 = vmatpush2.msra.mxu0 0.0
  %4390 = vmatprep.subr.mxu0 0.0
  %4391 = vmatpush2.msra.mxu0 0.0
  %4392 = vmatprep.mubr.f32.mxu0 0.0
  %4393 = vmatmul.mubr.f32.gmra.mxu0 %v4305
  %v4394 = vpop.f32.mrf.mxu0
  %v4395 = vadd.f32 %v4302, %v4394
  %v4396 = vpop.f32.mrf.mxu0
  %4397 = vmatprep.mubr.f32.mxu0 0.0
  %4398 = vmatmul.mubr.f32.gmra.mxu0 %v4308
  %v4399 = vpop.f32.mrf.mxu0
  %v4400 = vadd.f32 %v4302, %v4399
  %v4401 = vpop.f32.mrf.mxu0
  %4402 = vmatprep.mubr.f32.mxu0 0.0
  %4403 = vmatmul.mubr.f32.gmra.mxu0 %v4311
  %v4404 = vpop.f32.mrf.mxu0
  %v4405 = vadd.f32 %v4302, %v4404
  %v4406 = vpop.f32.mrf.mxu0
  %4407 = vmatprep.mubr.f32.mxu0 0.0
  %4408 = vmatmul.mubr.f32.gmra.mxu0 %v4314
  %v4409 = vpop.f32.mrf.mxu0
  %v4410 = vadd.f32 %v4302, %v4409
  %v4411 = vpop.f32.mrf.mxu0
  %4412 = vmatprep.mubr.f32.mxu0 0.0
  %4413 = vmatmul.mubr.f32.gmra.mxu0 %v4317
  %v4414 = vpop.f32.mrf.mxu0
  %v4415 = vadd.f32 %v4302, %v4414
  %v4416 = vpop.f32.mrf.mxu0
  %4417 = vmatprep.mubr.f32.mxu0 0.0
  %4418 = vmatmul.mubr.f32.gmra.mxu0 %v4320
  %v4419 = vpop.f32.mrf.mxu0
  %v4420 = vadd.f32 %v4302, %v4419
  %v4421 = vpop.f32.mrf.mxu0
  %4422 = vmatprep.mubr.f32.mxu0 0.0
  %4423 = vmatmul.mubr.f32.gmra.mxu0 %v4323
  %v4424 = vpop.f32.mrf.mxu0
  %v4425 = vadd.f32 %v4302, %v4424
  %v4426 = vpop.f32.mrf.mxu0
  %4427 = vdwg.mxu0
  %v4428 = vxor.u32 %v4395, 2147483648
  %v4429 = vxor.u32 %v4400, 2147483648
  %v4430 = vxor.u32 %v4405, 2147483648
  %v4431 = vxor.u32 %v4410, 2147483648
  %v4432 = vxor.u32 %v4415, 2147483648
  %v4433 = vxor.u32 %v4420, 2147483648
  %v4434 = vxor.u32 %v4425, 2147483648
  %v4435 = vmul.f32 %v4428, 1.442695
  %v4436 = vpow.pop %v4435
  %v4437 = vmul.f32 %v4429, 1.442695
  %v4438 = vpow.pop %v4437
  %v4439 = vmul.f32 %v4430, 1.442695
  %v4440 = vpow.pop %v4439
  %v4441 = vmul.f32 %v4431, 1.442695
  %v4442 = vpow.pop %v4441
  %v4443 = vmul.f32 %v4432, 1.442695
  %v4444 = vpow.pop %v4443
  %v4445 = vmul.f32 %v4433, 1.442695
  %v4446 = vpow.pop %v4445
  %v4447 = vmul.f32 %v4434, 1.442695
  %v4448 = vpow.pop %v4447
  %v4449 = vadd.f32 %v4436, 1.0
  %v4450 = vadd.f32 %v4438, 1.0
  %v4451 = vadd.f32 %v4440, 1.0
  %v4452 = vadd.f32 %v4442, 1.0
  %v4453 = vadd.f32 %v4444, 1.0
  %v4454 = vadd.f32 %v4446, 1.0
  %v4455 = vadd.f32 %v4448, 1.0
  %v4456 = vrcp.pop %v4449
  %v4457 = vmul.f32 1.0, %v4456
  %v4458 = vrcp.pop %v4450
  %v4459 = vmul.f32 1.0, %v4458
  %v4460 = vrcp.pop %v4451
  %v4461 = vmul.f32 1.0, %v4460
  %v4462 = vrcp.pop %v4452
  %v4463 = vmul.f32 1.0, %v4462
  %v4464 = vrcp.pop %v4453
  %v4465 = vmul.f32 1.0, %v4464
  %v4466 = vrcp.pop %v4454
  %v4467 = vmul.f32 1.0, %v4466
  %v4468 = vrcp.pop %v4455
  %v4469 = vmul.f32 1.0, %v4468
  %v4470 = vmul.f32 %v4395, %v4457
  %v4471 = vmul.f32 %v4400, %v4459
  %v4472 = vmul.f32 %v4405, %v4461
  %v4473 = vmul.f32 %v4410, %v4463
  %v4474 = vmul.f32 %v4415, %v4465
  %v4475 = vmul.f32 %v4420, %v4467
  %v4476 = vmul.f32 %v4425, %v4469
  %s4477 = scalar_lea.vmem %s41, 2
  %v4478 = vld [vmem:[%s4477] sm:$0x1]
  %v4480 = vlaneseq
  %v4481 = vshrl.u32 %v4480, 7
  %v4482 = vsub.s32 0, %v4481
  %v4483 = vrot.slane %v4478, %v4482
  %v4485 = vmul.f32 %v4470, %v4483
  %v4486 = vmul.f32 %v4471, %v4483
  %v4487 = vmul.f32 %v4472, %v4483
  %v4488 = vmul.f32 %v4473, %v4483
  %v4489 = vmul.f32 %v4474, %v4483
  %v4490 = vmul.f32 %v4475, %v4483
  %v4491 = vmul.f32 %v4476, %v4483
  %v4492 = vsel %vm162, %v4485, 0.0
  %4493 = vadd.xlane.f32.xlu0 %v4492
  %v4494 = vpop.xlane.xlu0 %4493
  %v4495 = vsel %vm162, %v4486, 0.0
  %4496 = vadd.xlane.f32.xlu0 %v4495
  %v4497 = vpop.xlane.xlu0 %4496
  %v4498 = vsel %vm162, %v4487, 0.0
  %4499 = vadd.xlane.f32.xlu0 %v4498
  %v4500 = vpop.xlane.xlu0 %4499
  %v4501 = vsel %vm162, %v4488, 0.0
  %4502 = vadd.xlane.f32.xlu0 %v4501
  %v4503 = vpop.xlane.xlu0 %4502
  %v4504 = vsel %vm162, %v4489, 0.0
  %4505 = vadd.xlane.f32.xlu0 %v4504
  %v4506 = vpop.xlane.xlu0 %4505
  %v4507 = vsel %vm162, %v4490, 0.0
  %4508 = vadd.xlane.f32.xlu0 %v4507
  %v4509 = vpop.xlane.xlu0 %4508
  %v4510 = vsel %vm162, %v4491, 0.0
  %4511 = vadd.xlane.f32.xlu0 %v4510
  %v4512 = vpop.xlane.xlu0 %4511
  %s4513 = scalar_lea.vmem %s43, 2
  %v4514 = vld [vmem:[%s4513] sm:$0x1]
  %v4516 = vlaneseq
  %v4517 = vshrl.u32 %v4516, 7
  %v4518 = vsub.s32 0, %v4517
  %v4519 = vrot.slane %v4514, %v4518
  %v4521 = vadd.f32 %v4494, %v4519
  %v4522 = vadd.f32 %v4497, %v4519
  %v4523 = vadd.f32 %v4500, %v4519
  %v4524 = vadd.f32 %v4503, %v4519
  %v4525 = vadd.f32 %v4506, %v4519
  %v4526 = vadd.f32 %v4509, %v4519
  %v4527 = vadd.f32 %v4512, %v4519
  %v4528 = vxor.u32 %v4521, 2147483648
  %v4529 = vxor.u32 %v4522, 2147483648
  %v4530 = vxor.u32 %v4523, 2147483648
  %v4531 = vxor.u32 %v4524, 2147483648
  %v4532 = vxor.u32 %v4525, 2147483648
  %v4533 = vxor.u32 %v4526, 2147483648
  %v4534 = vxor.u32 %v4527, 2147483648
  %v4535 = vmul.f32 %v4528, 1.442695
  %v4536 = vpow.pop %v4535
  %v4537 = vmul.f32 %v4529, 1.442695
  %v4538 = vpow.pop %v4537
  %v4539 = vmul.f32 %v4530, 1.442695
  %v4540 = vpow.pop %v4539
  %v4541 = vmul.f32 %v4531, 1.442695
  %v4542 = vpow.pop %v4541
  %v4543 = vmul.f32 %v4532, 1.442695
  %v4544 = vpow.pop %v4543
  %v4545 = vmul.f32 %v4533, 1.442695
  %v4546 = vpow.pop %v4545
  %v4547 = vmul.f32 %v4534, 1.442695
  %v4548 = vpow.pop %v4547
  %v4549 = vadd.f32 %v4536, 1.0
  %v4550 = vadd.f32 %v4538, 1.0
  %v4551 = vadd.f32 %v4540, 1.0
  %v4552 = vadd.f32 %v4542, 1.0
  %v4553 = vadd.f32 %v4544, 1.0
  %v4554 = vadd.f32 %v4546, 1.0
  %v4555 = vadd.f32 %v4548, 1.0
  %v4556 = vrcp.pop %v4549
  %v4557 = vmul.f32 1.0, %v4556
  %v4558 = vrcp.pop %v4550
  %v4559 = vmul.f32 1.0, %v4558
  %v4560 = vrcp.pop %v4551
  %v4561 = vmul.f32 1.0, %v4560
  %v4562 = vrcp.pop %v4552
  %v4563 = vmul.f32 1.0, %v4562
  %v4564 = vrcp.pop %v4553
  %v4565 = vmul.f32 1.0, %v4564
  %v4566 = vrcp.pop %v4554
  %v4567 = vmul.f32 1.0, %v4566
  %v4568 = vrcp.pop %v4555
  %v4569 = vmul.f32 1.0, %v4568
  %4571 = vset.pattern.permute.xlu0 0
  %4572 = vperm.xlu0 %4571, %v4557
  %v4573 = vpop.permute.xlu0 %4572
  %4576 = vset.pattern.permute.xlu0 0
  %4577 = vperm.xlu0 %4576, %v4559
  %v4578 = vpop.permute.xlu0 %4577
  %4581 = vset.pattern.permute.xlu0 0
  %4582 = vperm.xlu0 %4581, %v4561
  %v4583 = vpop.permute.xlu0 %4582
  %4586 = vset.pattern.permute.xlu0 0
  %4587 = vperm.xlu0 %4586, %v4563
  %v4588 = vpop.permute.xlu0 %4587
  %4591 = vset.pattern.permute.xlu0 0
  %4592 = vperm.xlu0 %4591, %v4565
  %v4593 = vpop.permute.xlu0 %4592
  %4596 = vset.pattern.permute.xlu0 0
  %4597 = vperm.xlu0 %4596, %v4567
  %v4598 = vpop.permute.xlu0 %4597
  %4601 = vset.pattern.permute.xlu0 0
  %4602 = vperm.xlu0 %4601, %v4569
  %v4603 = vpop.permute.xlu0 %4602
  %v4605 = vmul.f32 %v4470, %v4573
  %v4606 = vmul.f32 %v4471, %v4578
  %v4607 = vmul.f32 %v4472, %v4583
  %v4608 = vmul.f32 %v4473, %v4588
  %v4609 = vmul.f32 %v4474, %v4593
  %v4610 = vmul.f32 %v4475, %v4598
  %v4611 = vmul.f32 %v4476, %v4603
  %s4612 = scalar_lea.vmem %s45, 64
  %v4613 = vld [vmem:[%s4612] sm:$0xff]
  %v4614 = vld [vmem:[%s4612 + $0x8] sm:$0xff]
  %v4615 = vld [vmem:[%s4612 + $0x10] sm:$0xff]
  %v4616 = vld [vmem:[%s4612 + $0x18] sm:$0x3]
  %s4617 = scalar_lea.vmem %s47, 2
  %v4618 = vld [vmem:[%s4617] sm:$0x1]
  %v4620 = vlaneseq
  %v4621 = vshrl.u32 %v4620, 7
  %v4622 = vsub.s32 0, %v4621
  %v4623 = vrot.slane %v4618, %v4622
  %v4626 = vsel %vm162, %v4605, 0
  %v4629 = vsel %vm162, %v4606, 0
  %v4632 = vsel %vm162, %v4607, 0
  %v4635 = vsel %vm162, %v4608, 0
  %v4638 = vsel %vm162, %v4609, 0
  %v4641 = vsel %vm162, %v4610, 0
  %v4644 = vsel %vm162, %v4611, 0
  %v4647 = vsel %vm166, %v4616, 0
  %4649 = vmatprep.subr.mxu0 0.0
  %4650 = vmatpush1.msra.mxu0 0.0
  %4651 = vmatprep.subr.mxu0 0.0
  %4652 = vmatpush1.msra.mxu0 0.0
  %4653 = vmatprep.subr.mxu0 0.0
  %4654 = vmatpush1.msra.mxu0 0.0
  %4655 = vmatprep.subr.mxu0 0.0
  %4656 = vmatpush1.msra.mxu0 0.0
  %4657 = vmatprep.subr.mxu0 0.0
  %4658 = vmatpush1.msra.mxu0 0.0
  %4659 = vmatprep.subr.mxu0 0.0
  %4660 = vmatpush1.msra.mxu0 0.0
  %4661 = vmatprep.subr.mxu0 0.0
  %4662 = vmatpush1.msra.mxu0 0.0
  %4663 = vmatprep.subr.mxu0 0.0
  %4664 = vmatpush1.msra.mxu0 0.0
  %4665 = vmatprep.subr.mxu0 0.0
  %4666 = vmatpush1.msra.mxu0 0.0
  %4667 = vmatprep.subr.mxu0 0.0
  %4668 = vmatpush1.msra.mxu0 0.0
  %4669 = vmatprep.subr.mxu0 0.0
  %4670 = vmatpush1.msra.mxu0 0.0
  %4671 = vmatprep.subr.mxu0 0.0
  %4672 = vmatpush1.msra.mxu0 0.0
  %4673 = vmatprep.subr.mxu0 0.0
  %4674 = vmatpush1.msra.mxu0 %v4647
  %4675 = vmatprep.subr.mxu0 0.0
  %4676 = vmatpush1.msra.mxu0 %v4615
  %4677 = vmatprep.subr.mxu0 0.0
  %4678 = vmatpush1.msra.mxu0 %v4614
  %4679 = vmatprep.subr.mxu0 0.0
  %4680 = vmatpush1.msra.mxu0 %v4613
  %4681 = vmatprep.subr.mxu0 0.0
  %4682 = vmatpush2.msra.mxu0 0.0
  %4683 = vmatprep.subr.mxu0 0.0
  %4684 = vmatpush2.msra.mxu0 0.0
  %4685 = vmatprep.subr.mxu0 0.0
  %4686 = vmatpush2.msra.mxu0 0.0
  %4687 = vmatprep.subr.mxu0 0.0
  %4688 = vmatpush2.msra.mxu0 0.0
  %4689 = vmatprep.subr.mxu0 0.0
  %4690 = vmatpush2.msra.mxu0 0.0
  %4691 = vmatprep.subr.mxu0 0.0
  %4692 = vmatpush2.msra.mxu0 0.0
  %4693 = vmatprep.subr.mxu0 0.0
  %4694 = vmatpush2.msra.mxu0 0.0
  %4695 = vmatprep.subr.mxu0 0.0
  %4696 = vmatpush2.msra.mxu0 0.0
  %4697 = vmatprep.subr.mxu0 0.0
  %4698 = vmatpush2.msra.mxu0 0.0
  %4699 = vmatprep.subr.mxu0 0.0
  %4700 = vmatpush2.msra.mxu0 0.0
  %4701 = vmatprep.subr.mxu0 0.0
  %4702 = vmatpush2.msra.mxu0 0.0
  %4703 = vmatprep.subr.mxu0 0.0
  %4704 = vmatpush2.msra.mxu0 0.0
  %4705 = vmatprep.subr.mxu0 0.0
  %4706 = vmatpush2.msra.mxu0 0.0
  %4707 = vmatprep.subr.mxu0 0.0
  %4708 = vmatpush2.msra.mxu0 0.0
  %4709 = vmatprep.subr.mxu0 0.0
  %4710 = vmatpush2.msra.mxu0 0.0
  %4711 = vmatprep.subr.mxu0 0.0
  %4712 = vmatpush2.msra.mxu0 0.0
  %4713 = vmatprep.mubr.f32.mxu0 0.0
  %4714 = vmatmul.mubr.f32.gmra.mxu0 %v4626
  %v4715 = vpop.f32.mrf.mxu0
  %v4716 = vadd.f32 %v4623, %v4715
  %v4717 = vpop.f32.mrf.mxu0
  %4718 = vmatprep.mubr.f32.mxu0 0.0
  %4719 = vmatmul.mubr.f32.gmra.mxu0 %v4629
  %v4720 = vpop.f32.mrf.mxu0
  %v4721 = vadd.f32 %v4623, %v4720
  %v4722 = vpop.f32.mrf.mxu0
  %4723 = vmatprep.mubr.f32.mxu0 0.0
  %4724 = vmatmul.mubr.f32.gmra.mxu0 %v4632
  %v4725 = vpop.f32.mrf.mxu0
  %v4726 = vadd.f32 %v4623, %v4725
  %v4727 = vpop.f32.mrf.mxu0
  %4728 = vmatprep.mubr.f32.mxu0 0.0
  %4729 = vmatmul.mubr.f32.gmra.mxu0 %v4635
  %v4730 = vpop.f32.mrf.mxu0
  %v4731 = vadd.f32 %v4623, %v4730
  %v4732 = vpop.f32.mrf.mxu0
  %4733 = vmatprep.mubr.f32.mxu0 0.0
  %4734 = vmatmul.mubr.f32.gmra.mxu0 %v4638
  %v4735 = vpop.f32.mrf.mxu0
  %v4736 = vadd.f32 %v4623, %v4735
  %v4737 = vpop.f32.mrf.mxu0
  %4738 = vmatprep.mubr.f32.mxu0 0.0
  %4739 = vmatmul.mubr.f32.gmra.mxu0 %v4641
  %v4740 = vpop.f32.mrf.mxu0
  %v4741 = vadd.f32 %v4623, %v4740
  %v4742 = vpop.f32.mrf.mxu0
  %4743 = vmatprep.mubr.f32.mxu0 0.0
  %4744 = vmatmul.mubr.f32.gmra.mxu0 %v4644
  %v4745 = vpop.f32.mrf.mxu0
  %v4746 = vadd.f32 %v4623, %v4745
  %v4747 = vpop.f32.mrf.mxu0
  %4748 = vdwg.mxu0
  %v4749 = vxor.u32 %v4716, 2147483648
  %v4750 = vxor.u32 %v4721, 2147483648
  %v4751 = vxor.u32 %v4726, 2147483648
  %v4752 = vxor.u32 %v4731, 2147483648
  %v4753 = vxor.u32 %v4736, 2147483648
  %v4754 = vxor.u32 %v4741, 2147483648
  %v4755 = vxor.u32 %v4746, 2147483648
  %v4756 = vmul.f32 %v4749, 1.442695
  %v4757 = vpow.pop %v4756
  %v4758 = vmul.f32 %v4750, 1.442695
  %v4759 = vpow.pop %v4758
  %v4760 = vmul.f32 %v4751, 1.442695
  %v4761 = vpow.pop %v4760
  %v4762 = vmul.f32 %v4752, 1.442695
  %v4763 = vpow.pop %v4762
  %v4764 = vmul.f32 %v4753, 1.442695
  %v4765 = vpow.pop %v4764
  %v4766 = vmul.f32 %v4754, 1.442695
  %v4767 = vpow.pop %v4766
  %v4768 = vmul.f32 %v4755, 1.442695
  %v4769 = vpow.pop %v4768
  %v4770 = vadd.f32 %v4757, 1.0
  %v4771 = vadd.f32 %v4759, 1.0
  %v4772 = vadd.f32 %v4761, 1.0
  %v4773 = vadd.f32 %v4763, 1.0
  %v4774 = vadd.f32 %v4765, 1.0
  %v4775 = vadd.f32 %v4767, 1.0
  %v4776 = vadd.f32 %v4769, 1.0
  %v4777 = vrcp.pop %v4770
  %v4778 = vmul.f32 1.0, %v4777
  %v4779 = vrcp.pop %v4771
  %v4780 = vmul.f32 1.0, %v4779
  %v4781 = vrcp.pop %v4772
  %v4782 = vmul.f32 1.0, %v4781
  %v4783 = vrcp.pop %v4773
  %v4784 = vmul.f32 1.0, %v4783
  %v4785 = vrcp.pop %v4774
  %v4786 = vmul.f32 1.0, %v4785
  %v4787 = vrcp.pop %v4775
  %v4788 = vmul.f32 1.0, %v4787
  %v4789 = vrcp.pop %v4776
  %v4790 = vmul.f32 1.0, %v4789
  %v4791 = vmul.f32 %v4716, %v4778
  %v4792 = vmul.f32 %v4721, %v4780
  %v4793 = vmul.f32 %v4726, %v4782
  %v4794 = vmul.f32 %v4731, %v4784
  %v4795 = vmul.f32 %v4736, %v4786
  %v4796 = vmul.f32 %v4741, %v4788
  %v4797 = vmul.f32 %v4746, %v4790
  %s4798 = scalar_lea.vmem %s49, 2
  %v4799 = vld [vmem:[%s4798] sm:$0x1]
  %v4801 = vlaneseq
  %v4802 = vshrl.u32 %v4801, 7
  %v4803 = vsub.s32 0, %v4802
  %v4804 = vrot.slane %v4799, %v4803
  %v4806 = vmul.f32 %v4791, %v4804
  %v4807 = vmul.f32 %v4792, %v4804
  %v4808 = vmul.f32 %v4793, %v4804
  %v4809 = vmul.f32 %v4794, %v4804
  %v4810 = vmul.f32 %v4795, %v4804
  %v4811 = vmul.f32 %v4796, %v4804
  %v4812 = vmul.f32 %v4797, %v4804
  %v4813 = vsel %vm162, %v4806, 0.0
  %4814 = vadd.xlane.f32.xlu0 %v4813
  %v4815 = vpop.xlane.xlu0 %4814
  %v4816 = vsel %vm162, %v4807, 0.0
  %4817 = vadd.xlane.f32.xlu0 %v4816
  %v4818 = vpop.xlane.xlu0 %4817
  %v4819 = vsel %vm162, %v4808, 0.0
  %4820 = vadd.xlane.f32.xlu0 %v4819
  %v4821 = vpop.xlane.xlu0 %4820
  %v4822 = vsel %vm162, %v4809, 0.0
  %4823 = vadd.xlane.f32.xlu0 %v4822
  %v4824 = vpop.xlane.xlu0 %4823
  %v4825 = vsel %vm162, %v4810, 0.0
  %4826 = vadd.xlane.f32.xlu0 %v4825
  %v4827 = vpop.xlane.xlu0 %4826
  %v4828 = vsel %vm162, %v4811, 0.0
  %4829 = vadd.xlane.f32.xlu0 %v4828
  %v4830 = vpop.xlane.xlu0 %4829
  %v4831 = vsel %vm162, %v4812, 0.0
  %4832 = vadd.xlane.f32.xlu0 %v4831
  %v4833 = vpop.xlane.xlu0 %4832
  %v4834 = vmul.f32 %v4098, %v4815
  %v4835 = vmul.f32 %v4099, %v4818
  %v4836 = vmul.f32 %v4100, %v4821
  %v4837 = vmul.f32 %v4101, %v4824
  %v4838 = vmul.f32 %v4102, %v4827
  %v4839 = vmul.f32 %v4103, %v4830
  %v4840 = vmul.f32 %v4104, %v4833
  %4841 = vmatprep.subr.mxu0 0.0
  %4842 = vmatpush1.msra.mxu0 0.0
  %4843 = vmatprep.subr.mxu0 0.0
  %4844 = vmatpush1.msra.mxu0 0.0
  %4845 = vmatprep.subr.mxu0 0.0
  %4846 = vmatpush1.msra.mxu0 0.0
  %4847 = vmatprep.subr.mxu0 0.0
  %4848 = vmatpush1.msra.mxu0 0.0
  %4849 = vmatprep.subr.mxu0 0.0
  %4850 = vmatpush1.msra.mxu0 0.0
  %4851 = vmatprep.subr.mxu0 0.0
  %4852 = vmatpush1.msra.mxu0 0.0
  %4853 = vmatprep.subr.mxu0 0.0
  %4854 = vmatpush1.msra.mxu0 0.0
  %4855 = vmatprep.subr.mxu0 0.0
  %4856 = vmatpush1.msra.mxu0 0.0
  %4857 = vmatprep.subr.mxu0 0.0
  %4858 = vmatpush1.msra.mxu0 0.0
  %4859 = vmatprep.subr.mxu0 0.0
  %4860 = vmatpush1.msra.mxu0 %v4840
  %4861 = vmatprep.subr.mxu0 0.0
  %4862 = vmatpush1.msra.mxu0 %v4839
  %4863 = vmatprep.subr.mxu0 0.0
  %4864 = vmatpush1.msra.mxu0 %v4838
  %4865 = vmatprep.subr.mxu0 0.0
  %4866 = vmatpush1.msra.mxu0 %v4837
  %4867 = vmatprep.subr.mxu0 0.0
  %4868 = vmatpush1.msra.mxu0 %v4836
  %4869 = vmatprep.subr.mxu0 0.0
  %4870 = vmatpush1.msra.mxu0 %v4835
  %4871 = vmatprep.subr.mxu0 0.0
  %4872 = vmatpush1.msra.mxu0 %v4834
  %4873 = vmatprep.subr.mxu0 0.0
  %4874 = vmatpush2.msra.mxu0 0.0
  %4875 = vmatprep.subr.mxu0 0.0
  %4876 = vmatpush2.msra.mxu0 0.0
  %4877 = vmatprep.subr.mxu0 0.0
  %4878 = vmatpush2.msra.mxu0 0.0
  %4879 = vmatprep.subr.mxu0 0.0
  %4880 = vmatpush2.msra.mxu0 0.0
  %4881 = vmatprep.subr.mxu0 0.0
  %4882 = vmatpush2.msra.mxu0 0.0
  %4883 = vmatprep.subr.mxu0 0.0
  %4884 = vmatpush2.msra.mxu0 0.0
  %4885 = vmatprep.subr.mxu0 0.0
  %4886 = vmatpush2.msra.mxu0 0.0
  %4887 = vmatprep.subr.mxu0 0.0
  %4888 = vmatpush2.msra.mxu0 0.0
  %4889 = vmatprep.subr.mxu0 0.0
  %4890 = vmatpush2.msra.mxu0 0.0
  %4891 = vmatprep.subr.mxu0 0.0
  %4892 = vmatpush2.msra.mxu0 0.0
  %4893 = vmatprep.subr.mxu0 0.0
  %4894 = vmatpush2.msra.mxu0 0.0
  %4895 = vmatprep.subr.mxu0 0.0
  %4896 = vmatpush2.msra.mxu0 0.0
  %4897 = vmatprep.subr.mxu0 0.0
  %4898 = vmatpush2.msra.mxu0 0.0
  %4899 = vmatprep.subr.mxu0 0.0
  %4900 = vmatpush2.msra.mxu0 0.0
  %4901 = vmatprep.subr.mxu0 0.0
  %4902 = vmatpush2.msra.mxu0 0.0
  %4903 = vmatprep.subr.mxu0 0.0
  %4904 = vmatpush2.msra.mxu0 0.0
  %4905 = vmatprep.mubr.f32.mxu0 0.0
  %4906 = vmatmul.mubr.f32.gmra.mxu0 %v1527
  %v4907 = vpop.f32.mrf.mxu0
  %v4908 = vadd.f32 0.0, %v4907
  %v4909 = vpop.f32.mrf.mxu0
  %4910 = vdwg.mxu0
  %v4911 = vadd.f32 %v3254, %v4908
  %4912 = vmatprep.subr.mxu0 0.0
  %4913 = vmatpush1.msra.mxu0 0.0
  %4914 = vmatprep.subr.mxu0 0.0
  %4915 = vmatpush1.msra.mxu0 0.0
  %4916 = vmatprep.subr.mxu0 0.0
  %4917 = vmatpush1.msra.mxu0 0.0
  %4918 = vmatprep.subr.mxu0 0.0
  %4919 = vmatpush1.msra.mxu0 0.0
  %4920 = vmatprep.subr.mxu0 0.0
  %4921 = vmatpush1.msra.mxu0 0.0
  %4922 = vmatprep.subr.mxu0 0.0
  %4923 = vmatpush1.msra.mxu0 0.0
  %4924 = vmatprep.subr.mxu0 0.0
  %4925 = vmatpush1.msra.mxu0 0.0
  %4926 = vmatprep.subr.mxu0 0.0
  %4927 = vmatpush1.msra.mxu0 0.0
  %4928 = vmatprep.subr.mxu0 0.0
  %4929 = vmatpush1.msra.mxu0 0.0
  %4930 = vmatprep.subr.mxu0 0.0
  %4931 = vmatpush1.msra.mxu0 %v4611
  %4932 = vmatprep.subr.mxu0 0.0
  %4933 = vmatpush1.msra.mxu0 %v4610
  %4934 = vmatprep.subr.mxu0 0.0
  %4935 = vmatpush1.msra.mxu0 %v4609
  %4936 = vmatprep.subr.mxu0 0.0
  %4937 = vmatpush1.msra.mxu0 %v4608
  %4938 = vmatprep.subr.mxu0 0.0
  %4939 = vmatpush1.msra.mxu0 %v4607
  %4940 = vmatprep.subr.mxu0 0.0
  %4941 = vmatpush1.msra.mxu0 %v4606
  %4942 = vmatprep.subr.mxu0 0.0
  %4943 = vmatpush1.msra.mxu0 %v4605
  %4944 = vmatprep.subr.mxu0 0.0
  %4945 = vmatpush2.msra.mxu0 0.0
  %4946 = vmatprep.subr.mxu0 0.0
  %4947 = vmatpush2.msra.mxu0 0.0
  %4948 = vmatprep.subr.mxu0 0.0
  %4949 = vmatpush2.msra.mxu0 0.0
  %4950 = vmatprep.subr.mxu0 0.0
  %4951 = vmatpush2.msra.mxu0 0.0
  %4952 = vmatprep.subr.mxu0 0.0
  %4953 = vmatpush2.msra.mxu0 0.0
  %4954 = vmatprep.subr.mxu0 0.0
  %4955 = vmatpush2.msra.mxu0 0.0
  %4956 = vmatprep.subr.mxu0 0.0
  %4957 = vmatpush2.msra.mxu0 0.0
  %4958 = vmatprep.subr.mxu0 0.0
  %4959 = vmatpush2.msra.mxu0 0.0
  %4960 = vmatprep.subr.mxu0 0.0
  %4961 = vmatpush2.msra.mxu0 0.0
  %4962 = vmatprep.subr.mxu0 0.0
  %4963 = vmatpush2.msra.mxu0 0.0
  %4964 = vmatprep.subr.mxu0 0.0
  %4965 = vmatpush2.msra.mxu0 0.0
  %4966 = vmatprep.subr.mxu0 0.0
  %4967 = vmatpush2.msra.mxu0 0.0
  %4968 = vmatprep.subr.mxu0 0.0
  %4969 = vmatpush2.msra.mxu0 0.0
  %4970 = vmatprep.subr.mxu0 0.0
  %4971 = vmatpush2.msra.mxu0 0.0
  %4972 = vmatprep.subr.mxu0 0.0
  %4973 = vmatpush2.msra.mxu0 0.0
  %4974 = vmatprep.subr.mxu0 0.0
  %4975 = vmatpush2.msra.mxu0 0.0
  %4976 = vmatprep.mubr.f32.mxu0 0.0
  %4977 = vmatmul.mubr.f32.gmra.mxu0 %v1601
  %v4978 = vpop.f32.mrf.mxu0
  %v4979 = vadd.f32 0.0, %v4978
  %v4980 = vpop.f32.mrf.mxu0
  %4981 = vdwg.mxu0
  %s4982 = scalar_lea.vmem %s51, 64
  %v4983 = vld [vmem:[%s4982] sm:$0xff]
  %v4984 = vld [vmem:[%s4982 + $0x8] sm:$0xff]
  %v4985 = vld [vmem:[%s4982 + $0x10] sm:$0xff]
  %v4986 = vld [vmem:[%s4982 + $0x18] sm:$0x3]
  %s4987 = scalar_lea.vmem %s53, 64
  %v4988 = vld [vmem:[%s4987] sm:$0xff]
  %v4989 = vld [vmem:[%s4987 + $0x8] sm:$0xff]
  %v4990 = vld [vmem:[%s4987 + $0x10] sm:$0xff]
  %v4991 = vld [vmem:[%s4987 + $0x18] sm:$0x3]
  %v4993 = vsel %vm162, %v4979, 0
  %v4996 = vsel %vm166, %v4991, 0
  %4998 = vmatprep.subr.mxu0 0.0
  %4999 = vmatpush1.msra.mxu0 0.0
  %5000 = vmatprep.subr.mxu0 0.0
  %5001 = vmatpush1.msra.mxu0 0.0
  %5002 = vmatprep.subr.mxu0 0.0
  %5003 = vmatpush1.msra.mxu0 0.0
  %5004 = vmatprep.subr.mxu0 0.0
  %5005 = vmatpush1.msra.mxu0 0.0
  %5006 = vmatprep.subr.mxu0 0.0
  %5007 = vmatpush1.msra.mxu0 0.0
  %5008 = vmatprep.subr.mxu0 0.0
  %5009 = vmatpush1.msra.mxu0 0.0
  %5010 = vmatprep.subr.mxu0 0.0
  %5011 = vmatpush1.msra.mxu0 0.0
  %5012 = vmatprep.subr.mxu0 0.0
  %5013 = vmatpush1.msra.mxu0 0.0
  %5014 = vmatprep.subr.mxu0 0.0
  %5015 = vmatpush1.msra.mxu0 0.0
  %5016 = vmatprep.subr.mxu0 0.0
  %5017 = vmatpush1.msra.mxu0 0.0
  %5018 = vmatprep.subr.mxu0 0.0
  %5019 = vmatpush1.msra.mxu0 0.0
  %5020 = vmatprep.subr.mxu0 0.0
  %5021 = vmatpush1.msra.mxu0 0.0
  %5022 = vmatprep.subr.mxu0 0.0
  %5023 = vmatpush1.msra.mxu0 %v4996
  %5024 = vmatprep.subr.mxu0 0.0
  %5025 = vmatpush1.msra.mxu0 %v4990
  %5026 = vmatprep.subr.mxu0 0.0
  %5027 = vmatpush1.msra.mxu0 %v4989
  %5028 = vmatprep.subr.mxu0 0.0
  %5029 = vmatpush1.msra.mxu0 %v4988
  %5030 = vmatprep.subr.mxu0 0.0
  %5031 = vmatpush2.msra.mxu0 0.0
  %5032 = vmatprep.subr.mxu0 0.0
  %5033 = vmatpush2.msra.mxu0 0.0
  %5034 = vmatprep.subr.mxu0 0.0
  %5035 = vmatpush2.msra.mxu0 0.0
  %5036 = vmatprep.subr.mxu0 0.0
  %5037 = vmatpush2.msra.mxu0 0.0
  %5038 = vmatprep.subr.mxu0 0.0
  %5039 = vmatpush2.msra.mxu0 0.0
  %5040 = vmatprep.subr.mxu0 0.0
  %5041 = vmatpush2.msra.mxu0 0.0
  %5042 = vmatprep.subr.mxu0 0.0
  %5043 = vmatpush2.msra.mxu0 0.0
  %5044 = vmatprep.subr.mxu0 0.0
  %5045 = vmatpush2.msra.mxu0 0.0
  %5046 = vmatprep.subr.mxu0 0.0
  %5047 = vmatpush2.msra.mxu0 0.0
  %5048 = vmatprep.subr.mxu0 0.0
  %5049 = vmatpush2.msra.mxu0 0.0
  %5050 = vmatprep.subr.mxu0 0.0
  %5051 = vmatpush2.msra.mxu0 0.0
  %5052 = vmatprep.subr.mxu0 0.0
  %5053 = vmatpush2.msra.mxu0 0.0
  %5054 = vmatprep.subr.mxu0 0.0
  %5055 = vmatpush2.msra.mxu0 0.0
  %5056 = vmatprep.subr.mxu0 0.0
  %5057 = vmatpush2.msra.mxu0 0.0
  %5058 = vmatprep.subr.mxu0 0.0
  %5059 = vmatpush2.msra.mxu0 0.0
  %5060 = vmatprep.subr.mxu0 0.0
  %5061 = vmatpush2.msra.mxu0 0.0
  %5062 = vmatprep.mubr.f32.mxu0 0.0
  %5063 = vmatmul.mubr.f32.gmra.mxu0 %v4993
  %v5064 = vpop.f32.mrf.mxu0
  %v5065 = vadd.f32 0.0, %v5064
  %v5066 = vpop.f32.mrf.mxu0
  %5067 = vdwg.mxu0
  %v5069 = vsel %vm166, %v4986, 0
  %5071 = vmatprep.subr.mxu0 0.0
  %5072 = vmatpush1.msra.mxu0 0.0
  %5073 = vmatprep.subr.mxu0 0.0
  %5074 = vmatpush1.msra.mxu0 0.0
  %5075 = vmatprep.subr.mxu0 0.0
  %5076 = vmatpush1.msra.mxu0 0.0
  %5077 = vmatprep.subr.mxu0 0.0
  %5078 = vmatpush1.msra.mxu0 0.0
  %5079 = vmatprep.subr.mxu0 0.0
  %5080 = vmatpush1.msra.mxu0 0.0
  %5081 = vmatprep.subr.mxu0 0.0
  %5082 = vmatpush1.msra.mxu0 0.0
  %5083 = vmatprep.subr.mxu0 0.0
  %5084 = vmatpush1.msra.mxu0 0.0
  %5085 = vmatprep.subr.mxu0 0.0
  %5086 = vmatpush1.msra.mxu0 0.0
  %5087 = vmatprep.subr.mxu0 0.0
  %5088 = vmatpush1.msra.mxu0 0.0
  %5089 = vmatprep.subr.mxu0 0.0
  %5090 = vmatpush1.msra.mxu0 0.0
  %5091 = vmatprep.subr.mxu0 0.0
  %5092 = vmatpush1.msra.mxu0 0.0
  %5093 = vmatprep.subr.mxu0 0.0
  %5094 = vmatpush1.msra.mxu0 0.0
  %5095 = vmatprep.subr.mxu0 0.0
  %5096 = vmatpush1.msra.mxu0 %v5069
  %5097 = vmatprep.subr.mxu0 0.0
  %5098 = vmatpush1.msra.mxu0 %v4985
  %5099 = vmatprep.subr.mxu0 0.0
  %5100 = vmatpush1.msra.mxu0 %v4984
  %5101 = vmatprep.subr.mxu0 0.0
  %5102 = vmatpush1.msra.mxu0 %v4983
  %5103 = vmatprep.subr.mxu0 0.0
  %5104 = vmatpush2.msra.mxu0 0.0
  %5105 = vmatprep.subr.mxu0 0.0
  %5106 = vmatpush2.msra.mxu0 0.0
  %5107 = vmatprep.subr.mxu0 0.0
  %5108 = vmatpush2.msra.mxu0 0.0
  %5109 = vmatprep.subr.mxu0 0.0
  %5110 = vmatpush2.msra.mxu0 0.0
  %5111 = vmatprep.subr.mxu0 0.0
  %5112 = vmatpush2.msra.mxu0 0.0
  %5113 = vmatprep.subr.mxu0 0.0
  %5114 = vmatpush2.msra.mxu0 0.0
  %5115 = vmatprep.subr.mxu0 0.0
  %5116 = vmatpush2.msra.mxu0 0.0
  %5117 = vmatprep.subr.mxu0 0.0
  %5118 = vmatpush2.msra.mxu0 0.0
  %5119 = vmatprep.subr.mxu0 0.0
  %5120 = vmatpush2.msra.mxu0 0.0
  %5121 = vmatprep.subr.mxu0 0.0
  %5122 = vmatpush2.msra.mxu0 0.0
  %5123 = vmatprep.subr.mxu0 0.0
  %5124 = vmatpush2.msra.mxu0 0.0
  %5125 = vmatprep.subr.mxu0 0.0
  %5126 = vmatpush2.msra.mxu0 0.0
  %5127 = vmatprep.subr.mxu0 0.0
  %5128 = vmatpush2.msra.mxu0 0.0
  %5129 = vmatprep.subr.mxu0 0.0
  %5130 = vmatpush2.msra.mxu0 0.0
  %5131 = vmatprep.subr.mxu0 0.0
  %5132 = vmatpush2.msra.mxu0 0.0
  %5133 = vmatprep.subr.mxu0 0.0
  %5134 = vmatpush2.msra.mxu0 0.0
  %5135 = vmatprep.mubr.f32.mxu0 0.0
  %5136 = vmatmul.mubr.f32.gmra.mxu0 %v3596
  %v5137 = vpop.f32.mrf.mxu0
  %v5138 = vadd.f32 %v5065, %v5137
  %v5139 = vpop.f32.mrf.mxu0
  %5140 = vdwg.mxu0
  %s5141 = scalar_lea.vmem %s55, 2
  %v5142 = vld [vmem:[%s5141] sm:$0x1]
  %v5144 = vlaneseq
  %v5145 = vshrl.u32 %v5144, 7
  %v5146 = vsub.s32 0, %v5145
  %v5147 = vrot.slane %v5142, %v5146
  %v5149 = vadd.f32 %v5138, %v5147
  %v5150 = vxor.u32 %v5149, 2147483648
  %v5151 = vmul.f32 %v5150, 1.442695
  %v5152 = vpow.pop %v5151
  %v5153 = vadd.f32 %v5152, 1.0
  %v5154 = vrcp.pop %v5153
  %v5155 = vmul.f32 1.0, %v5154
  %v5156 = vmul.f32 %v5149, %v5155
  %s5157 = scalar_lea.vmem %s57, 64
  %v5158 = vld [vmem:[%s5157] sm:$0xff]
  %v5159 = vld [vmem:[%s5157 + $0x8] sm:$0xff]
  %v5160 = vld [vmem:[%s5157 + $0x10] sm:$0xff]
  %v5161 = vld [vmem:[%s5157 + $0x18] sm:$0x3]
  %s5162 = scalar_lea.vmem %s59, 2
  %v5163 = vld [vmem:[%s5162] sm:$0x1]
  %v5165 = vlaneseq
  %v5166 = vshrl.u32 %v5165, 7
  %v5167 = vsub.s32 0, %v5166
  %v5168 = vrot.slane %v5163, %v5167
  %v5171 = vsel %vm162, %v5156, 0
  %v5174 = vsel %vm166, %v5161, 0
  %5176 = vmatprep.subr.mxu0 0.0
  %5177 = vmatpush1.msra.mxu0 0.0
  %5178 = vmatprep.subr.mxu0 0.0
  %5179 = vmatpush1.msra.mxu0 0.0
  %5180 = vmatprep.subr.mxu0 0.0
  %5181 = vmatpush1.msra.mxu0 0.0
  %5182 = vmatprep.subr.mxu0 0.0
  %5183 = vmatpush1.msra.mxu0 0.0
  %5184 = vmatprep.subr.mxu0 0.0
  %5185 = vmatpush1.msra.mxu0 0.0
  %5186 = vmatprep.subr.mxu0 0.0
  %5187 = vmatpush1.msra.mxu0 0.0
  %5188 = vmatprep.subr.mxu0 0.0
  %5189 = vmatpush1.msra.mxu0 0.0
  %5190 = vmatprep.subr.mxu0 0.0
  %5191 = vmatpush1.msra.mxu0 0.0
  %5192 = vmatprep.subr.mxu0 0.0
  %5193 = vmatpush1.msra.mxu0 0.0
  %5194 = vmatprep.subr.mxu0 0.0
  %5195 = vmatpush1.msra.mxu0 0.0
  %5196 = vmatprep.subr.mxu0 0.0
  %5197 = vmatpush1.msra.mxu0 0.0
  %5198 = vmatprep.subr.mxu0 0.0
  %5199 = vmatpush1.msra.mxu0 0.0
  %5200 = vmatprep.subr.mxu0 0.0
  %5201 = vmatpush1.msra.mxu0 %v5174
  %5202 = vmatprep.subr.mxu0 0.0
  %5203 = vmatpush1.msra.mxu0 %v5160
  %5204 = vmatprep.subr.mxu0 0.0
  %5205 = vmatpush1.msra.mxu0 %v5159
  %5206 = vmatprep.subr.mxu0 0.0
  %5207 = vmatpush1.msra.mxu0 %v5158
  %5208 = vmatprep.subr.mxu0 0.0
  %5209 = vmatpush2.msra.mxu0 0.0
  %5210 = vmatprep.subr.mxu0 0.0
  %5211 = vmatpush2.msra.mxu0 0.0
  %5212 = vmatprep.subr.mxu0 0.0
  %5213 = vmatpush2.msra.mxu0 0.0
  %5214 = vmatprep.subr.mxu0 0.0
  %5215 = vmatpush2.msra.mxu0 0.0
  %5216 = vmatprep.subr.mxu0 0.0
  %5217 = vmatpush2.msra.mxu0 0.0
  %5218 = vmatprep.subr.mxu0 0.0
  %5219 = vmatpush2.msra.mxu0 0.0
  %5220 = vmatprep.subr.mxu0 0.0
  %5221 = vmatpush2.msra.mxu0 0.0
  %5222 = vmatprep.subr.mxu0 0.0
  %5223 = vmatpush2.msra.mxu0 0.0
  %5224 = vmatprep.subr.mxu0 0.0
  %5225 = vmatpush2.msra.mxu0 0.0
  %5226 = vmatprep.subr.mxu0 0.0
  %5227 = vmatpush2.msra.mxu0 0.0
  %5228 = vmatprep.subr.mxu0 0.0
  %5229 = vmatpush2.msra.mxu0 0.0
  %5230 = vmatprep.subr.mxu0 0.0
  %5231 = vmatpush2.msra.mxu0 0.0
  %5232 = vmatprep.subr.mxu0 0.0
  %5233 = vmatpush2.msra.mxu0 0.0
  %5234 = vmatprep.subr.mxu0 0.0
  %5235 = vmatpush2.msra.mxu0 0.0
  %5236 = vmatprep.subr.mxu0 0.0
  %5237 = vmatpush2.msra.mxu0 0.0
  %5238 = vmatprep.subr.mxu0 0.0
  %5239 = vmatpush2.msra.mxu0 0.0
  %5240 = vmatprep.mubr.f32.mxu0 0.0
  %5241 = vmatmul.mubr.f32.gmra.mxu0 %v5171
  %v5242 = vpop.f32.mrf.mxu0
  %v5243 = vadd.f32 %v5168, %v5242
  %v5244 = vpop.f32.mrf.mxu0
  %5245 = vdwg.mxu0
  %v5246 = vadd.f32 %v3589, %v5243
  %s5247 = scalar_lea.vmem %s29, 96
  %v5248 = vld [vmem:[%s5247] sm:$0xff]
  %v5249 = vld [vmem:[%s5247 + $0x8] sm:$0xff]
  %v5250 = vld [vmem:[%s5247 + $0x10] sm:$0xff]
  %v5251 = vld [vmem:[%s5247 + $0x18] sm:$0x3]
  %v5253 = vsel %vm162, %v5246, 0
  %v5256 = vsel %vm166, %v5251, 0
  %5258 = vmatprep.subr.mxu0 0.0
  %5259 = vmatpush1.msra.mxu0 0.0
  %5260 = vmatprep.subr.mxu0 0.0
  %5261 = vmatpush1.msra.mxu0 0.0
  %5262 = vmatprep.subr.mxu0 0.0
  %5263 = vmatpush1.msra.mxu0 0.0
  %5264 = vmatprep.subr.mxu0 0.0
  %5265 = vmatpush1.msra.mxu0 0.0
  %5266 = vmatprep.subr.mxu0 0.0
  %5267 = vmatpush1.msra.mxu0 0.0
  %5268 = vmatprep.subr.mxu0 0.0
  %5269 = vmatpush1.msra.mxu0 0.0
  %5270 = vmatprep.subr.mxu0 0.0
  %5271 = vmatpush1.msra.mxu0 0.0
  %5272 = vmatprep.subr.mxu0 0.0
  %5273 = vmatpush1.msra.mxu0 0.0
  %5274 = vmatprep.subr.mxu0 0.0
  %5275 = vmatpush1.msra.mxu0 0.0
  %5276 = vmatprep.subr.mxu0 0.0
  %5277 = vmatpush1.msra.mxu0 0.0
  %5278 = vmatprep.subr.mxu0 0.0
  %5279 = vmatpush1.msra.mxu0 0.0
  %5280 = vmatprep.subr.mxu0 0.0
  %5281 = vmatpush1.msra.mxu0 0.0
  %5282 = vmatprep.subr.mxu0 0.0
  %5283 = vmatpush1.msra.mxu0 %v5256
  %5284 = vmatprep.subr.mxu0 0.0
  %5285 = vmatpush1.msra.mxu0 %v5250
  %5286 = vmatprep.subr.mxu0 0.0
  %5287 = vmatpush1.msra.mxu0 %v5249
  %5288 = vmatprep.subr.mxu0 0.0
  %5289 = vmatpush1.msra.mxu0 %v5248
  %5290 = vmatprep.subr.mxu0 0.0
  %5291 = vmatpush2.msra.mxu0 0.0
  %5292 = vmatprep.subr.mxu0 0.0
  %5293 = vmatpush2.msra.mxu0 0.0
  %5294 = vmatprep.subr.mxu0 0.0
  %5295 = vmatpush2.msra.mxu0 0.0
  %5296 = vmatprep.subr.mxu0 0.0
  %5297 = vmatpush2.msra.mxu0 0.0
  %5298 = vmatprep.subr.mxu0 0.0
  %5299 = vmatpush2.msra.mxu0 0.0
  %5300 = vmatprep.subr.mxu0 0.0
  %5301 = vmatpush2.msra.mxu0 0.0
  %5302 = vmatprep.subr.mxu0 0.0
  %5303 = vmatpush2.msra.mxu0 0.0
  %5304 = vmatprep.subr.mxu0 0.0
  %5305 = vmatpush2.msra.mxu0 0.0
  %5306 = vmatprep.subr.mxu0 0.0
  %5307 = vmatpush2.msra.mxu0 0.0
  %5308 = vmatprep.subr.mxu0 0.0
  %5309 = vmatpush2.msra.mxu0 0.0
  %5310 = vmatprep.subr.mxu0 0.0
  %5311 = vmatpush2.msra.mxu0 0.0
  %5312 = vmatprep.subr.mxu0 0.0
  %5313 = vmatpush2.msra.mxu0 0.0
  %5314 = vmatprep.subr.mxu0 0.0
  %5315 = vmatpush2.msra.mxu0 0.0
  %5316 = vmatprep.subr.mxu0 0.0
  %5317 = vmatpush2.msra.mxu0 0.0
  %5318 = vmatprep.subr.mxu0 0.0
  %5319 = vmatpush2.msra.mxu0 0.0
  %5320 = vmatprep.subr.mxu0 0.0
  %5321 = vmatpush2.msra.mxu0 0.0
  %5322 = vmatprep.mubr.f32.mxu0 0.0
  %5323 = vmatmul.mubr.f32.gmra.mxu0 %v5253
  %v5324 = vpop.f32.mrf.mxu0
  %v5325 = vadd.f32 0.0, %v5324
  %v5326 = vpop.f32.mrf.mxu0
  %5327 = vdwg.mxu0
  %s5328 = scalar_lea.vmem %s31, 96
  %v5329 = vld [vmem:[%s5328] sm:$0xff]
  %v5330 = vld [vmem:[%s5328 + $0x8] sm:$0xff]
  %v5331 = vld [vmem:[%s5328 + $0x10] sm:$0xff]
  %v5332 = vld [vmem:[%s5328 + $0x18] sm:$0x3]
  %v5334 = vsel %vm166, %v5332, 0
  %5336 = vmatprep.subr.mxu0 0.0
  %5337 = vmatpush1.msra.mxu0 0.0
  %5338 = vmatprep.subr.mxu0 0.0
  %5339 = vmatpush1.msra.mxu0 0.0
  %5340 = vmatprep.subr.mxu0 0.0
  %5341 = vmatpush1.msra.mxu0 0.0
  %5342 = vmatprep.subr.mxu0 0.0
  %5343 = vmatpush1.msra.mxu0 0.0
  %5344 = vmatprep.subr.mxu0 0.0
  %5345 = vmatpush1.msra.mxu0 0.0
  %5346 = vmatprep.subr.mxu0 0.0
  %5347 = vmatpush1.msra.mxu0 0.0
  %5348 = vmatprep.subr.mxu0 0.0
  %5349 = vmatpush1.msra.mxu0 0.0
  %5350 = vmatprep.subr.mxu0 0.0
  %5351 = vmatpush1.msra.mxu0 0.0
  %5352 = vmatprep.subr.mxu0 0.0
  %5353 = vmatpush1.msra.mxu0 0.0
  %5354 = vmatprep.subr.mxu0 0.0
  %5355 = vmatpush1.msra.mxu0 0.0
  %5356 = vmatprep.subr.mxu0 0.0
  %5357 = vmatpush1.msra.mxu0 0.0
  %5358 = vmatprep.subr.mxu0 0.0
  %5359 = vmatpush1.msra.mxu0 0.0
  %5360 = vmatprep.subr.mxu0 0.0
  %5361 = vmatpush1.msra.mxu0 %v5334
  %5362 = vmatprep.subr.mxu0 0.0
  %5363 = vmatpush1.msra.mxu0 %v5331
  %5364 = vmatprep.subr.mxu0 0.0
  %5365 = vmatpush1.msra.mxu0 %v5330
  %5366 = vmatprep.subr.mxu0 0.0
  %5367 = vmatpush1.msra.mxu0 %v5329
  %5368 = vmatprep.subr.mxu0 0.0
  %5369 = vmatpush2.msra.mxu0 0.0
  %5370 = vmatprep.subr.mxu0 0.0
  %5371 = vmatpush2.msra.mxu0 0.0
  %5372 = vmatprep.subr.mxu0 0.0
  %5373 = vmatpush2.msra.mxu0 0.0
  %5374 = vmatprep.subr.mxu0 0.0
  %5375 = vmatpush2.msra.mxu0 0.0
  %5376 = vmatprep.subr.mxu0 0.0
  %5377 = vmatpush2.msra.mxu0 0.0
  %5378 = vmatprep.subr.mxu0 0.0
  %5379 = vmatpush2.msra.mxu0 0.0
  %5380 = vmatprep.subr.mxu0 0.0
  %5381 = vmatpush2.msra.mxu0 0.0
  %5382 = vmatprep.subr.mxu0 0.0
  %5383 = vmatpush2.msra.mxu0 0.0
  %5384 = vmatprep.subr.mxu0 0.0
  %5385 = vmatpush2.msra.mxu0 0.0
  %5386 = vmatprep.subr.mxu0 0.0
  %5387 = vmatpush2.msra.mxu0 0.0
  %5388 = vmatprep.subr.mxu0 0.0
  %5389 = vmatpush2.msra.mxu0 0.0
  %5390 = vmatprep.subr.mxu0 0.0
  %5391 = vmatpush2.msra.mxu0 0.0
  %5392 = vmatprep.subr.mxu0 0.0
  %5393 = vmatpush2.msra.mxu0 0.0
  %5394 = vmatprep.subr.mxu0 0.0
  %5395 = vmatpush2.msra.mxu0 0.0
  %5396 = vmatprep.subr.mxu0 0.0
  %5397 = vmatpush2.msra.mxu0 0.0
  %5398 = vmatprep.subr.mxu0 0.0
  %5399 = vmatpush2.msra.mxu0 0.0
  %5400 = vmatprep.mubr.f32.mxu0 0.0
  %5401 = vmatmul.mubr.f32.gmra.mxu0 %v5253
  %v5402 = vpop.f32.mrf.mxu0
  %v5403 = vadd.f32 0.0, %v5402
  %v5404 = vpop.f32.mrf.mxu0
  %5405 = vdwg.mxu0
  %5406 = vmatprep.subr.mxu0 0.0
  %5407 = vmatpush1.msra.mxu0 0.0
  %5408 = vmatprep.subr.mxu0 0.0
  %5409 = vmatpush1.msra.mxu0 0.0
  %5410 = vmatprep.subr.mxu0 0.0
  %5411 = vmatpush1.msra.mxu0 0.0
  %5412 = vmatprep.subr.mxu0 0.0
  %5413 = vmatpush1.msra.mxu0 0.0
  %5414 = vmatprep.subr.mxu0 0.0
  %5415 = vmatpush1.msra.mxu0 0.0
  %5416 = vmatprep.subr.mxu0 0.0
  %5417 = vmatpush1.msra.mxu0 0.0
  %5418 = vmatprep.subr.mxu0 0.0
  %5419 = vmatpush1.msra.mxu0 0.0
  %5420 = vmatprep.subr.mxu0 0.0
  %5421 = vmatpush1.msra.mxu0 0.0
  %5422 = vmatprep.subr.mxu0 0.0
  %5423 = vmatpush1.msra.mxu0 0.0
  %5424 = vmatprep.subr.mxu0 0.0
  %5425 = vmatpush1.msra.mxu0 0.0
  %5426 = vmatprep.subr.mxu0 0.0
  %5427 = vmatpush1.msra.mxu0 0.0
  %5428 = vmatprep.subr.mxu0 0.0
  %5429 = vmatpush1.msra.mxu0 0.0
  %5430 = vmatprep.subr.mxu0 0.0
  %5431 = vmatpush1.msra.mxu0 0.0
  %5432 = vmatprep.subr.mxu0 0.0
  %5433 = vmatpush1.msra.mxu0 0.0
  %5434 = vmatprep.subr.mxu0 0.0
  %5435 = vmatpush1.msra.mxu0 0.0
  %5436 = vmatprep.subr.mxu0 0.0
  %5437 = vmatpush1.msra.mxu0 %v5403
  %5438 = vmatprep.subr.mxu0 0.0
  %5439 = vmatpush2.msra.mxu0 0.0
  %5440 = vmatprep.subr.mxu0 0.0
  %5441 = vmatpush2.msra.mxu0 0.0
  %5442 = vmatprep.subr.mxu0 0.0
  %5443 = vmatpush2.msra.mxu0 0.0
  %5444 = vmatprep.subr.mxu0 0.0
  %5445 = vmatpush2.msra.mxu0 0.0
  %5446 = vmatprep.subr.mxu0 0.0
  %5447 = vmatpush2.msra.mxu0 0.0
  %5448 = vmatprep.subr.mxu0 0.0
  %5449 = vmatpush2.msra.mxu0 0.0
  %5450 = vmatprep.subr.mxu0 0.0
  %5451 = vmatpush2.msra.mxu0 0.0
  %5452 = vmatprep.subr.mxu0 0.0
  %5453 = vmatpush2.msra.mxu0 0.0
  %5454 = vmatprep.subr.mxu0 0.0
  %5455 = vmatpush2.msra.mxu0 0.0
  %5456 = vmatprep.subr.mxu0 0.0
  %5457 = vmatpush2.msra.mxu0 0.0
  %5458 = vmatprep.subr.mxu0 0.0
  %5459 = vmatpush2.msra.mxu0 0.0
  %5460 = vmatprep.subr.mxu0 0.0
  %5461 = vmatpush2.msra.mxu0 0.0
  %5462 = vmatprep.subr.mxu0 0.0
  %5463 = vmatpush2.msra.mxu0 0.0
  %5464 = vmatprep.subr.mxu0 0.0
  %5465 = vmatpush2.msra.mxu0 0.0
  %5466 = vmatprep.subr.mxu0 0.0
  %5467 = vmatpush2.msra.mxu0 0.0
  %5468 = vmatprep.subr.mxu0 0.0
  %5469 = vmatpush2.msra.mxu0 0.0
  %5470 = vmatprep.mubr.f32.mxu0 0.0
  %5471 = vmatmul.mubr.f32.gmra.mxu0 %v400
  %v5472 = vpop.f32.mrf.mxu0
  %v5473 = vadd.f32 0.0, %v5472
  %v5474 = vpop.f32.mrf.mxu0
  %5475 = vmatprep.mubr.f32.mxu0 0.0
  %5476 = vmatmul.mubr.f32.gmra.mxu0 %v403
  %v5477 = vpop.f32.mrf.mxu0
  %v5478 = vadd.f32 0.0, %v5477
  %v5479 = vpop.f32.mrf.mxu0
  %5480 = vmatprep.mubr.f32.mxu0 0.0
  %5481 = vmatmul.mubr.f32.gmra.mxu0 %v406
  %v5482 = vpop.f32.mrf.mxu0
  %v5483 = vadd.f32 0.0, %v5482
  %v5484 = vpop.f32.mrf.mxu0
  %5485 = vmatprep.mubr.f32.mxu0 0.0
  %5486 = vmatmul.mubr.f32.gmra.mxu0 %v409
  %v5487 = vpop.f32.mrf.mxu0
  %v5488 = vadd.f32 0.0, %v5487
  %v5489 = vpop.f32.mrf.mxu0
  %5490 = vmatprep.mubr.f32.mxu0 0.0
  %5491 = vmatmul.mubr.f32.gmra.mxu0 %v412
  %v5492 = vpop.f32.mrf.mxu0
  %v5493 = vadd.f32 0.0, %v5492
  %v5494 = vpop.f32.mrf.mxu0
  %5495 = vmatprep.mubr.f32.mxu0 0.0
  %5496 = vmatmul.mubr.f32.gmra.mxu0 %v415
  %v5497 = vpop.f32.mrf.mxu0
  %v5498 = vadd.f32 0.0, %v5497
  %v5499 = vpop.f32.mrf.mxu0
  %5500 = vmatprep.mubr.f32.mxu0 0.0
  %5501 = vmatmul.mubr.f32.gmra.mxu0 %v418
  %v5502 = vpop.f32.mrf.mxu0
  %v5503 = vadd.f32 0.0, %v5502
  %v5504 = vpop.f32.mrf.mxu0
  %5505 = vdwg.mxu0
  %5506 = vmatprep.subr.mxu0 0.0
  %5507 = vmatpush1.msra.mxu0 0.0
  %5508 = vmatprep.subr.mxu0 0.0
  %5509 = vmatpush1.msra.mxu0 0.0
  %5510 = vmatprep.subr.mxu0 0.0
  %5511 = vmatpush1.msra.mxu0 0.0
  %5512 = vmatprep.subr.mxu0 0.0
  %5513 = vmatpush1.msra.mxu0 0.0
  %5514 = vmatprep.subr.mxu0 0.0
  %5515 = vmatpush1.msra.mxu0 0.0
  %5516 = vmatprep.subr.mxu0 0.0
  %5517 = vmatpush1.msra.mxu0 0.0
  %5518 = vmatprep.subr.mxu0 0.0
  %5519 = vmatpush1.msra.mxu0 0.0
  %5520 = vmatprep.subr.mxu0 0.0
  %5521 = vmatpush1.msra.mxu0 0.0
  %5522 = vmatprep.subr.mxu0 0.0
  %5523 = vmatpush1.msra.mxu0 0.0
  %5524 = vmatprep.subr.mxu0 0.0
  %5525 = vmatpush1.msra.mxu0 0.0
  %5526 = vmatprep.subr.mxu0 0.0
  %5527 = vmatpush1.msra.mxu0 0.0
  %5528 = vmatprep.subr.mxu0 0.0
  %5529 = vmatpush1.msra.mxu0 0.0
  %5530 = vmatprep.subr.mxu0 0.0
  %5531 = vmatpush1.msra.mxu0 0.0
  %5532 = vmatprep.subr.mxu0 0.0
  %5533 = vmatpush1.msra.mxu0 0.0
  %5534 = vmatprep.subr.mxu0 0.0
  %5535 = vmatpush1.msra.mxu0 0.0
  %5536 = vmatprep.subr.mxu0 0.0
  %5537 = vmatpush1.msra.mxu0 %v4911
  %5538 = vmatprep.subr.mxu0 0.0
  %5539 = vmatpush2.msra.mxu0 0.0
  %5540 = vmatprep.subr.mxu0 0.0
  %5541 = vmatpush2.msra.mxu0 0.0
  %5542 = vmatprep.subr.mxu0 0.0
  %5543 = vmatpush2.msra.mxu0 0.0
  %5544 = vmatprep.subr.mxu0 0.0
  %5545 = vmatpush2.msra.mxu0 0.0
  %5546 = vmatprep.subr.mxu0 0.0
  %5547 = vmatpush2.msra.mxu0 0.0
  %5548 = vmatprep.subr.mxu0 0.0
  %5549 = vmatpush2.msra.mxu0 0.0
  %5550 = vmatprep.subr.mxu0 0.0
  %5551 = vmatpush2.msra.mxu0 0.0
  %5552 = vmatprep.subr.mxu0 0.0
  %5553 = vmatpush2.msra.mxu0 0.0
  %5554 = vmatprep.subr.mxu0 0.0
  %5555 = vmatpush2.msra.mxu0 0.0
  %5556 = vmatprep.subr.mxu0 0.0
  %5557 = vmatpush2.msra.mxu0 0.0
  %5558 = vmatprep.subr.mxu0 0.0
  %5559 = vmatpush2.msra.mxu0 0.0
  %5560 = vmatprep.subr.mxu0 0.0
  %5561 = vmatpush2.msra.mxu0 0.0
  %5562 = vmatprep.subr.mxu0 0.0
  %5563 = vmatpush2.msra.mxu0 0.0
  %5564 = vmatprep.subr.mxu0 0.0
  %5565 = vmatpush2.msra.mxu0 0.0
  %5566 = vmatprep.subr.mxu0 0.0
  %5567 = vmatpush2.msra.mxu0 0.0
  %5568 = vmatprep.subr.mxu0 0.0
  %5569 = vmatpush2.msra.mxu0 0.0
  %5570 = vmatprep.mubr.f32.mxu0 0.0
  %5571 = vmatmul.mubr.f32.gmra.mxu0 %v521
  %v5572 = vpop.f32.mrf.mxu0
  %v5573 = vadd.f32 0.0, %v5572
  %v5574 = vpop.f32.mrf.mxu0
  %5575 = vmatprep.mubr.f32.mxu0 0.0
  %5576 = vmatmul.mubr.f32.gmra.mxu0 %v524
  %v5577 = vpop.f32.mrf.mxu0
  %v5578 = vadd.f32 0.0, %v5577
  %v5579 = vpop.f32.mrf.mxu0
  %5580 = vmatprep.mubr.f32.mxu0 0.0
  %5581 = vmatmul.mubr.f32.gmra.mxu0 %v527
  %v5582 = vpop.f32.mrf.mxu0
  %v5583 = vadd.f32 0.0, %v5582
  %v5584 = vpop.f32.mrf.mxu0
  %5585 = vmatprep.mubr.f32.mxu0 0.0
  %5586 = vmatmul.mubr.f32.gmra.mxu0 %v530
  %v5587 = vpop.f32.mrf.mxu0
  %v5588 = vadd.f32 0.0, %v5587
  %v5589 = vpop.f32.mrf.mxu0
  %5590 = vmatprep.mubr.f32.mxu0 0.0
  %5591 = vmatmul.mubr.f32.gmra.mxu0 %v533
  %v5592 = vpop.f32.mrf.mxu0
  %v5593 = vadd.f32 0.0, %v5592
  %v5594 = vpop.f32.mrf.mxu0
  %5595 = vmatprep.mubr.f32.mxu0 0.0
  %5596 = vmatmul.mubr.f32.gmra.mxu0 %v536
  %v5597 = vpop.f32.mrf.mxu0
  %v5598 = vadd.f32 0.0, %v5597
  %v5599 = vpop.f32.mrf.mxu0
  %5600 = vmatprep.mubr.f32.mxu0 0.0
  %5601 = vmatmul.mubr.f32.gmra.mxu0 %v539
  %v5602 = vpop.f32.mrf.mxu0
  %v5603 = vadd.f32 0.0, %v5602
  %v5604 = vpop.f32.mrf.mxu0
  %5605 = vdwg.mxu0
  %5606 = vmatprep.subr.mxu0 0.0
  %5607 = vmatpush1.msra.mxu0 0.0
  %5608 = vmatprep.subr.mxu0 0.0
  %5609 = vmatpush1.msra.mxu0 0.0
  %5610 = vmatprep.subr.mxu0 0.0
  %5611 = vmatpush1.msra.mxu0 0.0
  %5612 = vmatprep.subr.mxu0 0.0
  %5613 = vmatpush1.msra.mxu0 0.0
  %5614 = vmatprep.subr.mxu0 0.0
  %5615 = vmatpush1.msra.mxu0 0.0
  %5616 = vmatprep.subr.mxu0 0.0
  %5617 = vmatpush1.msra.mxu0 0.0
  %5618 = vmatprep.subr.mxu0 0.0
  %5619 = vmatpush1.msra.mxu0 0.0
  %5620 = vmatprep.subr.mxu0 0.0
  %5621 = vmatpush1.msra.mxu0 0.0
  %5622 = vmatprep.subr.mxu0 0.0
  %5623 = vmatpush1.msra.mxu0 0.0
  %5624 = vmatprep.subr.mxu0 0.0
  %5625 = vmatpush1.msra.mxu0 0.0
  %5626 = vmatprep.subr.mxu0 0.0
  %5627 = vmatpush1.msra.mxu0 0.0
  %5628 = vmatprep.subr.mxu0 0.0
  %5629 = vmatpush1.msra.mxu0 0.0
  %5630 = vmatprep.subr.mxu0 0.0
  %5631 = vmatpush1.msra.mxu0 0.0
  %5632 = vmatprep.subr.mxu0 0.0
  %5633 = vmatpush1.msra.mxu0 0.0
  %5634 = vmatprep.subr.mxu0 0.0
  %5635 = vmatpush1.msra.mxu0 0.0
  %5636 = vmatprep.subr.mxu0 0.0
  %5637 = vmatpush1.msra.mxu0 %v4911
  %5638 = vmatprep.subr.mxu0 0.0
  %5639 = vmatpush2.msra.mxu0 0.0
  %5640 = vmatprep.subr.mxu0 0.0
  %5641 = vmatpush2.msra.mxu0 0.0
  %5642 = vmatprep.subr.mxu0 0.0
  %5643 = vmatpush2.msra.mxu0 0.0
  %5644 = vmatprep.subr.mxu0 0.0
  %5645 = vmatpush2.msra.mxu0 0.0
  %5646 = vmatprep.subr.mxu0 0.0
  %5647 = vmatpush2.msra.mxu0 0.0
  %5648 = vmatprep.subr.mxu0 0.0
  %5649 = vmatpush2.msra.mxu0 0.0
  %5650 = vmatprep.subr.mxu0 0.0
  %5651 = vmatpush2.msra.mxu0 0.0
  %5652 = vmatprep.subr.mxu0 0.0
  %5653 = vmatpush2.msra.mxu0 0.0
  %5654 = vmatprep.subr.mxu0 0.0
  %5655 = vmatpush2.msra.mxu0 0.0
  %5656 = vmatprep.subr.mxu0 0.0
  %5657 = vmatpush2.msra.mxu0 0.0
  %5658 = vmatprep.subr.mxu0 0.0
  %5659 = vmatpush2.msra.mxu0 0.0
  %5660 = vmatprep.subr.mxu0 0.0
  %5661 = vmatpush2.msra.mxu0 0.0
  %5662 = vmatprep.subr.mxu0 0.0
  %5663 = vmatpush2.msra.mxu0 0.0
  %5664 = vmatprep.subr.mxu0 0.0
  %5665 = vmatpush2.msra.mxu0 0.0
  %5666 = vmatprep.subr.mxu0 0.0
  %5667 = vmatpush2.msra.mxu0 0.0
  %5668 = vmatprep.subr.mxu0 0.0
  %5669 = vmatpush2.msra.mxu0 0.0
  %5670 = vmatprep.mubr.f32.mxu0 0.0
  %5671 = vmatmul.mubr.f32.gmra.mxu0 %v400
  %v5672 = vpop.f32.mrf.mxu0
  %v5673 = vadd.f32 0.0, %v5672
  %v5674 = vpop.f32.mrf.mxu0
  %5675 = vmatprep.mubr.f32.mxu0 0.0
  %5676 = vmatmul.mubr.f32.gmra.mxu0 %v403
  %v5677 = vpop.f32.mrf.mxu0
  %v5678 = vadd.f32 0.0, %v5677
  %v5679 = vpop.f32.mrf.mxu0
  %5680 = vmatprep.mubr.f32.mxu0 0.0
  %5681 = vmatmul.mubr.f32.gmra.mxu0 %v406
  %v5682 = vpop.f32.mrf.mxu0
  %v5683 = vadd.f32 0.0, %v5682
  %v5684 = vpop.f32.mrf.mxu0
  %5685 = vmatprep.mubr.f32.mxu0 0.0
  %5686 = vmatmul.mubr.f32.gmra.mxu0 %v409
  %v5687 = vpop.f32.mrf.mxu0
  %v5688 = vadd.f32 0.0, %v5687
  %v5689 = vpop.f32.mrf.mxu0
  %5690 = vmatprep.mubr.f32.mxu0 0.0
  %5691 = vmatmul.mubr.f32.gmra.mxu0 %v412
  %v5692 = vpop.f32.mrf.mxu0
  %v5693 = vadd.f32 0.0, %v5692
  %v5694 = vpop.f32.mrf.mxu0
  %5695 = vmatprep.mubr.f32.mxu0 0.0
  %5696 = vmatmul.mubr.f32.gmra.mxu0 %v415
  %v5697 = vpop.f32.mrf.mxu0
  %v5698 = vadd.f32 0.0, %v5697
  %v5699 = vpop.f32.mrf.mxu0
  %5700 = vmatprep.mubr.f32.mxu0 0.0
  %5701 = vmatmul.mubr.f32.gmra.mxu0 %v418
  %v5702 = vpop.f32.mrf.mxu0
  %v5703 = vadd.f32 0.0, %v5702
  %v5704 = vpop.f32.mrf.mxu0
  %5705 = vdwg.mxu0
  %v5706 = vsub.f32 %v5573, %v5673
  %v5707 = vsub.f32 %v5578, %v5678
  %v5708 = vsub.f32 %v5583, %v5683
  %v5709 = vsub.f32 %v5588, %v5688
  %v5710 = vsub.f32 %v5593, %v5693
  %v5711 = vsub.f32 %v5598, %v5698
  %v5712 = vsub.f32 %v5603, %v5703
  %v5713 = vmul.f32 %v5706, %v5706
  %v5714 = vmul.f32 %v5707, %v5707
  %v5715 = vmul.f32 %v5708, %v5708
  %v5716 = vmul.f32 %v5709, %v5709
  %v5717 = vmul.f32 %v5710, %v5710
  %v5718 = vmul.f32 %v5711, %v5711
  %v5719 = vmul.f32 %v5712, %v5712
  %v5720 = vsel %vm755, %v5713, 0.0
  %5721 = vadd.xlane.f32.xlu0 %v5720
  %v5722 = vpop.xlane.xlu0 %5721
  %v5723 = vsel %vm755, %v5714, 0.0
  %5724 = vadd.xlane.f32.xlu0 %v5723
  %v5725 = vpop.xlane.xlu0 %5724
  %v5726 = vsel %vm755, %v5715, 0.0
  %5727 = vadd.xlane.f32.xlu0 %v5726
  %v5728 = vpop.xlane.xlu0 %5727
  %v5729 = vsel %vm755, %v5716, 0.0
  %5730 = vadd.xlane.f32.xlu0 %v5729
  %v5731 = vpop.xlane.xlu0 %5730
  %v5732 = vsel %vm755, %v5717, 0.0
  %5733 = vadd.xlane.f32.xlu0 %v5732
  %v5734 = vpop.xlane.xlu0 %5733
  %v5735 = vsel %vm755, %v5718, 0.0
  %5736 = vadd.xlane.f32.xlu0 %v5735
  %v5737 = vpop.xlane.xlu0 %5736
  %v5738 = vsel %vm755, %v5719, 0.0
  %5739 = vadd.xlane.f32.xlu0 %v5738
  %v5740 = vpop.xlane.xlu0 %5739
  %v5741 = vadd.f32 %v5722, 1e-08
  %v5742 = vadd.f32 %v5725, 1e-08
  %v5743 = vadd.f32 %v5728, 1e-08
  %v5744 = vadd.f32 %v5731, 1e-08
  %v5745 = vadd.f32 %v5734, 1e-08
  %v5746 = vadd.f32 %v5737, 1e-08
  %v5747 = vadd.f32 %v5740, 1e-08
  %v5748 = vrsqrt.pop %v5741
  %v5749 = vrsqrt.pop %v5742
  %v5750 = vrsqrt.pop %v5743
  %v5751 = vrsqrt.pop %v5744
  %v5752 = vrsqrt.pop %v5745
  %v5753 = vrsqrt.pop %v5746
  %v5754 = vrsqrt.pop %v5747
  %v5755 = vmul.f32 %v5706, %v5748
  %v5756 = vmul.f32 %v5707, %v5749
  %v5757 = vmul.f32 %v5708, %v5750
  %v5758 = vmul.f32 %v5709, %v5751
  %v5759 = vmul.f32 %v5710, %v5752
  %v5760 = vmul.f32 %v5711, %v5753
  %v5761 = vmul.f32 %v5712, %v5754
  %5762 = vmatprep.subr.mxu0 0.0
  %5763 = vmatpush1.msra.mxu0 0.0
  %5764 = vmatprep.subr.mxu0 0.0
  %5765 = vmatpush1.msra.mxu0 0.0
  %5766 = vmatprep.subr.mxu0 0.0
  %5767 = vmatpush1.msra.mxu0 0.0
  %5768 = vmatprep.subr.mxu0 0.0
  %5769 = vmatpush1.msra.mxu0 0.0
  %5770 = vmatprep.subr.mxu0 0.0
  %5771 = vmatpush1.msra.mxu0 0.0
  %5772 = vmatprep.subr.mxu0 0.0
  %5773 = vmatpush1.msra.mxu0 0.0
  %5774 = vmatprep.subr.mxu0 0.0
  %5775 = vmatpush1.msra.mxu0 0.0
  %5776 = vmatprep.subr.mxu0 0.0
  %5777 = vmatpush1.msra.mxu0 0.0
  %5778 = vmatprep.subr.mxu0 0.0
  %5779 = vmatpush1.msra.mxu0 0.0
  %5780 = vmatprep.subr.mxu0 0.0
  %5781 = vmatpush1.msra.mxu0 0.0
  %5782 = vmatprep.subr.mxu0 0.0
  %5783 = vmatpush1.msra.mxu0 0.0
  %5784 = vmatprep.subr.mxu0 0.0
  %5785 = vmatpush1.msra.mxu0 0.0
  %5786 = vmatprep.subr.mxu0 0.0
  %5787 = vmatpush1.msra.mxu0 0.0
  %5788 = vmatprep.subr.mxu0 0.0
  %5789 = vmatpush1.msra.mxu0 0.0
  %5790 = vmatprep.subr.mxu0 0.0
  %5791 = vmatpush1.msra.mxu0 0.0
  %5792 = vmatprep.subr.mxu0 0.0
  %5793 = vmatpush1.msra.mxu0 %v5325
  %5794 = vmatprep.subr.mxu0 0.0
  %5795 = vmatpush2.msra.mxu0 0.0
  %5796 = vmatprep.subr.mxu0 0.0
  %5797 = vmatpush2.msra.mxu0 0.0
  %5798 = vmatprep.subr.mxu0 0.0
  %5799 = vmatpush2.msra.mxu0 0.0
  %5800 = vmatprep.subr.mxu0 0.0
  %5801 = vmatpush2.msra.mxu0 0.0
  %5802 = vmatprep.subr.mxu0 0.0
  %5803 = vmatpush2.msra.mxu0 0.0
  %5804 = vmatprep.subr.mxu0 0.0
  %5805 = vmatpush2.msra.mxu0 0.0
  %5806 = vmatprep.subr.mxu0 0.0
  %5807 = vmatpush2.msra.mxu0 0.0
  %5808 = vmatprep.subr.mxu0 0.0
  %5809 = vmatpush2.msra.mxu0 0.0
  %5810 = vmatprep.subr.mxu0 0.0
  %5811 = vmatpush2.msra.mxu0 0.0
  %5812 = vmatprep.subr.mxu0 0.0
  %5813 = vmatpush2.msra.mxu0 0.0
  %5814 = vmatprep.subr.mxu0 0.0
  %5815 = vmatpush2.msra.mxu0 0.0
  %5816 = vmatprep.subr.mxu0 0.0
  %5817 = vmatpush2.msra.mxu0 0.0
  %5818 = vmatprep.subr.mxu0 0.0
  %5819 = vmatpush2.msra.mxu0 0.0
  %5820 = vmatprep.subr.mxu0 0.0
  %5821 = vmatpush2.msra.mxu0 0.0
  %5822 = vmatprep.subr.mxu0 0.0
  %5823 = vmatpush2.msra.mxu0 0.0
  %5824 = vmatprep.subr.mxu0 0.0
  %5825 = vmatpush2.msra.mxu0 0.0
  %5826 = vmatprep.mubr.f32.mxu0 0.0
  %5827 = vmatmul.mubr.f32.gmra.mxu0 %v521
  %v5828 = vpop.f32.mrf.mxu0
  %v5829 = vadd.f32 %v5473, %v5828
  %v5830 = vpop.f32.mrf.mxu0
  %5831 = vmatprep.mubr.f32.mxu0 0.0
  %5832 = vmatmul.mubr.f32.gmra.mxu0 %v524
  %v5833 = vpop.f32.mrf.mxu0
  %v5834 = vadd.f32 %v5478, %v5833
  %v5835 = vpop.f32.mrf.mxu0
  %5836 = vmatprep.mubr.f32.mxu0 0.0
  %5837 = vmatmul.mubr.f32.gmra.mxu0 %v527
  %v5838 = vpop.f32.mrf.mxu0
  %v5839 = vadd.f32 %v5483, %v5838
  %v5840 = vpop.f32.mrf.mxu0
  %5841 = vmatprep.mubr.f32.mxu0 0.0
  %5842 = vmatmul.mubr.f32.gmra.mxu0 %v530
  %v5843 = vpop.f32.mrf.mxu0
  %v5844 = vadd.f32 %v5488, %v5843
  %v5845 = vpop.f32.mrf.mxu0
  %5846 = vmatprep.mubr.f32.mxu0 0.0
  %5847 = vmatmul.mubr.f32.gmra.mxu0 %v533
  %v5848 = vpop.f32.mrf.mxu0
  %v5849 = vadd.f32 %v5493, %v5848
  %v5850 = vpop.f32.mrf.mxu0
  %5851 = vmatprep.mubr.f32.mxu0 0.0
  %5852 = vmatmul.mubr.f32.gmra.mxu0 %v536
  %v5853 = vpop.f32.mrf.mxu0
  %v5854 = vadd.f32 %v5498, %v5853
  %v5855 = vpop.f32.mrf.mxu0
  %5856 = vmatprep.mubr.f32.mxu0 0.0
  %5857 = vmatmul.mubr.f32.gmra.mxu0 %v539
  %v5858 = vpop.f32.mrf.mxu0
  %v5859 = vadd.f32 %v5503, %v5858
  %v5860 = vpop.f32.mrf.mxu0
  %5861 = vdwg.mxu0
  %s5862 = scalar_lea.vmem %s33, 3
  %v5863 = vld [vmem:[%s5862] sm:$0x1]
  %v5865 = vlaneseq
  %v5866 = vshrl.u32 %v5865, 7
  %v5867 = vsub.s32 0, %v5866
  %v5868 = vrot.slane %v5863, %v5867
  %v5870 = vmul.f32 %v5722, %v5868
  %v5871 = vmul.f32 %v5725, %v5868
  %v5872 = vmul.f32 %v5728, %v5868
  %v5873 = vmul.f32 %v5731, %v5868
  %v5874 = vmul.f32 %v5734, %v5868
  %v5875 = vmul.f32 %v5737, %v5868
  %v5876 = vmul.f32 %v5740, %v5868
  %v5877 = vadd.f32 %v5829, %v5870
  %v5878 = vadd.f32 %v5834, %v5871
  %v5879 = vadd.f32 %v5839, %v5872
  %v5880 = vadd.f32 %v5844, %v5873
  %v5881 = vadd.f32 %v5849, %v5874
  %v5882 = vadd.f32 %v5854, %v5875
  %v5883 = vadd.f32 %v5859, %v5876
  %s5884 = scalar_lea.vmem %s35, 3
  %v5885 = vld [vmem:[%s5884] sm:$0x1]
  %v5887 = vlaneseq
  %v5888 = vshrl.u32 %v5887, 7
  %v5889 = vsub.s32 0, %v5888
  %v5890 = vrot.slane %v5885, %v5889
  %v5892 = vadd.f32 %v5877, %v5890
  %v5893 = vadd.f32 %v5878, %v5890
  %v5894 = vadd.f32 %v5879, %v5890
  %v5895 = vadd.f32 %v5880, %v5890
  %v5896 = vadd.f32 %v5881, %v5890
  %v5897 = vadd.f32 %v5882, %v5890
  %v5898 = vadd.f32 %v5883, %v5890
  %v5899 = vxor.u32 %v5892, 2147483648
  %v5900 = vxor.u32 %v5893, 2147483648
  %v5901 = vxor.u32 %v5894, 2147483648
  %v5902 = vxor.u32 %v5895, 2147483648
  %v5903 = vxor.u32 %v5896, 2147483648
  %v5904 = vxor.u32 %v5897, 2147483648
  %v5905 = vxor.u32 %v5898, 2147483648
  %v5906 = vmul.f32 %v5899, 1.442695
  %v5907 = vpow.pop %v5906
  %v5908 = vmul.f32 %v5900, 1.442695
  %v5909 = vpow.pop %v5908
  %v5910 = vmul.f32 %v5901, 1.442695
  %v5911 = vpow.pop %v5910
  %v5912 = vmul.f32 %v5902, 1.442695
  %v5913 = vpow.pop %v5912
  %v5914 = vmul.f32 %v5903, 1.442695
  %v5915 = vpow.pop %v5914
  %v5916 = vmul.f32 %v5904, 1.442695
  %v5917 = vpow.pop %v5916
  %v5918 = vmul.f32 %v5905, 1.442695
  %v5919 = vpow.pop %v5918
  %v5920 = vadd.f32 %v5907, 1.0
  %v5921 = vadd.f32 %v5909, 1.0
  %v5922 = vadd.f32 %v5911, 1.0
  %v5923 = vadd.f32 %v5913, 1.0
  %v5924 = vadd.f32 %v5915, 1.0
  %v5925 = vadd.f32 %v5917, 1.0
  %v5926 = vadd.f32 %v5919, 1.0
  %v5927 = vrcp.pop %v5920
  %v5928 = vmul.f32 1.0, %v5927
  %v5929 = vrcp.pop %v5921
  %v5930 = vmul.f32 1.0, %v5929
  %v5931 = vrcp.pop %v5922
  %v5932 = vmul.f32 1.0, %v5931
  %v5933 = vrcp.pop %v5923
  %v5934 = vmul.f32 1.0, %v5933
  %v5935 = vrcp.pop %v5924
  %v5936 = vmul.f32 1.0, %v5935
  %v5937 = vrcp.pop %v5925
  %v5938 = vmul.f32 1.0, %v5937
  %v5939 = vrcp.pop %v5926
  %v5940 = vmul.f32 1.0, %v5939
  %v5941 = vmul.f32 %v5892, %v5928
  %v5942 = vmul.f32 %v5893, %v5930
  %v5943 = vmul.f32 %v5894, %v5932
  %v5944 = vmul.f32 %v5895, %v5934
  %v5945 = vmul.f32 %v5896, %v5936
  %v5946 = vmul.f32 %v5897, %v5938
  %v5947 = vmul.f32 %v5898, %v5940
  %s5948 = scalar_lea.vmem %s37, 96
  %v5949 = vld [vmem:[%s5948] sm:$0xff]
  %v5950 = vld [vmem:[%s5948 + $0x8] sm:$0xff]
  %v5951 = vld [vmem:[%s5948 + $0x10] sm:$0xff]
  %v5952 = vld [vmem:[%s5948 + $0x18] sm:$0x3]
  %s5953 = scalar_lea.vmem %s39, 3
  %v5954 = vld [vmem:[%s5953] sm:$0x1]
  %v5956 = vlaneseq
  %v5957 = vshrl.u32 %v5956, 7
  %v5958 = vsub.s32 0, %v5957
  %v5959 = vrot.slane %v5954, %v5958
  %v5962 = vsel %vm162, %v5941, 0
  %v5965 = vsel %vm162, %v5942, 0
  %v5968 = vsel %vm162, %v5943, 0
  %v5971 = vsel %vm162, %v5944, 0
  %v5974 = vsel %vm162, %v5945, 0
  %v5977 = vsel %vm162, %v5946, 0
  %v5980 = vsel %vm162, %v5947, 0
  %v5983 = vsel %vm166, %v5952, 0
  %5985 = vmatprep.subr.mxu0 0.0
  %5986 = vmatpush1.msra.mxu0 0.0
  %5987 = vmatprep.subr.mxu0 0.0
  %5988 = vmatpush1.msra.mxu0 0.0
  %5989 = vmatprep.subr.mxu0 0.0
  %5990 = vmatpush1.msra.mxu0 0.0
  %5991 = vmatprep.subr.mxu0 0.0
  %5992 = vmatpush1.msra.mxu0 0.0
  %5993 = vmatprep.subr.mxu0 0.0
  %5994 = vmatpush1.msra.mxu0 0.0
  %5995 = vmatprep.subr.mxu0 0.0
  %5996 = vmatpush1.msra.mxu0 0.0
  %5997 = vmatprep.subr.mxu0 0.0
  %5998 = vmatpush1.msra.mxu0 0.0
  %5999 = vmatprep.subr.mxu0 0.0
  %6000 = vmatpush1.msra.mxu0 0.0
  %6001 = vmatprep.subr.mxu0 0.0
  %6002 = vmatpush1.msra.mxu0 0.0
  %6003 = vmatprep.subr.mxu0 0.0
  %6004 = vmatpush1.msra.mxu0 0.0
  %6005 = vmatprep.subr.mxu0 0.0
  %6006 = vmatpush1.msra.mxu0 0.0
  %6007 = vmatprep.subr.mxu0 0.0
  %6008 = vmatpush1.msra.mxu0 0.0
  %6009 = vmatprep.subr.mxu0 0.0
  %6010 = vmatpush1.msra.mxu0 %v5983
  %6011 = vmatprep.subr.mxu0 0.0
  %6012 = vmatpush1.msra.mxu0 %v5951
  %6013 = vmatprep.subr.mxu0 0.0
  %6014 = vmatpush1.msra.mxu0 %v5950
  %6015 = vmatprep.subr.mxu0 0.0
  %6016 = vmatpush1.msra.mxu0 %v5949
  %6017 = vmatprep.subr.mxu0 0.0
  %6018 = vmatpush2.msra.mxu0 0.0
  %6019 = vmatprep.subr.mxu0 0.0
  %6020 = vmatpush2.msra.mxu0 0.0
  %6021 = vmatprep.subr.mxu0 0.0
  %6022 = vmatpush2.msra.mxu0 0.0
  %6023 = vmatprep.subr.mxu0 0.0
  %6024 = vmatpush2.msra.mxu0 0.0
  %6025 = vmatprep.subr.mxu0 0.0
  %6026 = vmatpush2.msra.mxu0 0.0
  %6027 = vmatprep.subr.mxu0 0.0
  %6028 = vmatpush2.msra.mxu0 0.0
  %6029 = vmatprep.subr.mxu0 0.0
  %6030 = vmatpush2.msra.mxu0 0.0
  %6031 = vmatprep.subr.mxu0 0.0
  %6032 = vmatpush2.msra.mxu0 0.0
  %6033 = vmatprep.subr.mxu0 0.0
  %6034 = vmatpush2.msra.mxu0 0.0
  %6035 = vmatprep.subr.mxu0 0.0
  %6036 = vmatpush2.msra.mxu0 0.0
  %6037 = vmatprep.subr.mxu0 0.0
  %6038 = vmatpush2.msra.mxu0 0.0
  %6039 = vmatprep.subr.mxu0 0.0
  %6040 = vmatpush2.msra.mxu0 0.0
  %6041 = vmatprep.subr.mxu0 0.0
  %6042 = vmatpush2.msra.mxu0 0.0
  %6043 = vmatprep.subr.mxu0 0.0
  %6044 = vmatpush2.msra.mxu0 0.0
  %6045 = vmatprep.subr.mxu0 0.0
  %6046 = vmatpush2.msra.mxu0 0.0
  %6047 = vmatprep.subr.mxu0 0.0
  %6048 = vmatpush2.msra.mxu0 0.0
  %6049 = vmatprep.mubr.f32.mxu0 0.0
  %6050 = vmatmul.mubr.f32.gmra.mxu0 %v5962
  %v6051 = vpop.f32.mrf.mxu0
  %v6052 = vadd.f32 %v5959, %v6051
  %v6053 = vpop.f32.mrf.mxu0
  %6054 = vmatprep.mubr.f32.mxu0 0.0
  %6055 = vmatmul.mubr.f32.gmra.mxu0 %v5965
  %v6056 = vpop.f32.mrf.mxu0
  %v6057 = vadd.f32 %v5959, %v6056
  %v6058 = vpop.f32.mrf.mxu0
  %6059 = vmatprep.mubr.f32.mxu0 0.0
  %6060 = vmatmul.mubr.f32.gmra.mxu0 %v5968
  %v6061 = vpop.f32.mrf.mxu0
  %v6062 = vadd.f32 %v5959, %v6061
  %v6063 = vpop.f32.mrf.mxu0
  %6064 = vmatprep.mubr.f32.mxu0 0.0
  %6065 = vmatmul.mubr.f32.gmra.mxu0 %v5971
  %v6066 = vpop.f32.mrf.mxu0
  %v6067 = vadd.f32 %v5959, %v6066
  %v6068 = vpop.f32.mrf.mxu0
  %6069 = vmatprep.mubr.f32.mxu0 0.0
  %6070 = vmatmul.mubr.f32.gmra.mxu0 %v5974
  %v6071 = vpop.f32.mrf.mxu0
  %v6072 = vadd.f32 %v5959, %v6071
  %v6073 = vpop.f32.mrf.mxu0
  %6074 = vmatprep.mubr.f32.mxu0 0.0
  %6075 = vmatmul.mubr.f32.gmra.mxu0 %v5977
  %v6076 = vpop.f32.mrf.mxu0
  %v6077 = vadd.f32 %v5959, %v6076
  %v6078 = vpop.f32.mrf.mxu0
  %6079 = vmatprep.mubr.f32.mxu0 0.0
  %6080 = vmatmul.mubr.f32.gmra.mxu0 %v5980
  %v6081 = vpop.f32.mrf.mxu0
  %v6082 = vadd.f32 %v5959, %v6081
  %v6083 = vpop.f32.mrf.mxu0
  %6084 = vdwg.mxu0
  %v6085 = vxor.u32 %v6052, 2147483648
  %v6086 = vxor.u32 %v6057, 2147483648
  %v6087 = vxor.u32 %v6062, 2147483648
  %v6088 = vxor.u32 %v6067, 2147483648
  %v6089 = vxor.u32 %v6072, 2147483648
  %v6090 = vxor.u32 %v6077, 2147483648
  %v6091 = vxor.u32 %v6082, 2147483648
  %v6092 = vmul.f32 %v6085, 1.442695
  %v6093 = vpow.pop %v6092
  %v6094 = vmul.f32 %v6086, 1.442695
  %v6095 = vpow.pop %v6094
  %v6096 = vmul.f32 %v6087, 1.442695
  %v6097 = vpow.pop %v6096
  %v6098 = vmul.f32 %v6088, 1.442695
  %v6099 = vpow.pop %v6098
  %v6100 = vmul.f32 %v6089, 1.442695
  %v6101 = vpow.pop %v6100
  %v6102 = vmul.f32 %v6090, 1.442695
  %v6103 = vpow.pop %v6102
  %v6104 = vmul.f32 %v6091, 1.442695
  %v6105 = vpow.pop %v6104
  %v6106 = vadd.f32 %v6093, 1.0
  %v6107 = vadd.f32 %v6095, 1.0
  %v6108 = vadd.f32 %v6097, 1.0
  %v6109 = vadd.f32 %v6099, 1.0
  %v6110 = vadd.f32 %v6101, 1.0
  %v6111 = vadd.f32 %v6103, 1.0
  %v6112 = vadd.f32 %v6105, 1.0
  %v6113 = vrcp.pop %v6106
  %v6114 = vmul.f32 1.0, %v6113
  %v6115 = vrcp.pop %v6107
  %v6116 = vmul.f32 1.0, %v6115
  %v6117 = vrcp.pop %v6108
  %v6118 = vmul.f32 1.0, %v6117
  %v6119 = vrcp.pop %v6109
  %v6120 = vmul.f32 1.0, %v6119
  %v6121 = vrcp.pop %v6110
  %v6122 = vmul.f32 1.0, %v6121
  %v6123 = vrcp.pop %v6111
  %v6124 = vmul.f32 1.0, %v6123
  %v6125 = vrcp.pop %v6112
  %v6126 = vmul.f32 1.0, %v6125
  %v6127 = vmul.f32 %v6052, %v6114
  %v6128 = vmul.f32 %v6057, %v6116
  %v6129 = vmul.f32 %v6062, %v6118
  %v6130 = vmul.f32 %v6067, %v6120
  %v6131 = vmul.f32 %v6072, %v6122
  %v6132 = vmul.f32 %v6077, %v6124
  %v6133 = vmul.f32 %v6082, %v6126
  %s6134 = scalar_lea.vmem %s41, 3
  %v6135 = vld [vmem:[%s6134] sm:$0x1]
  %v6137 = vlaneseq
  %v6138 = vshrl.u32 %v6137, 7
  %v6139 = vsub.s32 0, %v6138
  %v6140 = vrot.slane %v6135, %v6139
  %v6142 = vmul.f32 %v6127, %v6140
  %v6143 = vmul.f32 %v6128, %v6140
  %v6144 = vmul.f32 %v6129, %v6140
  %v6145 = vmul.f32 %v6130, %v6140
  %v6146 = vmul.f32 %v6131, %v6140
  %v6147 = vmul.f32 %v6132, %v6140
  %v6148 = vmul.f32 %v6133, %v6140
  %v6149 = vsel %vm162, %v6142, 0.0
  %6150 = vadd.xlane.f32.xlu0 %v6149
  %v6151 = vpop.xlane.xlu0 %6150
  %v6152 = vsel %vm162, %v6143, 0.0
  %6153 = vadd.xlane.f32.xlu0 %v6152
  %v6154 = vpop.xlane.xlu0 %6153
  %v6155 = vsel %vm162, %v6144, 0.0
  %6156 = vadd.xlane.f32.xlu0 %v6155
  %v6157 = vpop.xlane.xlu0 %6156
  %v6158 = vsel %vm162, %v6145, 0.0
  %6159 = vadd.xlane.f32.xlu0 %v6158
  %v6160 = vpop.xlane.xlu0 %6159
  %v6161 = vsel %vm162, %v6146, 0.0
  %6162 = vadd.xlane.f32.xlu0 %v6161
  %v6163 = vpop.xlane.xlu0 %6162
  %v6164 = vsel %vm162, %v6147, 0.0
  %6165 = vadd.xlane.f32.xlu0 %v6164
  %v6166 = vpop.xlane.xlu0 %6165
  %v6167 = vsel %vm162, %v6148, 0.0
  %6168 = vadd.xlane.f32.xlu0 %v6167
  %v6169 = vpop.xlane.xlu0 %6168
  %s6170 = scalar_lea.vmem %s43, 3
  %v6171 = vld [vmem:[%s6170] sm:$0x1]
  %v6173 = vlaneseq
  %v6174 = vshrl.u32 %v6173, 7
  %v6175 = vsub.s32 0, %v6174
  %v6176 = vrot.slane %v6171, %v6175
  %v6178 = vadd.f32 %v6151, %v6176
  %v6179 = vadd.f32 %v6154, %v6176
  %v6180 = vadd.f32 %v6157, %v6176
  %v6181 = vadd.f32 %v6160, %v6176
  %v6182 = vadd.f32 %v6163, %v6176
  %v6183 = vadd.f32 %v6166, %v6176
  %v6184 = vadd.f32 %v6169, %v6176
  %v6185 = vxor.u32 %v6178, 2147483648
  %v6186 = vxor.u32 %v6179, 2147483648
  %v6187 = vxor.u32 %v6180, 2147483648
  %v6188 = vxor.u32 %v6181, 2147483648
  %v6189 = vxor.u32 %v6182, 2147483648
  %v6190 = vxor.u32 %v6183, 2147483648
  %v6191 = vxor.u32 %v6184, 2147483648
  %v6192 = vmul.f32 %v6185, 1.442695
  %v6193 = vpow.pop %v6192
  %v6194 = vmul.f32 %v6186, 1.442695
  %v6195 = vpow.pop %v6194
  %v6196 = vmul.f32 %v6187, 1.442695
  %v6197 = vpow.pop %v6196
  %v6198 = vmul.f32 %v6188, 1.442695
  %v6199 = vpow.pop %v6198
  %v6200 = vmul.f32 %v6189, 1.442695
  %v6201 = vpow.pop %v6200
  %v6202 = vmul.f32 %v6190, 1.442695
  %v6203 = vpow.pop %v6202
  %v6204 = vmul.f32 %v6191, 1.442695
  %v6205 = vpow.pop %v6204
  %v6206 = vadd.f32 %v6193, 1.0
  %v6207 = vadd.f32 %v6195, 1.0
  %v6208 = vadd.f32 %v6197, 1.0
  %v6209 = vadd.f32 %v6199, 1.0
  %v6210 = vadd.f32 %v6201, 1.0
  %v6211 = vadd.f32 %v6203, 1.0
  %v6212 = vadd.f32 %v6205, 1.0
  %v6213 = vrcp.pop %v6206
  %v6214 = vmul.f32 1.0, %v6213
  %v6215 = vrcp.pop %v6207
  %v6216 = vmul.f32 1.0, %v6215
  %v6217 = vrcp.pop %v6208
  %v6218 = vmul.f32 1.0, %v6217
  %v6219 = vrcp.pop %v6209
  %v6220 = vmul.f32 1.0, %v6219
  %v6221 = vrcp.pop %v6210
  %v6222 = vmul.f32 1.0, %v6221
  %v6223 = vrcp.pop %v6211
  %v6224 = vmul.f32 1.0, %v6223
  %v6225 = vrcp.pop %v6212
  %v6226 = vmul.f32 1.0, %v6225
  %6228 = vset.pattern.permute.xlu0 0
  %6229 = vperm.xlu0 %6228, %v6214
  %v6230 = vpop.permute.xlu0 %6229
  %6233 = vset.pattern.permute.xlu0 0
  %6234 = vperm.xlu0 %6233, %v6216
  %v6235 = vpop.permute.xlu0 %6234
  %6238 = vset.pattern.permute.xlu0 0
  %6239 = vperm.xlu0 %6238, %v6218
  %v6240 = vpop.permute.xlu0 %6239
  %6243 = vset.pattern.permute.xlu0 0
  %6244 = vperm.xlu0 %6243, %v6220
  %v6245 = vpop.permute.xlu0 %6244
  %6248 = vset.pattern.permute.xlu0 0
  %6249 = vperm.xlu0 %6248, %v6222
  %v6250 = vpop.permute.xlu0 %6249
  %6253 = vset.pattern.permute.xlu0 0
  %6254 = vperm.xlu0 %6253, %v6224
  %v6255 = vpop.permute.xlu0 %6254
  %6258 = vset.pattern.permute.xlu0 0
  %6259 = vperm.xlu0 %6258, %v6226
  %v6260 = vpop.permute.xlu0 %6259
  %v6262 = vmul.f32 %v6127, %v6230
  %v6263 = vmul.f32 %v6128, %v6235
  %v6264 = vmul.f32 %v6129, %v6240
  %v6265 = vmul.f32 %v6130, %v6245
  %v6266 = vmul.f32 %v6131, %v6250
  %v6267 = vmul.f32 %v6132, %v6255
  %v6268 = vmul.f32 %v6133, %v6260
  %s6269 = scalar_lea.vmem %s45, 96
  %v6270 = vld [vmem:[%s6269] sm:$0xff]
  %v6271 = vld [vmem:[%s6269 + $0x8] sm:$0xff]
  %v6272 = vld [vmem:[%s6269 + $0x10] sm:$0xff]
  %v6273 = vld [vmem:[%s6269 + $0x18] sm:$0x3]
  %s6274 = scalar_lea.vmem %s47, 3
  %v6275 = vld [vmem:[%s6274] sm:$0x1]
  %v6277 = vlaneseq
  %v6278 = vshrl.u32 %v6277, 7
  %v6279 = vsub.s32 0, %v6278
  %v6280 = vrot.slane %v6275, %v6279
  %v6283 = vsel %vm162, %v6262, 0
  %v6286 = vsel %vm162, %v6263, 0
  %v6289 = vsel %vm162, %v6264, 0
  %v6292 = vsel %vm162, %v6265, 0
  %v6295 = vsel %vm162, %v6266, 0
  %v6298 = vsel %vm162, %v6267, 0
  %v6301 = vsel %vm162, %v6268, 0
  %v6304 = vsel %vm166, %v6273, 0
  %6306 = vmatprep.subr.mxu0 0.0
  %6307 = vmatpush1.msra.mxu0 0.0
  %6308 = vmatprep.subr.mxu0 0.0
  %6309 = vmatpush1.msra.mxu0 0.0
  %6310 = vmatprep.subr.mxu0 0.0
  %6311 = vmatpush1.msra.mxu0 0.0
  %6312 = vmatprep.subr.mxu0 0.0
  %6313 = vmatpush1.msra.mxu0 0.0
  %6314 = vmatprep.subr.mxu0 0.0
  %6315 = vmatpush1.msra.mxu0 0.0
  %6316 = vmatprep.subr.mxu0 0.0
  %6317 = vmatpush1.msra.mxu0 0.0
  %6318 = vmatprep.subr.mxu0 0.0
  %6319 = vmatpush1.msra.mxu0 0.0
  %6320 = vmatprep.subr.mxu0 0.0
  %6321 = vmatpush1.msra.mxu0 0.0
  %6322 = vmatprep.subr.mxu0 0.0
  %6323 = vmatpush1.msra.mxu0 0.0
  %6324 = vmatprep.subr.mxu0 0.0
  %6325 = vmatpush1.msra.mxu0 0.0
  %6326 = vmatprep.subr.mxu0 0.0
  %6327 = vmatpush1.msra.mxu0 0.0
  %6328 = vmatprep.subr.mxu0 0.0
  %6329 = vmatpush1.msra.mxu0 0.0
  %6330 = vmatprep.subr.mxu0 0.0
  %6331 = vmatpush1.msra.mxu0 %v6304
  %6332 = vmatprep.subr.mxu0 0.0
  %6333 = vmatpush1.msra.mxu0 %v6272
  %6334 = vmatprep.subr.mxu0 0.0
  %6335 = vmatpush1.msra.mxu0 %v6271
  %6336 = vmatprep.subr.mxu0 0.0
  %6337 = vmatpush1.msra.mxu0 %v6270
  %6338 = vmatprep.subr.mxu0 0.0
  %6339 = vmatpush2.msra.mxu0 0.0
  %6340 = vmatprep.subr.mxu0 0.0
  %6341 = vmatpush2.msra.mxu0 0.0
  %6342 = vmatprep.subr.mxu0 0.0
  %6343 = vmatpush2.msra.mxu0 0.0
  %6344 = vmatprep.subr.mxu0 0.0
  %6345 = vmatpush2.msra.mxu0 0.0
  %6346 = vmatprep.subr.mxu0 0.0
  %6347 = vmatpush2.msra.mxu0 0.0
  %6348 = vmatprep.subr.mxu0 0.0
  %6349 = vmatpush2.msra.mxu0 0.0
  %6350 = vmatprep.subr.mxu0 0.0
  %6351 = vmatpush2.msra.mxu0 0.0
  %6352 = vmatprep.subr.mxu0 0.0
  %6353 = vmatpush2.msra.mxu0 0.0
  %6354 = vmatprep.subr.mxu0 0.0
  %6355 = vmatpush2.msra.mxu0 0.0
  %6356 = vmatprep.subr.mxu0 0.0
  %6357 = vmatpush2.msra.mxu0 0.0
  %6358 = vmatprep.subr.mxu0 0.0
  %6359 = vmatpush2.msra.mxu0 0.0
  %6360 = vmatprep.subr.mxu0 0.0
  %6361 = vmatpush2.msra.mxu0 0.0
  %6362 = vmatprep.subr.mxu0 0.0
  %6363 = vmatpush2.msra.mxu0 0.0
  %6364 = vmatprep.subr.mxu0 0.0
  %6365 = vmatpush2.msra.mxu0 0.0
  %6366 = vmatprep.subr.mxu0 0.0
  %6367 = vmatpush2.msra.mxu0 0.0
  %6368 = vmatprep.subr.mxu0 0.0
  %6369 = vmatpush2.msra.mxu0 0.0
  %6370 = vmatprep.mubr.f32.mxu0 0.0
  %6371 = vmatmul.mubr.f32.gmra.mxu0 %v6283
  %v6372 = vpop.f32.mrf.mxu0
  %v6373 = vadd.f32 %v6280, %v6372
  %v6374 = vpop.f32.mrf.mxu0
  %6375 = vmatprep.mubr.f32.mxu0 0.0
  %6376 = vmatmul.mubr.f32.gmra.mxu0 %v6286
  %v6377 = vpop.f32.mrf.mxu0
  %v6378 = vadd.f32 %v6280, %v6377
  %v6379 = vpop.f32.mrf.mxu0
  %6380 = vmatprep.mubr.f32.mxu0 0.0
  %6381 = vmatmul.mubr.f32.gmra.mxu0 %v6289
  %v6382 = vpop.f32.mrf.mxu0
  %v6383 = vadd.f32 %v6280, %v6382
  %v6384 = vpop.f32.mrf.mxu0
  %6385 = vmatprep.mubr.f32.mxu0 0.0
  %6386 = vmatmul.mubr.f32.gmra.mxu0 %v6292
  %v6387 = vpop.f32.mrf.mxu0
  %v6388 = vadd.f32 %v6280, %v6387
  %v6389 = vpop.f32.mrf.mxu0
  %6390 = vmatprep.mubr.f32.mxu0 0.0
  %6391 = vmatmul.mubr.f32.gmra.mxu0 %v6295
  %v6392 = vpop.f32.mrf.mxu0
  %v6393 = vadd.f32 %v6280, %v6392
  %v6394 = vpop.f32.mrf.mxu0
  %6395 = vmatprep.mubr.f32.mxu0 0.0
  %6396 = vmatmul.mubr.f32.gmra.mxu0 %v6298
  %v6397 = vpop.f32.mrf.mxu0
  %v6398 = vadd.f32 %v6280, %v6397
  %v6399 = vpop.f32.mrf.mxu0
  %6400 = vmatprep.mubr.f32.mxu0 0.0
  %6401 = vmatmul.mubr.f32.gmra.mxu0 %v6301
  %v6402 = vpop.f32.mrf.mxu0
  %v6403 = vadd.f32 %v6280, %v6402
  %v6404 = vpop.f32.mrf.mxu0
  %6405 = vdwg.mxu0
  %v6406 = vxor.u32 %v6373, 2147483648
  %v6407 = vxor.u32 %v6378, 2147483648
  %v6408 = vxor.u32 %v6383, 2147483648
  %v6409 = vxor.u32 %v6388, 2147483648
  %v6410 = vxor.u32 %v6393, 2147483648
  %v6411 = vxor.u32 %v6398, 2147483648
  %v6412 = vxor.u32 %v6403, 2147483648
  %v6413 = vmul.f32 %v6406, 1.442695
  %v6414 = vpow.pop %v6413
  %v6415 = vmul.f32 %v6407, 1.442695
  %v6416 = vpow.pop %v6415
  %v6417 = vmul.f32 %v6408, 1.442695
  %v6418 = vpow.pop %v6417
  %v6419 = vmul.f32 %v6409, 1.442695
  %v6420 = vpow.pop %v6419
  %v6421 = vmul.f32 %v6410, 1.442695
  %v6422 = vpow.pop %v6421
  %v6423 = vmul.f32 %v6411, 1.442695
  %v6424 = vpow.pop %v6423
  %v6425 = vmul.f32 %v6412, 1.442695
  %v6426 = vpow.pop %v6425
  %v6427 = vadd.f32 %v6414, 1.0
  %v6428 = vadd.f32 %v6416, 1.0
  %v6429 = vadd.f32 %v6418, 1.0
  %v6430 = vadd.f32 %v6420, 1.0
  %v6431 = vadd.f32 %v6422, 1.0
  %v6432 = vadd.f32 %v6424, 1.0
  %v6433 = vadd.f32 %v6426, 1.0
  %v6434 = vrcp.pop %v6427
  %v6435 = vmul.f32 1.0, %v6434
  %v6436 = vrcp.pop %v6428
  %v6437 = vmul.f32 1.0, %v6436
  %v6438 = vrcp.pop %v6429
  %v6439 = vmul.f32 1.0, %v6438
  %v6440 = vrcp.pop %v6430
  %v6441 = vmul.f32 1.0, %v6440
  %v6442 = vrcp.pop %v6431
  %v6443 = vmul.f32 1.0, %v6442
  %v6444 = vrcp.pop %v6432
  %v6445 = vmul.f32 1.0, %v6444
  %v6446 = vrcp.pop %v6433
  %v6447 = vmul.f32 1.0, %v6446
  %v6448 = vmul.f32 %v6373, %v6435
  %v6449 = vmul.f32 %v6378, %v6437
  %v6450 = vmul.f32 %v6383, %v6439
  %v6451 = vmul.f32 %v6388, %v6441
  %v6452 = vmul.f32 %v6393, %v6443
  %v6453 = vmul.f32 %v6398, %v6445
  %v6454 = vmul.f32 %v6403, %v6447
  %s6455 = scalar_lea.vmem %s49, 3
  %v6456 = vld [vmem:[%s6455] sm:$0x1]
  %v6458 = vlaneseq
  %v6459 = vshrl.u32 %v6458, 7
  %v6460 = vsub.s32 0, %v6459
  %v6461 = vrot.slane %v6456, %v6460
  %v6463 = vmul.f32 %v6448, %v6461
  %v6464 = vmul.f32 %v6449, %v6461
  %v6465 = vmul.f32 %v6450, %v6461
  %v6466 = vmul.f32 %v6451, %v6461
  %v6467 = vmul.f32 %v6452, %v6461
  %v6468 = vmul.f32 %v6453, %v6461
  %v6469 = vmul.f32 %v6454, %v6461
  %v6470 = vsel %vm162, %v6463, 0.0
  %6471 = vadd.xlane.f32.xlu0 %v6470
  %v6472 = vpop.xlane.xlu0 %6471
  %v6473 = vsel %vm162, %v6464, 0.0
  %6474 = vadd.xlane.f32.xlu0 %v6473
  %v6475 = vpop.xlane.xlu0 %6474
  %v6476 = vsel %vm162, %v6465, 0.0
  %6477 = vadd.xlane.f32.xlu0 %v6476
  %v6478 = vpop.xlane.xlu0 %6477
  %v6479 = vsel %vm162, %v6466, 0.0
  %6480 = vadd.xlane.f32.xlu0 %v6479
  %v6481 = vpop.xlane.xlu0 %6480
  %v6482 = vsel %vm162, %v6467, 0.0
  %6483 = vadd.xlane.f32.xlu0 %v6482
  %v6484 = vpop.xlane.xlu0 %6483
  %v6485 = vsel %vm162, %v6468, 0.0
  %6486 = vadd.xlane.f32.xlu0 %v6485
  %v6487 = vpop.xlane.xlu0 %6486
  %v6488 = vsel %vm162, %v6469, 0.0
  %6489 = vadd.xlane.f32.xlu0 %v6488
  %v6490 = vpop.xlane.xlu0 %6489
  %v6491 = vmul.f32 %v5755, %v6472
  %v6492 = vmul.f32 %v5756, %v6475
  %v6493 = vmul.f32 %v5757, %v6478
  %v6494 = vmul.f32 %v5758, %v6481
  %v6495 = vmul.f32 %v5759, %v6484
  %v6496 = vmul.f32 %v5760, %v6487
  %v6497 = vmul.f32 %v5761, %v6490
  %6498 = vmatprep.subr.mxu0 0.0
  %6499 = vmatpush1.msra.mxu0 0.0
  %6500 = vmatprep.subr.mxu0 0.0
  %6501 = vmatpush1.msra.mxu0 0.0
  %6502 = vmatprep.subr.mxu0 0.0
  %6503 = vmatpush1.msra.mxu0 0.0
  %6504 = vmatprep.subr.mxu0 0.0
  %6505 = vmatpush1.msra.mxu0 0.0
  %6506 = vmatprep.subr.mxu0 0.0
  %6507 = vmatpush1.msra.mxu0 0.0
  %6508 = vmatprep.subr.mxu0 0.0
  %6509 = vmatpush1.msra.mxu0 0.0
  %6510 = vmatprep.subr.mxu0 0.0
  %6511 = vmatpush1.msra.mxu0 0.0
  %6512 = vmatprep.subr.mxu0 0.0
  %6513 = vmatpush1.msra.mxu0 0.0
  %6514 = vmatprep.subr.mxu0 0.0
  %6515 = vmatpush1.msra.mxu0 0.0
  %6516 = vmatprep.subr.mxu0 0.0
  %6517 = vmatpush1.msra.mxu0 %v6497
  %6518 = vmatprep.subr.mxu0 0.0
  %6519 = vmatpush1.msra.mxu0 %v6496
  %6520 = vmatprep.subr.mxu0 0.0
  %6521 = vmatpush1.msra.mxu0 %v6495
  %6522 = vmatprep.subr.mxu0 0.0
  %6523 = vmatpush1.msra.mxu0 %v6494
  %6524 = vmatprep.subr.mxu0 0.0
  %6525 = vmatpush1.msra.mxu0 %v6493
  %6526 = vmatprep.subr.mxu0 0.0
  %6527 = vmatpush1.msra.mxu0 %v6492
  %6528 = vmatprep.subr.mxu0 0.0
  %6529 = vmatpush1.msra.mxu0 %v6491
  %6530 = vmatprep.subr.mxu0 0.0
  %6531 = vmatpush2.msra.mxu0 0.0
  %6532 = vmatprep.subr.mxu0 0.0
  %6533 = vmatpush2.msra.mxu0 0.0
  %6534 = vmatprep.subr.mxu0 0.0
  %6535 = vmatpush2.msra.mxu0 0.0
  %6536 = vmatprep.subr.mxu0 0.0
  %6537 = vmatpush2.msra.mxu0 0.0
  %6538 = vmatprep.subr.mxu0 0.0
  %6539 = vmatpush2.msra.mxu0 0.0
  %6540 = vmatprep.subr.mxu0 0.0
  %6541 = vmatpush2.msra.mxu0 0.0
  %6542 = vmatprep.subr.mxu0 0.0
  %6543 = vmatpush2.msra.mxu0 0.0
  %6544 = vmatprep.subr.mxu0 0.0
  %6545 = vmatpush2.msra.mxu0 0.0
  %6546 = vmatprep.subr.mxu0 0.0
  %6547 = vmatpush2.msra.mxu0 0.0
  %6548 = vmatprep.subr.mxu0 0.0
  %6549 = vmatpush2.msra.mxu0 0.0
  %6550 = vmatprep.subr.mxu0 0.0
  %6551 = vmatpush2.msra.mxu0 0.0
  %6552 = vmatprep.subr.mxu0 0.0
  %6553 = vmatpush2.msra.mxu0 0.0
  %6554 = vmatprep.subr.mxu0 0.0
  %6555 = vmatpush2.msra.mxu0 0.0
  %6556 = vmatprep.subr.mxu0 0.0
  %6557 = vmatpush2.msra.mxu0 0.0
  %6558 = vmatprep.subr.mxu0 0.0
  %6559 = vmatpush2.msra.mxu0 0.0
  %6560 = vmatprep.subr.mxu0 0.0
  %6561 = vmatpush2.msra.mxu0 0.0
  %6562 = vmatprep.mubr.f32.mxu0 0.0
  %6563 = vmatmul.mubr.f32.gmra.mxu0 %v1527
  %v6564 = vpop.f32.mrf.mxu0
  %v6565 = vadd.f32 0.0, %v6564
  %v6566 = vpop.f32.mrf.mxu0
  %6567 = vdwg.mxu0
  %v6568 = vadd.f32 %v4911, %v6565
  %6569 = vmatprep.subr.mxu0 0.0
  %6570 = vmatpush1.msra.mxu0 0.0
  %6571 = vmatprep.subr.mxu0 0.0
  %6572 = vmatpush1.msra.mxu0 0.0
  %6573 = vmatprep.subr.mxu0 0.0
  %6574 = vmatpush1.msra.mxu0 0.0
  %6575 = vmatprep.subr.mxu0 0.0
  %6576 = vmatpush1.msra.mxu0 0.0
  %6577 = vmatprep.subr.mxu0 0.0
  %6578 = vmatpush1.msra.mxu0 0.0
  %6579 = vmatprep.subr.mxu0 0.0
  %6580 = vmatpush1.msra.mxu0 0.0
  %6581 = vmatprep.subr.mxu0 0.0
  %6582 = vmatpush1.msra.mxu0 0.0
  %6583 = vmatprep.subr.mxu0 0.0
  %6584 = vmatpush1.msra.mxu0 0.0
  %6585 = vmatprep.subr.mxu0 0.0
  %6586 = vmatpush1.msra.mxu0 0.0
  %6587 = vmatprep.subr.mxu0 0.0
  %6588 = vmatpush1.msra.mxu0 %v6268
  %6589 = vmatprep.subr.mxu0 0.0
  %6590 = vmatpush1.msra.mxu0 %v6267
  %6591 = vmatprep.subr.mxu0 0.0
  %6592 = vmatpush1.msra.mxu0 %v6266
  %6593 = vmatprep.subr.mxu0 0.0
  %6594 = vmatpush1.msra.mxu0 %v6265
  %6595 = vmatprep.subr.mxu0 0.0
  %6596 = vmatpush1.msra.mxu0 %v6264
  %6597 = vmatprep.subr.mxu0 0.0
  %6598 = vmatpush1.msra.mxu0 %v6263
  %6599 = vmatprep.subr.mxu0 0.0
  %6600 = vmatpush1.msra.mxu0 %v6262
  %6601 = vmatprep.subr.mxu0 0.0
  %6602 = vmatpush2.msra.mxu0 0.0
  %6603 = vmatprep.subr.mxu0 0.0
  %6604 = vmatpush2.msra.mxu0 0.0
  %6605 = vmatprep.subr.mxu0 0.0
  %6606 = vmatpush2.msra.mxu0 0.0
  %6607 = vmatprep.subr.mxu0 0.0
  %6608 = vmatpush2.msra.mxu0 0.0
  %6609 = vmatprep.subr.mxu0 0.0
  %6610 = vmatpush2.msra.mxu0 0.0
  %6611 = vmatprep.subr.mxu0 0.0
  %6612 = vmatpush2.msra.mxu0 0.0
  %6613 = vmatprep.subr.mxu0 0.0
  %6614 = vmatpush2.msra.mxu0 0.0
  %6615 = vmatprep.subr.mxu0 0.0
  %6616 = vmatpush2.msra.mxu0 0.0
  %6617 = vmatprep.subr.mxu0 0.0
  %6618 = vmatpush2.msra.mxu0 0.0
  %6619 = vmatprep.subr.mxu0 0.0
  %6620 = vmatpush2.msra.mxu0 0.0
  %6621 = vmatprep.subr.mxu0 0.0
  %6622 = vmatpush2.msra.mxu0 0.0
  %6623 = vmatprep.subr.mxu0 0.0
  %6624 = vmatpush2.msra.mxu0 0.0
  %6625 = vmatprep.subr.mxu0 0.0
  %6626 = vmatpush2.msra.mxu0 0.0
  %6627 = vmatprep.subr.mxu0 0.0
  %6628 = vmatpush2.msra.mxu0 0.0
  %6629 = vmatprep.subr.mxu0 0.0
  %6630 = vmatpush2.msra.mxu0 0.0
  %6631 = vmatprep.subr.mxu0 0.0
  %6632 = vmatpush2.msra.mxu0 0.0
  %6633 = vmatprep.mubr.f32.mxu0 0.0
  %6634 = vmatmul.mubr.f32.gmra.mxu0 %v1601
  %v6635 = vpop.f32.mrf.mxu0
  %v6636 = vadd.f32 0.0, %v6635
  %v6637 = vpop.f32.mrf.mxu0
  %6638 = vdwg.mxu0
  %s6639 = scalar_lea.vmem %s51, 96
  %v6640 = vld [vmem:[%s6639] sm:$0xff]
  %v6641 = vld [vmem:[%s6639 + $0x8] sm:$0xff]
  %v6642 = vld [vmem:[%s6639 + $0x10] sm:$0xff]
  %v6643 = vld [vmem:[%s6639 + $0x18] sm:$0x3]
  %s6644 = scalar_lea.vmem %s53, 96
  %v6645 = vld [vmem:[%s6644] sm:$0xff]
  %v6646 = vld [vmem:[%s6644 + $0x8] sm:$0xff]
  %v6647 = vld [vmem:[%s6644 + $0x10] sm:$0xff]
  %v6648 = vld [vmem:[%s6644 + $0x18] sm:$0x3]
  %v6650 = vsel %vm162, %v6636, 0
  %v6653 = vsel %vm166, %v6648, 0
  %6655 = vmatprep.subr.mxu0 0.0
  %6656 = vmatpush1.msra.mxu0 0.0
  %6657 = vmatprep.subr.mxu0 0.0
  %6658 = vmatpush1.msra.mxu0 0.0
  %6659 = vmatprep.subr.mxu0 0.0
  %6660 = vmatpush1.msra.mxu0 0.0
  %6661 = vmatprep.subr.mxu0 0.0
  %6662 = vmatpush1.msra.mxu0 0.0
  %6663 = vmatprep.subr.mxu0 0.0
  %6664 = vmatpush1.msra.mxu0 0.0
  %6665 = vmatprep.subr.mxu0 0.0
  %6666 = vmatpush1.msra.mxu0 0.0
  %6667 = vmatprep.subr.mxu0 0.0
  %6668 = vmatpush1.msra.mxu0 0.0
  %6669 = vmatprep.subr.mxu0 0.0
  %6670 = vmatpush1.msra.mxu0 0.0
  %6671 = vmatprep.subr.mxu0 0.0
  %6672 = vmatpush1.msra.mxu0 0.0
  %6673 = vmatprep.subr.mxu0 0.0
  %6674 = vmatpush1.msra.mxu0 0.0
  %6675 = vmatprep.subr.mxu0 0.0
  %6676 = vmatpush1.msra.mxu0 0.0
  %6677 = vmatprep.subr.mxu0 0.0
  %6678 = vmatpush1.msra.mxu0 0.0
  %6679 = vmatprep.subr.mxu0 0.0
  %6680 = vmatpush1.msra.mxu0 %v6653
  %6681 = vmatprep.subr.mxu0 0.0
  %6682 = vmatpush1.msra.mxu0 %v6647
  %6683 = vmatprep.subr.mxu0 0.0
  %6684 = vmatpush1.msra.mxu0 %v6646
  %6685 = vmatprep.subr.mxu0 0.0
  %6686 = vmatpush1.msra.mxu0 %v6645
  %6687 = vmatprep.subr.mxu0 0.0
  %6688 = vmatpush2.msra.mxu0 0.0
  %6689 = vmatprep.subr.mxu0 0.0
  %6690 = vmatpush2.msra.mxu0 0.0
  %6691 = vmatprep.subr.mxu0 0.0
  %6692 = vmatpush2.msra.mxu0 0.0
  %6693 = vmatprep.subr.mxu0 0.0
  %6694 = vmatpush2.msra.mxu0 0.0
  %6695 = vmatprep.subr.mxu0 0.0
  %6696 = vmatpush2.msra.mxu0 0.0
  %6697 = vmatprep.subr.mxu0 0.0
  %6698 = vmatpush2.msra.mxu0 0.0
  %6699 = vmatprep.subr.mxu0 0.0
  %6700 = vmatpush2.msra.mxu0 0.0
  %6701 = vmatprep.subr.mxu0 0.0
  %6702 = vmatpush2.msra.mxu0 0.0
  %6703 = vmatprep.subr.mxu0 0.0
  %6704 = vmatpush2.msra.mxu0 0.0
  %6705 = vmatprep.subr.mxu0 0.0
  %6706 = vmatpush2.msra.mxu0 0.0
  %6707 = vmatprep.subr.mxu0 0.0
  %6708 = vmatpush2.msra.mxu0 0.0
  %6709 = vmatprep.subr.mxu0 0.0
  %6710 = vmatpush2.msra.mxu0 0.0
  %6711 = vmatprep.subr.mxu0 0.0
  %6712 = vmatpush2.msra.mxu0 0.0
  %6713 = vmatprep.subr.mxu0 0.0
  %6714 = vmatpush2.msra.mxu0 0.0
  %6715 = vmatprep.subr.mxu0 0.0
  %6716 = vmatpush2.msra.mxu0 0.0
  %6717 = vmatprep.subr.mxu0 0.0
  %6718 = vmatpush2.msra.mxu0 0.0
  %6719 = vmatprep.mubr.f32.mxu0 0.0
  %6720 = vmatmul.mubr.f32.gmra.mxu0 %v6650
  %v6721 = vpop.f32.mrf.mxu0
  %v6722 = vadd.f32 0.0, %v6721
  %v6723 = vpop.f32.mrf.mxu0
  %6724 = vdwg.mxu0
  %v6726 = vsel %vm166, %v6643, 0
  %6728 = vmatprep.subr.mxu0 0.0
  %6729 = vmatpush1.msra.mxu0 0.0
  %6730 = vmatprep.subr.mxu0 0.0
  %6731 = vmatpush1.msra.mxu0 0.0
  %6732 = vmatprep.subr.mxu0 0.0
  %6733 = vmatpush1.msra.mxu0 0.0
  %6734 = vmatprep.subr.mxu0 0.0
  %6735 = vmatpush1.msra.mxu0 0.0
  %6736 = vmatprep.subr.mxu0 0.0
  %6737 = vmatpush1.msra.mxu0 0.0
  %6738 = vmatprep.subr.mxu0 0.0
  %6739 = vmatpush1.msra.mxu0 0.0
  %6740 = vmatprep.subr.mxu0 0.0
  %6741 = vmatpush1.msra.mxu0 0.0
  %6742 = vmatprep.subr.mxu0 0.0
  %6743 = vmatpush1.msra.mxu0 0.0
  %6744 = vmatprep.subr.mxu0 0.0
  %6745 = vmatpush1.msra.mxu0 0.0
  %6746 = vmatprep.subr.mxu0 0.0
  %6747 = vmatpush1.msra.mxu0 0.0
  %6748 = vmatprep.subr.mxu0 0.0
  %6749 = vmatpush1.msra.mxu0 0.0
  %6750 = vmatprep.subr.mxu0 0.0
  %6751 = vmatpush1.msra.mxu0 0.0
  %6752 = vmatprep.subr.mxu0 0.0
  %6753 = vmatpush1.msra.mxu0 %v6726
  %6754 = vmatprep.subr.mxu0 0.0
  %6755 = vmatpush1.msra.mxu0 %v6642
  %6756 = vmatprep.subr.mxu0 0.0
  %6757 = vmatpush1.msra.mxu0 %v6641
  %6758 = vmatprep.subr.mxu0 0.0
  %6759 = vmatpush1.msra.mxu0 %v6640
  %6760 = vmatprep.subr.mxu0 0.0
  %6761 = vmatpush2.msra.mxu0 0.0
  %6762 = vmatprep.subr.mxu0 0.0
  %6763 = vmatpush2.msra.mxu0 0.0
  %6764 = vmatprep.subr.mxu0 0.0
  %6765 = vmatpush2.msra.mxu0 0.0
  %6766 = vmatprep.subr.mxu0 0.0
  %6767 = vmatpush2.msra.mxu0 0.0
  %6768 = vmatprep.subr.mxu0 0.0
  %6769 = vmatpush2.msra.mxu0 0.0
  %6770 = vmatprep.subr.mxu0 0.0
  %6771 = vmatpush2.msra.mxu0 0.0
  %6772 = vmatprep.subr.mxu0 0.0
  %6773 = vmatpush2.msra.mxu0 0.0
  %6774 = vmatprep.subr.mxu0 0.0
  %6775 = vmatpush2.msra.mxu0 0.0
  %6776 = vmatprep.subr.mxu0 0.0
  %6777 = vmatpush2.msra.mxu0 0.0
  %6778 = vmatprep.subr.mxu0 0.0
  %6779 = vmatpush2.msra.mxu0 0.0
  %6780 = vmatprep.subr.mxu0 0.0
  %6781 = vmatpush2.msra.mxu0 0.0
  %6782 = vmatprep.subr.mxu0 0.0
  %6783 = vmatpush2.msra.mxu0 0.0
  %6784 = vmatprep.subr.mxu0 0.0
  %6785 = vmatpush2.msra.mxu0 0.0
  %6786 = vmatprep.subr.mxu0 0.0
  %6787 = vmatpush2.msra.mxu0 0.0
  %6788 = vmatprep.subr.mxu0 0.0
  %6789 = vmatpush2.msra.mxu0 0.0
  %6790 = vmatprep.subr.mxu0 0.0
  %6791 = vmatpush2.msra.mxu0 0.0
  %6792 = vmatprep.mubr.f32.mxu0 0.0
  %6793 = vmatmul.mubr.f32.gmra.mxu0 %v5253
  %v6794 = vpop.f32.mrf.mxu0
  %v6795 = vadd.f32 %v6722, %v6794
  %v6796 = vpop.f32.mrf.mxu0
  %6797 = vdwg.mxu0
  %s6798 = scalar_lea.vmem %s55, 3
  %v6799 = vld [vmem:[%s6798] sm:$0x1]
  %v6801 = vlaneseq
  %v6802 = vshrl.u32 %v6801, 7
  %v6803 = vsub.s32 0, %v6802
  %v6804 = vrot.slane %v6799, %v6803
  %v6806 = vadd.f32 %v6795, %v6804
  %v6807 = vxor.u32 %v6806, 2147483648
  %v6808 = vmul.f32 %v6807, 1.442695
  %v6809 = vpow.pop %v6808
  %v6810 = vadd.f32 %v6809, 1.0
  %v6811 = vrcp.pop %v6810
  %v6812 = vmul.f32 1.0, %v6811
  %v6813 = vmul.f32 %v6806, %v6812
  %s6814 = scalar_lea.vmem %s57, 96
  %v6815 = vld [vmem:[%s6814] sm:$0xff]
  %v6816 = vld [vmem:[%s6814 + $0x8] sm:$0xff]
  %v6817 = vld [vmem:[%s6814 + $0x10] sm:$0xff]
  %v6818 = vld [vmem:[%s6814 + $0x18] sm:$0x3]
  %s6819 = scalar_lea.vmem %s59, 3
  %v6820 = vld [vmem:[%s6819] sm:$0x1]
  %v6822 = vlaneseq
  %v6823 = vshrl.u32 %v6822, 7
  %v6824 = vsub.s32 0, %v6823
  %v6825 = vrot.slane %v6820, %v6824
  %v6828 = vsel %vm162, %v6813, 0
  %v6831 = vsel %vm166, %v6818, 0
  %6833 = vmatprep.subr.mxu0 0.0
  %6834 = vmatpush1.msra.mxu0 0.0
  %6835 = vmatprep.subr.mxu0 0.0
  %6836 = vmatpush1.msra.mxu0 0.0
  %6837 = vmatprep.subr.mxu0 0.0
  %6838 = vmatpush1.msra.mxu0 0.0
  %6839 = vmatprep.subr.mxu0 0.0
  %6840 = vmatpush1.msra.mxu0 0.0
  %6841 = vmatprep.subr.mxu0 0.0
  %6842 = vmatpush1.msra.mxu0 0.0
  %6843 = vmatprep.subr.mxu0 0.0
  %6844 = vmatpush1.msra.mxu0 0.0
  %6845 = vmatprep.subr.mxu0 0.0
  %6846 = vmatpush1.msra.mxu0 0.0
  %6847 = vmatprep.subr.mxu0 0.0
  %6848 = vmatpush1.msra.mxu0 0.0
  %6849 = vmatprep.subr.mxu0 0.0
  %6850 = vmatpush1.msra.mxu0 0.0
  %6851 = vmatprep.subr.mxu0 0.0
  %6852 = vmatpush1.msra.mxu0 0.0
  %6853 = vmatprep.subr.mxu0 0.0
  %6854 = vmatpush1.msra.mxu0 0.0
  %6855 = vmatprep.subr.mxu0 0.0
  %6856 = vmatpush1.msra.mxu0 0.0
  %6857 = vmatprep.subr.mxu0 0.0
  %6858 = vmatpush1.msra.mxu0 %v6831
  %6859 = vmatprep.subr.mxu0 0.0
  %6860 = vmatpush1.msra.mxu0 %v6817
  %6861 = vmatprep.subr.mxu0 0.0
  %6862 = vmatpush1.msra.mxu0 %v6816
  %6863 = vmatprep.subr.mxu0 0.0
  %6864 = vmatpush1.msra.mxu0 %v6815
  %6865 = vmatprep.subr.mxu0 0.0
  %6866 = vmatpush2.msra.mxu0 0.0
  %6867 = vmatprep.subr.mxu0 0.0
  %6868 = vmatpush2.msra.mxu0 0.0
  %6869 = vmatprep.subr.mxu0 0.0
  %6870 = vmatpush2.msra.mxu0 0.0
  %6871 = vmatprep.subr.mxu0 0.0
  %6872 = vmatpush2.msra.mxu0 0.0
  %6873 = vmatprep.subr.mxu0 0.0
  %6874 = vmatpush2.msra.mxu0 0.0
  %6875 = vmatprep.subr.mxu0 0.0
  %6876 = vmatpush2.msra.mxu0 0.0
  %6877 = vmatprep.subr.mxu0 0.0
  %6878 = vmatpush2.msra.mxu0 0.0
  %6879 = vmatprep.subr.mxu0 0.0
  %6880 = vmatpush2.msra.mxu0 0.0
  %6881 = vmatprep.subr.mxu0 0.0
  %6882 = vmatpush2.msra.mxu0 0.0
  %6883 = vmatprep.subr.mxu0 0.0
  %6884 = vmatpush2.msra.mxu0 0.0
  %6885 = vmatprep.subr.mxu0 0.0
  %6886 = vmatpush2.msra.mxu0 0.0
  %6887 = vmatprep.subr.mxu0 0.0
  %6888 = vmatpush2.msra.mxu0 0.0
  %6889 = vmatprep.subr.mxu0 0.0
  %6890 = vmatpush2.msra.mxu0 0.0
  %6891 = vmatprep.subr.mxu0 0.0
  %6892 = vmatpush2.msra.mxu0 0.0
  %6893 = vmatprep.subr.mxu0 0.0
  %6894 = vmatpush2.msra.mxu0 0.0
  %6895 = vmatprep.subr.mxu0 0.0
  %6896 = vmatpush2.msra.mxu0 0.0
  %6897 = vmatprep.mubr.f32.mxu0 0.0
  %6898 = vmatmul.mubr.f32.gmra.mxu0 %v6828
  %v6899 = vpop.f32.mrf.mxu0
  %v6900 = vadd.f32 %v6825, %v6899
  %v6901 = vpop.f32.mrf.mxu0
  %6902 = vdwg.mxu0
  %v6903 = vadd.f32 %v5246, %v6900
  %v6904 = vld [vmem:[%s61] sm:$0xff]
  %v6905 = vld [vmem:[%s61 + $0x8] sm:$0xff]
  %v6906 = vld [vmem:[%s61 + $0x10] sm:$0xff]
  %v6907 = vld [vmem:[%s61 + $0x18] sm:$0x3]
  %v6908 = vld [vmem:[%s63] sm:$0x1]
  %v6910 = vlaneseq
  %v6911 = vshrl.u32 %v6910, 7
  %v6912 = vsub.s32 0, %v6911
  %v6913 = vrot.slane %v6908, %v6912
  %v6916 = vsel %vm162, %v6903, 0
  %v6919 = vsel %vm166, %v6907, 0
  %6921 = vmatprep.subr.mxu0 0.0
  %6922 = vmatpush1.msra.mxu0 0.0
  %6923 = vmatprep.subr.mxu0 0.0
  %6924 = vmatpush1.msra.mxu0 0.0
  %6925 = vmatprep.subr.mxu0 0.0
  %6926 = vmatpush1.msra.mxu0 0.0
  %6927 = vmatprep.subr.mxu0 0.0
  %6928 = vmatpush1.msra.mxu0 0.0
  %6929 = vmatprep.subr.mxu0 0.0
  %6930 = vmatpush1.msra.mxu0 0.0
  %6931 = vmatprep.subr.mxu0 0.0
  %6932 = vmatpush1.msra.mxu0 0.0
  %6933 = vmatprep.subr.mxu0 0.0
  %6934 = vmatpush1.msra.mxu0 0.0
  %6935 = vmatprep.subr.mxu0 0.0
  %6936 = vmatpush1.msra.mxu0 0.0
  %6937 = vmatprep.subr.mxu0 0.0
  %6938 = vmatpush1.msra.mxu0 0.0
  %6939 = vmatprep.subr.mxu0 0.0
  %6940 = vmatpush1.msra.mxu0 0.0
  %6941 = vmatprep.subr.mxu0 0.0
  %6942 = vmatpush1.msra.mxu0 0.0
  %6943 = vmatprep.subr.mxu0 0.0
  %6944 = vmatpush1.msra.mxu0 0.0
  %6945 = vmatprep.subr.mxu0 0.0
  %6946 = vmatpush1.msra.mxu0 %v6919
  %6947 = vmatprep.subr.mxu0 0.0
  %6948 = vmatpush1.msra.mxu0 %v6906
  %6949 = vmatprep.subr.mxu0 0.0
  %6950 = vmatpush1.msra.mxu0 %v6905
  %6951 = vmatprep.subr.mxu0 0.0
  %6952 = vmatpush1.msra.mxu0 %v6904
  %6953 = vmatprep.subr.mxu0 0.0
  %6954 = vmatpush2.msra.mxu0 0.0
  %6955 = vmatprep.subr.mxu0 0.0
  %6956 = vmatpush2.msra.mxu0 0.0
  %6957 = vmatprep.subr.mxu0 0.0
  %6958 = vmatpush2.msra.mxu0 0.0
  %6959 = vmatprep.subr.mxu0 0.0
  %6960 = vmatpush2.msra.mxu0 0.0
  %6961 = vmatprep.subr.mxu0 0.0
  %6962 = vmatpush2.msra.mxu0 0.0
  %6963 = vmatprep.subr.mxu0 0.0
  %6964 = vmatpush2.msra.mxu0 0.0
  %6965 = vmatprep.subr.mxu0 0.0
  %6966 = vmatpush2.msra.mxu0 0.0
  %6967 = vmatprep.subr.mxu0 0.0
  %6968 = vmatpush2.msra.mxu0 0.0
  %6969 = vmatprep.subr.mxu0 0.0
  %6970 = vmatpush2.msra.mxu0 0.0
  %6971 = vmatprep.subr.mxu0 0.0
  %6972 = vmatpush2.msra.mxu0 0.0
  %6973 = vmatprep.subr.mxu0 0.0
  %6974 = vmatpush2.msra.mxu0 0.0
  %6975 = vmatprep.subr.mxu0 0.0
  %6976 = vmatpush2.msra.mxu0 0.0
  %6977 = vmatprep.subr.mxu0 0.0
  %6978 = vmatpush2.msra.mxu0 0.0
  %6979 = vmatprep.subr.mxu0 0.0
  %6980 = vmatpush2.msra.mxu0 0.0
  %6981 = vmatprep.subr.mxu0 0.0
  %6982 = vmatpush2.msra.mxu0 0.0
  %6983 = vmatprep.subr.mxu0 0.0
  %6984 = vmatpush2.msra.mxu0 0.0
  %6985 = vmatprep.mubr.f32.mxu0 0.0
  %6986 = vmatmul.mubr.f32.gmra.mxu0 %v6916
  %v6987 = vpop.f32.mrf.mxu0
  %v6988 = vadd.f32 %v6913, %v6987
  %v6989 = vpop.f32.mrf.mxu0
  %6990 = vdwg.mxu0
  %v6991 = vlaneseq
  %v6992 = vand.u32 %v6991, 127
  %vm6993 = vcmp.lt.s32.totalorder %v6992, 20
  %v6994 = vsel %vm6993, %v6988, -1e+30
  %vm6995 = vcmask 187392
  %v6996 = vsel %vm6995, %v6994, -inf
  %6997 = vmax.xlane.f32.xlu0 %v6996
  %v6998 = vpop.xlane.xlu0 %6997
  %v6999 = vsub.f32 %v6988, %v6998
  %v7000 = vmul.f32 %v6999, 1.442695
  %v7001 = vpow.pop %v7000
  %v7002 = vsel %vm6993, %v7001, 0.0
  %v7003 = vsel %vm6995, %v7002, 0.0
  %7004 = vadd.xlane.f32.xlu0 %v7003
  %v7005 = vpop.xlane.xlu0 %7004
  %v7006 = vrcp.pop %v7005
  %v7007 = vmul.f32 %v7002, %v7006
  %v7008 = vld [vmem:[%s21] sm:$0xff]
  %v7009 = vmul.f32 %v7008, %v7007
  %v7010 = vld [vmem:[%s23] sm:$0xff]
  %v7011 = vadd.f32 %v7009, %v7010
  %v7012 = vsel %vm6995, %v7011, 0.0
  %7013 = vadd.xlane.f32.xlu0 %v7012
  %v7014 = vpop.xlane.xlu0 %7013
  %v7015 = vadd.f32 %v7014, 1e-08
  %v7016 = vrcp.pop %v7015
  %v7017 = vmul.f32 %v7011, %v7016
  %v7018 = vld [vmem:[%s19] sm:$0xff]
  %vm7019 = vcmp.gt.f32.partialorder %v7018, 0.0
  %v7020 = vmax.f32 %v7018, 1e-30
  %v7021 = vlog2.pop %v7020
  %v7022 = vmul.f32 %v7021, 0.6931472
  %v7023 = vmul.f32 %v7018, %v7022
  %v7024 = vsel %vm7019, %v7023, 0.0
  %v7025 = vadd.f32 %v7017, 1e-08
  %v7026 = vlog2.pop %v7025
  %v7027 = vmul.f32 %v7026, 0.6931472
  %v7028 = vmul.f32 %v7018, %v7027
  %v7029 = vsub.f32 %v7024, %v7028
  %v7030 = vsel %vm6995, %v7029, 0.0
  %7031 = vadd.xlane.f32.xlu0 %v7030
  %v7032 = vpop.xlane.xlu0 %7031
  %v7033 = vrot.slane %v7032, 4
  %v7034 = vadd.f32 %v7032, %v7033
  %v7035 = vrot.slane %v7034, 2
  %v7036 = vadd.f32 %v7034, %v7035
  %v7037 = vrot.slane %v7036, 1
  %v7038 = vadd.f32 %v7036, %v7037
  %v7039 = vrcp.pop 8.0
  %v7040 = vmul.f32 %v7038, %v7039
  %v7041 = vld [vmem:[%s13] sm:$0xff]
  %v7042 = vsub.f32 %v6568, %v7041
  %v7043 = vmul.f32 %v7042, %v7042
  %v7044 = vsel %vm755, %v7043, 0.0
  %7045 = vadd.xlane.f32.xlu0 %v7044
  %v7046 = vpop.xlane.xlu0 %7045
  %v7047 = vrot.slane %v7046, 4
  %v7048 = vadd.f32 %v7046, %v7047
  %v7049 = vrot.slane %v7048, 2
  %v7050 = vadd.f32 %v7048, %v7049
  %v7051 = vrot.slane %v7050, 1
  %v7052 = vadd.f32 %v7050, %v7051
  %v7053 = vmul.f32 %v7052, %v7039
  %vm7054 = vcmp.eq.s32.totalorder %v6992, 20
  %v7055 = vsel %vm7054, %v6988, 0.0
  %v7056 = vsel %vm6995, %v7055, 0.0
  %7057 = vadd.xlane.f32.xlu0 %v7056
  %v7058 = vpop.xlane.xlu0 %7057
  %vm7059 = vcmp.eq.s32.totalorder %v6992, 21
  %v7060 = vsel %vm7059, %v6988, 0.0
  %v7061 = vsel %vm6995, %v7060, 0.0
  %7062 = vadd.xlane.f32.xlu0 %v7061
  %v7063 = vpop.xlane.xlu0 %7062
  %vm7064 = vcmp.eq.s32.totalorder %v6992, 22
  %v7065 = vsel %vm7064, %v6988, 0.0
  %v7066 = vsel %vm6995, %v7065, 0.0
  %7067 = vadd.xlane.f32.xlu0 %v7066
  %v7068 = vpop.xlane.xlu0 %7067
  %v7069 = vmul.f32 %v7058, %v7058
  %v7070 = vadd.f32 %v7069, 1.0
  %v7071 = vmul.f32 %v7063, %v7063
  %v7072 = vadd.f32 %v7070, %v7071
  %v7073 = vmul.f32 %v7068, %v7068
  %v7074 = vadd.f32 %v7072, %v7073
  %v7075 = vrsqrt.pop %v7074
  %v7076 = vmul.f32 %v7058, %v7075
  %v7077 = vmul.f32 %v7063, %v7075
  %v7078 = vmul.f32 %v7068, %v7075
  %v7079 = vmul.f32 %v7075, %v7075
  %v7080 = vmul.f32 %v7076, %v7076
  %v7081 = vadd.f32 %v7079, %v7080
  %v7082 = vmul.f32 %v7077, %v7077
  %v7083 = vsub.f32 %v7081, %v7082
  %v7084 = vmul.f32 %v7078, %v7078
  %v7085 = vsub.f32 %v7083, %v7084
  %v7086 = vmul.f32 %v7076, %v7077
  %v7087 = vmul.f32 %v7075, %v7078
  %v7088 = vsub.f32 %v7086, %v7087
  %v7089 = vmul.f32 %v7088, 2.0
  %v7090 = vmul.f32 %v7076, %v7078
  %v7091 = vmul.f32 %v7075, %v7077
  %v7092 = vadd.f32 %v7090, %v7091
  %v7093 = vmul.f32 %v7092, 2.0
  %v7094 = vadd.f32 %v7086, %v7087
  %v7095 = vmul.f32 %v7094, 2.0
  %v7096 = vsub.f32 %v7079, %v7080
  %v7097 = vadd.f32 %v7096, %v7082
  %v7098 = vsub.f32 %v7097, %v7084
  %v7099 = vmul.f32 %v7077, %v7078
  %v7100 = vmul.f32 %v7075, %v7076
  %v7101 = vsub.f32 %v7099, %v7100
  %v7102 = vmul.f32 %v7101, 2.0
  %v7103 = vsub.f32 %v7090, %v7091
  %v7104 = vmul.f32 %v7103, 2.0
  %v7105 = vadd.f32 %v7099, %v7100
  %v7106 = vmul.f32 %v7105, 2.0
  %v7107 = vsub.f32 %v7096, %v7082
  %v7108 = vadd.f32 %v7107, %v7084
  %v7109 = vld [vmem:[%s15] sm:$0xff]
  %v7110 = vld [vmem:[%s17] sm:$0xff]
  %vm7111 = vcmp.eq.s32.totalorder %v6992, 0
  %v7112 = vsel %vm7111, %v7109, 0.0
  %vm7113 = vcmask 72704
  %v7114 = vsel %vm7113, %v7112, 0.0
  %7115 = vadd.xlane.f32.xlu0 %v7114
  %v7116 = vpop.xlane.xlu0 %7115
  %vm7117 = vcmp.eq.s32.totalorder %v6992, 1
  %v7118 = vsel %vm7117, %v7109, 0.0
  %v7119 = vsel %vm7113, %v7118, 0.0
  %7120 = vadd.xlane.f32.xlu0 %v7119
  %v7121 = vpop.xlane.xlu0 %7120
  %vm7122 = vcmp.eq.s32.totalorder %v6992, 2
  %v7123 = vsel %vm7122, %v7109, 0.0
  %v7124 = vsel %vm7113, %v7123, 0.0
  %7125 = vadd.xlane.f32.xlu0 %v7124
  %v7126 = vpop.xlane.xlu0 %7125
  %vm7127 = vcmp.eq.s32.totalorder %v6992, 3
  %v7128 = vsel %vm7127, %v7109, 0.0
  %v7129 = vsel %vm7113, %v7128, 0.0
  %7130 = vadd.xlane.f32.xlu0 %v7129
  %v7131 = vpop.xlane.xlu0 %7130
  %vm7132 = vcmp.eq.s32.totalorder %v6992, 4
  %v7133 = vsel %vm7132, %v7109, 0.0
  %v7134 = vsel %vm7113, %v7133, 0.0
  %7135 = vadd.xlane.f32.xlu0 %v7134
  %v7136 = vpop.xlane.xlu0 %7135
  %vm7137 = vcmp.eq.s32.totalorder %v6992, 5
  %v7138 = vsel %vm7137, %v7109, 0.0
  %v7139 = vsel %vm7113, %v7138, 0.0
  %7140 = vadd.xlane.f32.xlu0 %v7139
  %v7141 = vpop.xlane.xlu0 %7140
  %vm7142 = vcmp.eq.s32.totalorder %v6992, 6
  %v7143 = vsel %vm7142, %v7109, 0.0
  %v7144 = vsel %vm7113, %v7143, 0.0
  %7145 = vadd.xlane.f32.xlu0 %v7144
  %v7146 = vpop.xlane.xlu0 %7145
  %vm7147 = vcmp.eq.s32.totalorder %v6992, 7
  %v7148 = vsel %vm7147, %v7109, 0.0
  %v7149 = vsel %vm7113, %v7148, 0.0
  %7150 = vadd.xlane.f32.xlu0 %v7149
  %v7151 = vpop.xlane.xlu0 %7150
  %vm7152 = vcmp.eq.s32.totalorder %v6992, 8
  %v7153 = vsel %vm7152, %v7109, 0.0
  %v7154 = vsel %vm7113, %v7153, 0.0
  %7155 = vadd.xlane.f32.xlu0 %v7154
  %v7156 = vpop.xlane.xlu0 %7155
  %v7157 = vmul.f32 %v7116, %v7085
  %v7158 = vmul.f32 %v7121, %v7095
  %v7159 = vadd.f32 %v7157, %v7158
  %v7160 = vmul.f32 %v7126, %v7104
  %v7161 = vadd.f32 %v7159, %v7160
  %v7162 = vmul.f32 %v7131, %v7085
  %v7163 = vmul.f32 %v7136, %v7095
  %v7164 = vadd.f32 %v7162, %v7163
  %v7165 = vmul.f32 %v7141, %v7104
  %v7166 = vadd.f32 %v7164, %v7165
  %v7167 = vmul.f32 %v7146, %v7085
  %v7168 = vmul.f32 %v7151, %v7095
  %v7169 = vadd.f32 %v7167, %v7168
  %v7170 = vmul.f32 %v7156, %v7104
  %v7171 = vadd.f32 %v7169, %v7170
  %v7172 = vsel %vm7111, %v7110, 0.0
  %v7173 = vsel %vm7113, %v7172, 0.0
  %7174 = vadd.xlane.f32.xlu0 %v7173
  %v7175 = vpop.xlane.xlu0 %7174
  %v7176 = vsel %vm7117, %v7110, 0.0
  %v7177 = vsel %vm7113, %v7176, 0.0
  %7178 = vadd.xlane.f32.xlu0 %v7177
  %v7179 = vpop.xlane.xlu0 %7178
  %v7180 = vsel %vm7122, %v7110, 0.0
  %v7181 = vsel %vm7113, %v7180, 0.0
  %7182 = vadd.xlane.f32.xlu0 %v7181
  %v7183 = vpop.xlane.xlu0 %7182
  %v7184 = vmul.f32 %v7161, %v7175
  %v7185 = vmul.f32 %v7166, %v7179
  %v7186 = vadd.f32 %v7184, %v7185
  %v7187 = vmul.f32 %v7171, %v7183
  %v7188 = vadd.f32 %v7186, %v7187
  %v7189 = vmul.f32 %v7161, %v7161
  %v7190 = vmul.f32 %v7166, %v7166
  %v7191 = vadd.f32 %v7189, %v7190
  %v7192 = vmul.f32 %v7171, %v7171
  %v7193 = vadd.f32 %v7191, %v7192
  %v7194 = vrsqrt.pop %v7193
  %v7195 = vmul.f32 %v7193, %v7194
  %vm7196 = vcmp.eq.f32.partialorder %v7193, inf
  %v7197 = vsel %vm7196, %v7193, %v7195
  %vm7198 = vcmp.eq.f32.partialorder %v7193, 0.0
  %v7199 = vand.u32 %v7193, 2147483648
  %v7200 = vsel %vm7198, %v7199, %v7197
  %v7201 = vmul.f32 %v7175, %v7175
  %v7202 = vmul.f32 %v7179, %v7179
  %v7203 = vadd.f32 %v7201, %v7202
  %v7204 = vmul.f32 %v7183, %v7183
  %v7205 = vadd.f32 %v7203, %v7204
  %v7206 = vrsqrt.pop %v7205
  %v7207 = vmul.f32 %v7205, %v7206
  %vm7208 = vcmp.eq.f32.partialorder %v7205, inf
  %v7209 = vsel %vm7208, %v7205, %v7207
  %vm7210 = vcmp.eq.f32.partialorder %v7205, 0.0
  %v7211 = vand.u32 %v7205, 2147483648
  %v7212 = vsel %vm7210, %v7211, %v7209
  %v7213 = vmax.f32 %v7200, 1e-08
  %v7214 = vmax.f32 %v7212, 1e-08
  %v7215 = vmul.f32 %v7213, %v7214
  %v7216 = vrcp.pop %v7215
  %v7217 = vmul.f32 %v7188, %v7216
  %v7218 = vsub.f32 1.0, %v7217
  %v7219 = vadd.f32 %v7218, 0.0
  %v7220 = vmul.f32 %v7116, %v7089
  %v7221 = vmul.f32 %v7121, %v7098
  %v7222 = vadd.f32 %v7220, %v7221
  %v7223 = vmul.f32 %v7126, %v7106
  %v7224 = vadd.f32 %v7222, %v7223
  %v7225 = vmul.f32 %v7131, %v7089
  %v7226 = vmul.f32 %v7136, %v7098
  %v7227 = vadd.f32 %v7225, %v7226
  %v7228 = vmul.f32 %v7141, %v7106
  %v7229 = vadd.f32 %v7227, %v7228
  %v7230 = vmul.f32 %v7146, %v7089
  %v7231 = vmul.f32 %v7151, %v7098
  %v7232 = vadd.f32 %v7230, %v7231
  %v7233 = vmul.f32 %v7156, %v7106
  %v7234 = vadd.f32 %v7232, %v7233
  %v7235 = vsel %vm7127, %v7110, 0.0
  %v7236 = vsel %vm7113, %v7235, 0.0
  %7237 = vadd.xlane.f32.xlu0 %v7236
  %v7238 = vpop.xlane.xlu0 %7237
  %v7239 = vsel %vm7132, %v7110, 0.0
  %v7240 = vsel %vm7113, %v7239, 0.0
  %7241 = vadd.xlane.f32.xlu0 %v7240
  %v7242 = vpop.xlane.xlu0 %7241
  %v7243 = vsel %vm7137, %v7110, 0.0
  %v7244 = vsel %vm7113, %v7243, 0.0
  %7245 = vadd.xlane.f32.xlu0 %v7244
  %v7246 = vpop.xlane.xlu0 %7245
  %v7247 = vmul.f32 %v7224, %v7238
  %v7248 = vmul.f32 %v7229, %v7242
  %v7249 = vadd.f32 %v7247, %v7248
  %v7250 = vmul.f32 %v7234, %v7246
  %v7251 = vadd.f32 %v7249, %v7250
  %v7252 = vmul.f32 %v7224, %v7224
  %v7253 = vmul.f32 %v7229, %v7229
  %v7254 = vadd.f32 %v7252, %v7253
  %v7255 = vmul.f32 %v7234, %v7234
  %v7256 = vadd.f32 %v7254, %v7255
  %v7257 = vrsqrt.pop %v7256
  %v7258 = vmul.f32 %v7256, %v7257
  %vm7259 = vcmp.eq.f32.partialorder %v7256, inf
  %v7260 = vsel %vm7259, %v7256, %v7258
  %vm7261 = vcmp.eq.f32.partialorder %v7256, 0.0
  %v7262 = vand.u32 %v7256, 2147483648
  %v7263 = vsel %vm7261, %v7262, %v7260
  %v7264 = vmul.f32 %v7238, %v7238
  %v7265 = vmul.f32 %v7242, %v7242
  %v7266 = vadd.f32 %v7264, %v7265
  %v7267 = vmul.f32 %v7246, %v7246
  %v7268 = vadd.f32 %v7266, %v7267
  %v7269 = vrsqrt.pop %v7268
  %v7270 = vmul.f32 %v7268, %v7269
  %vm7271 = vcmp.eq.f32.partialorder %v7268, inf
  %v7272 = vsel %vm7271, %v7268, %v7270
  %vm7273 = vcmp.eq.f32.partialorder %v7268, 0.0
  %v7274 = vand.u32 %v7268, 2147483648
  %v7275 = vsel %vm7273, %v7274, %v7272
  %v7276 = vmax.f32 %v7263, 1e-08
  %v7277 = vmax.f32 %v7275, 1e-08
  %v7278 = vmul.f32 %v7276, %v7277
  %v7279 = vrcp.pop %v7278
  %v7280 = vmul.f32 %v7251, %v7279
  %v7281 = vsub.f32 1.0, %v7280
  %v7282 = vadd.f32 %v7219, %v7281
  %v7283 = vmul.f32 %v7116, %v7093
  %v7284 = vmul.f32 %v7121, %v7102
  %v7285 = vadd.f32 %v7283, %v7284
  %v7286 = vmul.f32 %v7126, %v7108
  %v7287 = vadd.f32 %v7285, %v7286
  %v7288 = vmul.f32 %v7131, %v7093
  %v7289 = vmul.f32 %v7136, %v7102
  %v7290 = vadd.f32 %v7288, %v7289
  %v7291 = vmul.f32 %v7141, %v7108
  %v7292 = vadd.f32 %v7290, %v7291
  %v7293 = vmul.f32 %v7146, %v7093
  %v7294 = vmul.f32 %v7151, %v7102
  %v7295 = vadd.f32 %v7293, %v7294
  %v7296 = vmul.f32 %v7156, %v7108
  %v7297 = vadd.f32 %v7295, %v7296
  %v7298 = vsel %vm7142, %v7110, 0.0
  %v7299 = vsel %vm7113, %v7298, 0.0
  %7300 = vadd.xlane.f32.xlu0 %v7299
  %v7301 = vpop.xlane.xlu0 %7300
  %v7302 = vsel %vm7147, %v7110, 0.0
  %v7303 = vsel %vm7113, %v7302, 0.0
  %7304 = vadd.xlane.f32.xlu0 %v7303
  %v7305 = vpop.xlane.xlu0 %7304
  %v7306 = vsel %vm7152, %v7110, 0.0
  %v7307 = vsel %vm7113, %v7306, 0.0
  %7308 = vadd.xlane.f32.xlu0 %v7307
  %v7309 = vpop.xlane.xlu0 %7308
  %v7310 = vmul.f32 %v7287, %v7301
  %v7311 = vmul.f32 %v7292, %v7305
  %v7312 = vadd.f32 %v7310, %v7311
  %v7313 = vmul.f32 %v7297, %v7309
  %v7314 = vadd.f32 %v7312, %v7313
  %v7315 = vmul.f32 %v7287, %v7287
  %v7316 = vmul.f32 %v7292, %v7292
  %v7317 = vadd.f32 %v7315, %v7316
  %v7318 = vmul.f32 %v7297, %v7297
  %v7319 = vadd.f32 %v7317, %v7318
  %v7320 = vrsqrt.pop %v7319
  %v7321 = vmul.f32 %v7319, %v7320
  %vm7322 = vcmp.eq.f32.partialorder %v7319, inf
  %v7323 = vsel %vm7322, %v7319, %v7321
  %vm7324 = vcmp.eq.f32.partialorder %v7319, 0.0
  %v7325 = vand.u32 %v7319, 2147483648
  %v7326 = vsel %vm7324, %v7325, %v7323
  %v7327 = vmul.f32 %v7301, %v7301
  %v7328 = vmul.f32 %v7305, %v7305
  %v7329 = vadd.f32 %v7327, %v7328
  %v7330 = vmul.f32 %v7309, %v7309
  %v7331 = vadd.f32 %v7329, %v7330
  %v7332 = vrsqrt.pop %v7331
  %v7333 = vmul.f32 %v7331, %v7332
  %vm7334 = vcmp.eq.f32.partialorder %v7331, inf
  %v7335 = vsel %vm7334, %v7331, %v7333
  %vm7336 = vcmp.eq.f32.partialorder %v7331, 0.0
  %v7337 = vand.u32 %v7331, 2147483648
  %v7338 = vsel %vm7336, %v7337, %v7335
  %v7339 = vmax.f32 %v7326, 1e-08
  %v7340 = vmax.f32 %v7338, 1e-08
  %v7341 = vmul.f32 %v7339, %v7340
  %v7342 = vrcp.pop %v7341
  %v7343 = vmul.f32 %v7314, %v7342
  %v7344 = vsub.f32 1.0, %v7343
  %v7345 = vadd.f32 %v7282, %v7344
  %v7346 = vrot.slane %v7345, 4
  %v7347 = vadd.f32 %v7345, %v7346
  %v7348 = vrot.slane %v7347, 2
  %v7349 = vadd.f32 %v7347, %v7348
  %v7350 = vrot.slane %v7349, 1
  %v7351 = vadd.f32 %v7349, %v7350
  %v7352 = vmul.f32 %v7351, %v7039
  %v7353 = vsel %vm7122, %v7040, 0.0
  %v7354 = vsel %vm7117, %v7053, %v7353
  %v7355 = vsel %vm7111, %v7352, %v7354
  %7356 = vst [vmem:[%s65] sm:$0x1] %v7355
  // Predicated region
  $region130: #{full_dpm_forward.3} parent=0 // pred_check
    _
  $region131: #{full_dpm_forward.3} parent=0 // pred_check_branch
    %7358 = sbr.rel (0) target = $region133
  $region132: #{full_dpm_forward.3} parent=0 // pred_region
    _
  $region133: #{full_dpm_forward.3} parent=0 // pred_fallthru
    _
  // Predicated region
  $region134: #{full_dpm_forward.3} parent=0 // pred_check
    _
  $region135: #{full_dpm_forward.3} parent=0 // pred_check_branch
    %7360 = sbr.rel (0) target = $region137
  $region136: #{full_dpm_forward.3} parent=0 // pred_region
    _
  $region137: #{full_dpm_forward.3} parent=0 // pred_fallthru
    _

</llo_original>
